<compile_context>
chip_gen: v5e
topology: v5e:2x2
jax: 0.10.0
libtpu: 0.0.40
codegen_flags: <defaults>
</compile_context>

<pallas_src>
import random
import functools

import jax
import jax.numpy as jnp
import numpy as np
from jax import lax
from jax.experimental import pallas as pl
from jax.experimental.pallas import tpu as pltpu


def _round_up(x, m):
    return ((x + m - 1) // m) * m


# ------------------------------ weight packing ------------------------------

def _pack_lstm_weights(wih, whh, b, Ep, Hp):
    """Pack (E,4H)/(H,4H)/(1,4H) into a stacked, gate-padded (Ep+Hp, 4Hp) weight + (1,4Hp) bias.

    Gate order is reordered from PyTorch's (i,f,g,o) to (i,f,o,g) so the kernel applies one
    sigmoid to the contiguous first 3*Hp lanes and tanh to the last Hp lanes.  Each gate block
    is zero-padded H->Hp so padded hidden lanes stay exactly zero through the recurrence."""
    H = whh.shape[0]
    order = (0, 1, 3, 2)  # i, f, o, g

    def pad_gates(w, rows_to):
        rows = w.shape[0]
        gates = jnp.split(w, 4, axis=1)                                    # 4 x (rows, H)
        gates = [gates[k] for k in order]
        gates = [jnp.pad(g, ((0, rows_to - rows), (0, Hp - H))) for g in gates]
        return jnp.concatenate(gates, axis=1)                              # (rows_to, 4Hp)

    wih_p = pad_gates(wih, Ep)                                             # (Ep, 4Hp)
    whh_p = pad_gates(whh, Hp)                                             # (Hp, 4Hp)
    w_stacked = jnp.concatenate([wih_p, whh_p], axis=0)                    # (Ep+Hp, 4Hp)

    b_gates = jnp.split(b, 4, axis=1)
    b_gates = [b_gates[k] for k in order]
    b_p = jnp.concatenate([jnp.pad(g, ((0, 0), (0, Hp - H))) for g in b_gates], axis=1)
    return w_stacked, b_p


# ------------------------------ fused encoder+decoder kernel ------------------------------

def _seq2seq_kernel(src_ref, tgt_ref, tf_ref,                 # SMEM int32
                    enc_emb_ref, enc_w_ref, enc_b_ref,        # VMEM-resident weights
                    dec_emb_ref, dec_w_ref, dec_b_ref,
                    wo_ref, bo_ref,
                    out_ref,                                  # (T-1, Bp, Vp) logits
                    h_scr, c_scr, xh_scr, xoh_scr,            # VMEM scratch
                    *, B, S, T, V, Bp, Ep, Hp, Vp, SVp):
    f32 = jnp.float32

    lane_v = lax.broadcasted_iota(jnp.int32, (Bp, Vp), 1)
    row_v = lax.broadcasted_iota(jnp.int32, (Bp, Vp), 0)
    lane_s = lax.broadcasted_iota(jnp.int32, (Bp, SVp), 1)
    row_s = lax.broadcasted_iota(jnp.int32, (Bp, SVp), 0)

    def one_hot_from_smem(ids_ref, col, lane, row, width):
        # Build a (Bp, width) one-hot from per-row token ids stored in SMEM.
        oh = jnp.zeros((Bp, width), f32)
        for b in range(B):                                    # static unroll over real rows
            tid = ids_ref[b, col]
            oh = jnp.where((row == b) & (lane == tid), f32(1.0), oh)
        return oh

    def lstm_step(w_ref, b_ref):
        # gates packed (i, f, o, g): one sigmoid over [:, :3Hp], tanh over the last Hp lanes.
        gates = jnp.dot(xh_scr[...], w_ref[...], preferred_element_type=f32) + b_ref[...]
        sg = jax.nn.sigmoid(gates[:, : 3 * Hp])
        i_g = sg[:, 0 * Hp:1 * Hp]
        f_g = sg[:, 1 * Hp:2 * Hp]
        o_g = sg[:, 2 * Hp:3 * Hp]
        g_g = jnp.tanh(gates[:, 3 * Hp:])
        c_new = f_g * c_scr[...] + i_g * g_g
        h_new = o_g * jnp.tanh(c_new)
        c_scr[...] = c_new
        h_scr[...] = h_new
        xh_scr[:, pl.ds(Ep, Hp)] = h_new                      # h half of the stacked input
        return h_new

    # ---- init resident state ----
    h_scr[...] = jnp.zeros_like(h_scr)
    c_scr[...] = jnp.zeros_like(c_scr)
    xh_scr[...] = jnp.zeros_like(xh_scr)

    # ---- encoder over source time steps (in-kernel loop, no grid) ----
    def enc_body(s, carry):
        oh = one_hot_from_smem(src_ref, s, lane_s, row_s, SVp)
        x_emb = jnp.dot(oh, enc_emb_ref[...], preferred_element_type=f32)
        xh_scr[:, pl.ds(0, Ep)] = x_emb
        lstm_step(enc_w_ref, enc_b_ref)
        return carry

    lax.fori_loop(0, S, enc_body, 0, unroll=True)

    # ---- decoder over target time steps (teacher forcing / greedy feedback) ----
    xoh_scr[...] = one_hot_from_smem(tgt_ref, 0, lane_v, row_v, Vp)   # one-hot of target[:, 0]

    def dec_body(s, carry):
        # Embedding gather of the fed-back token as a one-hot matmul (keeps feedback on-chip).
        x_emb = jnp.dot(xoh_scr[...], dec_emb_ref[...], preferred_element_type=f32)
        xh_scr[:, pl.ds(0, Ep)] = x_emb
        h_new = lstm_step(dec_w_ref, dec_b_ref)

        logits = jnp.dot(h_new, wo_ref[...], preferred_element_type=f32) + bo_ref[...]
        out_ref[s] = logits                                   # lane-dense store into resident block

        @pl.when(tf_ref[s] > 0)
        def _teacher():
            xoh_scr[...] = one_hot_from_smem(tgt_ref, s + 1, lane_v, row_v, Vp)

        @pl.when(tf_ref[s] == 0)
        def _greedy():
            # argmax over real vocab lanes via max/min reductions (first-index tie-break).
            masked = jnp.where(lane_v < V, logits, f32(-1e30))
            row_max = jnp.max(masked, axis=1, keepdims=True)
            first_idx = jnp.min(jnp.where(masked == row_max, lane_v, jnp.int32(Vp)),
                                axis=1, keepdims=True)
            xoh_scr[...] = (lane_v == first_idx).astype(f32)

        return carry

    lax.fori_loop(0, T - 1, dec_body, 0, unroll=True)


def _run_fused(src_ids, tgt_ids, tf_mask, enc_emb, enc_w, enc_b,
               dec_emb, dec_w, dec_b, w_out, b_out,
               *, B, S, T, V, Bp, Ep, Hp, Vp, SVp):
    kernel = functools.partial(_seq2seq_kernel, B=B, S=S, T=T, V=V,
                               Bp=Bp, Ep=Ep, Hp=Hp, Vp=Vp, SVp=SVp)
    smem = pl.BlockSpec(memory_space=pltpu.MemorySpace.SMEM)
    vmem = pl.BlockSpec(memory_space=pltpu.MemorySpace.VMEM)
    return pl.pallas_call(
        kernel,
        out_shape=jax.ShapeDtypeStruct((T - 1, Bp, Vp), jnp.float32),
        in_specs=[smem, smem, smem,                           # src ids, tgt ids, tf mask
                  vmem, vmem, vmem,                           # enc emb / W / b
                  vmem, vmem, vmem,                           # dec emb / W / b
                  vmem, vmem],                                # out-proj W / b
        out_specs=vmem,
        scratch_shapes=[pltpu.VMEM((Bp, Hp), jnp.float32),    # hidden
                        pltpu.VMEM((Bp, Hp), jnp.float32),    # cell
                        pltpu.VMEM((Bp, Ep + Hp), jnp.float32),  # stacked [x | h] input
                        pltpu.VMEM((Bp, Vp), jnp.float32)],   # fed-back token one-hot
    )(src_ids, tgt_ids, tf_mask, enc_emb, enc_w, enc_b,
      dec_emb, dec_w, dec_b, w_out, b_out)


# ------------------------------ parameters ------------------------------

def init_params(key, *, src_vocab, tgt_vocab, emb_dim, hidden_dim):
    ks = jax.random.split(key, 10)
    s = 0.1
    return {
        # encoder
        "enc_emb": jax.random.normal(ks[0], (src_vocab, emb_dim), jnp.float32) * s,
        "enc_wih": jax.random.normal(ks[1], (emb_dim, 4 * hidden_dim), jnp.float32) * s,
        "enc_whh": jax.random.normal(ks[2], (hidden_dim, 4 * hidden_dim), jnp.float32) * s,
        "enc_b":   jax.random.normal(ks[3], (1, 4 * hidden_dim), jnp.float32) * s,
        # decoder
        "dec_emb": jax.random.normal(ks[4], (tgt_vocab, emb_dim), jnp.float32) * s,
        "dec_wih": jax.random.normal(ks[5], (emb_dim, 4 * hidden_dim), jnp.float32) * s,
        "dec_whh": jax.random.normal(ks[6], (hidden_dim, 4 * hidden_dim), jnp.float32) * s,
        "dec_b":   jax.random.normal(ks[7], (1, 4 * hidden_dim), jnp.float32) * s,
        "dec_out_w": jax.random.normal(ks[8], (hidden_dim, tgt_vocab), jnp.float32) * s,
        "dec_out_b": jax.random.normal(ks[9], (1, tgt_vocab), jnp.float32) * s,
    }


# ------------------------------ Seq2Seq forward ------------------------------

def _seq2seq_core(params, source, target, tf_mask):
    B, S = source.shape
    T = target.shape[1]
    E = params["enc_emb"].shape[1]
    H = params["enc_whh"].shape[0]
    SV = params["enc_emb"].shape[0]
    V = params["dec_out_w"].shape[1]

    if T <= 1:
        return jnp.zeros((B, T, V), jnp.float32)

    Bp = _round_up(B, 8)
    Ep = _round_up(E, 128)
    Hp = _round_up(H, 128)
    Vp = _round_up(V, 128)
    SVp = _round_up(SV, 128)

    # Pack / pad weights once (trace-time XLA work, fused by XLA).
    enc_w, enc_b = _pack_lstm_weights(params["enc_wih"], params["enc_whh"], params["enc_b"], Ep, Hp)
    dec_w, dec_b = _pack_lstm_weights(params["dec_wih"], params["dec_whh"], params["dec_b"], Ep, Hp)
    enc_emb = jnp.pad(params["enc_emb"], ((0, SVp - SV), (0, Ep - E)))
    dec_emb = jnp.pad(params["dec_emb"], ((0, Vp - params["dec_emb"].shape[0]), (0, Ep - E)))
    w_out = jnp.pad(params["dec_out_w"], ((0, Hp - H), (0, Vp - V)))
    b_out = jnp.pad(params["dec_out_b"], ((0, 0), (0, Vp - V)))

    dec_out = _run_fused(source.astype(jnp.int32), target.astype(jnp.int32),
                         tf_mask.astype(jnp.int32),
                         enc_emb, enc_w, enc_b, dec_emb, dec_w, dec_b, w_out, b_out,
                         B=B, S=S, T=T, V=V, Bp=Bp, Ep=Ep, Hp=Hp, Vp=Vp, SVp=SVp)

    dec_out = jnp.transpose(dec_out, (1, 0, 2))[:B, :, :V]                 # (B, T-1, V)
    # outputs[:, 0] stays zero, as in the PyTorch forward.
    return jnp.concatenate([jnp.zeros((B, 1, V), jnp.float32), dec_out], axis=1)


_seq2seq_core_jit = jax.jit(_seq2seq_core)


def _teacher_force_mask(T, teacher_force_ratio, seed):
    # TODO(synk): teacher-force coin flips use a seeded Python RNG resolved before the jitted
    # call (torch uses random.random() at runtime inside forward); decisions are passed in as
    # an int32 mask so the compiled program itself is reusable across calls.
    rng = random.Random(seed)
    return jnp.array([1 if rng.random() < teacher_force_ratio else 0
                      for _ in range(max(T - 1, 1))], dtype=jnp.int32)


def seq2seq_forward(params, source, target, teacher_force_ratio=0.5, seed=0):
    """Mirrors Seq2Seq.forward: returns outputs of shape (B, target_len, tgt_vocab)."""
    tf_mask = _teacher_force_mask(target.shape[1], teacher_force_ratio, seed)
    return _seq2seq_core_jit(params, source, target, tf_mask)


# ------------------------------ pure-JAX reference (for checking) ------------------------------

def _reference_forward(params, source, target, tf_mask):
    B, S = source.shape
    T = target.shape[1]
    H = params["enc_whh"].shape[0]
    V = params["dec_out_w"].shape[1]

    def cell(x, h, c, wih, whh, b):
        gates = x @ wih + h @ whh + b
        i = jax.nn.sigmoid(gates[:, 0 * H:1 * H])
        f = jax.nn.sigmoid(gates[:, 1 * H:2 * H])
        g = jnp.tanh(gates[:, 2 * H:3 * H])
        o = jax.nn.sigmoid(gates[:, 3 * H:4 * H])
        c = f * c + i * g
        return o * jnp.tanh(c), c

    h = jnp.zeros((B, H), jnp.float32)
    c = jnp.zeros((B, H), jnp.float32)
    src_emb = jnp.take(params["enc_emb"], source, axis=0)
    for t in range(S):
        h, c = cell(src_emb[:, t], h, c, params["enc_wih"], params["enc_whh"], params["enc_b"])

    outputs = jnp.zeros((B, T, V), jnp.float32)
    x = target[:, 0]
    for t in range(1, T):
        xe = jnp.take(params["dec_emb"], x, axis=0)
        h, c = cell(xe, h, c, params["dec_wih"], params["dec_whh"], params["dec_b"])
        out = h @ params["dec_out_w"] + params["dec_out_b"]
        outputs = outputs.at[:, t, :].set(out)
        best = jnp.argmax(out, axis=1).astype(target.dtype)
        x = jnp.where(tf_mask[t - 1] > 0, target[:, t], best)
    return outputs


# ------------------------------ main ------------------------------

if __name__ == "__main__":
    B = 2            # batch
    SRC_LEN = 8      # source sequence length
    TGT_LEN = 8      # target sequence length
    EMB = 32         # embedding dim
    HID = 32         # hidden dim (encoder.hidden_dim == decoder.hidden_dim)
    SRC_VOCAB = 16
    TGT_VOCAB = 16   # decoder.output_size

    key = jax.random.PRNGKey(0)
    kp, ks, kt = jax.random.split(key, 3)

    params = init_params(kp, src_vocab=SRC_VOCAB, tgt_vocab=TGT_VOCAB,
                         emb_dim=EMB, hidden_dim=HID)
    source = jax.random.randint(ks, (B, SRC_LEN), 0, SRC_VOCAB, dtype=jnp.int32)
    target = jax.random.randint(kt, (B, TGT_LEN), 0, TGT_VOCAB, dtype=jnp.int32)

    outputs = seq2seq_forward(params, source, target, teacher_force_ratio=0.5, seed=0)
    outputs = jax.block_until_ready(outputs)

    assert outputs.shape == (B, TGT_LEN, TGT_VOCAB)
    assert bool(jnp.all(jnp.isfinite(outputs)))

    # cross-check against an unpadded pure-JAX reference with identical teacher-force mask
    tf_mask = _teacher_force_mask(TGT_LEN, 0.5, 0)
    ref = jax.block_until_ready(_reference_forward(params, source, target, tf_mask))
    assert np.allclose(np.asarray(outputs), np.asarray(ref), rtol=1e-2, atol=1e-3)

    print("KERNEL_OK")
</pallas_src>

<mosaic_0001>
module attributes {stable_mosaic.version = 11 : i64} {
  func.func @_seq2seq_kernel(%arg0: memref<2x8xi32, #tpu.memory_space<smem>>, %arg1: memref<2x8xi32, #tpu.memory_space<smem>>, %arg2: memref<7xi32, #tpu.memory_space<smem>>, %arg3: memref<128x128xf32, #tpu.memory_space<vmem>>, %arg4: memref<256x512xf32, #tpu.memory_space<vmem>>, %arg5: memref<1x512xf32, #tpu.memory_space<vmem>>, %arg6: memref<128x128xf32, #tpu.memory_space<vmem>>, %arg7: memref<256x512xf32, #tpu.memory_space<vmem>>, %arg8: memref<1x512xf32, #tpu.memory_space<vmem>>, %arg9: memref<128x128xf32, #tpu.memory_space<vmem>>, %arg10: memref<1x128xf32, #tpu.memory_space<vmem>>, %arg11: memref<7x8x128xf32, #tpu.memory_space<vmem>>, %arg12: memref<8x128xf32, #tpu.memory_space<vmem>>, %arg13: memref<8x128xf32, #tpu.memory_space<vmem>>, %arg14: memref<8x256xf32, #tpu.memory_space<vmem>>, %arg15: memref<8x128xf32, #tpu.memory_space<vmem>>) attributes {dimension_semantics = [], scalar_prefetch = 0 : i64, scratch_operands = 4 : i64, tpu.core_type = #tpu.core_type<tc>} {
    %0 = tpu.iota {dimensions = array<i32: 1>} : vector<8x128xi32>
    %1 = tpu.iota {dimensions = array<i32: 0>} : vector<8x128xi32>
    %2 = tpu.iota {dimensions = array<i32: 1>} : vector<8x128xi32>
    %3 = tpu.iota {dimensions = array<i32: 0>} : vector<8x128xi32>
    %cst = arith.constant 0.000000e+00 : f32
    %4 = vector.broadcast %cst : f32 to vector<8x128xf32>
    %c0 = arith.constant 0 : index
    %c0_0 = arith.constant 0 : index
    %5 = vector.load %arg12[%c0, %c0_0] : memref<8x128xf32, #tpu.memory_space<vmem>>, vector<8x128xf32>
    tpu.vector_store %arg12[%c0, %c0_0], %4 {strides = array<i32>} : memref<8x128xf32, #tpu.memory_space<vmem>>, vector<8x128xf32>,
    %cst_1 = arith.constant 0.000000e+00 : f32
    %6 = vector.broadcast %cst_1 : f32 to vector<8x128xf32>
    %c0_2 = arith.constant 0 : index
    %c0_3 = arith.constant 0 : index
    %7 = vector.load %arg13[%c0_2, %c0_3] : memref<8x128xf32, #tpu.memory_space<vmem>>, vector<8x128xf32>
    tpu.vector_store %arg13[%c0_2, %c0_3], %6 {strides = array<i32>} : memref<8x128xf32, #tpu.memory_space<vmem>>, vector<8x128xf32>,
    %cst_4 = arith.constant 0.000000e+00 : f32
    %8 = vector.broadcast %cst_4 : f32 to vector<8x256xf32>
    %c0_5 = arith.constant 0 : index
    %c0_6 = arith.constant 0 : index
    %9 = vector.load %arg14[%c0_5, %c0_6] : memref<8x256xf32, #tpu.memory_space<vmem>>, vector<8x256xf32>
    tpu.vector_store %arg14[%c0_5, %c0_6], %8 {strides = array<i32>} : memref<8x256xf32, #tpu.memory_space<vmem>>, vector<8x256xf32>,
    %c0_i32 = arith.constant 0 : i32
    %cst_7 = arith.constant 0.000000e+00 : f32
    %10 = vector.broadcast %cst_7 : f32 to vector<8x128xf32>
    %c0_8 = arith.constant 0 : index
    %11 = arith.index_cast %c0_i32 : i32 to index
    %12 = memref.load %arg0[%c0_8, %11] : memref<2x8xi32, #tpu.memory_space<smem>>
    %c0_i32_9 = arith.constant 0 : i32
    %13 = vector.broadcast %c0_i32_9 : i32 to vector<8x128xi32>
    %14 = arith.cmpi eq, %3, %13 : vector<8x128xi32>
    %15 = vector.broadcast %12 : i32 to vector<8x128xi32>
    %16 = arith.cmpi eq, %2, %15 : vector<8x128xi32>
    %17 = arith.andi %14, %16 : vector<8x128xi1>
    %cst_10 = arith.constant 1.000000e+00 : f32
    %18 = vector.broadcast %cst_10 : f32 to vector<8x128xf32>
    %19 = arith.select %17, %18, %10 : vector<8x128xi1>, vector<8x128xf32>
    %c1 = arith.constant 1 : index
    %20 = arith.index_cast %c0_i32 : i32 to index
    %21 = memref.load %arg0[%c1, %20] : memref<2x8xi32, #tpu.memory_space<smem>>
    %c1_i32 = arith.constant 1 : i32
    %22 = vector.broadcast %c1_i32 : i32 to vector<8x128xi32>
    %23 = arith.cmpi eq, %3, %22 : vector<8x128xi32>
    %24 = vector.broadcast %21 : i32 to vector<8x128xi32>
    %25 = arith.cmpi eq, %2, %24 : vector<8x128xi32>
    %26 = arith.andi %23, %25 : vector<8x128xi1>
    %cst_11 = arith.constant 1.000000e+00 : f32
    %27 = vector.broadcast %cst_11 : f32 to vector<8x128xf32>
    %28 = arith.select %26, %27, %19 : vector<8x128xi1>, vector<8x128xf32>
    %c0_12 = arith.constant 0 : index
    %c0_13 = arith.constant 0 : index
    %29 = vector.load %arg3[%c0_12, %c0_13] : memref<128x128xf32, #tpu.memory_space<vmem>>, vector<128x128xf32>
    %cst_14 = arith.constant dense<0.000000e+00> : vector<8x128xf32>
    %30 = tpu.matmul %28, %29, %cst_14 {dimension_numbers = #tpu.dot_dimension_numbers<[1], [0], [0], [1], [0, 0, 1, 1], [], []>} : vector<8x128xf32>, vector<128x128xf32>, vector<8x128xf32> -> vector<8x128xf32>
    %c0_15 = arith.constant 0 : index
    %c0_16 = arith.constant 0 : index
    %31 = vector.load %arg14[%c0_15, %c0_16] : memref<8x256xf32, #tpu.memory_space<vmem>>, vector<8x128xf32>
    tpu.vector_store %arg14[%c0_15, %c0_16], %30 {strides = array<i32>} : memref<8x256xf32, #tpu.memory_space<vmem>>, vector<8x128xf32>,
    %c0_17 = arith.constant 0 : index
    %c0_18 = arith.constant 0 : index
    %32 = vector.load %arg14[%c0_17, %c0_18] : memref<8x256xf32, #tpu.memory_space<vmem>>, vector<8x256xf32>
    %c0_19 = arith.constant 0 : index
    %c0_20 = arith.constant 0 : index
    %33 = vector.load %arg4[%c0_19, %c0_20] : memref<256x512xf32, #tpu.memory_space<vmem>>, vector<256x512xf32>
    %cst_21 = arith.constant dense<0.000000e+00> : vector<8x512xf32>
    %34 = tpu.matmul %32, %33, %cst_21 {dimension_numbers = #tpu.dot_dimension_numbers<[1], [0], [0], [1], [0, 0, 1, 1], [], []>} : vector<8x256xf32>, vector<256x512xf32>, vector<8x512xf32> -> vector<8x512xf32>
    %c0_22 = arith.constant 0 : index
    %c0_23 = arith.constant 0 : index
    %35 = vector.load %arg5[%c0_22, %c0_23] : memref<1x512xf32, #tpu.memory_space<vmem>>, vector<1x512xf32>
    %36 = vector.broadcast %35 : vector<1x512xf32> to vector<8x512xf32>
    %37 = arith.addf %34, %36 : vector<8x512xf32>
    %38 = vector.extract_strided_slice %37 {offsets = [0, 0], sizes = [8, 384], strides = [1, 1]} : vector<8x512xf32> to vector<8x384xf32>
    %39 = arith.negf %38 : vector<8x384xf32>
    %40 = math.exp %39 : vector<8x384xf32>
    %cst_24 = arith.constant 1.000000e+00 : f32
    %41 = vector.broadcast %cst_24 : f32 to vector<8x384xf32>
    %42 = arith.addf %41, %40 : vector<8x384xf32>
    %43 = arith.divf %41, %42 : vector<8x384xf32>
    %44 = vector.extract_strided_slice %43 {offsets = [0, 0], sizes = [8, 128], strides = [1, 1]} : vector<8x384xf32> to vector<8x128xf32>
    %45 = vector.extract_strided_slice %43 {offsets = [0, 128], sizes = [8, 128], strides = [1, 1]} : vector<8x384xf32> to vector<8x128xf32>
    %46 = vector.extract_strided_slice %43 {offsets = [0, 256], sizes = [8, 128], strides = [1, 1]} : vector<8x384xf32> to vector<8x128xf32>
    %47 = vector.extract_strided_slice %37 {offsets = [0, 384], sizes = [8, 128], strides = [1, 1]} : vector<8x512xf32> to vector<8x128xf32>
    %48 = math.tanh %47 : vector<8x128xf32>
    %c0_25 = arith.constant 0 : index
    %c0_26 = arith.constant 0 : index
    %49 = vector.load %arg13[%c0_25, %c0_26] : memref<8x128xf32, #tpu.memory_space<vmem>>, vector<8x128xf32>
    %50 = arith.mulf %45, %49 : vector<8x128xf32>
    %51 = arith.mulf %44, %48 : vector<8x128xf32>
    %52 = arith.addf %50, %51 : vector<8x128xf32>
    %53 = math.tanh %52 : vector<8x128xf32>
    %54 = arith.mulf %46, %53 : vector<8x128xf32>
    %c0_27 = arith.constant 0 : index
    %c0_28 = arith.constant 0 : index
    %55 = vector.load %arg13[%c0_27, %c0_28] : memref<8x128xf32, #tpu.memory_space<vmem>>, vector<8x128xf32>
    tpu.vector_store %arg13[%c0_27, %c0_28], %52 {strides = array<i32>} : memref<8x128xf32, #tpu.memory_space<vmem>>, vector<8x128xf32>,
    %c0_29 = arith.constant 0 : index
    %c0_30 = arith.constant 0 : index
    %56 = vector.load %arg12[%c0_29, %c0_30] : memref<8x128xf32, #tpu.memory_space<vmem>>, vector<8x128xf32>
    tpu.vector_store %arg12[%c0_29, %c0_30], %54 {strides = array<i32>} : memref<8x128xf32, #tpu.memory_space<vmem>>, vector<8x128xf32>,
    %c0_31 = arith.constant 0 : index
    %c128 = arith.constant 128 : index
    %57 = vector.load %arg14[%c0_31, %c128] : memref<8x256xf32, #tpu.memory_space<vmem>>, vector<8x128xf32>
    tpu.vector_store %arg14[%c0_31, %c128], %54 {strides = array<i32>} : memref<8x256xf32, #tpu.memory_space<vmem>>, vector<8x128xf32>,
    %c1_i32_32 = arith.constant 1 : i32
    %cst_33 = arith.constant 0.000000e+00 : f32
    %58 = vector.broadcast %cst_33 : f32 to vector<8x128xf32>
    %c0_34 = arith.constant 0 : index
    %59 = arith.index_cast %c1_i32_32 : i32 to index
    %60 = memref.load %arg0[%c0_34, %59] : memref<2x8xi32, #tpu.memory_space<smem>>
    %c0_i32_35 = arith.constant 0 : i32
    %61 = vector.broadcast %c0_i32_35 : i32 to vector<8x128xi32>
    %62 = arith.cmpi eq, %3, %61 : vector<8x128xi32>
    %63 = vector.broadcast %60 : i32 to vector<8x128xi32>
    %64 = arith.cmpi eq, %2, %63 : vector<8x128xi32>
    %65 = arith.andi %62, %64 : vector<8x128xi1>
    %cst_36 = arith.constant 1.000000e+00 : f32
    %66 = vector.broadcast %cst_36 : f32 to vector<8x128xf32>
    %67 = arith.select %65, %66, %58 : vector<8x128xi1>, vector<8x128xf32>
    %c1_37 = arith.constant 1 : index
    %68 = arith.index_cast %c1_i32_32 : i32 to index
    %69 = memref.load %arg0[%c1_37, %68] : memref<2x8xi32, #tpu.memory_space<smem>>
    %c1_i32_38 = arith.constant 1 : i32
    %70 = vector.broadcast %c1_i32_38 : i32 to vector<8x128xi32>
    %71 = arith.cmpi eq, %3, %70 : vector<8x128xi32>
    %72 = vector.broadcast %69 : i32 to vector<8x128xi32>
    %73 = arith.cmpi eq, %2, %72 : vector<8x128xi32>
    %74 = arith.andi %71, %73 : vector<8x128xi1>
    %cst_39 = arith.constant 1.000000e+00 : f32
    %75 = vector.broadcast %cst_39 : f32 to vector<8x128xf32>
    %76 = arith.select %74, %75, %67 : vector<8x128xi1>, vector<8x128xf32>
    %c0_40 = arith.constant 0 : index
    %c0_41 = arith.constant 0 : index
    %77 = vector.load %arg3[%c0_40, %c0_41] : memref<128x128xf32, #tpu.memory_space<vmem>>, vector<128x128xf32>
    %cst_42 = arith.constant dense<0.000000e+00> : vector<8x128xf32>
    %78 = tpu.matmul %76, %77, %cst_42 {dimension_numbers = #tpu.dot_dimension_numbers<[1], [0], [0], [1], [0, 0, 1, 1], [], []>} : vector<8x128xf32>, vector<128x128xf32>, vector<8x128xf32> -> vector<8x128xf32>
    %c0_43 = arith.constant 0 : index
    %c0_44 = arith.constant 0 : index
    %79 = vector.load %arg14[%c0_43, %c0_44] : memref<8x256xf32, #tpu.memory_space<vmem>>, vector<8x128xf32>
    tpu.vector_store %arg14[%c0_43, %c0_44], %78 {strides = array<i32>} : memref<8x256xf32, #tpu.memory_space<vmem>>, vector<8x128xf32>,
    %c0_45 = arith.constant 0 : index
    %c0_46 = arith.constant 0 : index
    %80 = vector.load %arg14[%c0_45, %c0_46] : memref<8x256xf32, #tpu.memory_space<vmem>>, vector<8x256xf32>
    %c0_47 = arith.constant 0 : index
    %c0_48 = arith.constant 0 : index
    %81 = vector.load %arg4[%c0_47, %c0_48] : memref<256x512xf32, #tpu.memory_space<vmem>>, vector<256x512xf32>
    %cst_49 = arith.constant dense<0.000000e+00> : vector<8x512xf32>
    %82 = tpu.matmul %80, %81, %cst_49 {dimension_numbers = #tpu.dot_dimension_numbers<[1], [0], [0], [1], [0, 0, 1, 1], [], []>} : vector<8x256xf32>, vector<256x512xf32>, vector<8x512xf32> -> vector<8x512xf32>
    %c0_50 = arith.constant 0 : index
    %c0_51 = arith.constant 0 : index
    %83 = vector.load %arg5[%c0_50, %c0_51] : memref<1x512xf32, #tpu.memory_space<vmem>>, vector<1x512xf32>
    %84 = vector.broadcast %83 : vector<1x512xf32> to vector<8x512xf32>
    %85 = arith.addf %82, %84 : vector<8x512xf32>
    %86 = vector.extract_strided_slice %85 {offsets = [0, 0], sizes = [8, 384], strides = [1, 1]} : vector<8x512xf32> to vector<8x384xf32>
    %87 = arith.negf %86 : vector<8x384xf32>
    %88 = math.exp %87 : vector<8x384xf32>
    %cst_52 = arith.constant 1.000000e+00 : f32
    %89 = vector.broadcast %cst_52 : f32 to vector<8x384xf32>
    %90 = arith.addf %89, %88 : vector<8x384xf32>
    %91 = arith.divf %89, %90 : vector<8x384xf32>
    %92 = vector.extract_strided_slice %91 {offsets = [0, 0], sizes = [8, 128], strides = [1, 1]} : vector<8x384xf32> to vector<8x128xf32>
    %93 = vector.extract_strided_slice %91 {offsets = [0, 128], sizes = [8, 128], strides = [1, 1]} : vector<8x384xf32> to vector<8x128xf32>
    %94 = vector.extract_strided_slice %91 {offsets = [0, 256], sizes = [8, 128], strides = [1, 1]} : vector<8x384xf32> to vector<8x128xf32>
    %95 = vector.extract_strided_slice %85 {offsets = [0, 384], sizes = [8, 128], strides = [1, 1]} : vector<8x512xf32> to vector<8x128xf32>
    %96 = math.tanh %95 : vector<8x128xf32>
    %c0_53 = arith.constant 0 : index
    %c0_54 = arith.constant 0 : index
    %97 = vector.load %arg13[%c0_53, %c0_54] : memref<8x128xf32, #tpu.memory_space<vmem>>, vector<8x128xf32>
    %98 = arith.mulf %93, %97 : vector<8x128xf32>
    %99 = arith.mulf %92, %96 : vector<8x128xf32>
    %100 = arith.addf %98, %99 : vector<8x128xf32>
    %101 = math.tanh %100 : vector<8x128xf32>
    %102 = arith.mulf %94, %101 : vector<8x128xf32>
    %c0_55 = arith.constant 0 : index
    %c0_56 = arith.constant 0 : index
    %103 = vector.load %arg13[%c0_55, %c0_56] : memref<8x128xf32, #tpu.memory_space<vmem>>, vector<8x128xf32>
    tpu.vector_store %arg13[%c0_55, %c0_56], %100 {strides = array<i32>} : memref<8x128xf32, #tpu.memory_space<vmem>>, vector<8x128xf32>,
    %c0_57 = arith.constant 0 : index
    %c0_58 = arith.constant 0 : index
    %104 = vector.load %arg12[%c0_57, %c0_58] : memref<8x128xf32, #tpu.memory_space<vmem>>, vector<8x128xf32>
    tpu.vector_store %arg12[%c0_57, %c0_58], %102 {strides = array<i32>} : memref<8x128xf32, #tpu.memory_space<vmem>>, vector<8x128xf32>,
    %c0_59 = arith.constant 0 : index
    %c128_60 = arith.constant 128 : index
    %105 = vector.load %arg14[%c0_59, %c128_60] : memref<8x256xf32, #tpu.memory_space<vmem>>, vector<8x128xf32>
    tpu.vector_store %arg14[%c0_59, %c128_60], %102 {strides = array<i32>} : memref<8x256xf32, #tpu.memory_space<vmem>>, vector<8x128xf32>,
    %c2_i32 = arith.constant 2 : i32
    %cst_61 = arith.constant 0.000000e+00 : f32
    %106 = vector.broadcast %cst_61 : f32 to vector<8x128xf32>
    %c0_62 = arith.constant 0 : index
    %107 = arith.index_cast %c2_i32 : i32 to index
    %108 = memref.load %arg0[%c0_62, %107] : memref<2x8xi32, #tpu.memory_space<smem>>
    %c0_i32_63 = arith.constant 0 : i32
    %109 = vector.broadcast %c0_i32_63 : i32 to vector<8x128xi32>
    %110 = arith.cmpi eq, %3, %109 : vector<8x128xi32>
    %111 = vector.broadcast %108 : i32 to vector<8x128xi32>
    %112 = arith.cmpi eq, %2, %111 : vector<8x128xi32>
    %113 = arith.andi %110, %112 : vector<8x128xi1>
    %cst_64 = arith.constant 1.000000e+00 : f32
    %114 = vector.broadcast %cst_64 : f32 to vector<8x128xf32>
    %115 = arith.select %113, %114, %106 : vector<8x128xi1>, vector<8x128xf32>
    %c1_65 = arith.constant 1 : index
    %116 = arith.index_cast %c2_i32 : i32 to index
    %117 = memref.load %arg0[%c1_65, %116] : memref<2x8xi32, #tpu.memory_space<smem>>
    %c1_i32_66 = arith.constant 1 : i32
    %118 = vector.broadcast %c1_i32_66 : i32 to vector<8x128xi32>
    %119 = arith.cmpi eq, %3, %118 : vector<8x128xi32>
    %120 = vector.broadcast %117 : i32 to vector<8x128xi32>
    %121 = arith.cmpi eq, %2, %120 : vector<8x128xi32>
    %122 = arith.andi %119, %121 : vector<8x128xi1>
    %cst_67 = arith.constant 1.000000e+00 : f32
    %123 = vector.broadcast %cst_67 : f32 to vector<8x128xf32>
    %124 = arith.select %122, %123, %115 : vector<8x128xi1>, vector<8x128xf32>
    %c0_68 = arith.constant 0 : index
    %c0_69 = arith.constant 0 : index
    %125 = vector.load %arg3[%c0_68, %c0_69] : memref<128x128xf32, #tpu.memory_space<vmem>>, vector<128x128xf32>
    %cst_70 = arith.constant dense<0.000000e+00> : vector<8x128xf32>
    %126 = tpu.matmul %124, %125, %cst_70 {dimension_numbers = #tpu.dot_dimension_numbers<[1], [0], [0], [1], [0, 0, 1, 1], [], []>} : vector<8x128xf32>, vector<128x128xf32>, vector<8x128xf32> -> vector<8x128xf32>
    %c0_71 = arith.constant 0 : index
    %c0_72 = arith.constant 0 : index
    %127 = vector.load %arg14[%c0_71, %c0_72] : memref<8x256xf32, #tpu.memory_space<vmem>>, vector<8x128xf32>
    tpu.vector_store %arg14[%c0_71, %c0_72], %126 {strides = array<i32>} : memref<8x256xf32, #tpu.memory_space<vmem>>, vector<8x128xf32>,
    %c0_73 = arith.constant 0 : index
    %c0_74 = arith.constant 0 : index
    %128 = vector.load %arg14[%c0_73, %c0_74] : memref<8x256xf32, #tpu.memory_space<vmem>>, vector<8x256xf32>
    %c0_75 = arith.constant 0 : index
    %c0_76 = arith.constant 0 : index
    %129 = vector.load %arg4[%c0_75, %c0_76] : memref<256x512xf32, #tpu.memory_space<vmem>>, vector<256x512xf32>
    %cst_77 = arith.constant dense<0.000000e+00> : vector<8x512xf32>
    %130 = tpu.matmul %128, %129, %cst_77 {dimension_numbers = #tpu.dot_dimension_numbers<[1], [0], [0], [1], [0, 0, 1, 1], [], []>} : vector<8x256xf32>, vector<256x512xf32>, vector<8x512xf32> -> vector<8x512xf32>
    %c0_78 = arith.constant 0 : index
    %c0_79 = arith.constant 0 : index
    %131 = vector.load %arg5[%c0_78, %c0_79] : memref<1x512xf32, #tpu.memory_space<vmem>>, vector<1x512xf32>
    %132 = vector.broadcast %131 : vector<1x512xf32> to vector<8x512xf32>
    %133 = arith.addf %130, %132 : vector<8x512xf32>
    %134 = vector.extract_strided_slice %133 {offsets = [0, 0], sizes = [8, 384], strides = [1, 1]} : vector<8x512xf32> to vector<8x384xf32>
    %135 = arith.negf %134 : vector<8x384xf32>
    %136 = math.exp %135 : vector<8x384xf32>
    %cst_80 = arith.constant 1.000000e+00 : f32
    %137 = vector.broadcast %cst_80 : f32 to vector<8x384xf32>
    %138 = arith.addf %137, %136 : vector<8x384xf32>
    %139 = arith.divf %137, %138 : vector<8x384xf32>
    %140 = vector.extract_strided_slice %139 {offsets = [0, 0], sizes = [8, 128], strides = [1, 1]} : vector<8x384xf32> to vector<8x128xf32>
    %141 = vector.extract_strided_slice %139 {offsets = [0, 128], sizes = [8, 128], strides = [1, 1]} : vector<8x384xf32> to vector<8x128xf32>
    %142 = vector.extract_strided_slice %139 {offsets = [0, 256], sizes = [8, 128], strides = [1, 1]} : vector<8x384xf32> to vector<8x128xf32>
    %143 = vector.extract_strided_slice %133 {offsets = [0, 384], sizes = [8, 128], strides = [1, 1]} : vector<8x512xf32> to vector<8x128xf32>
    %144 = math.tanh %143 : vector<8x128xf32>
    %c0_81 = arith.constant 0 : index
    %c0_82 = arith.constant 0 : index
    %145 = vector.load %arg13[%c0_81, %c0_82] : memref<8x128xf32, #tpu.memory_space<vmem>>, vector<8x128xf32>
    %146 = arith.mulf %141, %145 : vector<8x128xf32>
    %147 = arith.mulf %140, %144 : vector<8x128xf32>
    %148 = arith.addf %146, %147 : vector<8x128xf32>
    %149 = math.tanh %148 : vector<8x128xf32>
    %150 = arith.mulf %142, %149 : vector<8x128xf32>
    %c0_83 = arith.constant 0 : index
    %c0_84 = arith.constant 0 : index
    %151 = vector.load %arg13[%c0_83, %c0_84] : memref<8x128xf32, #tpu.memory_space<vmem>>, vector<8x128xf32>
    tpu.vector_store %arg13[%c0_83, %c0_84], %148 {strides = array<i32>} : memref<8x128xf32, #tpu.memory_space<vmem>>, vector<8x128xf32>,
    %c0_85 = arith.constant 0 : index
    %c0_86 = arith.constant 0 : index
    %152 = vector.load %arg12[%c0_85, %c0_86] : memref<8x128xf32, #tpu.memory_space<vmem>>, vector<8x128xf32>
    tpu.vector_store %arg12[%c0_85, %c0_86], %150 {strides = array<i32>} : memref<8x128xf32, #tpu.memory_space<vmem>>, vector<8x128xf32>,
    %c0_87 = arith.constant 0 : index
    %c128_88 = arith.constant 128 : index
    %153 = vector.load %arg14[%c0_87, %c128_88] : memref<8x256xf32, #tpu.memory_space<vmem>>, vector<8x128xf32>
    tpu.vector_store %arg14[%c0_87, %c128_88], %150 {strides = array<i32>} : memref<8x256xf32, #tpu.memory_space<vmem>>, vector<8x128xf32>,
    %c3_i32 = arith.constant 3 : i32
    %cst_89 = arith.constant 0.000000e+00 : f32
    %154 = vector.broadcast %cst_89 : f32 to vector<8x128xf32>
    %c0_90 = arith.constant 0 : index
    %155 = arith.index_cast %c3_i32 : i32 to index
    %156 = memref.load %arg0[%c0_90, %155] : memref<2x8xi32, #tpu.memory_space<smem>>
    %c0_i32_91 = arith.constant 0 : i32
    %157 = vector.broadcast %c0_i32_91 : i32 to vector<8x128xi32>
    %158 = arith.cmpi eq, %3, %157 : vector<8x128xi32>
    %159 = vector.broadcast %156 : i32 to vector<8x128xi32>
    %160 = arith.cmpi eq, %2, %159 : vector<8x128xi32>
    %161 = arith.andi %158, %160 : vector<8x128xi1>
    %cst_92 = arith.constant 1.000000e+00 : f32
    %162 = vector.broadcast %cst_92 : f32 to vector<8x128xf32>
    %163 = arith.select %161, %162, %154 : vector<8x128xi1>, vector<8x128xf32>
    %c1_93 = arith.constant 1 : index
    %164 = arith.index_cast %c3_i32 : i32 to index
    %165 = memref.load %arg0[%c1_93, %164] : memref<2x8xi32, #tpu.memory_space<smem>>
    %c1_i32_94 = arith.constant 1 : i32
    %166 = vector.broadcast %c1_i32_94 : i32 to vector<8x128xi32>
    %167 = arith.cmpi eq, %3, %166 : vector<8x128xi32>
    %168 = vector.broadcast %165 : i32 to vector<8x128xi32>
    %169 = arith.cmpi eq, %2, %168 : vector<8x128xi32>
    %170 = arith.andi %167, %169 : vector<8x128xi1>
    %cst_95 = arith.constant 1.000000e+00 : f32
    %171 = vector.broadcast %cst_95 : f32 to vector<8x128xf32>
    %172 = arith.select %170, %171, %163 : vector<8x128xi1>, vector<8x128xf32>
    %c0_96 = arith.constant 0 : index
    %c0_97 = arith.constant 0 : index
    %173 = vector.load %arg3[%c0_96, %c0_97] : memref<128x128xf32, #tpu.memory_space<vmem>>, vector<128x128xf32>
    %cst_98 = arith.constant dense<0.000000e+00> : vector<8x128xf32>
    %174 = tpu.matmul %172, %173, %cst_98 {dimension_numbers = #tpu.dot_dimension_numbers<[1], [0], [0], [1], [0, 0, 1, 1], [], []>} : vector<8x128xf32>, vector<128x128xf32>, vector<8x128xf32> -> vector<8x128xf32>
    %c0_99 = arith.constant 0 : index
    %c0_100 = arith.constant 0 : index
    %175 = vector.load %arg14[%c0_99, %c0_100] : memref<8x256xf32, #tpu.memory_space<vmem>>, vector<8x128xf32>
    tpu.vector_store %arg14[%c0_99, %c0_100], %174 {strides = array<i32>} : memref<8x256xf32, #tpu.memory_space<vmem>>, vector<8x128xf32>,
    %c0_101 = arith.constant 0 : index
    %c0_102 = arith.constant 0 : index
    %176 = vector.load %arg14[%c0_101, %c0_102] : memref<8x256xf32, #tpu.memory_space<vmem>>, vector<8x256xf32>
    %c0_103 = arith.constant 0 : index
    %c0_104 = arith.constant 0 : index
    %177 = vector.load %arg4[%c0_103, %c0_104] : memref<256x512xf32, #tpu.memory_space<vmem>>, vector<256x512xf32>
    %cst_105 = arith.constant dense<0.000000e+00> : vector<8x512xf32>
    %178 = tpu.matmul %176, %177, %cst_105 {dimension_numbers = #tpu.dot_dimension_numbers<[1], [0], [0], [1], [0, 0, 1, 1], [], []>} : vector<8x256xf32>, vector<256x512xf32>, vector<8x512xf32> -> vector<8x512xf32>
    %c0_106 = arith.constant 0 : index
    %c0_107 = arith.constant 0 : index
    %179 = vector.load %arg5[%c0_106, %c0_107] : memref<1x512xf32, #tpu.memory_space<vmem>>, vector<1x512xf32>
    %180 = vector.broadcast %179 : vector<1x512xf32> to vector<8x512xf32>
    %181 = arith.addf %178, %180 : vector<8x512xf32>
    %182 = vector.extract_strided_slice %181 {offsets = [0, 0], sizes = [8, 384], strides = [1, 1]} : vector<8x512xf32> to vector<8x384xf32>
    %183 = arith.negf %182 : vector<8x384xf32>
    %184 = math.exp %183 : vector<8x384xf32>
    %cst_108 = arith.constant 1.000000e+00 : f32
    %185 = vector.broadcast %cst_108 : f32 to vector<8x384xf32>
    %186 = arith.addf %185, %184 : vector<8x384xf32>
    %187 = arith.divf %185, %186 : vector<8x384xf32>
    %188 = vector.extract_strided_slice %187 {offsets = [0, 0], sizes = [8, 128], strides = [1, 1]} : vector<8x384xf32> to vector<8x128xf32>
    %189 = vector.extract_strided_slice %187 {offsets = [0, 128], sizes = [8, 128], strides = [1, 1]} : vector<8x384xf32> to vector<8x128xf32>
    %190 = vector.extract_strided_slice %187 {offsets = [0, 256], sizes = [8, 128], strides = [1, 1]} : vector<8x384xf32> to vector<8x128xf32>
    %191 = vector.extract_strided_slice %181 {offsets = [0, 384], sizes = [8, 128], strides = [1, 1]} : vector<8x512xf32> to vector<8x128xf32>
    %192 = math.tanh %191 : vector<8x128xf32>
    %c0_109 = arith.constant 0 : index
    %c0_110 = arith.constant 0 : index
    %193 = vector.load %arg13[%c0_109, %c0_110] : memref<8x128xf32, #tpu.memory_space<vmem>>, vector<8x128xf32>
    %194 = arith.mulf %189, %193 : vector<8x128xf32>
    %195 = arith.mulf %188, %192 : vector<8x128xf32>
    %196 = arith.addf %194, %195 : vector<8x128xf32>
    %197 = math.tanh %196 : vector<8x128xf32>
    %198 = arith.mulf %190, %197 : vector<8x128xf32>
    %c0_111 = arith.constant 0 : index
    %c0_112 = arith.constant 0 : index
    %199 = vector.load %arg13[%c0_111, %c0_112] : memref<8x128xf32, #tpu.memory_space<vmem>>, vector<8x128xf32>
    tpu.vector_store %arg13[%c0_111, %c0_112], %196 {strides = array<i32>} : memref<8x128xf32, #tpu.memory_space<vmem>>, vector<8x128xf32>,
    %c0_113 = arith.constant 0 : index
    %c0_114 = arith.constant 0 : index
    %200 = vector.load %arg12[%c0_113, %c0_114] : memref<8x128xf32, #tpu.memory_space<vmem>>, vector<8x128xf32>
    tpu.vector_store %arg12[%c0_113, %c0_114], %198 {strides = array<i32>} : memref<8x128xf32, #tpu.memory_space<vmem>>, vector<8x128xf32>,
    %c0_115 = arith.constant 0 : index
    %c128_116 = arith.constant 128 : index
    %201 = vector.load %arg14[%c0_115, %c128_116] : memref<8x256xf32, #tpu.memory_space<vmem>>, vector<8x128xf32>
    tpu.vector_store %arg14[%c0_115, %c128_116], %198 {strides = array<i32>} : memref<8x256xf32, #tpu.memory_space<vmem>>, vector<8x128xf32>,
    %c4_i32 = arith.constant 4 : i32
    %cst_117 = arith.constant 0.000000e+00 : f32
    %202 = vector.broadcast %cst_117 : f32 to vector<8x128xf32>
    %c0_118 = arith.constant 0 : index
    %203 = arith.index_cast %c4_i32 : i32 to index
    %204 = memref.load %arg0[%c0_118, %203] : memref<2x8xi32, #tpu.memory_space<smem>>
    %c0_i32_119 = arith.constant 0 : i32
    %205 = vector.broadcast %c0_i32_119 : i32 to vector<8x128xi32>
    %206 = arith.cmpi eq, %3, %205 : vector<8x128xi32>
    %207 = vector.broadcast %204 : i32 to vector<8x128xi32>
    %208 = arith.cmpi eq, %2, %207 : vector<8x128xi32>
    %209 = arith.andi %206, %208 : vector<8x128xi1>
    %cst_120 = arith.constant 1.000000e+00 : f32
    %210 = vector.broadcast %cst_120 : f32 to vector<8x128xf32>
    %211 = arith.select %209, %210, %202 : vector<8x128xi1>, vector<8x128xf32>
    %c1_121 = arith.constant 1 : index
    %212 = arith.index_cast %c4_i32 : i32 to index
    %213 = memref.load %arg0[%c1_121, %212] : memref<2x8xi32, #tpu.memory_space<smem>>
    %c1_i32_122 = arith.constant 1 : i32
    %214 = vector.broadcast %c1_i32_122 : i32 to vector<8x128xi32>
    %215 = arith.cmpi eq, %3, %214 : vector<8x128xi32>
    %216 = vector.broadcast %213 : i32 to vector<8x128xi32>
    %217 = arith.cmpi eq, %2, %216 : vector<8x128xi32>
    %218 = arith.andi %215, %217 : vector<8x128xi1>
    %cst_123 = arith.constant 1.000000e+00 : f32
    %219 = vector.broadcast %cst_123 : f32 to vector<8x128xf32>
    %220 = arith.select %218, %219, %211 : vector<8x128xi1>, vector<8x128xf32>
    %c0_124 = arith.constant 0 : index
    %c0_125 = arith.constant 0 : index
    %221 = vector.load %arg3[%c0_124, %c0_125] : memref<128x128xf32, #tpu.memory_space<vmem>>, vector<128x128xf32>
    %cst_126 = arith.constant dense<0.000000e+00> : vector<8x128xf32>
    %222 = tpu.matmul %220, %221, %cst_126 {dimension_numbers = #tpu.dot_dimension_numbers<[1], [0], [0], [1], [0, 0, 1, 1], [], []>} : vector<8x128xf32>, vector<128x128xf32>, vector<8x128xf32> -> vector<8x128xf32>
    %c0_127 = arith.constant 0 : index
    %c0_128 = arith.constant 0 : index
    %223 = vector.load %arg14[%c0_127, %c0_128] : memref<8x256xf32, #tpu.memory_space<vmem>>, vector<8x128xf32>
    tpu.vector_store %arg14[%c0_127, %c0_128], %222 {strides = array<i32>} : memref<8x256xf32, #tpu.memory_space<vmem>>, vector<8x128xf32>,
    %c0_129 = arith.constant 0 : index
    %c0_130 = arith.constant 0 : index
    %224 = vector.load %arg14[%c0_129, %c0_130] : memref<8x256xf32, #tpu.memory_space<vmem>>, vector<8x256xf32>
    %c0_131 = arith.constant 0 : index
    %c0_132 = arith.constant 0 : index
    %225 = vector.load %arg4[%c0_131, %c0_132] : memref<256x512xf32, #tpu.memory_space<vmem>>, vector<256x512xf32>
    %cst_133 = arith.constant dense<0.000000e+00> : vector<8x512xf32>
    %226 = tpu.matmul %224, %225, %cst_133 {dimension_numbers = #tpu.dot_dimension_numbers<[1], [0], [0], [1], [0, 0, 1, 1], [], []>} : vector<8x256xf32>, vector<256x512xf32>, vector<8x512xf32> -> vector<8x512xf32>
    %c0_134 = arith.constant 0 : index
    %c0_135 = arith.constant 0 : index
    %227 = vector.load %arg5[%c0_134, %c0_135] : memref<1x512xf32, #tpu.memory_space<vmem>>, vector<1x512xf32>
    %228 = vector.broadcast %227 : vector<1x512xf32> to vector<8x512xf32>
    %229 = arith.addf %226, %228 : vector<8x512xf32>
    %230 = vector.extract_strided_slice %229 {offsets = [0, 0], sizes = [8, 384], strides = [1, 1]} : vector<8x512xf32> to vector<8x384xf32>
    %231 = arith.negf %230 : vector<8x384xf32>
    %232 = math.exp %231 : vector<8x384xf32>
    %cst_136 = arith.constant 1.000000e+00 : f32
    %233 = vector.broadcast %cst_136 : f32 to vector<8x384xf32>
    %234 = arith.addf %233, %232 : vector<8x384xf32>
    %235 = arith.divf %233, %234 : vector<8x384xf32>
    %236 = vector.extract_strided_slice %235 {offsets = [0, 0], sizes = [8, 128], strides = [1, 1]} : vector<8x384xf32> to vector<8x128xf32>
    %237 = vector.extract_strided_slice %235 {offsets = [0, 128], sizes = [8, 128], strides = [1, 1]} : vector<8x384xf32> to vector<8x128xf32>
    %238 = vector.extract_strided_slice %235 {offsets = [0, 256], sizes = [8, 128], strides = [1, 1]} : vector<8x384xf32> to vector<8x128xf32>
    %239 = vector.extract_strided_slice %229 {offsets = [0, 384], sizes = [8, 128], strides = [1, 1]} : vector<8x512xf32> to vector<8x128xf32>
    %240 = math.tanh %239 : vector<8x128xf32>
    %c0_137 = arith.constant 0 : index
    %c0_138 = arith.constant 0 : index
    %241 = vector.load %arg13[%c0_137, %c0_138] : memref<8x128xf32, #tpu.memory_space<vmem>>, vector<8x128xf32>
    %242 = arith.mulf %237, %241 : vector<8x128xf32>
    %243 = arith.mulf %236, %240 : vector<8x128xf32>
    %244 = arith.addf %242, %243 : vector<8x128xf32>
    %245 = math.tanh %244 : vector<8x128xf32>
    %246 = arith.mulf %238, %245 : vector<8x128xf32>
    %c0_139 = arith.constant 0 : index
    %c0_140 = arith.constant 0 : index
    %247 = vector.load %arg13[%c0_139, %c0_140] : memref<8x128xf32, #tpu.memory_space<vmem>>, vector<8x128xf32>
    tpu.vector_store %arg13[%c0_139, %c0_140], %244 {strides = array<i32>} : memref<8x128xf32, #tpu.memory_space<vmem>>, vector<8x128xf32>,
    %c0_141 = arith.constant 0 : index
    %c0_142 = arith.constant 0 : index
    %248 = vector.load %arg12[%c0_141, %c0_142] : memref<8x128xf32, #tpu.memory_space<vmem>>, vector<8x128xf32>
    tpu.vector_store %arg12[%c0_141, %c0_142], %246 {strides = array<i32>} : memref<8x128xf32, #tpu.memory_space<vmem>>, vector<8x128xf32>,
    %c0_143 = arith.constant 0 : index
    %c128_144 = arith.constant 128 : index
    %249 = vector.load %arg14[%c0_143, %c128_144] : memref<8x256xf32, #tpu.memory_space<vmem>>, vector<8x128xf32>
    tpu.vector_store %arg14[%c0_143, %c128_144], %246 {strides = array<i32>} : memref<8x256xf32, #tpu.memory_space<vmem>>, vector<8x128xf32>,
    %c5_i32 = arith.constant 5 : i32
    %cst_145 = arith.constant 0.000000e+00 : f32
    %250 = vector.broadcast %cst_145 : f32 to vector<8x128xf32>
    %c0_146 = arith.constant 0 : index
    %251 = arith.index_cast %c5_i32 : i32 to index
    %252 = memref.load %arg0[%c0_146, %251] : memref<2x8xi32, #tpu.memory_space<smem>>
    %c0_i32_147 = arith.constant 0 : i32
    %253 = vector.broadcast %c0_i32_147 : i32 to vector<8x128xi32>
    %254 = arith.cmpi eq, %3, %253 : vector<8x128xi32>
    %255 = vector.broadcast %252 : i32 to vector<8x128xi32>
    %256 = arith.cmpi eq, %2, %255 : vector<8x128xi32>
    %257 = arith.andi %254, %256 : vector<8x128xi1>
    %cst_148 = arith.constant 1.000000e+00 : f32
    %258 = vector.broadcast %cst_148 : f32 to vector<8x128xf32>
    %259 = arith.select %257, %258, %250 : vector<8x128xi1>, vector<8x128xf32>
    %c1_149 = arith.constant 1 : index
    %260 = arith.index_cast %c5_i32 : i32 to index
    %261 = memref.load %arg0[%c1_149, %260] : memref<2x8xi32, #tpu.memory_space<smem>>
    %c1_i32_150 = arith.constant 1 : i32
    %262 = vector.broadcast %c1_i32_150 : i32 to vector<8x128xi32>
    %263 = arith.cmpi eq, %3, %262 : vector<8x128xi32>
    %264 = vector.broadcast %261 : i32 to vector<8x128xi32>
    %265 = arith.cmpi eq, %2, %264 : vector<8x128xi32>
    %266 = arith.andi %263, %265 : vector<8x128xi1>
    %cst_151 = arith.constant 1.000000e+00 : f32
    %267 = vector.broadcast %cst_151 : f32 to vector<8x128xf32>
    %268 = arith.select %266, %267, %259 : vector<8x128xi1>, vector<8x128xf32>
    %c0_152 = arith.constant 0 : index
    %c0_153 = arith.constant 0 : index
    %269 = vector.load %arg3[%c0_152, %c0_153] : memref<128x128xf32, #tpu.memory_space<vmem>>, vector<128x128xf32>
    %cst_154 = arith.constant dense<0.000000e+00> : vector<8x128xf32>
    %270 = tpu.matmul %268, %269, %cst_154 {dimension_numbers = #tpu.dot_dimension_numbers<[1], [0], [0], [1], [0, 0, 1, 1], [], []>} : vector<8x128xf32>, vector<128x128xf32>, vector<8x128xf32> -> vector<8x128xf32>
    %c0_155 = arith.constant 0 : index
    %c0_156 = arith.constant 0 : index
    %271 = vector.load %arg14[%c0_155, %c0_156] : memref<8x256xf32, #tpu.memory_space<vmem>>, vector<8x128xf32>
    tpu.vector_store %arg14[%c0_155, %c0_156], %270 {strides = array<i32>} : memref<8x256xf32, #tpu.memory_space<vmem>>, vector<8x128xf32>,
    %c0_157 = arith.constant 0 : index
    %c0_158 = arith.constant 0 : index
    %272 = vector.load %arg14[%c0_157, %c0_158] : memref<8x256xf32, #tpu.memory_space<vmem>>, vector<8x256xf32>
    %c0_159 = arith.constant 0 : index
    %c0_160 = arith.constant 0 : index
    %273 = vector.load %arg4[%c0_159, %c0_160] : memref<256x512xf32, #tpu.memory_space<vmem>>, vector<256x512xf32>
    %cst_161 = arith.constant dense<0.000000e+00> : vector<8x512xf32>
    %274 = tpu.matmul %272, %273, %cst_161 {dimension_numbers = #tpu.dot_dimension_numbers<[1], [0], [0], [1], [0, 0, 1, 1], [], []>} : vector<8x256xf32>, vector<256x512xf32>, vector<8x512xf32> -> vector<8x512xf32>
    %c0_162 = arith.constant 0 : index
    %c0_163 = arith.constant 0 : index
    %275 = vector.load %arg5[%c0_162, %c0_163] : memref<1x512xf32, #tpu.memory_space<vmem>>, vector<1x512xf32>
    %276 = vector.broadcast %275 : vector<1x512xf32> to vector<8x512xf32>
    %277 = arith.addf %274, %276 : vector<8x512xf32>
    %278 = vector.extract_strided_slice %277 {offsets = [0, 0], sizes = [8, 384], strides = [1, 1]} : vector<8x512xf32> to vector<8x384xf32>
    %279 = arith.negf %278 : vector<8x384xf32>
    %280 = math.exp %279 : vector<8x384xf32>
    %cst_164 = arith.constant 1.000000e+00 : f32
    %281 = vector.broadcast %cst_164 : f32 to vector<8x384xf32>
    %282 = arith.addf %281, %280 : vector<8x384xf32>
    %283 = arith.divf %281, %282 : vector<8x384xf32>
    %284 = vector.extract_strided_slice %283 {offsets = [0, 0], sizes = [8, 128], strides = [1, 1]} : vector<8x384xf32> to vector<8x128xf32>
    %285 = vector.extract_strided_slice %283 {offsets = [0, 128], sizes = [8, 128], strides = [1, 1]} : vector<8x384xf32> to vector<8x128xf32>
    %286 = vector.extract_strided_slice %283 {offsets = [0, 256], sizes = [8, 128], strides = [1, 1]} : vector<8x384xf32> to vector<8x128xf32>
    %287 = vector.extract_strided_slice %277 {offsets = [0, 384], sizes = [8, 128], strides = [1, 1]} : vector<8x512xf32> to vector<8x128xf32>
    %288 = math.tanh %287 : vector<8x128xf32>
    %c0_165 = arith.constant 0 : index
    %c0_166 = arith.constant 0 : index
    %289 = vector.load %arg13[%c0_165, %c0_166] : memref<8x128xf32, #tpu.memory_space<vmem>>, vector<8x128xf32>
    %290 = arith.mulf %285, %289 : vector<8x128xf32>
    %291 = arith.mulf %284, %288 : vector<8x128xf32>
    %292 = arith.addf %290, %291 : vector<8x128xf32>
    %293 = math.tanh %292 : vector<8x128xf32>
    %294 = arith.mulf %286, %293 : vector<8x128xf32>
    %c0_167 = arith.constant 0 : index
    %c0_168 = arith.constant 0 : index
    %295 = vector.load %arg13[%c0_167, %c0_168] : memref<8x128xf32, #tpu.memory_space<vmem>>, vector<8x128xf32>
    tpu.vector_store %arg13[%c0_167, %c0_168], %292 {strides = array<i32>} : memref<8x128xf32, #tpu.memory_space<vmem>>, vector<8x128xf32>,
    %c0_169 = arith.constant 0 : index
    %c0_170 = arith.constant 0 : index
    %296 = vector.load %arg12[%c0_169, %c0_170] : memref<8x128xf32, #tpu.memory_space<vmem>>, vector<8x128xf32>
    tpu.vector_store %arg12[%c0_169, %c0_170], %294 {strides = array<i32>} : memref<8x128xf32, #tpu.memory_space<vmem>>, vector<8x128xf32>,
    %c0_171 = arith.constant 0 : index
    %c128_172 = arith.constant 128 : index
    %297 = vector.load %arg14[%c0_171, %c128_172] : memref<8x256xf32, #tpu.memory_space<vmem>>, vector<8x128xf32>
    tpu.vector_store %arg14[%c0_171, %c128_172], %294 {strides = array<i32>} : memref<8x256xf32, #tpu.memory_space<vmem>>, vector<8x128xf32>,
    %c6_i32 = arith.constant 6 : i32
    %cst_173 = arith.constant 0.000000e+00 : f32
    %298 = vector.broadcast %cst_173 : f32 to vector<8x128xf32>
    %c0_174 = arith.constant 0 : index
    %299 = arith.index_cast %c6_i32 : i32 to index
    %300 = memref.load %arg0[%c0_174, %299] : memref<2x8xi32, #tpu.memory_space<smem>>
    %c0_i32_175 = arith.constant 0 : i32
    %301 = vector.broadcast %c0_i32_175 : i32 to vector<8x128xi32>
    %302 = arith.cmpi eq, %3, %301 : vector<8x128xi32>
    %303 = vector.broadcast %300 : i32 to vector<8x128xi32>
    %304 = arith.cmpi eq, %2, %303 : vector<8x128xi32>
    %305 = arith.andi %302, %304 : vector<8x128xi1>
    %cst_176 = arith.constant 1.000000e+00 : f32
    %306 = vector.broadcast %cst_176 : f32 to vector<8x128xf32>
    %307 = arith.select %305, %306, %298 : vector<8x128xi1>, vector<8x128xf32>
    %c1_177 = arith.constant 1 : index
    %308 = arith.index_cast %c6_i32 : i32 to index
    %309 = memref.load %arg0[%c1_177, %308] : memref<2x8xi32, #tpu.memory_space<smem>>
    %c1_i32_178 = arith.constant 1 : i32
    %310 = vector.broadcast %c1_i32_178 : i32 to vector<8x128xi32>
    %311 = arith.cmpi eq, %3, %310 : vector<8x128xi32>
    %312 = vector.broadcast %309 : i32 to vector<8x128xi32>
    %313 = arith.cmpi eq, %2, %312 : vector<8x128xi32>
    %314 = arith.andi %311, %313 : vector<8x128xi1>
    %cst_179 = arith.constant 1.000000e+00 : f32
    %315 = vector.broadcast %cst_179 : f32 to vector<8x128xf32>
    %316 = arith.select %314, %315, %307 : vector<8x128xi1>, vector<8x128xf32>
    %c0_180 = arith.constant 0 : index
    %c0_181 = arith.constant 0 : index
    %317 = vector.load %arg3[%c0_180, %c0_181] : memref<128x128xf32, #tpu.memory_space<vmem>>, vector<128x128xf32>
    %cst_182 = arith.constant dense<0.000000e+00> : vector<8x128xf32>
    %318 = tpu.matmul %316, %317, %cst_182 {dimension_numbers = #tpu.dot_dimension_numbers<[1], [0], [0], [1], [0, 0, 1, 1], [], []>} : vector<8x128xf32>, vector<128x128xf32>, vector<8x128xf32> -> vector<8x128xf32>
    %c0_183 = arith.constant 0 : index
    %c0_184 = arith.constant 0 : index
    %319 = vector.load %arg14[%c0_183, %c0_184] : memref<8x256xf32, #tpu.memory_space<vmem>>, vector<8x128xf32>
    tpu.vector_store %arg14[%c0_183, %c0_184], %318 {strides = array<i32>} : memref<8x256xf32, #tpu.memory_space<vmem>>, vector<8x128xf32>,
    %c0_185 = arith.constant 0 : index
    %c0_186 = arith.constant 0 : index
    %320 = vector.load %arg14[%c0_185, %c0_186] : memref<8x256xf32, #tpu.memory_space<vmem>>, vector<8x256xf32>
    %c0_187 = arith.constant 0 : index
    %c0_188 = arith.constant 0 : index
    %321 = vector.load %arg4[%c0_187, %c0_188] : memref<256x512xf32, #tpu.memory_space<vmem>>, vector<256x512xf32>
    %cst_189 = arith.constant dense<0.000000e+00> : vector<8x512xf32>
    %322 = tpu.matmul %320, %321, %cst_189 {dimension_numbers = #tpu.dot_dimension_numbers<[1], [0], [0], [1], [0, 0, 1, 1], [], []>} : vector<8x256xf32>, vector<256x512xf32>, vector<8x512xf32> -> vector<8x512xf32>
    %c0_190 = arith.constant 0 : index
    %c0_191 = arith.constant 0 : index
    %323 = vector.load %arg5[%c0_190, %c0_191] : memref<1x512xf32, #tpu.memory_space<vmem>>, vector<1x512xf32>
    %324 = vector.broadcast %323 : vector<1x512xf32> to vector<8x512xf32>
    %325 = arith.addf %322, %324 : vector<8x512xf32>
    %326 = vector.extract_strided_slice %325 {offsets = [0, 0], sizes = [8, 384], strides = [1, 1]} : vector<8x512xf32> to vector<8x384xf32>
    %327 = arith.negf %326 : vector<8x384xf32>
    %328 = math.exp %327 : vector<8x384xf32>
    %cst_192 = arith.constant 1.000000e+00 : f32
    %329 = vector.broadcast %cst_192 : f32 to vector<8x384xf32>
    %330 = arith.addf %329, %328 : vector<8x384xf32>
    %331 = arith.divf %329, %330 : vector<8x384xf32>
    %332 = vector.extract_strided_slice %331 {offsets = [0, 0], sizes = [8, 128], strides = [1, 1]} : vector<8x384xf32> to vector<8x128xf32>
    %333 = vector.extract_strided_slice %331 {offsets = [0, 128], sizes = [8, 128], strides = [1, 1]} : vector<8x384xf32> to vector<8x128xf32>
    %334 = vector.extract_strided_slice %331 {offsets = [0, 256], sizes = [8, 128], strides = [1, 1]} : vector<8x384xf32> to vector<8x128xf32>
    %335 = vector.extract_strided_slice %325 {offsets = [0, 384], sizes = [8, 128], strides = [1, 1]} : vector<8x512xf32> to vector<8x128xf32>
    %336 = math.tanh %335 : vector<8x128xf32>
    %c0_193 = arith.constant 0 : index
    %c0_194 = arith.constant 0 : index
    %337 = vector.load %arg13[%c0_193, %c0_194] : memref<8x128xf32, #tpu.memory_space<vmem>>, vector<8x128xf32>
    %338 = arith.mulf %333, %337 : vector<8x128xf32>
    %339 = arith.mulf %332, %336 : vector<8x128xf32>
    %340 = arith.addf %338, %339 : vector<8x128xf32>
    %341 = math.tanh %340 : vector<8x128xf32>
    %342 = arith.mulf %334, %341 : vector<8x128xf32>
    %c0_195 = arith.constant 0 : index
    %c0_196 = arith.constant 0 : index
    %343 = vector.load %arg13[%c0_195, %c0_196] : memref<8x128xf32, #tpu.memory_space<vmem>>, vector<8x128xf32>
    tpu.vector_store %arg13[%c0_195, %c0_196], %340 {strides = array<i32>} : memref<8x128xf32, #tpu.memory_space<vmem>>, vector<8x128xf32>,
    %c0_197 = arith.constant 0 : index
    %c0_198 = arith.constant 0 : index
    %344 = vector.load %arg12[%c0_197, %c0_198] : memref<8x128xf32, #tpu.memory_space<vmem>>, vector<8x128xf32>
    tpu.vector_store %arg12[%c0_197, %c0_198], %342 {strides = array<i32>} : memref<8x128xf32, #tpu.memory_space<vmem>>, vector<8x128xf32>,
    %c0_199 = arith.constant 0 : index
    %c128_200 = arith.constant 128 : index
    %345 = vector.load %arg14[%c0_199, %c128_200] : memref<8x256xf32, #tpu.memory_space<vmem>>, vector<8x128xf32>
    tpu.vector_store %arg14[%c0_199, %c128_200], %342 {strides = array<i32>} : memref<8x256xf32, #tpu.memory_space<vmem>>, vector<8x128xf32>,
    %c7_i32 = arith.constant 7 : i32
    %cst_201 = arith.constant 0.000000e+00 : f32
    %346 = vector.broadcast %cst_201 : f32 to vector<8x128xf32>
    %c0_202 = arith.constant 0 : index
    %347 = arith.index_cast %c7_i32 : i32 to index
    %348 = memref.load %arg0[%c0_202, %347] : memref<2x8xi32, #tpu.memory_space<smem>>
    %c0_i32_203 = arith.constant 0 : i32
    %349 = vector.broadcast %c0_i32_203 : i32 to vector<8x128xi32>
    %350 = arith.cmpi eq, %3, %349 : vector<8x128xi32>
    %351 = vector.broadcast %348 : i32 to vector<8x128xi32>
    %352 = arith.cmpi eq, %2, %351 : vector<8x128xi32>
    %353 = arith.andi %350, %352 : vector<8x128xi1>
    %cst_204 = arith.constant 1.000000e+00 : f32
    %354 = vector.broadcast %cst_204 : f32 to vector<8x128xf32>
    %355 = arith.select %353, %354, %346 : vector<8x128xi1>, vector<8x128xf32>
    %c1_205 = arith.constant 1 : index
    %356 = arith.index_cast %c7_i32 : i32 to index
    %357 = memref.load %arg0[%c1_205, %356] : memref<2x8xi32, #tpu.memory_space<smem>>
    %c1_i32_206 = arith.constant 1 : i32
    %358 = vector.broadcast %c1_i32_206 : i32 to vector<8x128xi32>
    %359 = arith.cmpi eq, %3, %358 : vector<8x128xi32>
    %360 = vector.broadcast %357 : i32 to vector<8x128xi32>
    %361 = arith.cmpi eq, %2, %360 : vector<8x128xi32>
    %362 = arith.andi %359, %361 : vector<8x128xi1>
    %cst_207 = arith.constant 1.000000e+00 : f32
    %363 = vector.broadcast %cst_207 : f32 to vector<8x128xf32>
    %364 = arith.select %362, %363, %355 : vector<8x128xi1>, vector<8x128xf32>
    %c0_208 = arith.constant 0 : index
    %c0_209 = arith.constant 0 : index
    %365 = vector.load %arg3[%c0_208, %c0_209] : memref<128x128xf32, #tpu.memory_space<vmem>>, vector<128x128xf32>
    %cst_210 = arith.constant dense<0.000000e+00> : vector<8x128xf32>
    %366 = tpu.matmul %364, %365, %cst_210 {dimension_numbers = #tpu.dot_dimension_numbers<[1], [0], [0], [1], [0, 0, 1, 1], [], []>} : vector<8x128xf32>, vector<128x128xf32>, vector<8x128xf32> -> vector<8x128xf32>
    %c0_211 = arith.constant 0 : index
    %c0_212 = arith.constant 0 : index
    %367 = vector.load %arg14[%c0_211, %c0_212] : memref<8x256xf32, #tpu.memory_space<vmem>>, vector<8x128xf32>
    tpu.vector_store %arg14[%c0_211, %c0_212], %366 {strides = array<i32>} : memref<8x256xf32, #tpu.memory_space<vmem>>, vector<8x128xf32>,
    %c0_213 = arith.constant 0 : index
    %c0_214 = arith.constant 0 : index
    %368 = vector.load %arg14[%c0_213, %c0_214] : memref<8x256xf32, #tpu.memory_space<vmem>>, vector<8x256xf32>
    %c0_215 = arith.constant 0 : index
    %c0_216 = arith.constant 0 : index
    %369 = vector.load %arg4[%c0_215, %c0_216] : memref<256x512xf32, #tpu.memory_space<vmem>>, vector<256x512xf32>
    %cst_217 = arith.constant dense<0.000000e+00> : vector<8x512xf32>
    %370 = tpu.matmul %368, %369, %cst_217 {dimension_numbers = #tpu.dot_dimension_numbers<[1], [0], [0], [1], [0, 0, 1, 1], [], []>} : vector<8x256xf32>, vector<256x512xf32>, vector<8x512xf32> -> vector<8x512xf32>
    %c0_218 = arith.constant 0 : index
    %c0_219 = arith.constant 0 : index
    %371 = vector.load %arg5[%c0_218, %c0_219] : memref<1x512xf32, #tpu.memory_space<vmem>>, vector<1x512xf32>
    %372 = vector.broadcast %371 : vector<1x512xf32> to vector<8x512xf32>
    %373 = arith.addf %370, %372 : vector<8x512xf32>
    %374 = vector.extract_strided_slice %373 {offsets = [0, 0], sizes = [8, 384], strides = [1, 1]} : vector<8x512xf32> to vector<8x384xf32>
    %375 = arith.negf %374 : vector<8x384xf32>
    %376 = math.exp %375 : vector<8x384xf32>
    %cst_220 = arith.constant 1.000000e+00 : f32
    %377 = vector.broadcast %cst_220 : f32 to vector<8x384xf32>
    %378 = arith.addf %377, %376 : vector<8x384xf32>
    %379 = arith.divf %377, %378 : vector<8x384xf32>
    %380 = vector.extract_strided_slice %379 {offsets = [0, 0], sizes = [8, 128], strides = [1, 1]} : vector<8x384xf32> to vector<8x128xf32>
    %381 = vector.extract_strided_slice %379 {offsets = [0, 128], sizes = [8, 128], strides = [1, 1]} : vector<8x384xf32> to vector<8x128xf32>
    %382 = vector.extract_strided_slice %379 {offsets = [0, 256], sizes = [8, 128], strides = [1, 1]} : vector<8x384xf32> to vector<8x128xf32>
    %383 = vector.extract_strided_slice %373 {offsets = [0, 384], sizes = [8, 128], strides = [1, 1]} : vector<8x512xf32> to vector<8x128xf32>
    %384 = math.tanh %383 : vector<8x128xf32>
    %c0_221 = arith.constant 0 : index
    %c0_222 = arith.constant 0 : index
    %385 = vector.load %arg13[%c0_221, %c0_222] : memref<8x128xf32, #tpu.memory_space<vmem>>, vector<8x128xf32>
    %386 = arith.mulf %381, %385 : vector<8x128xf32>
    %387 = arith.mulf %380, %384 : vector<8x128xf32>
    %388 = arith.addf %386, %387 : vector<8x128xf32>
    %389 = math.tanh %388 : vector<8x128xf32>
    %390 = arith.mulf %382, %389 : vector<8x128xf32>
    %c0_223 = arith.constant 0 : index
    %c0_224 = arith.constant 0 : index
    %391 = vector.load %arg13[%c0_223, %c0_224] : memref<8x128xf32, #tpu.memory_space<vmem>>, vector<8x128xf32>
    tpu.vector_store %arg13[%c0_223, %c0_224], %388 {strides = array<i32>} : memref<8x128xf32, #tpu.memory_space<vmem>>, vector<8x128xf32>,
    %c0_225 = arith.constant 0 : index
    %c0_226 = arith.constant 0 : index
    %392 = vector.load %arg12[%c0_225, %c0_226] : memref<8x128xf32, #tpu.memory_space<vmem>>, vector<8x128xf32>
    tpu.vector_store %arg12[%c0_225, %c0_226], %390 {strides = array<i32>} : memref<8x128xf32, #tpu.memory_space<vmem>>, vector<8x128xf32>,
    %c0_227 = arith.constant 0 : index
    %c128_228 = arith.constant 128 : index
    %393 = vector.load %arg14[%c0_227, %c128_228] : memref<8x256xf32, #tpu.memory_space<vmem>>, vector<8x128xf32>
    tpu.vector_store %arg14[%c0_227, %c128_228], %390 {strides = array<i32>} : memref<8x256xf32, #tpu.memory_space<vmem>>, vector<8x128xf32>,
    %c8_i32 = arith.constant 8 : i32
    %cst_229 = arith.constant 0.000000e+00 : f32
    %394 = vector.broadcast %cst_229 : f32 to vector<8x128xf32>
    %c0_230 = arith.constant 0 : index
    %c0_231 = arith.constant 0 : index
    %395 = memref.load %arg1[%c0_230, %c0_231] : memref<2x8xi32, #tpu.memory_space<smem>>
    %c0_i32_232 = arith.constant 0 : i32
    %396 = vector.broadcast %c0_i32_232 : i32 to vector<8x128xi32>
    %397 = arith.cmpi eq, %1, %396 : vector<8x128xi32>
    %398 = vector.broadcast %395 : i32 to vector<8x128xi32>
    %399 = arith.cmpi eq, %0, %398 : vector<8x128xi32>
    %400 = arith.andi %397, %399 : vector<8x128xi1>
    %cst_233 = arith.constant 1.000000e+00 : f32
    %401 = vector.broadcast %cst_233 : f32 to vector<8x128xf32>
    %402 = arith.select %400, %401, %394 : vector<8x128xi1>, vector<8x128xf32>
    %c1_234 = arith.constant 1 : index
    %c0_235 = arith.constant 0 : index
    %403 = memref.load %arg1[%c1_234, %c0_235] : memref<2x8xi32, #tpu.memory_space<smem>>
    %c1_i32_236 = arith.constant 1 : i32
    %404 = vector.broadcast %c1_i32_236 : i32 to vector<8x128xi32>
    %405 = arith.cmpi eq, %1, %404 : vector<8x128xi32>
    %406 = vector.broadcast %403 : i32 to vector<8x128xi32>
    %407 = arith.cmpi eq, %0, %406 : vector<8x128xi32>
    %408 = arith.andi %405, %407 : vector<8x128xi1>
    %cst_237 = arith.constant 1.000000e+00 : f32
    %409 = vector.broadcast %cst_237 : f32 to vector<8x128xf32>
    %410 = arith.select %408, %409, %402 : vector<8x128xi1>, vector<8x128xf32>
    %c0_238 = arith.constant 0 : index
    %c0_239 = arith.constant 0 : index
    %411 = vector.load %arg15[%c0_238, %c0_239] : memref<8x128xf32, #tpu.memory_space<vmem>>, vector<8x128xf32>
    tpu.vector_store %arg15[%c0_238, %c0_239], %410 {strides = array<i32>} : memref<8x128xf32, #tpu.memory_space<vmem>>, vector<8x128xf32>,
    %c0_i32_240 = arith.constant 0 : i32
    %c0_241 = arith.constant 0 : index
    %c0_242 = arith.constant 0 : index
    %412 = vector.load %arg15[%c0_241, %c0_242] : memref<8x128xf32, #tpu.memory_space<vmem>>, vector<8x128xf32>
    %c0_243 = arith.constant 0 : index
    %c0_244 = arith.constant 0 : index
    %413 = vector.load %arg6[%c0_243, %c0_244] : memref<128x128xf32, #tpu.memory_space<vmem>>, vector<128x128xf32>
    %cst_245 = arith.constant dense<0.000000e+00> : vector<8x128xf32>
    %414 = tpu.matmul %412, %413, %cst_245 {dimension_numbers = #tpu.dot_dimension_numbers<[1], [0], [0], [1], [0, 0, 1, 1], [], []>} : vector<8x128xf32>, vector<128x128xf32>, vector<8x128xf32> -> vector<8x128xf32>
    %c0_246 = arith.constant 0 : index
    %c0_247 = arith.constant 0 : index
    %415 = vector.load %arg14[%c0_246, %c0_247] : memref<8x256xf32, #tpu.memory_space<vmem>>, vector<8x128xf32>
    tpu.vector_store %arg14[%c0_246, %c0_247], %414 {strides = array<i32>} : memref<8x256xf32, #tpu.memory_space<vmem>>, vector<8x128xf32>,
    %c0_248 = arith.constant 0 : index
    %c0_249 = arith.constant 0 : index
    %416 = vector.load %arg14[%c0_248, %c0_249] : memref<8x256xf32, #tpu.memory_space<vmem>>, vector<8x256xf32>
    %c0_250 = arith.constant 0 : index
    %c0_251 = arith.constant 0 : index
    %417 = vector.load %arg7[%c0_250, %c0_251] : memref<256x512xf32, #tpu.memory_space<vmem>>, vector<256x512xf32>
    %cst_252 = arith.constant dense<0.000000e+00> : vector<8x512xf32>
    %418 = tpu.matmul %416, %417, %cst_252 {dimension_numbers = #tpu.dot_dimension_numbers<[1], [0], [0], [1], [0, 0, 1, 1], [], []>} : vector<8x256xf32>, vector<256x512xf32>, vector<8x512xf32> -> vector<8x512xf32>
    %c0_253 = arith.constant 0 : index
    %c0_254 = arith.constant 0 : index
    %419 = vector.load %arg8[%c0_253, %c0_254] : memref<1x512xf32, #tpu.memory_space<vmem>>, vector<1x512xf32>
    %420 = vector.broadcast %419 : vector<1x512xf32> to vector<8x512xf32>
    %421 = arith.addf %418, %420 : vector<8x512xf32>
    %422 = vector.extract_strided_slice %421 {offsets = [0, 0], sizes = [8, 384], strides = [1, 1]} : vector<8x512xf32> to vector<8x384xf32>
    %423 = arith.negf %422 : vector<8x384xf32>
    %424 = math.exp %423 : vector<8x384xf32>
    %cst_255 = arith.constant 1.000000e+00 : f32
    %425 = vector.broadcast %cst_255 : f32 to vector<8x384xf32>
    %426 = arith.addf %425, %424 : vector<8x384xf32>
    %427 = arith.divf %425, %426 : vector<8x384xf32>
    %428 = vector.extract_strided_slice %427 {offsets = [0, 0], sizes = [8, 128], strides = [1, 1]} : vector<8x384xf32> to vector<8x128xf32>
    %429 = vector.extract_strided_slice %427 {offsets = [0, 128], sizes = [8, 128], strides = [1, 1]} : vector<8x384xf32> to vector<8x128xf32>
    %430 = vector.extract_strided_slice %427 {offsets = [0, 256], sizes = [8, 128], strides = [1, 1]} : vector<8x384xf32> to vector<8x128xf32>
    %431 = vector.extract_strided_slice %421 {offsets = [0, 384], sizes = [8, 128], strides = [1, 1]} : vector<8x512xf32> to vector<8x128xf32>
    %432 = math.tanh %431 : vector<8x128xf32>
    %c0_256 = arith.constant 0 : index
    %c0_257 = arith.constant 0 : index
    %433 = vector.load %arg13[%c0_256, %c0_257] : memref<8x128xf32, #tpu.memory_space<vmem>>, vector<8x128xf32>
    %434 = arith.mulf %429, %433 : vector<8x128xf32>
    %435 = arith.mulf %428, %432 : vector<8x128xf32>
    %436 = arith.addf %434, %435 : vector<8x128xf32>
    %437 = math.tanh %436 : vector<8x128xf32>
    %438 = arith.mulf %430, %437 : vector<8x128xf32>
    %c0_258 = arith.constant 0 : index
    %c0_259 = arith.constant 0 : index
    %439 = vector.load %arg13[%c0_258, %c0_259] : memref<8x128xf32, #tpu.memory_space<vmem>>, vector<8x128xf32>
    tpu.vector_store %arg13[%c0_258, %c0_259], %436 {strides = array<i32>} : memref<8x128xf32, #tpu.memory_space<vmem>>, vector<8x128xf32>,
    %c0_260 = arith.constant 0 : index
    %c0_261 = arith.constant 0 : index
    %440 = vector.load %arg12[%c0_260, %c0_261] : memref<8x128xf32, #tpu.memory_space<vmem>>, vector<8x128xf32>
    tpu.vector_store %arg12[%c0_260, %c0_261], %438 {strides = array<i32>} : memref<8x128xf32, #tpu.memory_space<vmem>>, vector<8x128xf32>,
    %c0_262 = arith.constant 0 : index
    %c128_263 = arith.constant 128 : index
    %441 = vector.load %arg14[%c0_262, %c128_263] : memref<8x256xf32, #tpu.memory_space<vmem>>, vector<8x128xf32>
    tpu.vector_store %arg14[%c0_262, %c128_263], %438 {strides = array<i32>} : memref<8x256xf32, #tpu.memory_space<vmem>>, vector<8x128xf32>,
    %c0_264 = arith.constant 0 : index
    %c0_265 = arith.constant 0 : index
    %442 = vector.load %arg9[%c0_264, %c0_265] : memref<128x128xf32, #tpu.memory_space<vmem>>, vector<128x128xf32>
    %cst_266 = arith.constant dense<0.000000e+00> : vector<8x128xf32>
    %443 = tpu.matmul %438, %442, %cst_266 {dimension_numbers = #tpu.dot_dimension_numbers<[1], [0], [0], [1], [0, 0, 1, 1], [], []>} : vector<8x128xf32>, vector<128x128xf32>, vector<8x128xf32> -> vector<8x128xf32>
    %c0_267 = arith.constant 0 : index
    %c0_268 = arith.constant 0 : index
    %444 = vector.load %arg10[%c0_267, %c0_268] : memref<1x128xf32, #tpu.memory_space<vmem>>, vector<1x128xf32>
    %445 = vector.broadcast %444 : vector<1x128xf32> to vector<8x128xf32>
    %446 = arith.addf %443, %445 : vector<8x128xf32>
    %447 = arith.index_cast %c0_i32_240 : i32 to index
    %c0_269 = arith.constant 0 : index
    %c0_270 = arith.constant 0 : index
    %448 = vector.load %arg11[%447, %c0_269, %c0_270] : memref<7x8x128xf32, #tpu.memory_space<vmem>>, vector<1x8x128xf32>
    %449 = vector.shape_cast %448 : vector<1x8x128xf32> to vector<8x128xf32>
    %450 = vector.shape_cast %446 : vector<8x128xf32> to vector<1x8x128xf32>
    tpu.vector_store %arg11[%447, %c0_269, %c0_270], %450 {strides = array<i32>} : memref<7x8x128xf32, #tpu.memory_space<vmem>>, vector<1x8x128xf32>,
    %451 = arith.index_cast %c0_i32_240 : i32 to index
    %452 = memref.load %arg2[%451] : memref<7xi32, #tpu.memory_space<smem>>
    %c0_i32_271 = arith.constant 0 : i32
    %453 = arith.cmpi sgt, %452, %c0_i32_271 : i32
    %454 = arith.extui %453 : i1 to i32
    %c0_i32_272 = arith.constant 0 : i32
    %455 = arith.cmpi ne, %454, %c0_i32_272 : i32
    scf.if %455 {
      %c1_i32_486 = arith.constant 1 : i32
      %755 = arith.addi %c0_i32_240, %c1_i32_486 : i32
      %cst_487 = arith.constant 0.000000e+00 : f32
      %756 = vector.broadcast %cst_487 : f32 to vector<8x128xf32>
      %c0_488 = arith.constant 0 : index
      %757 = arith.index_cast %755 : i32 to index
      %758 = memref.load %arg1[%c0_488, %757] : memref<2x8xi32, #tpu.memory_space<smem>>
      %c0_i32_489 = arith.constant 0 : i32
      %759 = vector.broadcast %c0_i32_489 : i32 to vector<8x128xi32>
      %760 = arith.cmpi eq, %1, %759 : vector<8x128xi32>
      %761 = vector.broadcast %758 : i32 to vector<8x128xi32>
      %762 = arith.cmpi eq, %0, %761 : vector<8x128xi32>
      %763 = arith.andi %760, %762 : vector<8x128xi1>
      %cst_490 = arith.constant 1.000000e+00 : f32
      %764 = vector.broadcast %cst_490 : f32 to vector<8x128xf32>
      %765 = arith.select %763, %764, %756 : vector<8x128xi1>, vector<8x128xf32>
      %c1_491 = arith.constant 1 : index
      %766 = arith.index_cast %755 : i32 to index
      %767 = memref.load %arg1[%c1_491, %766] : memref<2x8xi32, #tpu.memory_space<smem>>
      %c1_i32_492 = arith.constant 1 : i32
      %768 = vector.broadcast %c1_i32_492 : i32 to vector<8x128xi32>
      %769 = arith.cmpi eq, %1, %768 : vector<8x128xi32>
      %770 = vector.broadcast %767 : i32 to vector<8x128xi32>
      %771 = arith.cmpi eq, %0, %770 : vector<8x128xi32>
      %772 = arith.andi %769, %771 : vector<8x128xi1>
      %cst_493 = arith.constant 1.000000e+00 : f32
      %773 = vector.broadcast %cst_493 : f32 to vector<8x128xf32>
      %774 = arith.select %772, %773, %765 : vector<8x128xi1>, vector<8x128xf32>
      %c0_494 = arith.constant 0 : index
      %c0_495 = arith.constant 0 : index
      %775 = vector.load %arg15[%c0_494, %c0_495] : memref<8x128xf32, #tpu.memory_space<vmem>>, vector<8x128xf32>
      tpu.vector_store %arg15[%c0_494, %c0_495], %774 {strides = array<i32>} : memref<8x128xf32, #tpu.memory_space<vmem>>, vector<8x128xf32>,
    } else {
    }
    %456 = arith.index_cast %c0_i32_240 : i32 to index
    %457 = memref.load %arg2[%456] : memref<7xi32, #tpu.memory_space<smem>>
    %c0_i32_273 = arith.constant 0 : i32
    %458 = arith.cmpi eq, %457, %c0_i32_273 : i32
    %459 = arith.extui %458 : i1 to i32
    %c0_i32_274 = arith.constant 0 : i32
    %460 = arith.cmpi ne, %459, %c0_i32_274 : i32
    scf.if %460 {
      %c16_i32 = arith.constant 16 : i32
      %755 = vector.broadcast %c16_i32 : i32 to vector<8x128xi32>
      %756 = arith.cmpi slt, %0, %755 : vector<8x128xi32>
      %cst_486 = arith.constant -1.000000e+30 : f32
      %757 = vector.broadcast %cst_486 : f32 to vector<8x128xf32>
      %758 = arith.select %756, %446, %757 : vector<8x128xi1>, vector<8x128xf32>
      %cst_487 = arith.constant dense<0xFF800000> : vector<8xf32>
      %759 = vector.multi_reduction <maximumf>, %758, %cst_487 [1] : vector<8x128xf32> to vector<8xf32>
      %760 = vector.shape_cast %759 : vector<8xf32> to vector<8x1xf32>
      %761 = vector.broadcast %760 : vector<8x1xf32> to vector<8x128xf32>
      %762 = arith.cmpf oeq, %758, %761 : vector<8x128xf32>
      %c128_i32 = arith.constant 128 : i32
      %763 = vector.broadcast %c128_i32 : i32 to vector<8x128xi32>
      %764 = arith.select %762, %0, %763 : vector<8x128xi1>, vector<8x128xi32>
      %cst_488 = arith.constant dense<2147483647> : vector<8xi32>
      %765 = vector.multi_reduction <minsi>, %764, %cst_488 [1] : vector<8x128xi32> to vector<8xi32>
      %766 = vector.shape_cast %765 : vector<8xi32> to vector<8x1xi32>
      %767 = vector.broadcast %766 : vector<8x1xi32> to vector<8x128xi32>
      %768 = arith.cmpi eq, %0, %767 : vector<8x128xi32>
      %769 = arith.extui %768 : vector<8x128xi1> to vector<8x128xi32>
      %770 = arith.sitofp %769 : vector<8x128xi32> to vector<8x128xf32>
      %c0_489 = arith.constant 0 : index
      %c0_490 = arith.constant 0 : index
      %771 = vector.load %arg15[%c0_489, %c0_490] : memref<8x128xf32, #tpu.memory_space<vmem>>, vector<8x128xf32>
      tpu.vector_store %arg15[%c0_489, %c0_490], %770 {strides = array<i32>} : memref<8x128xf32, #tpu.memory_space<vmem>>, vector<8x128xf32>,
    } else {
    }
    %c1_i32_275 = arith.constant 1 : i32
    %c0_276 = arith.constant 0 : index
    %c0_277 = arith.constant 0 : index
    %461 = vector.load %arg15[%c0_276, %c0_277] : memref<8x128xf32, #tpu.memory_space<vmem>>, vector<8x128xf32>
    %c0_278 = arith.constant 0 : index
    %c0_279 = arith.constant 0 : index
    %462 = vector.load %arg6[%c0_278, %c0_279] : memref<128x128xf32, #tpu.memory_space<vmem>>, vector<128x128xf32>
    %cst_280 = arith.constant dense<0.000000e+00> : vector<8x128xf32>
    %463 = tpu.matmul %461, %462, %cst_280 {dimension_numbers = #tpu.dot_dimension_numbers<[1], [0], [0], [1], [0, 0, 1, 1], [], []>} : vector<8x128xf32>, vector<128x128xf32>, vector<8x128xf32> -> vector<8x128xf32>
    %c0_281 = arith.constant 0 : index
    %c0_282 = arith.constant 0 : index
    %464 = vector.load %arg14[%c0_281, %c0_282] : memref<8x256xf32, #tpu.memory_space<vmem>>, vector<8x128xf32>
    tpu.vector_store %arg14[%c0_281, %c0_282], %463 {strides = array<i32>} : memref<8x256xf32, #tpu.memory_space<vmem>>, vector<8x128xf32>,
    %c0_283 = arith.constant 0 : index
    %c0_284 = arith.constant 0 : index
    %465 = vector.load %arg14[%c0_283, %c0_284] : memref<8x256xf32, #tpu.memory_space<vmem>>, vector<8x256xf32>
    %c0_285 = arith.constant 0 : index
    %c0_286 = arith.constant 0 : index
    %466 = vector.load %arg7[%c0_285, %c0_286] : memref<256x512xf32, #tpu.memory_space<vmem>>, vector<256x512xf32>
    %cst_287 = arith.constant dense<0.000000e+00> : vector<8x512xf32>
    %467 = tpu.matmul %465, %466, %cst_287 {dimension_numbers = #tpu.dot_dimension_numbers<[1], [0], [0], [1], [0, 0, 1, 1], [], []>} : vector<8x256xf32>, vector<256x512xf32>, vector<8x512xf32> -> vector<8x512xf32>
    %c0_288 = arith.constant 0 : index
    %c0_289 = arith.constant 0 : index
    %468 = vector.load %arg8[%c0_288, %c0_289] : memref<1x512xf32, #tpu.memory_space<vmem>>, vector<1x512xf32>
    %469 = vector.broadcast %468 : vector<1x512xf32> to vector<8x512xf32>
    %470 = arith.addf %467, %469 : vector<8x512xf32>
    %471 = vector.extract_strided_slice %470 {offsets = [0, 0], sizes = [8, 384], strides = [1, 1]} : vector<8x512xf32> to vector<8x384xf32>
    %472 = arith.negf %471 : vector<8x384xf32>
    %473 = math.exp %472 : vector<8x384xf32>
    %cst_290 = arith.constant 1.000000e+00 : f32
    %474 = vector.broadcast %cst_290 : f32 to vector<8x384xf32>
    %475 = arith.addf %474, %473 : vector<8x384xf32>
    %476 = arith.divf %474, %475 : vector<8x384xf32>
    %477 = vector.extract_strided_slice %476 {offsets = [0, 0], sizes = [8, 128], strides = [1, 1]} : vector<8x384xf32> to vector<8x128xf32>
    %478 = vector.extract_strided_slice %476 {offsets = [0, 128], sizes = [8, 128], strides = [1, 1]} : vector<8x384xf32> to vector<8x128xf32>
    %479 = vector.extract_strided_slice %476 {offsets = [0, 256], sizes = [8, 128], strides = [1, 1]} : vector<8x384xf32> to vector<8x128xf32>
    %480 = vector.extract_strided_slice %470 {offsets = [0, 384], sizes = [8, 128], strides = [1, 1]} : vector<8x512xf32> to vector<8x128xf32>
    %481 = math.tanh %480 : vector<8x128xf32>
    %c0_291 = arith.constant 0 : index
    %c0_292 = arith.constant 0 : index
    %482 = vector.load %arg13[%c0_291, %c0_292] : memref<8x128xf32, #tpu.memory_space<vmem>>, vector<8x128xf32>
    %483 = arith.mulf %478, %482 : vector<8x128xf32>
    %484 = arith.mulf %477, %481 : vector<8x128xf32>
    %485 = arith.addf %483, %484 : vector<8x128xf32>
    %486 = math.tanh %485 : vector<8x128xf32>
    %487 = arith.mulf %479, %486 : vector<8x128xf32>
    %c0_293 = arith.constant 0 : index
    %c0_294 = arith.constant 0 : index
    %488 = vector.load %arg13[%c0_293, %c0_294] : memref<8x128xf32, #tpu.memory_space<vmem>>, vector<8x128xf32>
    tpu.vector_store %arg13[%c0_293, %c0_294], %485 {strides = array<i32>} : memref<8x128xf32, #tpu.memory_space<vmem>>, vector<8x128xf32>,
    %c0_295 = arith.constant 0 : index
    %c0_296 = arith.constant 0 : index
    %489 = vector.load %arg12[%c0_295, %c0_296] : memref<8x128xf32, #tpu.memory_space<vmem>>, vector<8x128xf32>
    tpu.vector_store %arg12[%c0_295, %c0_296], %487 {strides = array<i32>} : memref<8x128xf32, #tpu.memory_space<vmem>>, vector<8x128xf32>,
    %c0_297 = arith.constant 0 : index
    %c128_298 = arith.constant 128 : index
    %490 = vector.load %arg14[%c0_297, %c128_298] : memref<8x256xf32, #tpu.memory_space<vmem>>, vector<8x128xf32>
    tpu.vector_store %arg14[%c0_297, %c128_298], %487 {strides = array<i32>} : memref<8x256xf32, #tpu.memory_space<vmem>>, vector<8x128xf32>,
    %c0_299 = arith.constant 0 : index
    %c0_300 = arith.constant 0 : index
    %491 = vector.load %arg9[%c0_299, %c0_300] : memref<128x128xf32, #tpu.memory_space<vmem>>, vector<128x128xf32>
    %cst_301 = arith.constant dense<0.000000e+00> : vector<8x128xf32>
    %492 = tpu.matmul %487, %491, %cst_301 {dimension_numbers = #tpu.dot_dimension_numbers<[1], [0], [0], [1], [0, 0, 1, 1], [], []>} : vector<8x128xf32>, vector<128x128xf32>, vector<8x128xf32> -> vector<8x128xf32>
    %c0_302 = arith.constant 0 : index
    %c0_303 = arith.constant 0 : index
    %493 = vector.load %arg10[%c0_302, %c0_303] : memref<1x128xf32, #tpu.memory_space<vmem>>, vector<1x128xf32>
    %494 = vector.broadcast %493 : vector<1x128xf32> to vector<8x128xf32>
    %495 = arith.addf %492, %494 : vector<8x128xf32>
    %496 = arith.index_cast %c1_i32_275 : i32 to index
    %c0_304 = arith.constant 0 : index
    %c0_305 = arith.constant 0 : index
    %497 = vector.load %arg11[%496, %c0_304, %c0_305] : memref<7x8x128xf32, #tpu.memory_space<vmem>>, vector<1x8x128xf32>
    %498 = vector.shape_cast %497 : vector<1x8x128xf32> to vector<8x128xf32>
    %499 = vector.shape_cast %495 : vector<8x128xf32> to vector<1x8x128xf32>
    tpu.vector_store %arg11[%496, %c0_304, %c0_305], %499 {strides = array<i32>} : memref<7x8x128xf32, #tpu.memory_space<vmem>>, vector<1x8x128xf32>,
    %500 = arith.index_cast %c1_i32_275 : i32 to index
    %501 = memref.load %arg2[%500] : memref<7xi32, #tpu.memory_space<smem>>
    %c0_i32_306 = arith.constant 0 : i32
    %502 = arith.cmpi sgt, %501, %c0_i32_306 : i32
    %503 = arith.extui %502 : i1 to i32
    %c0_i32_307 = arith.constant 0 : i32
    %504 = arith.cmpi ne, %503, %c0_i32_307 : i32
    scf.if %504 {
      %c1_i32_486 = arith.constant 1 : i32
      %755 = arith.addi %c1_i32_275, %c1_i32_486 : i32
      %cst_487 = arith.constant 0.000000e+00 : f32
      %756 = vector.broadcast %cst_487 : f32 to vector<8x128xf32>
      %c0_488 = arith.constant 0 : index
      %757 = arith.index_cast %755 : i32 to index
      %758 = memref.load %arg1[%c0_488, %757] : memref<2x8xi32, #tpu.memory_space<smem>>
      %c0_i32_489 = arith.constant 0 : i32
      %759 = vector.broadcast %c0_i32_489 : i32 to vector<8x128xi32>
      %760 = arith.cmpi eq, %1, %759 : vector<8x128xi32>
      %761 = vector.broadcast %758 : i32 to vector<8x128xi32>
      %762 = arith.cmpi eq, %0, %761 : vector<8x128xi32>
      %763 = arith.andi %760, %762 : vector<8x128xi1>
      %cst_490 = arith.constant 1.000000e+00 : f32
      %764 = vector.broadcast %cst_490 : f32 to vector<8x128xf32>
      %765 = arith.select %763, %764, %756 : vector<8x128xi1>, vector<8x128xf32>
      %c1_491 = arith.constant 1 : index
      %766 = arith.index_cast %755 : i32 to index
      %767 = memref.load %arg1[%c1_491, %766] : memref<2x8xi32, #tpu.memory_space<smem>>
      %c1_i32_492 = arith.constant 1 : i32
      %768 = vector.broadcast %c1_i32_492 : i32 to vector<8x128xi32>
      %769 = arith.cmpi eq, %1, %768 : vector<8x128xi32>
      %770 = vector.broadcast %767 : i32 to vector<8x128xi32>
      %771 = arith.cmpi eq, %0, %770 : vector<8x128xi32>
      %772 = arith.andi %769, %771 : vector<8x128xi1>
      %cst_493 = arith.constant 1.000000e+00 : f32
      %773 = vector.broadcast %cst_493 : f32 to vector<8x128xf32>
      %774 = arith.select %772, %773, %765 : vector<8x128xi1>, vector<8x128xf32>
      %c0_494 = arith.constant 0 : index
      %c0_495 = arith.constant 0 : index
      %775 = vector.load %arg15[%c0_494, %c0_495] : memref<8x128xf32, #tpu.memory_space<vmem>>, vector<8x128xf32>
      tpu.vector_store %arg15[%c0_494, %c0_495], %774 {strides = array<i32>} : memref<8x128xf32, #tpu.memory_space<vmem>>, vector<8x128xf32>,
    } else {
    }
    %505 = arith.index_cast %c1_i32_275 : i32 to index
    %506 = memref.load %arg2[%505] : memref<7xi32, #tpu.memory_space<smem>>
    %c0_i32_308 = arith.constant 0 : i32
    %507 = arith.cmpi eq, %506, %c0_i32_308 : i32
    %508 = arith.extui %507 : i1 to i32
    %c0_i32_309 = arith.constant 0 : i32
    %509 = arith.cmpi ne, %508, %c0_i32_309 : i32
    scf.if %509 {
      %c16_i32 = arith.constant 16 : i32
      %755 = vector.broadcast %c16_i32 : i32 to vector<8x128xi32>
      %756 = arith.cmpi slt, %0, %755 : vector<8x128xi32>
      %cst_486 = arith.constant -1.000000e+30 : f32
      %757 = vector.broadcast %cst_486 : f32 to vector<8x128xf32>
      %758 = arith.select %756, %495, %757 : vector<8x128xi1>, vector<8x128xf32>
      %cst_487 = arith.constant dense<0xFF800000> : vector<8xf32>
      %759 = vector.multi_reduction <maximumf>, %758, %cst_487 [1] : vector<8x128xf32> to vector<8xf32>
      %760 = vector.shape_cast %759 : vector<8xf32> to vector<8x1xf32>
      %761 = vector.broadcast %760 : vector<8x1xf32> to vector<8x128xf32>
      %762 = arith.cmpf oeq, %758, %761 : vector<8x128xf32>
      %c128_i32 = arith.constant 128 : i32
      %763 = vector.broadcast %c128_i32 : i32 to vector<8x128xi32>
      %764 = arith.select %762, %0, %763 : vector<8x128xi1>, vector<8x128xi32>
      %cst_488 = arith.constant dense<2147483647> : vector<8xi32>
      %765 = vector.multi_reduction <minsi>, %764, %cst_488 [1] : vector<8x128xi32> to vector<8xi32>
      %766 = vector.shape_cast %765 : vector<8xi32> to vector<8x1xi32>
      %767 = vector.broadcast %766 : vector<8x1xi32> to vector<8x128xi32>
      %768 = arith.cmpi eq, %0, %767 : vector<8x128xi32>
      %769 = arith.extui %768 : vector<8x128xi1> to vector<8x128xi32>
      %770 = arith.sitofp %769 : vector<8x128xi32> to vector<8x128xf32>
      %c0_489 = arith.constant 0 : index
      %c0_490 = arith.constant 0 : index
      %771 = vector.load %arg15[%c0_489, %c0_490] : memref<8x128xf32, #tpu.memory_space<vmem>>, vector<8x128xf32>
      tpu.vector_store %arg15[%c0_489, %c0_490], %770 {strides = array<i32>} : memref<8x128xf32, #tpu.memory_space<vmem>>, vector<8x128xf32>,
    } else {
    }
    %c2_i32_310 = arith.constant 2 : i32
    %c0_311 = arith.constant 0 : index
    %c0_312 = arith.constant 0 : index
    %510 = vector.load %arg15[%c0_311, %c0_312] : memref<8x128xf32, #tpu.memory_space<vmem>>, vector<8x128xf32>
    %c0_313 = arith.constant 0 : index
    %c0_314 = arith.constant 0 : index
    %511 = vector.load %arg6[%c0_313, %c0_314] : memref<128x128xf32, #tpu.memory_space<vmem>>, vector<128x128xf32>
    %cst_315 = arith.constant dense<0.000000e+00> : vector<8x128xf32>
    %512 = tpu.matmul %510, %511, %cst_315 {dimension_numbers = #tpu.dot_dimension_numbers<[1], [0], [0], [1], [0, 0, 1, 1], [], []>} : vector<8x128xf32>, vector<128x128xf32>, vector<8x128xf32> -> vector<8x128xf32>
    %c0_316 = arith.constant 0 : index
    %c0_317 = arith.constant 0 : index
    %513 = vector.load %arg14[%c0_316, %c0_317] : memref<8x256xf32, #tpu.memory_space<vmem>>, vector<8x128xf32>
    tpu.vector_store %arg14[%c0_316, %c0_317], %512 {strides = array<i32>} : memref<8x256xf32, #tpu.memory_space<vmem>>, vector<8x128xf32>,
    %c0_318 = arith.constant 0 : index
    %c0_319 = arith.constant 0 : index
    %514 = vector.load %arg14[%c0_318, %c0_319] : memref<8x256xf32, #tpu.memory_space<vmem>>, vector<8x256xf32>
    %c0_320 = arith.constant 0 : index
    %c0_321 = arith.constant 0 : index
    %515 = vector.load %arg7[%c0_320, %c0_321] : memref<256x512xf32, #tpu.memory_space<vmem>>, vector<256x512xf32>
    %cst_322 = arith.constant dense<0.000000e+00> : vector<8x512xf32>
    %516 = tpu.matmul %514, %515, %cst_322 {dimension_numbers = #tpu.dot_dimension_numbers<[1], [0], [0], [1], [0, 0, 1, 1], [], []>} : vector<8x256xf32>, vector<256x512xf32>, vector<8x512xf32> -> vector<8x512xf32>
    %c0_323 = arith.constant 0 : index
    %c0_324 = arith.constant 0 : index
    %517 = vector.load %arg8[%c0_323, %c0_324] : memref<1x512xf32, #tpu.memory_space<vmem>>, vector<1x512xf32>
    %518 = vector.broadcast %517 : vector<1x512xf32> to vector<8x512xf32>
    %519 = arith.addf %516, %518 : vector<8x512xf32>
    %520 = vector.extract_strided_slice %519 {offsets = [0, 0], sizes = [8, 384], strides = [1, 1]} : vector<8x512xf32> to vector<8x384xf32>
    %521 = arith.negf %520 : vector<8x384xf32>
    %522 = math.exp %521 : vector<8x384xf32>
    %cst_325 = arith.constant 1.000000e+00 : f32
    %523 = vector.broadcast %cst_325 : f32 to vector<8x384xf32>
    %524 = arith.addf %523, %522 : vector<8x384xf32>
    %525 = arith.divf %523, %524 : vector<8x384xf32>
    %526 = vector.extract_strided_slice %525 {offsets = [0, 0], sizes = [8, 128], strides = [1, 1]} : vector<8x384xf32> to vector<8x128xf32>
    %527 = vector.extract_strided_slice %525 {offsets = [0, 128], sizes = [8, 128], strides = [1, 1]} : vector<8x384xf32> to vector<8x128xf32>
    %528 = vector.extract_strided_slice %525 {offsets = [0, 256], sizes = [8, 128], strides = [1, 1]} : vector<8x384xf32> to vector<8x128xf32>
    %529 = vector.extract_strided_slice %519 {offsets = [0, 384], sizes = [8, 128], strides = [1, 1]} : vector<8x512xf32> to vector<8x128xf32>
    %530 = math.tanh %529 : vector<8x128xf32>
    %c0_326 = arith.constant 0 : index
    %c0_327 = arith.constant 0 : index
    %531 = vector.load %arg13[%c0_326, %c0_327] : memref<8x128xf32, #tpu.memory_space<vmem>>, vector<8x128xf32>
    %532 = arith.mulf %527, %531 : vector<8x128xf32>
    %533 = arith.mulf %526, %530 : vector<8x128xf32>
    %534 = arith.addf %532, %533 : vector<8x128xf32>
    %535 = math.tanh %534 : vector<8x128xf32>
    %536 = arith.mulf %528, %535 : vector<8x128xf32>
    %c0_328 = arith.constant 0 : index
    %c0_329 = arith.constant 0 : index
    %537 = vector.load %arg13[%c0_328, %c0_329] : memref<8x128xf32, #tpu.memory_space<vmem>>, vector<8x128xf32>
    tpu.vector_store %arg13[%c0_328, %c0_329], %534 {strides = array<i32>} : memref<8x128xf32, #tpu.memory_space<vmem>>, vector<8x128xf32>,
    %c0_330 = arith.constant 0 : index
    %c0_331 = arith.constant 0 : index
    %538 = vector.load %arg12[%c0_330, %c0_331] : memref<8x128xf32, #tpu.memory_space<vmem>>, vector<8x128xf32>
    tpu.vector_store %arg12[%c0_330, %c0_331], %536 {strides = array<i32>} : memref<8x128xf32, #tpu.memory_space<vmem>>, vector<8x128xf32>,
    %c0_332 = arith.constant 0 : index
    %c128_333 = arith.constant 128 : index
    %539 = vector.load %arg14[%c0_332, %c128_333] : memref<8x256xf32, #tpu.memory_space<vmem>>, vector<8x128xf32>
    tpu.vector_store %arg14[%c0_332, %c128_333], %536 {strides = array<i32>} : memref<8x256xf32, #tpu.memory_space<vmem>>, vector<8x128xf32>,
    %c0_334 = arith.constant 0 : index
    %c0_335 = arith.constant 0 : index
    %540 = vector.load %arg9[%c0_334, %c0_335] : memref<128x128xf32, #tpu.memory_space<vmem>>, vector<128x128xf32>
    %cst_336 = arith.constant dense<0.000000e+00> : vector<8x128xf32>
    %541 = tpu.matmul %536, %540, %cst_336 {dimension_numbers = #tpu.dot_dimension_numbers<[1], [0], [0], [1], [0, 0, 1, 1], [], []>} : vector<8x128xf32>, vector<128x128xf32>, vector<8x128xf32> -> vector<8x128xf32>
    %c0_337 = arith.constant 0 : index
    %c0_338 = arith.constant 0 : index
    %542 = vector.load %arg10[%c0_337, %c0_338] : memref<1x128xf32, #tpu.memory_space<vmem>>, vector<1x128xf32>
    %543 = vector.broadcast %542 : vector<1x128xf32> to vector<8x128xf32>
    %544 = arith.addf %541, %543 : vector<8x128xf32>
    %545 = arith.index_cast %c2_i32_310 : i32 to index
    %c0_339 = arith.constant 0 : index
    %c0_340 = arith.constant 0 : index
    %546 = vector.load %arg11[%545, %c0_339, %c0_340] : memref<7x8x128xf32, #tpu.memory_space<vmem>>, vector<1x8x128xf32>
    %547 = vector.shape_cast %546 : vector<1x8x128xf32> to vector<8x128xf32>
    %548 = vector.shape_cast %544 : vector<8x128xf32> to vector<1x8x128xf32>
    tpu.vector_store %arg11[%545, %c0_339, %c0_340], %548 {strides = array<i32>} : memref<7x8x128xf32, #tpu.memory_space<vmem>>, vector<1x8x128xf32>,
    %549 = arith.index_cast %c2_i32_310 : i32 to index
    %550 = memref.load %arg2[%549] : memref<7xi32, #tpu.memory_space<smem>>
    %c0_i32_341 = arith.constant 0 : i32
    %551 = arith.cmpi sgt, %550, %c0_i32_341 : i32
    %552 = arith.extui %551 : i1 to i32
    %c0_i32_342 = arith.constant 0 : i32
    %553 = arith.cmpi ne, %552, %c0_i32_342 : i32
    scf.if %553 {
      %c1_i32_486 = arith.constant 1 : i32
      %755 = arith.addi %c2_i32_310, %c1_i32_486 : i32
      %cst_487 = arith.constant 0.000000e+00 : f32
      %756 = vector.broadcast %cst_487 : f32 to vector<8x128xf32>
      %c0_488 = arith.constant 0 : index
      %757 = arith.index_cast %755 : i32 to index
      %758 = memref.load %arg1[%c0_488, %757] : memref<2x8xi32, #tpu.memory_space<smem>>
      %c0_i32_489 = arith.constant 0 : i32
      %759 = vector.broadcast %c0_i32_489 : i32 to vector<8x128xi32>
      %760 = arith.cmpi eq, %1, %759 : vector<8x128xi32>
      %761 = vector.broadcast %758 : i32 to vector<8x128xi32>
      %762 = arith.cmpi eq, %0, %761 : vector<8x128xi32>
      %763 = arith.andi %760, %762 : vector<8x128xi1>
      %cst_490 = arith.constant 1.000000e+00 : f32
      %764 = vector.broadcast %cst_490 : f32 to vector<8x128xf32>
      %765 = arith.select %763, %764, %756 : vector<8x128xi1>, vector<8x128xf32>
      %c1_491 = arith.constant 1 : index
      %766 = arith.index_cast %755 : i32 to index
      %767 = memref.load %arg1[%c1_491, %766] : memref<2x8xi32, #tpu.memory_space<smem>>
      %c1_i32_492 = arith.constant 1 : i32
      %768 = vector.broadcast %c1_i32_492 : i32 to vector<8x128xi32>
      %769 = arith.cmpi eq, %1, %768 : vector<8x128xi32>
      %770 = vector.broadcast %767 : i32 to vector<8x128xi32>
      %771 = arith.cmpi eq, %0, %770 : vector<8x128xi32>
      %772 = arith.andi %769, %771 : vector<8x128xi1>
      %cst_493 = arith.constant 1.000000e+00 : f32
      %773 = vector.broadcast %cst_493 : f32 to vector<8x128xf32>
      %774 = arith.select %772, %773, %765 : vector<8x128xi1>, vector<8x128xf32>
      %c0_494 = arith.constant 0 : index
      %c0_495 = arith.constant 0 : index
      %775 = vector.load %arg15[%c0_494, %c0_495] : memref<8x128xf32, #tpu.memory_space<vmem>>, vector<8x128xf32>
      tpu.vector_store %arg15[%c0_494, %c0_495], %774 {strides = array<i32>} : memref<8x128xf32, #tpu.memory_space<vmem>>, vector<8x128xf32>,
    } else {
    }
    %554 = arith.index_cast %c2_i32_310 : i32 to index
    %555 = memref.load %arg2[%554] : memref<7xi32, #tpu.memory_space<smem>>
    %c0_i32_343 = arith.constant 0 : i32
    %556 = arith.cmpi eq, %555, %c0_i32_343 : i32
    %557 = arith.extui %556 : i1 to i32
    %c0_i32_344 = arith.constant 0 : i32
    %558 = arith.cmpi ne, %557, %c0_i32_344 : i32
    scf.if %558 {
      %c16_i32 = arith.constant 16 : i32
      %755 = vector.broadcast %c16_i32 : i32 to vector<8x128xi32>
      %756 = arith.cmpi slt, %0, %755 : vector<8x128xi32>
      %cst_486 = arith.constant -1.000000e+30 : f32
      %757 = vector.broadcast %cst_486 : f32 to vector<8x128xf32>
      %758 = arith.select %756, %544, %757 : vector<8x128xi1>, vector<8x128xf32>
      %cst_487 = arith.constant dense<0xFF800000> : vector<8xf32>
      %759 = vector.multi_reduction <maximumf>, %758, %cst_487 [1] : vector<8x128xf32> to vector<8xf32>
      %760 = vector.shape_cast %759 : vector<8xf32> to vector<8x1xf32>
      %761 = vector.broadcast %760 : vector<8x1xf32> to vector<8x128xf32>
      %762 = arith.cmpf oeq, %758, %761 : vector<8x128xf32>
      %c128_i32 = arith.constant 128 : i32
      %763 = vector.broadcast %c128_i32 : i32 to vector<8x128xi32>
      %764 = arith.select %762, %0, %763 : vector<8x128xi1>, vector<8x128xi32>
      %cst_488 = arith.constant dense<2147483647> : vector<8xi32>
      %765 = vector.multi_reduction <minsi>, %764, %cst_488 [1] : vector<8x128xi32> to vector<8xi32>
      %766 = vector.shape_cast %765 : vector<8xi32> to vector<8x1xi32>
      %767 = vector.broadcast %766 : vector<8x1xi32> to vector<8x128xi32>
      %768 = arith.cmpi eq, %0, %767 : vector<8x128xi32>
      %769 = arith.extui %768 : vector<8x128xi1> to vector<8x128xi32>
      %770 = arith.sitofp %769 : vector<8x128xi32> to vector<8x128xf32>
      %c0_489 = arith.constant 0 : index
      %c0_490 = arith.constant 0 : index
      %771 = vector.load %arg15[%c0_489, %c0_490] : memref<8x128xf32, #tpu.memory_space<vmem>>, vector<8x128xf32>
      tpu.vector_store %arg15[%c0_489, %c0_490], %770 {strides = array<i32>} : memref<8x128xf32, #tpu.memory_space<vmem>>, vector<8x128xf32>,
    } else {
    }
    %c3_i32_345 = arith.constant 3 : i32
    %c0_346 = arith.constant 0 : index
    %c0_347 = arith.constant 0 : index
    %559 = vector.load %arg15[%c0_346, %c0_347] : memref<8x128xf32, #tpu.memory_space<vmem>>, vector<8x128xf32>
    %c0_348 = arith.constant 0 : index
    %c0_349 = arith.constant 0 : index
    %560 = vector.load %arg6[%c0_348, %c0_349] : memref<128x128xf32, #tpu.memory_space<vmem>>, vector<128x128xf32>
    %cst_350 = arith.constant dense<0.000000e+00> : vector<8x128xf32>
    %561 = tpu.matmul %559, %560, %cst_350 {dimension_numbers = #tpu.dot_dimension_numbers<[1], [0], [0], [1], [0, 0, 1, 1], [], []>} : vector<8x128xf32>, vector<128x128xf32>, vector<8x128xf32> -> vector<8x128xf32>
    %c0_351 = arith.constant 0 : index
    %c0_352 = arith.constant 0 : index
    %562 = vector.load %arg14[%c0_351, %c0_352] : memref<8x256xf32, #tpu.memory_space<vmem>>, vector<8x128xf32>
    tpu.vector_store %arg14[%c0_351, %c0_352], %561 {strides = array<i32>} : memref<8x256xf32, #tpu.memory_space<vmem>>, vector<8x128xf32>,
    %c0_353 = arith.constant 0 : index
    %c0_354 = arith.constant 0 : index
    %563 = vector.load %arg14[%c0_353, %c0_354] : memref<8x256xf32, #tpu.memory_space<vmem>>, vector<8x256xf32>
    %c0_355 = arith.constant 0 : index
    %c0_356 = arith.constant 0 : index
    %564 = vector.load %arg7[%c0_355, %c0_356] : memref<256x512xf32, #tpu.memory_space<vmem>>, vector<256x512xf32>
    %cst_357 = arith.constant dense<0.000000e+00> : vector<8x512xf32>
    %565 = tpu.matmul %563, %564, %cst_357 {dimension_numbers = #tpu.dot_dimension_numbers<[1], [0], [0], [1], [0, 0, 1, 1], [], []>} : vector<8x256xf32>, vector<256x512xf32>, vector<8x512xf32> -> vector<8x512xf32>
    %c0_358 = arith.constant 0 : index
    %c0_359 = arith.constant 0 : index
    %566 = vector.load %arg8[%c0_358, %c0_359] : memref<1x512xf32, #tpu.memory_space<vmem>>, vector<1x512xf32>
    %567 = vector.broadcast %566 : vector<1x512xf32> to vector<8x512xf32>
    %568 = arith.addf %565, %567 : vector<8x512xf32>
    %569 = vector.extract_strided_slice %568 {offsets = [0, 0], sizes = [8, 384], strides = [1, 1]} : vector<8x512xf32> to vector<8x384xf32>
    %570 = arith.negf %569 : vector<8x384xf32>
    %571 = math.exp %570 : vector<8x384xf32>
    %cst_360 = arith.constant 1.000000e+00 : f32
    %572 = vector.broadcast %cst_360 : f32 to vector<8x384xf32>
    %573 = arith.addf %572, %571 : vector<8x384xf32>
    %574 = arith.divf %572, %573 : vector<8x384xf32>
    %575 = vector.extract_strided_slice %574 {offsets = [0, 0], sizes = [8, 128], strides = [1, 1]} : vector<8x384xf32> to vector<8x128xf32>
    %576 = vector.extract_strided_slice %574 {offsets = [0, 128], sizes = [8, 128], strides = [1, 1]} : vector<8x384xf32> to vector<8x128xf32>
    %577 = vector.extract_strided_slice %574 {offsets = [0, 256], sizes = [8, 128], strides = [1, 1]} : vector<8x384xf32> to vector<8x128xf32>
    %578 = vector.extract_strided_slice %568 {offsets = [0, 384], sizes = [8, 128], strides = [1, 1]} : vector<8x512xf32> to vector<8x128xf32>
    %579 = math.tanh %578 : vector<8x128xf32>
    %c0_361 = arith.constant 0 : index
    %c0_362 = arith.constant 0 : index
    %580 = vector.load %arg13[%c0_361, %c0_362] : memref<8x128xf32, #tpu.memory_space<vmem>>, vector<8x128xf32>
    %581 = arith.mulf %576, %580 : vector<8x128xf32>
    %582 = arith.mulf %575, %579 : vector<8x128xf32>
    %583 = arith.addf %581, %582 : vector<8x128xf32>
    %584 = math.tanh %583 : vector<8x128xf32>
    %585 = arith.mulf %577, %584 : vector<8x128xf32>
    %c0_363 = arith.constant 0 : index
    %c0_364 = arith.constant 0 : index
    %586 = vector.load %arg13[%c0_363, %c0_364] : memref<8x128xf32, #tpu.memory_space<vmem>>, vector<8x128xf32>
    tpu.vector_store %arg13[%c0_363, %c0_364], %583 {strides = array<i32>} : memref<8x128xf32, #tpu.memory_space<vmem>>, vector<8x128xf32>,
    %c0_365 = arith.constant 0 : index
    %c0_366 = arith.constant 0 : index
    %587 = vector.load %arg12[%c0_365, %c0_366] : memref<8x128xf32, #tpu.memory_space<vmem>>, vector<8x128xf32>
    tpu.vector_store %arg12[%c0_365, %c0_366], %585 {strides = array<i32>} : memref<8x128xf32, #tpu.memory_space<vmem>>, vector<8x128xf32>,
    %c0_367 = arith.constant 0 : index
    %c128_368 = arith.constant 128 : index
    %588 = vector.load %arg14[%c0_367, %c128_368] : memref<8x256xf32, #tpu.memory_space<vmem>>, vector<8x128xf32>
    tpu.vector_store %arg14[%c0_367, %c128_368], %585 {strides = array<i32>} : memref<8x256xf32, #tpu.memory_space<vmem>>, vector<8x128xf32>,
    %c0_369 = arith.constant 0 : index
    %c0_370 = arith.constant 0 : index
    %589 = vector.load %arg9[%c0_369, %c0_370] : memref<128x128xf32, #tpu.memory_space<vmem>>, vector<128x128xf32>
    %cst_371 = arith.constant dense<0.000000e+00> : vector<8x128xf32>
    %590 = tpu.matmul %585, %589, %cst_371 {dimension_numbers = #tpu.dot_dimension_numbers<[1], [0], [0], [1], [0, 0, 1, 1], [], []>} : vector<8x128xf32>, vector<128x128xf32>, vector<8x128xf32> -> vector<8x128xf32>
    %c0_372 = arith.constant 0 : index
    %c0_373 = arith.constant 0 : index
    %591 = vector.load %arg10[%c0_372, %c0_373] : memref<1x128xf32, #tpu.memory_space<vmem>>, vector<1x128xf32>
    %592 = vector.broadcast %591 : vector<1x128xf32> to vector<8x128xf32>
    %593 = arith.addf %590, %592 : vector<8x128xf32>
    %594 = arith.index_cast %c3_i32_345 : i32 to index
    %c0_374 = arith.constant 0 : index
    %c0_375 = arith.constant 0 : index
    %595 = vector.load %arg11[%594, %c0_374, %c0_375] : memref<7x8x128xf32, #tpu.memory_space<vmem>>, vector<1x8x128xf32>
    %596 = vector.shape_cast %595 : vector<1x8x128xf32> to vector<8x128xf32>
    %597 = vector.shape_cast %593 : vector<8x128xf32> to vector<1x8x128xf32>
    tpu.vector_store %arg11[%594, %c0_374, %c0_375], %597 {strides = array<i32>} : memref<7x8x128xf32, #tpu.memory_space<vmem>>, vector<1x8x128xf32>,
    %598 = arith.index_cast %c3_i32_345 : i32 to index
    %599 = memref.load %arg2[%598] : memref<7xi32, #tpu.memory_space<smem>>
    %c0_i32_376 = arith.constant 0 : i32
    %600 = arith.cmpi sgt, %599, %c0_i32_376 : i32
    %601 = arith.extui %600 : i1 to i32
    %c0_i32_377 = arith.constant 0 : i32
    %602 = arith.cmpi ne, %601, %c0_i32_377 : i32
    scf.if %602 {
      %c1_i32_486 = arith.constant 1 : i32
      %755 = arith.addi %c3_i32_345, %c1_i32_486 : i32
      %cst_487 = arith.constant 0.000000e+00 : f32
      %756 = vector.broadcast %cst_487 : f32 to vector<8x128xf32>
      %c0_488 = arith.constant 0 : index
      %757 = arith.index_cast %755 : i32 to index
      %758 = memref.load %arg1[%c0_488, %757] : memref<2x8xi32, #tpu.memory_space<smem>>
      %c0_i32_489 = arith.constant 0 : i32
      %759 = vector.broadcast %c0_i32_489 : i32 to vector<8x128xi32>
      %760 = arith.cmpi eq, %1, %759 : vector<8x128xi32>
      %761 = vector.broadcast %758 : i32 to vector<8x128xi32>
      %762 = arith.cmpi eq, %0, %761 : vector<8x128xi32>
      %763 = arith.andi %760, %762 : vector<8x128xi1>
      %cst_490 = arith.constant 1.000000e+00 : f32
      %764 = vector.broadcast %cst_490 : f32 to vector<8x128xf32>
      %765 = arith.select %763, %764, %756 : vector<8x128xi1>, vector<8x128xf32>
      %c1_491 = arith.constant 1 : index
      %766 = arith.index_cast %755 : i32 to index
      %767 = memref.load %arg1[%c1_491, %766] : memref<2x8xi32, #tpu.memory_space<smem>>
      %c1_i32_492 = arith.constant 1 : i32
      %768 = vector.broadcast %c1_i32_492 : i32 to vector<8x128xi32>
      %769 = arith.cmpi eq, %1, %768 : vector<8x128xi32>
      %770 = vector.broadcast %767 : i32 to vector<8x128xi32>
      %771 = arith.cmpi eq, %0, %770 : vector<8x128xi32>
      %772 = arith.andi %769, %771 : vector<8x128xi1>
      %cst_493 = arith.constant 1.000000e+00 : f32
      %773 = vector.broadcast %cst_493 : f32 to vector<8x128xf32>
      %774 = arith.select %772, %773, %765 : vector<8x128xi1>, vector<8x128xf32>
      %c0_494 = arith.constant 0 : index
      %c0_495 = arith.constant 0 : index
      %775 = vector.load %arg15[%c0_494, %c0_495] : memref<8x128xf32, #tpu.memory_space<vmem>>, vector<8x128xf32>
      tpu.vector_store %arg15[%c0_494, %c0_495], %774 {strides = array<i32>} : memref<8x128xf32, #tpu.memory_space<vmem>>, vector<8x128xf32>,
    } else {
    }
    %603 = arith.index_cast %c3_i32_345 : i32 to index
    %604 = memref.load %arg2[%603] : memref<7xi32, #tpu.memory_space<smem>>
    %c0_i32_378 = arith.constant 0 : i32
    %605 = arith.cmpi eq, %604, %c0_i32_378 : i32
    %606 = arith.extui %605 : i1 to i32
    %c0_i32_379 = arith.constant 0 : i32
    %607 = arith.cmpi ne, %606, %c0_i32_379 : i32
    scf.if %607 {
      %c16_i32 = arith.constant 16 : i32
      %755 = vector.broadcast %c16_i32 : i32 to vector<8x128xi32>
      %756 = arith.cmpi slt, %0, %755 : vector<8x128xi32>
      %cst_486 = arith.constant -1.000000e+30 : f32
      %757 = vector.broadcast %cst_486 : f32 to vector<8x128xf32>
      %758 = arith.select %756, %593, %757 : vector<8x128xi1>, vector<8x128xf32>
      %cst_487 = arith.constant dense<0xFF800000> : vector<8xf32>
      %759 = vector.multi_reduction <maximumf>, %758, %cst_487 [1] : vector<8x128xf32> to vector<8xf32>
      %760 = vector.shape_cast %759 : vector<8xf32> to vector<8x1xf32>
      %761 = vector.broadcast %760 : vector<8x1xf32> to vector<8x128xf32>
      %762 = arith.cmpf oeq, %758, %761 : vector<8x128xf32>
      %c128_i32 = arith.constant 128 : i32
      %763 = vector.broadcast %c128_i32 : i32 to vector<8x128xi32>
      %764 = arith.select %762, %0, %763 : vector<8x128xi1>, vector<8x128xi32>
      %cst_488 = arith.constant dense<2147483647> : vector<8xi32>
      %765 = vector.multi_reduction <minsi>, %764, %cst_488 [1] : vector<8x128xi32> to vector<8xi32>
      %766 = vector.shape_cast %765 : vector<8xi32> to vector<8x1xi32>
      %767 = vector.broadcast %766 : vector<8x1xi32> to vector<8x128xi32>
      %768 = arith.cmpi eq, %0, %767 : vector<8x128xi32>
      %769 = arith.extui %768 : vector<8x128xi1> to vector<8x128xi32>
      %770 = arith.sitofp %769 : vector<8x128xi32> to vector<8x128xf32>
      %c0_489 = arith.constant 0 : index
      %c0_490 = arith.constant 0 : index
      %771 = vector.load %arg15[%c0_489, %c0_490] : memref<8x128xf32, #tpu.memory_space<vmem>>, vector<8x128xf32>
      tpu.vector_store %arg15[%c0_489, %c0_490], %770 {strides = array<i32>} : memref<8x128xf32, #tpu.memory_space<vmem>>, vector<8x128xf32>,
    } else {
    }
    %c4_i32_380 = arith.constant 4 : i32
    %c0_381 = arith.constant 0 : index
    %c0_382 = arith.constant 0 : index
    %608 = vector.load %arg15[%c0_381, %c0_382] : memref<8x128xf32, #tpu.memory_space<vmem>>, vector<8x128xf32>
    %c0_383 = arith.constant 0 : index
    %c0_384 = arith.constant 0 : index
    %609 = vector.load %arg6[%c0_383, %c0_384] : memref<128x128xf32, #tpu.memory_space<vmem>>, vector<128x128xf32>
    %cst_385 = arith.constant dense<0.000000e+00> : vector<8x128xf32>
    %610 = tpu.matmul %608, %609, %cst_385 {dimension_numbers = #tpu.dot_dimension_numbers<[1], [0], [0], [1], [0, 0, 1, 1], [], []>} : vector<8x128xf32>, vector<128x128xf32>, vector<8x128xf32> -> vector<8x128xf32>
    %c0_386 = arith.constant 0 : index
    %c0_387 = arith.constant 0 : index
    %611 = vector.load %arg14[%c0_386, %c0_387] : memref<8x256xf32, #tpu.memory_space<vmem>>, vector<8x128xf32>
    tpu.vector_store %arg14[%c0_386, %c0_387], %610 {strides = array<i32>} : memref<8x256xf32, #tpu.memory_space<vmem>>, vector<8x128xf32>,
    %c0_388 = arith.constant 0 : index
    %c0_389 = arith.constant 0 : index
    %612 = vector.load %arg14[%c0_388, %c0_389] : memref<8x256xf32, #tpu.memory_space<vmem>>, vector<8x256xf32>
    %c0_390 = arith.constant 0 : index
    %c0_391 = arith.constant 0 : index
    %613 = vector.load %arg7[%c0_390, %c0_391] : memref<256x512xf32, #tpu.memory_space<vmem>>, vector<256x512xf32>
    %cst_392 = arith.constant dense<0.000000e+00> : vector<8x512xf32>
    %614 = tpu.matmul %612, %613, %cst_392 {dimension_numbers = #tpu.dot_dimension_numbers<[1], [0], [0], [1], [0, 0, 1, 1], [], []>} : vector<8x256xf32>, vector<256x512xf32>, vector<8x512xf32> -> vector<8x512xf32>
    %c0_393 = arith.constant 0 : index
    %c0_394 = arith.constant 0 : index
    %615 = vector.load %arg8[%c0_393, %c0_394] : memref<1x512xf32, #tpu.memory_space<vmem>>, vector<1x512xf32>
    %616 = vector.broadcast %615 : vector<1x512xf32> to vector<8x512xf32>
    %617 = arith.addf %614, %616 : vector<8x512xf32>
    %618 = vector.extract_strided_slice %617 {offsets = [0, 0], sizes = [8, 384], strides = [1, 1]} : vector<8x512xf32> to vector<8x384xf32>
    %619 = arith.negf %618 : vector<8x384xf32>
    %620 = math.exp %619 : vector<8x384xf32>
    %cst_395 = arith.constant 1.000000e+00 : f32
    %621 = vector.broadcast %cst_395 : f32 to vector<8x384xf32>
    %622 = arith.addf %621, %620 : vector<8x384xf32>
    %623 = arith.divf %621, %622 : vector<8x384xf32>
    %624 = vector.extract_strided_slice %623 {offsets = [0, 0], sizes = [8, 128], strides = [1, 1]} : vector<8x384xf32> to vector<8x128xf32>
    %625 = vector.extract_strided_slice %623 {offsets = [0, 128], sizes = [8, 128], strides = [1, 1]} : vector<8x384xf32> to vector<8x128xf32>
    %626 = vector.extract_strided_slice %623 {offsets = [0, 256], sizes = [8, 128], strides = [1, 1]} : vector<8x384xf32> to vector<8x128xf32>
    %627 = vector.extract_strided_slice %617 {offsets = [0, 384], sizes = [8, 128], strides = [1, 1]} : vector<8x512xf32> to vector<8x128xf32>
    %628 = math.tanh %627 : vector<8x128xf32>
    %c0_396 = arith.constant 0 : index
    %c0_397 = arith.constant 0 : index
    %629 = vector.load %arg13[%c0_396, %c0_397] : memref<8x128xf32, #tpu.memory_space<vmem>>, vector<8x128xf32>
    %630 = arith.mulf %625, %629 : vector<8x128xf32>
    %631 = arith.mulf %624, %628 : vector<8x128xf32>
    %632 = arith.addf %630, %631 : vector<8x128xf32>
    %633 = math.tanh %632 : vector<8x128xf32>
    %634 = arith.mulf %626, %633 : vector<8x128xf32>
    %c0_398 = arith.constant 0 : index
    %c0_399 = arith.constant 0 : index
    %635 = vector.load %arg13[%c0_398, %c0_399] : memref<8x128xf32, #tpu.memory_space<vmem>>, vector<8x128xf32>
    tpu.vector_store %arg13[%c0_398, %c0_399], %632 {strides = array<i32>} : memref<8x128xf32, #tpu.memory_space<vmem>>, vector<8x128xf32>,
    %c0_400 = arith.constant 0 : index
    %c0_401 = arith.constant 0 : index
    %636 = vector.load %arg12[%c0_400, %c0_401] : memref<8x128xf32, #tpu.memory_space<vmem>>, vector<8x128xf32>
    tpu.vector_store %arg12[%c0_400, %c0_401], %634 {strides = array<i32>} : memref<8x128xf32, #tpu.memory_space<vmem>>, vector<8x128xf32>,
    %c0_402 = arith.constant 0 : index
    %c128_403 = arith.constant 128 : index
    %637 = vector.load %arg14[%c0_402, %c128_403] : memref<8x256xf32, #tpu.memory_space<vmem>>, vector<8x128xf32>
    tpu.vector_store %arg14[%c0_402, %c128_403], %634 {strides = array<i32>} : memref<8x256xf32, #tpu.memory_space<vmem>>, vector<8x128xf32>,
    %c0_404 = arith.constant 0 : index
    %c0_405 = arith.constant 0 : index
    %638 = vector.load %arg9[%c0_404, %c0_405] : memref<128x128xf32, #tpu.memory_space<vmem>>, vector<128x128xf32>
    %cst_406 = arith.constant dense<0.000000e+00> : vector<8x128xf32>
    %639 = tpu.matmul %634, %638, %cst_406 {dimension_numbers = #tpu.dot_dimension_numbers<[1], [0], [0], [1], [0, 0, 1, 1], [], []>} : vector<8x128xf32>, vector<128x128xf32>, vector<8x128xf32> -> vector<8x128xf32>
    %c0_407 = arith.constant 0 : index
    %c0_408 = arith.constant 0 : index
    %640 = vector.load %arg10[%c0_407, %c0_408] : memref<1x128xf32, #tpu.memory_space<vmem>>, vector<1x128xf32>
    %641 = vector.broadcast %640 : vector<1x128xf32> to vector<8x128xf32>
    %642 = arith.addf %639, %641 : vector<8x128xf32>
    %643 = arith.index_cast %c4_i32_380 : i32 to index
    %c0_409 = arith.constant 0 : index
    %c0_410 = arith.constant 0 : index
    %644 = vector.load %arg11[%643, %c0_409, %c0_410] : memref<7x8x128xf32, #tpu.memory_space<vmem>>, vector<1x8x128xf32>
    %645 = vector.shape_cast %644 : vector<1x8x128xf32> to vector<8x128xf32>
    %646 = vector.shape_cast %642 : vector<8x128xf32> to vector<1x8x128xf32>
    tpu.vector_store %arg11[%643, %c0_409, %c0_410], %646 {strides = array<i32>} : memref<7x8x128xf32, #tpu.memory_space<vmem>>, vector<1x8x128xf32>,
    %647 = arith.index_cast %c4_i32_380 : i32 to index
    %648 = memref.load %arg2[%647] : memref<7xi32, #tpu.memory_space<smem>>
    %c0_i32_411 = arith.constant 0 : i32
    %649 = arith.cmpi sgt, %648, %c0_i32_411 : i32
    %650 = arith.extui %649 : i1 to i32
    %c0_i32_412 = arith.constant 0 : i32
    %651 = arith.cmpi ne, %650, %c0_i32_412 : i32
    scf.if %651 {
      %c1_i32_486 = arith.constant 1 : i32
      %755 = arith.addi %c4_i32_380, %c1_i32_486 : i32
      %cst_487 = arith.constant 0.000000e+00 : f32
      %756 = vector.broadcast %cst_487 : f32 to vector<8x128xf32>
      %c0_488 = arith.constant 0 : index
      %757 = arith.index_cast %755 : i32 to index
      %758 = memref.load %arg1[%c0_488, %757] : memref<2x8xi32, #tpu.memory_space<smem>>
      %c0_i32_489 = arith.constant 0 : i32
      %759 = vector.broadcast %c0_i32_489 : i32 to vector<8x128xi32>
      %760 = arith.cmpi eq, %1, %759 : vector<8x128xi32>
      %761 = vector.broadcast %758 : i32 to vector<8x128xi32>
      %762 = arith.cmpi eq, %0, %761 : vector<8x128xi32>
      %763 = arith.andi %760, %762 : vector<8x128xi1>
      %cst_490 = arith.constant 1.000000e+00 : f32
      %764 = vector.broadcast %cst_490 : f32 to vector<8x128xf32>
      %765 = arith.select %763, %764, %756 : vector<8x128xi1>, vector<8x128xf32>
      %c1_491 = arith.constant 1 : index
      %766 = arith.index_cast %755 : i32 to index
      %767 = memref.load %arg1[%c1_491, %766] : memref<2x8xi32, #tpu.memory_space<smem>>
      %c1_i32_492 = arith.constant 1 : i32
      %768 = vector.broadcast %c1_i32_492 : i32 to vector<8x128xi32>
      %769 = arith.cmpi eq, %1, %768 : vector<8x128xi32>
      %770 = vector.broadcast %767 : i32 to vector<8x128xi32>
      %771 = arith.cmpi eq, %0, %770 : vector<8x128xi32>
      %772 = arith.andi %769, %771 : vector<8x128xi1>
      %cst_493 = arith.constant 1.000000e+00 : f32
      %773 = vector.broadcast %cst_493 : f32 to vector<8x128xf32>
      %774 = arith.select %772, %773, %765 : vector<8x128xi1>, vector<8x128xf32>
      %c0_494 = arith.constant 0 : index
      %c0_495 = arith.constant 0 : index
      %775 = vector.load %arg15[%c0_494, %c0_495] : memref<8x128xf32, #tpu.memory_space<vmem>>, vector<8x128xf32>
      tpu.vector_store %arg15[%c0_494, %c0_495], %774 {strides = array<i32>} : memref<8x128xf32, #tpu.memory_space<vmem>>, vector<8x128xf32>,
    } else {
    }
    %652 = arith.index_cast %c4_i32_380 : i32 to index
    %653 = memref.load %arg2[%652] : memref<7xi32, #tpu.memory_space<smem>>
    %c0_i32_413 = arith.constant 0 : i32
    %654 = arith.cmpi eq, %653, %c0_i32_413 : i32
    %655 = arith.extui %654 : i1 to i32
    %c0_i32_414 = arith.constant 0 : i32
    %656 = arith.cmpi ne, %655, %c0_i32_414 : i32
    scf.if %656 {
      %c16_i32 = arith.constant 16 : i32
      %755 = vector.broadcast %c16_i32 : i32 to vector<8x128xi32>
      %756 = arith.cmpi slt, %0, %755 : vector<8x128xi32>
      %cst_486 = arith.constant -1.000000e+30 : f32
      %757 = vector.broadcast %cst_486 : f32 to vector<8x128xf32>
      %758 = arith.select %756, %642, %757 : vector<8x128xi1>, vector<8x128xf32>
      %cst_487 = arith.constant dense<0xFF800000> : vector<8xf32>
      %759 = vector.multi_reduction <maximumf>, %758, %cst_487 [1] : vector<8x128xf32> to vector<8xf32>
      %760 = vector.shape_cast %759 : vector<8xf32> to vector<8x1xf32>
      %761 = vector.broadcast %760 : vector<8x1xf32> to vector<8x128xf32>
      %762 = arith.cmpf oeq, %758, %761 : vector<8x128xf32>
      %c128_i32 = arith.constant 128 : i32
      %763 = vector.broadcast %c128_i32 : i32 to vector<8x128xi32>
      %764 = arith.select %762, %0, %763 : vector<8x128xi1>, vector<8x128xi32>
      %cst_488 = arith.constant dense<2147483647> : vector<8xi32>
      %765 = vector.multi_reduction <minsi>, %764, %cst_488 [1] : vector<8x128xi32> to vector<8xi32>
      %766 = vector.shape_cast %765 : vector<8xi32> to vector<8x1xi32>
      %767 = vector.broadcast %766 : vector<8x1xi32> to vector<8x128xi32>
      %768 = arith.cmpi eq, %0, %767 : vector<8x128xi32>
      %769 = arith.extui %768 : vector<8x128xi1> to vector<8x128xi32>
      %770 = arith.sitofp %769 : vector<8x128xi32> to vector<8x128xf32>
      %c0_489 = arith.constant 0 : index
      %c0_490 = arith.constant 0 : index
      %771 = vector.load %arg15[%c0_489, %c0_490] : memref<8x128xf32, #tpu.memory_space<vmem>>, vector<8x128xf32>
      tpu.vector_store %arg15[%c0_489, %c0_490], %770 {strides = array<i32>} : memref<8x128xf32, #tpu.memory_space<vmem>>, vector<8x128xf32>,
    } else {
    }
    %c5_i32_415 = arith.constant 5 : i32
    %c0_416 = arith.constant 0 : index
    %c0_417 = arith.constant 0 : index
    %657 = vector.load %arg15[%c0_416, %c0_417] : memref<8x128xf32, #tpu.memory_space<vmem>>, vector<8x128xf32>
    %c0_418 = arith.constant 0 : index
    %c0_419 = arith.constant 0 : index
    %658 = vector.load %arg6[%c0_418, %c0_419] : memref<128x128xf32, #tpu.memory_space<vmem>>, vector<128x128xf32>
    %cst_420 = arith.constant dense<0.000000e+00> : vector<8x128xf32>
    %659 = tpu.matmul %657, %658, %cst_420 {dimension_numbers = #tpu.dot_dimension_numbers<[1], [0], [0], [1], [0, 0, 1, 1], [], []>} : vector<8x128xf32>, vector<128x128xf32>, vector<8x128xf32> -> vector<8x128xf32>
    %c0_421 = arith.constant 0 : index
    %c0_422 = arith.constant 0 : index
    %660 = vector.load %arg14[%c0_421, %c0_422] : memref<8x256xf32, #tpu.memory_space<vmem>>, vector<8x128xf32>
    tpu.vector_store %arg14[%c0_421, %c0_422], %659 {strides = array<i32>} : memref<8x256xf32, #tpu.memory_space<vmem>>, vector<8x128xf32>,
    %c0_423 = arith.constant 0 : index
    %c0_424 = arith.constant 0 : index
    %661 = vector.load %arg14[%c0_423, %c0_424] : memref<8x256xf32, #tpu.memory_space<vmem>>, vector<8x256xf32>
    %c0_425 = arith.constant 0 : index
    %c0_426 = arith.constant 0 : index
    %662 = vector.load %arg7[%c0_425, %c0_426] : memref<256x512xf32, #tpu.memory_space<vmem>>, vector<256x512xf32>
    %cst_427 = arith.constant dense<0.000000e+00> : vector<8x512xf32>
    %663 = tpu.matmul %661, %662, %cst_427 {dimension_numbers = #tpu.dot_dimension_numbers<[1], [0], [0], [1], [0, 0, 1, 1], [], []>} : vector<8x256xf32>, vector<256x512xf32>, vector<8x512xf32> -> vector<8x512xf32>
    %c0_428 = arith.constant 0 : index
    %c0_429 = arith.constant 0 : index
    %664 = vector.load %arg8[%c0_428, %c0_429] : memref<1x512xf32, #tpu.memory_space<vmem>>, vector<1x512xf32>
    %665 = vector.broadcast %664 : vector<1x512xf32> to vector<8x512xf32>
    %666 = arith.addf %663, %665 : vector<8x512xf32>
    %667 = vector.extract_strided_slice %666 {offsets = [0, 0], sizes = [8, 384], strides = [1, 1]} : vector<8x512xf32> to vector<8x384xf32>
    %668 = arith.negf %667 : vector<8x384xf32>
    %669 = math.exp %668 : vector<8x384xf32>
    %cst_430 = arith.constant 1.000000e+00 : f32
    %670 = vector.broadcast %cst_430 : f32 to vector<8x384xf32>
    %671 = arith.addf %670, %669 : vector<8x384xf32>
    %672 = arith.divf %670, %671 : vector<8x384xf32>
    %673 = vector.extract_strided_slice %672 {offsets = [0, 0], sizes = [8, 128], strides = [1, 1]} : vector<8x384xf32> to vector<8x128xf32>
    %674 = vector.extract_strided_slice %672 {offsets = [0, 128], sizes = [8, 128], strides = [1, 1]} : vector<8x384xf32> to vector<8x128xf32>
    %675 = vector.extract_strided_slice %672 {offsets = [0, 256], sizes = [8, 128], strides = [1, 1]} : vector<8x384xf32> to vector<8x128xf32>
    %676 = vector.extract_strided_slice %666 {offsets = [0, 384], sizes = [8, 128], strides = [1, 1]} : vector<8x512xf32> to vector<8x128xf32>
    %677 = math.tanh %676 : vector<8x128xf32>
    %c0_431 = arith.constant 0 : index
    %c0_432 = arith.constant 0 : index
    %678 = vector.load %arg13[%c0_431, %c0_432] : memref<8x128xf32, #tpu.memory_space<vmem>>, vector<8x128xf32>
    %679 = arith.mulf %674, %678 : vector<8x128xf32>
    %680 = arith.mulf %673, %677 : vector<8x128xf32>
    %681 = arith.addf %679, %680 : vector<8x128xf32>
    %682 = math.tanh %681 : vector<8x128xf32>
    %683 = arith.mulf %675, %682 : vector<8x128xf32>
    %c0_433 = arith.constant 0 : index
    %c0_434 = arith.constant 0 : index
    %684 = vector.load %arg13[%c0_433, %c0_434] : memref<8x128xf32, #tpu.memory_space<vmem>>, vector<8x128xf32>
    tpu.vector_store %arg13[%c0_433, %c0_434], %681 {strides = array<i32>} : memref<8x128xf32, #tpu.memory_space<vmem>>, vector<8x128xf32>,
    %c0_435 = arith.constant 0 : index
    %c0_436 = arith.constant 0 : index
    %685 = vector.load %arg12[%c0_435, %c0_436] : memref<8x128xf32, #tpu.memory_space<vmem>>, vector<8x128xf32>
    tpu.vector_store %arg12[%c0_435, %c0_436], %683 {strides = array<i32>} : memref<8x128xf32, #tpu.memory_space<vmem>>, vector<8x128xf32>,
    %c0_437 = arith.constant 0 : index
    %c128_438 = arith.constant 128 : index
    %686 = vector.load %arg14[%c0_437, %c128_438] : memref<8x256xf32, #tpu.memory_space<vmem>>, vector<8x128xf32>
    tpu.vector_store %arg14[%c0_437, %c128_438], %683 {strides = array<i32>} : memref<8x256xf32, #tpu.memory_space<vmem>>, vector<8x128xf32>,
    %c0_439 = arith.constant 0 : index
    %c0_440 = arith.constant 0 : index
    %687 = vector.load %arg9[%c0_439, %c0_440] : memref<128x128xf32, #tpu.memory_space<vmem>>, vector<128x128xf32>
    %cst_441 = arith.constant dense<0.000000e+00> : vector<8x128xf32>
    %688 = tpu.matmul %683, %687, %cst_441 {dimension_numbers = #tpu.dot_dimension_numbers<[1], [0], [0], [1], [0, 0, 1, 1], [], []>} : vector<8x128xf32>, vector<128x128xf32>, vector<8x128xf32> -> vector<8x128xf32>
    %c0_442 = arith.constant 0 : index
    %c0_443 = arith.constant 0 : index
    %689 = vector.load %arg10[%c0_442, %c0_443] : memref<1x128xf32, #tpu.memory_space<vmem>>, vector<1x128xf32>
    %690 = vector.broadcast %689 : vector<1x128xf32> to vector<8x128xf32>
    %691 = arith.addf %688, %690 : vector<8x128xf32>
    %692 = arith.index_cast %c5_i32_415 : i32 to index
    %c0_444 = arith.constant 0 : index
    %c0_445 = arith.constant 0 : index
    %693 = vector.load %arg11[%692, %c0_444, %c0_445] : memref<7x8x128xf32, #tpu.memory_space<vmem>>, vector<1x8x128xf32>
    %694 = vector.shape_cast %693 : vector<1x8x128xf32> to vector<8x128xf32>
    %695 = vector.shape_cast %691 : vector<8x128xf32> to vector<1x8x128xf32>
    tpu.vector_store %arg11[%692, %c0_444, %c0_445], %695 {strides = array<i32>} : memref<7x8x128xf32, #tpu.memory_space<vmem>>, vector<1x8x128xf32>,
    %696 = arith.index_cast %c5_i32_415 : i32 to index
    %697 = memref.load %arg2[%696] : memref<7xi32, #tpu.memory_space<smem>>
    %c0_i32_446 = arith.constant 0 : i32
    %698 = arith.cmpi sgt, %697, %c0_i32_446 : i32
    %699 = arith.extui %698 : i1 to i32
    %c0_i32_447 = arith.constant 0 : i32
    %700 = arith.cmpi ne, %699, %c0_i32_447 : i32
    scf.if %700 {
      %c1_i32_486 = arith.constant 1 : i32
      %755 = arith.addi %c5_i32_415, %c1_i32_486 : i32
      %cst_487 = arith.constant 0.000000e+00 : f32
      %756 = vector.broadcast %cst_487 : f32 to vector<8x128xf32>
      %c0_488 = arith.constant 0 : index
      %757 = arith.index_cast %755 : i32 to index
      %758 = memref.load %arg1[%c0_488, %757] : memref<2x8xi32, #tpu.memory_space<smem>>
      %c0_i32_489 = arith.constant 0 : i32
      %759 = vector.broadcast %c0_i32_489 : i32 to vector<8x128xi32>
      %760 = arith.cmpi eq, %1, %759 : vector<8x128xi32>
      %761 = vector.broadcast %758 : i32 to vector<8x128xi32>
      %762 = arith.cmpi eq, %0, %761 : vector<8x128xi32>
      %763 = arith.andi %760, %762 : vector<8x128xi1>
      %cst_490 = arith.constant 1.000000e+00 : f32
      %764 = vector.broadcast %cst_490 : f32 to vector<8x128xf32>
      %765 = arith.select %763, %764, %756 : vector<8x128xi1>, vector<8x128xf32>
      %c1_491 = arith.constant 1 : index
      %766 = arith.index_cast %755 : i32 to index
      %767 = memref.load %arg1[%c1_491, %766] : memref<2x8xi32, #tpu.memory_space<smem>>
      %c1_i32_492 = arith.constant 1 : i32
      %768 = vector.broadcast %c1_i32_492 : i32 to vector<8x128xi32>
      %769 = arith.cmpi eq, %1, %768 : vector<8x128xi32>
      %770 = vector.broadcast %767 : i32 to vector<8x128xi32>
      %771 = arith.cmpi eq, %0, %770 : vector<8x128xi32>
      %772 = arith.andi %769, %771 : vector<8x128xi1>
      %cst_493 = arith.constant 1.000000e+00 : f32
      %773 = vector.broadcast %cst_493 : f32 to vector<8x128xf32>
      %774 = arith.select %772, %773, %765 : vector<8x128xi1>, vector<8x128xf32>
      %c0_494 = arith.constant 0 : index
      %c0_495 = arith.constant 0 : index
      %775 = vector.load %arg15[%c0_494, %c0_495] : memref<8x128xf32, #tpu.memory_space<vmem>>, vector<8x128xf32>
      tpu.vector_store %arg15[%c0_494, %c0_495], %774 {strides = array<i32>} : memref<8x128xf32, #tpu.memory_space<vmem>>, vector<8x128xf32>,
    } else {
    }
    %701 = arith.index_cast %c5_i32_415 : i32 to index
    %702 = memref.load %arg2[%701] : memref<7xi32, #tpu.memory_space<smem>>
    %c0_i32_448 = arith.constant 0 : i32
    %703 = arith.cmpi eq, %702, %c0_i32_448 : i32
    %704 = arith.extui %703 : i1 to i32
    %c0_i32_449 = arith.constant 0 : i32
    %705 = arith.cmpi ne, %704, %c0_i32_449 : i32
    scf.if %705 {
      %c16_i32 = arith.constant 16 : i32
      %755 = vector.broadcast %c16_i32 : i32 to vector<8x128xi32>
      %756 = arith.cmpi slt, %0, %755 : vector<8x128xi32>
      %cst_486 = arith.constant -1.000000e+30 : f32
      %757 = vector.broadcast %cst_486 : f32 to vector<8x128xf32>
      %758 = arith.select %756, %691, %757 : vector<8x128xi1>, vector<8x128xf32>
      %cst_487 = arith.constant dense<0xFF800000> : vector<8xf32>
      %759 = vector.multi_reduction <maximumf>, %758, %cst_487 [1] : vector<8x128xf32> to vector<8xf32>
      %760 = vector.shape_cast %759 : vector<8xf32> to vector<8x1xf32>
      %761 = vector.broadcast %760 : vector<8x1xf32> to vector<8x128xf32>
      %762 = arith.cmpf oeq, %758, %761 : vector<8x128xf32>
      %c128_i32 = arith.constant 128 : i32
      %763 = vector.broadcast %c128_i32 : i32 to vector<8x128xi32>
      %764 = arith.select %762, %0, %763 : vector<8x128xi1>, vector<8x128xi32>
      %cst_488 = arith.constant dense<2147483647> : vector<8xi32>
      %765 = vector.multi_reduction <minsi>, %764, %cst_488 [1] : vector<8x128xi32> to vector<8xi32>
      %766 = vector.shape_cast %765 : vector<8xi32> to vector<8x1xi32>
      %767 = vector.broadcast %766 : vector<8x1xi32> to vector<8x128xi32>
      %768 = arith.cmpi eq, %0, %767 : vector<8x128xi32>
      %769 = arith.extui %768 : vector<8x128xi1> to vector<8x128xi32>
      %770 = arith.sitofp %769 : vector<8x128xi32> to vector<8x128xf32>
      %c0_489 = arith.constant 0 : index
      %c0_490 = arith.constant 0 : index
      %771 = vector.load %arg15[%c0_489, %c0_490] : memref<8x128xf32, #tpu.memory_space<vmem>>, vector<8x128xf32>
      tpu.vector_store %arg15[%c0_489, %c0_490], %770 {strides = array<i32>} : memref<8x128xf32, #tpu.memory_space<vmem>>, vector<8x128xf32>,
    } else {
    }
    %c6_i32_450 = arith.constant 6 : i32
    %c0_451 = arith.constant 0 : index
    %c0_452 = arith.constant 0 : index
    %706 = vector.load %arg15[%c0_451, %c0_452] : memref<8x128xf32, #tpu.memory_space<vmem>>, vector<8x128xf32>
    %c0_453 = arith.constant 0 : index
    %c0_454 = arith.constant 0 : index
    %707 = vector.load %arg6[%c0_453, %c0_454] : memref<128x128xf32, #tpu.memory_space<vmem>>, vector<128x128xf32>
    %cst_455 = arith.constant dense<0.000000e+00> : vector<8x128xf32>
    %708 = tpu.matmul %706, %707, %cst_455 {dimension_numbers = #tpu.dot_dimension_numbers<[1], [0], [0], [1], [0, 0, 1, 1], [], []>} : vector<8x128xf32>, vector<128x128xf32>, vector<8x128xf32> -> vector<8x128xf32>
    %c0_456 = arith.constant 0 : index
    %c0_457 = arith.constant 0 : index
    %709 = vector.load %arg14[%c0_456, %c0_457] : memref<8x256xf32, #tpu.memory_space<vmem>>, vector<8x128xf32>
    tpu.vector_store %arg14[%c0_456, %c0_457], %708 {strides = array<i32>} : memref<8x256xf32, #tpu.memory_space<vmem>>, vector<8x128xf32>,
    %c0_458 = arith.constant 0 : index
    %c0_459 = arith.constant 0 : index
    %710 = vector.load %arg14[%c0_458, %c0_459] : memref<8x256xf32, #tpu.memory_space<vmem>>, vector<8x256xf32>
    %c0_460 = arith.constant 0 : index
    %c0_461 = arith.constant 0 : index
    %711 = vector.load %arg7[%c0_460, %c0_461] : memref<256x512xf32, #tpu.memory_space<vmem>>, vector<256x512xf32>
    %cst_462 = arith.constant dense<0.000000e+00> : vector<8x512xf32>
    %712 = tpu.matmul %710, %711, %cst_462 {dimension_numbers = #tpu.dot_dimension_numbers<[1], [0], [0], [1], [0, 0, 1, 1], [], []>} : vector<8x256xf32>, vector<256x512xf32>, vector<8x512xf32> -> vector<8x512xf32>
    %c0_463 = arith.constant 0 : index
    %c0_464 = arith.constant 0 : index
    %713 = vector.load %arg8[%c0_463, %c0_464] : memref<1x512xf32, #tpu.memory_space<vmem>>, vector<1x512xf32>
    %714 = vector.broadcast %713 : vector<1x512xf32> to vector<8x512xf32>
    %715 = arith.addf %712, %714 : vector<8x512xf32>
    %716 = vector.extract_strided_slice %715 {offsets = [0, 0], sizes = [8, 384], strides = [1, 1]} : vector<8x512xf32> to vector<8x384xf32>
    %717 = arith.negf %716 : vector<8x384xf32>
    %718 = math.exp %717 : vector<8x384xf32>
    %cst_465 = arith.constant 1.000000e+00 : f32
    %719 = vector.broadcast %cst_465 : f32 to vector<8x384xf32>
    %720 = arith.addf %719, %718 : vector<8x384xf32>
    %721 = arith.divf %719, %720 : vector<8x384xf32>
    %722 = vector.extract_strided_slice %721 {offsets = [0, 0], sizes = [8, 128], strides = [1, 1]} : vector<8x384xf32> to vector<8x128xf32>
    %723 = vector.extract_strided_slice %721 {offsets = [0, 128], sizes = [8, 128], strides = [1, 1]} : vector<8x384xf32> to vector<8x128xf32>
    %724 = vector.extract_strided_slice %721 {offsets = [0, 256], sizes = [8, 128], strides = [1, 1]} : vector<8x384xf32> to vector<8x128xf32>
    %725 = vector.extract_strided_slice %715 {offsets = [0, 384], sizes = [8, 128], strides = [1, 1]} : vector<8x512xf32> to vector<8x128xf32>
    %726 = math.tanh %725 : vector<8x128xf32>
    %c0_466 = arith.constant 0 : index
    %c0_467 = arith.constant 0 : index
    %727 = vector.load %arg13[%c0_466, %c0_467] : memref<8x128xf32, #tpu.memory_space<vmem>>, vector<8x128xf32>
    %728 = arith.mulf %723, %727 : vector<8x128xf32>
    %729 = arith.mulf %722, %726 : vector<8x128xf32>
    %730 = arith.addf %728, %729 : vector<8x128xf32>
    %731 = math.tanh %730 : vector<8x128xf32>
    %732 = arith.mulf %724, %731 : vector<8x128xf32>
    %c0_468 = arith.constant 0 : index
    %c0_469 = arith.constant 0 : index
    %733 = vector.load %arg13[%c0_468, %c0_469] : memref<8x128xf32, #tpu.memory_space<vmem>>, vector<8x128xf32>
    tpu.vector_store %arg13[%c0_468, %c0_469], %730 {strides = array<i32>} : memref<8x128xf32, #tpu.memory_space<vmem>>, vector<8x128xf32>,
    %c0_470 = arith.constant 0 : index
    %c0_471 = arith.constant 0 : index
    %734 = vector.load %arg12[%c0_470, %c0_471] : memref<8x128xf32, #tpu.memory_space<vmem>>, vector<8x128xf32>
    tpu.vector_store %arg12[%c0_470, %c0_471], %732 {strides = array<i32>} : memref<8x128xf32, #tpu.memory_space<vmem>>, vector<8x128xf32>,
    %c0_472 = arith.constant 0 : index
    %c128_473 = arith.constant 128 : index
    %735 = vector.load %arg14[%c0_472, %c128_473] : memref<8x256xf32, #tpu.memory_space<vmem>>, vector<8x128xf32>
    tpu.vector_store %arg14[%c0_472, %c128_473], %732 {strides = array<i32>} : memref<8x256xf32, #tpu.memory_space<vmem>>, vector<8x128xf32>,
    %c0_474 = arith.constant 0 : index
    %c0_475 = arith.constant 0 : index
    %736 = vector.load %arg9[%c0_474, %c0_475] : memref<128x128xf32, #tpu.memory_space<vmem>>, vector<128x128xf32>
    %cst_476 = arith.constant dense<0.000000e+00> : vector<8x128xf32>
    %737 = tpu.matmul %732, %736, %cst_476 {dimension_numbers = #tpu.dot_dimension_numbers<[1], [0], [0], [1], [0, 0, 1, 1], [], []>} : vector<8x128xf32>, vector<128x128xf32>, vector<8x128xf32> -> vector<8x128xf32>
    %c0_477 = arith.constant 0 : index
    %c0_478 = arith.constant 0 : index
    %738 = vector.load %arg10[%c0_477, %c0_478] : memref<1x128xf32, #tpu.memory_space<vmem>>, vector<1x128xf32>
    %739 = vector.broadcast %738 : vector<1x128xf32> to vector<8x128xf32>
    %740 = arith.addf %737, %739 : vector<8x128xf32>
    %741 = arith.index_cast %c6_i32_450 : i32 to index
    %c0_479 = arith.constant 0 : index
    %c0_480 = arith.constant 0 : index
    %742 = vector.load %arg11[%741, %c0_479, %c0_480] : memref<7x8x128xf32, #tpu.memory_space<vmem>>, vector<1x8x128xf32>
    %743 = vector.shape_cast %742 : vector<1x8x128xf32> to vector<8x128xf32>
    %744 = vector.shape_cast %740 : vector<8x128xf32> to vector<1x8x128xf32>
    tpu.vector_store %arg11[%741, %c0_479, %c0_480], %744 {strides = array<i32>} : memref<7x8x128xf32, #tpu.memory_space<vmem>>, vector<1x8x128xf32>,
    %745 = arith.index_cast %c6_i32_450 : i32 to index
    %746 = memref.load %arg2[%745] : memref<7xi32, #tpu.memory_space<smem>>
    %c0_i32_481 = arith.constant 0 : i32
    %747 = arith.cmpi sgt, %746, %c0_i32_481 : i32
    %748 = arith.extui %747 : i1 to i32
    %c0_i32_482 = arith.constant 0 : i32
    %749 = arith.cmpi ne, %748, %c0_i32_482 : i32
    scf.if %749 {
      %c1_i32_486 = arith.constant 1 : i32
      %755 = arith.addi %c6_i32_450, %c1_i32_486 : i32
      %cst_487 = arith.constant 0.000000e+00 : f32
      %756 = vector.broadcast %cst_487 : f32 to vector<8x128xf32>
      %c0_488 = arith.constant 0 : index
      %757 = arith.index_cast %755 : i32 to index
      %758 = memref.load %arg1[%c0_488, %757] : memref<2x8xi32, #tpu.memory_space<smem>>
      %c0_i32_489 = arith.constant 0 : i32
      %759 = vector.broadcast %c0_i32_489 : i32 to vector<8x128xi32>
      %760 = arith.cmpi eq, %1, %759 : vector<8x128xi32>
      %761 = vector.broadcast %758 : i32 to vector<8x128xi32>
      %762 = arith.cmpi eq, %0, %761 : vector<8x128xi32>
      %763 = arith.andi %760, %762 : vector<8x128xi1>
      %cst_490 = arith.constant 1.000000e+00 : f32
      %764 = vector.broadcast %cst_490 : f32 to vector<8x128xf32>
      %765 = arith.select %763, %764, %756 : vector<8x128xi1>, vector<8x128xf32>
      %c1_491 = arith.constant 1 : index
      %766 = arith.index_cast %755 : i32 to index
      %767 = memref.load %arg1[%c1_491, %766] : memref<2x8xi32, #tpu.memory_space<smem>>
      %c1_i32_492 = arith.constant 1 : i32
      %768 = vector.broadcast %c1_i32_492 : i32 to vector<8x128xi32>
      %769 = arith.cmpi eq, %1, %768 : vector<8x128xi32>
      %770 = vector.broadcast %767 : i32 to vector<8x128xi32>
      %771 = arith.cmpi eq, %0, %770 : vector<8x128xi32>
      %772 = arith.andi %769, %771 : vector<8x128xi1>
      %cst_493 = arith.constant 1.000000e+00 : f32
      %773 = vector.broadcast %cst_493 : f32 to vector<8x128xf32>
      %774 = arith.select %772, %773, %765 : vector<8x128xi1>, vector<8x128xf32>
      %c0_494 = arith.constant 0 : index
      %c0_495 = arith.constant 0 : index
      %775 = vector.load %arg15[%c0_494, %c0_495] : memref<8x128xf32, #tpu.memory_space<vmem>>, vector<8x128xf32>
      tpu.vector_store %arg15[%c0_494, %c0_495], %774 {strides = array<i32>} : memref<8x128xf32, #tpu.memory_space<vmem>>, vector<8x128xf32>,
    } else {
    }
    %750 = arith.index_cast %c6_i32_450 : i32 to index
    %751 = memref.load %arg2[%750] : memref<7xi32, #tpu.memory_space<smem>>
    %c0_i32_483 = arith.constant 0 : i32
    %752 = arith.cmpi eq, %751, %c0_i32_483 : i32
    %753 = arith.extui %752 : i1 to i32
    %c0_i32_484 = arith.constant 0 : i32
    %754 = arith.cmpi ne, %753, %c0_i32_484 : i32
    scf.if %754 {
      %c16_i32 = arith.constant 16 : i32
      %755 = vector.broadcast %c16_i32 : i32 to vector<8x128xi32>
      %756 = arith.cmpi slt, %0, %755 : vector<8x128xi32>
      %cst_486 = arith.constant -1.000000e+30 : f32
      %757 = vector.broadcast %cst_486 : f32 to vector<8x128xf32>
      %758 = arith.select %756, %740, %757 : vector<8x128xi1>, vector<8x128xf32>
      %cst_487 = arith.constant dense<0xFF800000> : vector<8xf32>
      %759 = vector.multi_reduction <maximumf>, %758, %cst_487 [1] : vector<8x128xf32> to vector<8xf32>
      %760 = vector.shape_cast %759 : vector<8xf32> to vector<8x1xf32>
      %761 = vector.broadcast %760 : vector<8x1xf32> to vector<8x128xf32>
      %762 = arith.cmpf oeq, %758, %761 : vector<8x128xf32>
      %c128_i32 = arith.constant 128 : i32
      %763 = vector.broadcast %c128_i32 : i32 to vector<8x128xi32>
      %764 = arith.select %762, %0, %763 : vector<8x128xi1>, vector<8x128xi32>
      %cst_488 = arith.constant dense<2147483647> : vector<8xi32>
      %765 = vector.multi_reduction <minsi>, %764, %cst_488 [1] : vector<8x128xi32> to vector<8xi32>
      %766 = vector.shape_cast %765 : vector<8xi32> to vector<8x1xi32>
      %767 = vector.broadcast %766 : vector<8x1xi32> to vector<8x128xi32>
      %768 = arith.cmpi eq, %0, %767 : vector<8x128xi32>
      %769 = arith.extui %768 : vector<8x128xi1> to vector<8x128xi32>
      %770 = arith.sitofp %769 : vector<8x128xi32> to vector<8x128xf32>
      %c0_489 = arith.constant 0 : index
      %c0_490 = arith.constant 0 : index
      %771 = vector.load %arg15[%c0_489, %c0_490] : memref<8x128xf32, #tpu.memory_space<vmem>>, vector<8x128xf32>
      tpu.vector_store %arg15[%c0_489, %c0_490], %770 {strides = array<i32>} : memref<8x128xf32, #tpu.memory_space<vmem>>, vector<8x128xf32>,
    } else {
    }
    %c7_i32_485 = arith.constant 7 : i32
    return
  }
}

</mosaic_0001>

<llo_original>
// kernel: _seq2seq_core.1
$region0: #{_seq2seq_core.1}
  #allocation0 [shape = 'u32[]', space=smem, size = 0x4, offset = 0x4, fixed_abs, tag = 'smem constant byte address 0x4 - core index']
  #allocation1 [shape = 'u32[72,128]{1,0:T(1,128)}', space=vmem, size = 0x9000, scoped, tag = 'internal scratch']
  #allocation2 [shape = 'f32[8,128]{1,0:T(8,128)}', space=vmem, size = 0x1000, scoped, tag = 'scratch operand']
  #allocation3 [shape = 'f32[8,128]{1,0:T(8,128)}', space=vmem, size = 0x1000, scoped, tag = 'scratch operand']
  #allocation4 [shape = 'f32[8,256]{1,0:T(8,128)}', space=vmem, size = 0x2000, scoped, tag = 'scratch operand']
  #allocation5 [shape = 'f32[8,128]{1,0:T(8,128)}', space=vmem, size = 0x1000, scoped, tag = 'scratch operand']
  %s0 = inlined_call_operand.vmem [shape: s32[2,8], index: 0, kind: input, shape index: {}]
  %s1 = inlined_call_operand.vmem [shape: s32[2,8], index: 1, kind: input, shape index: {}]
  %s2 = inlined_call_operand.vmem [shape: s32[7], index: 2, kind: input, shape index: {}]
  %s3 = inlined_call_operand.vmem [shape: f32[128,128], index: 3, kind: input, shape index: {}]
  %s4 = inlined_call_operand.vmem [shape: f32[256,512], index: 4, kind: input, shape index: {}]
  %s5 = inlined_call_operand.vmem [shape: f32[1,512], index: 5, kind: input, shape index: {}]
  %s6 = inlined_call_operand.vmem [shape: f32[128,128], index: 6, kind: input, shape index: {}]
  %s7 = inlined_call_operand.vmem [shape: f32[256,512], index: 7, kind: input, shape index: {}]
  %s8 = inlined_call_operand.vmem [shape: f32[1,512], index: 8, kind: input, shape index: {}]
  %s9 = inlined_call_operand.vmem [shape: f32[128,128], index: 9, kind: input, shape index: {}]
  %s10 = inlined_call_operand.vmem [shape: f32[1,128], index: 10, kind: input, shape index: {}]
  %s11 = inlined_call_operand.vmem [shape: f32[7,8,128], index: 11, kind: output, shape index: {}]
  %s12 = sld [smem:[#allocation0]]
  $region122: #{_seq2seq_core.1} parent=0
    _
  %s14 = ssub.s32 1, %s12
  %s15 = scalar_select 0, %s14, %s12
  $region1: #{_seq2seq_core.1} parent=0
    #allocation6 [shape = 'u8[1024]{0}', space=smem, size = 0x400, scoped, tag = 'input window, operand 0, single buffered']
    #allocation7 [shape = 's32[1]{0}', space=sflag, size = 0x4, scoped, tag = 'scoped memory for _seq2seq_core.1']
    #allocation8 [shape = 'u8[1024]{0}', space=smem, size = 0x400, scoped, tag = 'input window, operand 1, single buffered']
    #allocation9 [shape = 's32[1]{0}', space=sflag, size = 0x4, scoped, tag = 'scoped memory for _seq2seq_core.1']
    #allocation10 [shape = 'u8[512]{0}', space=smem, size = 0x200, scoped, tag = 'input window, operand 2, single buffered']
    %16 = vsyncpa [#allocation7], 0
    %17 = vsyncpa [#allocation9], 0
    // Predicated region
    $region2: #{_seq2seq_core.1} parent=1 // pred_check
      _
    $region3: #{_seq2seq_core.1} parent=1 // pred_check_branch
      %19 = sbr.rel (0) target = $region5
    $region4: #{_seq2seq_core.1} parent=1 // pred_region
      %21 = vsyncadd [#allocation7], 0
      %s23 = sshll.u32 %s0, 4
      %s24 = int_to_ptr.vmem [resolvable:$true] %s23
      %26 = dma.vmem_to_smem %s24, 32, [#allocation6], [#allocation7]
    $region5: #{_seq2seq_core.1} parent=1 // pred_fallthru
      _
    // Predicated region
    $region6: #{_seq2seq_core.1} parent=1 // pred_check
      _
    $region7: #{_seq2seq_core.1} parent=1 // pred_check_branch
      %28 = sbr.rel (0) target = $region9
    $region8: #{_seq2seq_core.1} parent=1 // pred_region
      %30 = vsyncadd [#allocation9], 0
      %s32 = sshll.u32 %s1, 4
      %s33 = int_to_ptr.vmem [resolvable:$true] %s32
      %35 = dma.vmem_to_smem %s33, 32, [#allocation8], [#allocation9]
    $region9: #{_seq2seq_core.1} parent=1 // pred_fallthru
      _
    // Predicated region
    $region10: #{_seq2seq_core.1} parent=1 // pred_check
      _
    $region11: #{_seq2seq_core.1} parent=1 // pred_check_branch
      %37 = sbr.rel (0) target = $region13
    $region12: #{_seq2seq_core.1} parent=1 // pred_region
      %39 = vsyncadd [#allocation9], 0
      %s41 = sshll.u32 %s2, 4
      %s42 = int_to_ptr.vmem [resolvable:$true] %s41
      %44 = dma.vmem_to_smem %s42, 16, [#allocation10], [#allocation9]
    $region13: #{_seq2seq_core.1} parent=1 // pred_fallthru
      _
    // Predicated region
    $region14: #{_seq2seq_core.1} parent=1 // pred_check
      _
    $region15: #{_seq2seq_core.1} parent=1 // pred_check_branch
      %46 = sbr.rel (0) target = $region17
    $region16: #{_seq2seq_core.1} parent=1 // pred_region
      _
    $region17: #{_seq2seq_core.1} parent=1 // pred_fallthru
      _
    // Predicated region
    $region18: #{_seq2seq_core.1} parent=1 // pred_check
      _
    $region19: #{_seq2seq_core.1} parent=1 // pred_check_branch
      %48 = sbr.rel (0) target = $region21
    $region20: #{_seq2seq_core.1} parent=1 // pred_region
      _
    $region21: #{_seq2seq_core.1} parent=1 // pred_fallthru
      _
    // Predicated region
    $region22: #{_seq2seq_core.1} parent=1 // pred_check
      _
    $region23: #{_seq2seq_core.1} parent=1 // pred_check_branch
      %50 = sbr.rel (0) target = $region25
    $region24: #{_seq2seq_core.1} parent=1 // pred_region
      _
    $region25: #{_seq2seq_core.1} parent=1 // pred_fallthru
      _
    // Predicated region
    $region26: #{_seq2seq_core.1} parent=1 // pred_check
      _
    $region27: #{_seq2seq_core.1} parent=1 // pred_check_branch
      %52 = sbr.rel (0) target = $region29
    $region28: #{_seq2seq_core.1} parent=1 // pred_region
      _
    $region29: #{_seq2seq_core.1} parent=1 // pred_fallthru
      _
    // Predicated region
    $region30: #{_seq2seq_core.1} parent=1 // pred_check
      _
    $region31: #{_seq2seq_core.1} parent=1 // pred_check_branch
      %54 = sbr.rel (0) target = $region33
    $region32: #{_seq2seq_core.1} parent=1 // pred_region
      _
    $region33: #{_seq2seq_core.1} parent=1 // pred_fallthru
      _
    // Predicated region
    $region34: #{_seq2seq_core.1} parent=1 // pred_check
      _
    $region35: #{_seq2seq_core.1} parent=1 // pred_check_branch
      %56 = sbr.rel (0) target = $region37
    $region36: #{_seq2seq_core.1} parent=1 // pred_region
      _
    $region37: #{_seq2seq_core.1} parent=1 // pred_fallthru
      _
    // Predicated region
    $region38: #{_seq2seq_core.1} parent=1 // pred_check
      _
    $region39: #{_seq2seq_core.1} parent=1 // pred_check_branch
      %58 = sbr.rel (0) target = $region41
    $region40: #{_seq2seq_core.1} parent=1 // pred_region
      _
    $region41: #{_seq2seq_core.1} parent=1 // pred_fallthru
      _
    // Predicated region
    $region42: #{_seq2seq_core.1} parent=1 // pred_check
      _
    $region43: #{_seq2seq_core.1} parent=1 // pred_check_branch
      %60 = sbr.rel (0) target = $region45
    $region44: #{_seq2seq_core.1} parent=1 // pred_region
      _
    $region45: #{_seq2seq_core.1} parent=1 // pred_fallthru
      _
    // Predicated region
    $region46: #{_seq2seq_core.1} parent=1 // pred_check
      _
    $region47: #{_seq2seq_core.1} parent=1 // pred_check_branch
      %62 = sbr.rel (0) target = $region49
    $region48: #{_seq2seq_core.1} parent=1 // pred_region
      %64 = dma.done [#allocation7], 32
    $region49: #{_seq2seq_core.1} parent=1 // pred_fallthru
      _
    // Predicated region
    $region50: #{_seq2seq_core.1} parent=1 // pred_check
      _
    $region51: #{_seq2seq_core.1} parent=1 // pred_check_branch
      %66 = sbr.rel (0) target = $region53
    $region52: #{_seq2seq_core.1} parent=1 // pred_region
      %68 = dma.done [#allocation9], 32
    $region53: #{_seq2seq_core.1} parent=1 // pred_fallthru
      _
    // Predicated region
    $region54: #{_seq2seq_core.1} parent=1 // pred_check
      _
    $region55: #{_seq2seq_core.1} parent=1 // pred_check_branch
      %70 = sbr.rel (0) target = $region57
    $region56: #{_seq2seq_core.1} parent=1 // pred_region
      %72 = dma.done [#allocation9], 16
    $region57: #{_seq2seq_core.1} parent=1 // pred_fallthru
      _
    %73 = sfence
    %v74 = vlaneseq
    %v75 = vand.u32 %v74, 127
    %v76 = vlaneseq
    %v77 = vshrl.u32 %v76, 7
    %78 = vst [vmem:[#allocation2] sm:$0xff] 0.0
    %79 = vst [vmem:[#allocation3] sm:$0xff] 0.0
    %80 = vst [vmem:[#allocation4] sm:$0xff] 0.0
    %81 = vst [vmem:[#allocation4 + $0x8] sm:$0xff] 0.0
    %s82 = sld [smem:[#allocation6]]
    %vm83 = vcmp.eq.s32.totalorder %v77, 0
    %v84 = vstv %s82
    %vm85 = vcmp.eq.s32.totalorder %v75, %v84
    %vm86 = vmand %vm83, %vm85
    %v87 = vsel %vm86, 1.0, 0.0
    %s88 = sld [smem:[#allocation6 + $0x80]]
    %vm89 = vcmp.eq.s32.totalorder %v77, 1
    %v90 = vstv %s88
    %vm91 = vcmp.eq.s32.totalorder %v75, %v90
    %vm92 = vmand %vm89, %vm91
    %v93 = vsel %vm92, 1.0, %v87
    %v94 = vld [vmem:[%s3] sm:$0xff]
    %v95 = vld [vmem:[%s3 + $0x8] sm:$0xff]
    %v96 = vld [vmem:[%s3 + $0x10] sm:$0xff]
    %v97 = vld [vmem:[%s3 + $0x18] sm:$0xff]
    %v98 = vld [vmem:[%s3 + $0x20] sm:$0xff]
    %v99 = vld [vmem:[%s3 + $0x28] sm:$0xff]
    %v100 = vld [vmem:[%s3 + $0x30] sm:$0xff]
    %v101 = vld [vmem:[%s3 + $0x38] sm:$0xff]
    %v102 = vld [vmem:[%s3 + $0x40] sm:$0xff]
    %v103 = vld [vmem:[%s3 + $0x48] sm:$0xff]
    %v104 = vld [vmem:[%s3 + $0x50] sm:$0xff]
    %v105 = vld [vmem:[%s3 + $0x58] sm:$0xff]
    %v106 = vld [vmem:[%s3 + $0x60] sm:$0xff]
    %v107 = vld [vmem:[%s3 + $0x68] sm:$0xff]
    %v108 = vld [vmem:[%s3 + $0x70] sm:$0xff]
    %v109 = vld [vmem:[%s3 + $0x78] sm:$0xff]
    %110 = vmatpush.msra.mxu0 %v109
    %111 = vmatpush.msra.mxu0 %v108
    %112 = vmatpush.msra.mxu0 %v107
    %113 = vmatpush.msra.mxu0 %v106
    %114 = vmatpush.msra.mxu0 %v105
    %115 = vmatpush.msra.mxu0 %v104
    %116 = vmatpush.msra.mxu0 %v103
    %117 = vmatpush.msra.mxu0 %v102
    %118 = vmatpush.msra.mxu0 %v101
    %119 = vmatpush.msra.mxu0 %v100
    %120 = vmatpush.msra.mxu0 %v99
    %121 = vmatpush.msra.mxu0 %v98
    %122 = vmatpush.msra.mxu0 %v97
    %123 = vmatpush.msra.mxu0 %v96
    %124 = vmatpush.msra.mxu0 %v95
    %125 = vmatpush.msra.mxu0 %v94
    %126 = vmatmul.f32.gmra.mxu0 %v93
    %v127 = vpop.f32.mrf.mxu0
    %v128 = vadd.f32 0.0, %v127
    %129 = vdwg.mxu0
    %130 = vst [vmem:[#allocation4] sm:$0xff] %v128
    %v131 = vld [vmem:[#allocation4] sm:$0xff]
    %v132 = vld [vmem:[#allocation4 + $0x8] sm:$0xff]
    %v133 = vld [vmem:[%s4] sm:$0xff]
    %v134 = vld [vmem:[%s4 + $0x8] sm:$0xff]
    %v135 = vld [vmem:[%s4 + $0x10] sm:$0xff]
    %v136 = vld [vmem:[%s4 + $0x18] sm:$0xff]
    %v137 = vld [vmem:[%s4 + $0x20] sm:$0xff]
    %v138 = vld [vmem:[%s4 + $0x28] sm:$0xff]
    %v139 = vld [vmem:[%s4 + $0x30] sm:$0xff]
    %v140 = vld [vmem:[%s4 + $0x38] sm:$0xff]
    %v141 = vld [vmem:[%s4 + $0x40] sm:$0xff]
    %v142 = vld [vmem:[%s4 + $0x48] sm:$0xff]
    %v143 = vld [vmem:[%s4 + $0x50] sm:$0xff]
    %v144 = vld [vmem:[%s4 + $0x58] sm:$0xff]
    %v145 = vld [vmem:[%s4 + $0x60] sm:$0xff]
    %v146 = vld [vmem:[%s4 + $0x68] sm:$0xff]
    %v147 = vld [vmem:[%s4 + $0x70] sm:$0xff]
    %v148 = vld [vmem:[%s4 + $0x78] sm:$0xff]
    %v149 = vld [vmem:[%s4 + $0x80] sm:$0xff]
    %v150 = vld [vmem:[%s4 + $0x88] sm:$0xff]
    %v151 = vld [vmem:[%s4 + $0x90] sm:$0xff]
    %v152 = vld [vmem:[%s4 + $0x98] sm:$0xff]
    %v153 = vld [vmem:[%s4 + $0xa0] sm:$0xff]
    %v154 = vld [vmem:[%s4 + $0xa8] sm:$0xff]
    %v155 = vld [vmem:[%s4 + $0xb0] sm:$0xff]
    %v156 = vld [vmem:[%s4 + $0xb8] sm:$0xff]
    %v157 = vld [vmem:[%s4 + $0xc0] sm:$0xff]
    %v158 = vld [vmem:[%s4 + $0xc8] sm:$0xff]
    %v159 = vld [vmem:[%s4 + $0xd0] sm:$0xff]
    %v160 = vld [vmem:[%s4 + $0xd8] sm:$0xff]
    %v161 = vld [vmem:[%s4 + $0xe0] sm:$0xff]
    %v162 = vld [vmem:[%s4 + $0xe8] sm:$0xff]
    %v163 = vld [vmem:[%s4 + $0xf0] sm:$0xff]
    %v164 = vld [vmem:[%s4 + $0xf8] sm:$0xff]
    %v165 = vld [vmem:[%s4 + $0x100] sm:$0xff]
    %v166 = vld [vmem:[%s4 + $0x108] sm:$0xff]
    %v167 = vld [vmem:[%s4 + $0x110] sm:$0xff]
    %v168 = vld [vmem:[%s4 + $0x118] sm:$0xff]
    %v169 = vld [vmem:[%s4 + $0x120] sm:$0xff]
    %v170 = vld [vmem:[%s4 + $0x128] sm:$0xff]
    %v171 = vld [vmem:[%s4 + $0x130] sm:$0xff]
    %v172 = vld [vmem:[%s4 + $0x138] sm:$0xff]
    %v173 = vld [vmem:[%s4 + $0x140] sm:$0xff]
    %v174 = vld [vmem:[%s4 + $0x148] sm:$0xff]
    %v175 = vld [vmem:[%s4 + $0x150] sm:$0xff]
    %v176 = vld [vmem:[%s4 + $0x158] sm:$0xff]
    %v177 = vld [vmem:[%s4 + $0x160] sm:$0xff]
    %v178 = vld [vmem:[%s4 + $0x168] sm:$0xff]
    %v179 = vld [vmem:[%s4 + $0x170] sm:$0xff]
    %v180 = vld [vmem:[%s4 + $0x178] sm:$0xff]
    %v181 = vld [vmem:[%s4 + $0x180] sm:$0xff]
    %v182 = vld [vmem:[%s4 + $0x188] sm:$0xff]
    %v183 = vld [vmem:[%s4 + $0x190] sm:$0xff]
    %v184 = vld [vmem:[%s4 + $0x198] sm:$0xff]
    %v185 = vld [vmem:[%s4 + $0x1a0] sm:$0xff]
    %v186 = vld [vmem:[%s4 + $0x1a8] sm:$0xff]
    %v187 = vld [vmem:[%s4 + $0x1b0] sm:$0xff]
    %v188 = vld [vmem:[%s4 + $0x1b8] sm:$0xff]
    %v189 = vld [vmem:[%s4 + $0x1c0] sm:$0xff]
    %v190 = vld [vmem:[%s4 + $0x1c8] sm:$0xff]
    %v191 = vld [vmem:[%s4 + $0x1d0] sm:$0xff]
    %v192 = vld [vmem:[%s4 + $0x1d8] sm:$0xff]
    %v193 = vld [vmem:[%s4 + $0x1e0] sm:$0xff]
    %v194 = vld [vmem:[%s4 + $0x1e8] sm:$0xff]
    %v195 = vld [vmem:[%s4 + $0x1f0] sm:$0xff]
    %v196 = vld [vmem:[%s4 + $0x1f8] sm:$0xff]
    %v197 = vld [vmem:[%s4 + $0x200] sm:$0xff]
    %v198 = vld [vmem:[%s4 + $0x208] sm:$0xff]
    %v199 = vld [vmem:[%s4 + $0x210] sm:$0xff]
    %v200 = vld [vmem:[%s4 + $0x218] sm:$0xff]
    %v201 = vld [vmem:[%s4 + $0x220] sm:$0xff]
    %v202 = vld [vmem:[%s4 + $0x228] sm:$0xff]
    %v203 = vld [vmem:[%s4 + $0x230] sm:$0xff]
    %v204 = vld [vmem:[%s4 + $0x238] sm:$0xff]
    %v205 = vld [vmem:[%s4 + $0x240] sm:$0xff]
    %v206 = vld [vmem:[%s4 + $0x248] sm:$0xff]
    %v207 = vld [vmem:[%s4 + $0x250] sm:$0xff]
    %v208 = vld [vmem:[%s4 + $0x258] sm:$0xff]
    %v209 = vld [vmem:[%s4 + $0x260] sm:$0xff]
    %v210 = vld [vmem:[%s4 + $0x268] sm:$0xff]
    %v211 = vld [vmem:[%s4 + $0x270] sm:$0xff]
    %v212 = vld [vmem:[%s4 + $0x278] sm:$0xff]
    %v213 = vld [vmem:[%s4 + $0x280] sm:$0xff]
    %v214 = vld [vmem:[%s4 + $0x288] sm:$0xff]
    %v215 = vld [vmem:[%s4 + $0x290] sm:$0xff]
    %v216 = vld [vmem:[%s4 + $0x298] sm:$0xff]
    %v217 = vld [vmem:[%s4 + $0x2a0] sm:$0xff]
    %v218 = vld [vmem:[%s4 + $0x2a8] sm:$0xff]
    %v219 = vld [vmem:[%s4 + $0x2b0] sm:$0xff]
    %v220 = vld [vmem:[%s4 + $0x2b8] sm:$0xff]
    %v221 = vld [vmem:[%s4 + $0x2c0] sm:$0xff]
    %v222 = vld [vmem:[%s4 + $0x2c8] sm:$0xff]
    %v223 = vld [vmem:[%s4 + $0x2d0] sm:$0xff]
    %v224 = vld [vmem:[%s4 + $0x2d8] sm:$0xff]
    %v225 = vld [vmem:[%s4 + $0x2e0] sm:$0xff]
    %v226 = vld [vmem:[%s4 + $0x2e8] sm:$0xff]
    %v227 = vld [vmem:[%s4 + $0x2f0] sm:$0xff]
    %v228 = vld [vmem:[%s4 + $0x2f8] sm:$0xff]
    %v229 = vld [vmem:[%s4 + $0x300] sm:$0xff]
    %v230 = vld [vmem:[%s4 + $0x308] sm:$0xff]
    %v231 = vld [vmem:[%s4 + $0x310] sm:$0xff]
    %v232 = vld [vmem:[%s4 + $0x318] sm:$0xff]
    %v233 = vld [vmem:[%s4 + $0x320] sm:$0xff]
    %v234 = vld [vmem:[%s4 + $0x328] sm:$0xff]
    %v235 = vld [vmem:[%s4 + $0x330] sm:$0xff]
    %v236 = vld [vmem:[%s4 + $0x338] sm:$0xff]
    %v237 = vld [vmem:[%s4 + $0x340] sm:$0xff]
    %v238 = vld [vmem:[%s4 + $0x348] sm:$0xff]
    %v239 = vld [vmem:[%s4 + $0x350] sm:$0xff]
    %v240 = vld [vmem:[%s4 + $0x358] sm:$0xff]
    %v241 = vld [vmem:[%s4 + $0x360] sm:$0xff]
    %v242 = vld [vmem:[%s4 + $0x368] sm:$0xff]
    %v243 = vld [vmem:[%s4 + $0x370] sm:$0xff]
    %v244 = vld [vmem:[%s4 + $0x378] sm:$0xff]
    %v245 = vld [vmem:[%s4 + $0x380] sm:$0xff]
    %v246 = vld [vmem:[%s4 + $0x388] sm:$0xff]
    %v247 = vld [vmem:[%s4 + $0x390] sm:$0xff]
    %v248 = vld [vmem:[%s4 + $0x398] sm:$0xff]
    %v249 = vld [vmem:[%s4 + $0x3a0] sm:$0xff]
    %v250 = vld [vmem:[%s4 + $0x3a8] sm:$0xff]
    %v251 = vld [vmem:[%s4 + $0x3b0] sm:$0xff]
    %v252 = vld [vmem:[%s4 + $0x3b8] sm:$0xff]
    %v253 = vld [vmem:[%s4 + $0x3c0] sm:$0xff]
    %v254 = vld [vmem:[%s4 + $0x3c8] sm:$0xff]
    %v255 = vld [vmem:[%s4 + $0x3d0] sm:$0xff]
    %v256 = vld [vmem:[%s4 + $0x3d8] sm:$0xff]
    %v257 = vld [vmem:[%s4 + $0x3e0] sm:$0xff]
    %v258 = vld [vmem:[%s4 + $0x3e8] sm:$0xff]
    %v259 = vld [vmem:[%s4 + $0x3f0] sm:$0xff]
    %v260 = vld [vmem:[%s4 + $0x3f8] sm:$0xff]
    %v261 = vld [vmem:[%s5] sm:$0xf]
    %v263 = vperm.slane %v261, 0
    %v264 = vperm.slane %v261, 1
    %v265 = vperm.slane %v261, 2
    %v266 = vperm.slane %v261, 3
    %271 = vmatpush.msra.mxu0 %v193
    %272 = vmatpush.msra.mxu0 %v189
    %273 = vmatpush.msra.mxu0 %v185
    %274 = vmatpush.msra.mxu0 %v181
    %275 = vmatpush.msra.mxu0 %v177
    %276 = vmatpush.msra.mxu0 %v173
    %277 = vmatpush.msra.mxu0 %v169
    %278 = vmatpush.msra.mxu0 %v165
    %279 = vmatpush.msra.mxu0 %v161
    %280 = vmatpush.msra.mxu0 %v157
    %281 = vmatpush.msra.mxu0 %v153
    %282 = vmatpush.msra.mxu0 %v149
    %283 = vmatpush.msra.mxu0 %v145
    %284 = vmatpush.msra.mxu0 %v141
    %285 = vmatpush.msra.mxu0 %v137
    %286 = vmatpush.msra.mxu0 %v133
    %287 = vmatmul.f32.gmra.mxu0 %v131
    %v288 = vpop.f32.mrf.mxu0
    %v289 = vadd.f32 %v263, %v288
    %290 = vdwg.mxu0
    %291 = vmatpush.msra.mxu0 %v257
    %292 = vmatpush.msra.mxu0 %v253
    %293 = vmatpush.msra.mxu0 %v249
    %294 = vmatpush.msra.mxu0 %v245
    %295 = vmatpush.msra.mxu0 %v241
    %296 = vmatpush.msra.mxu0 %v237
    %297 = vmatpush.msra.mxu0 %v233
    %298 = vmatpush.msra.mxu0 %v229
    %299 = vmatpush.msra.mxu0 %v225
    %300 = vmatpush.msra.mxu0 %v221
    %301 = vmatpush.msra.mxu0 %v217
    %302 = vmatpush.msra.mxu0 %v213
    %303 = vmatpush.msra.mxu0 %v209
    %304 = vmatpush.msra.mxu0 %v205
    %305 = vmatpush.msra.mxu0 %v201
    %306 = vmatpush.msra.mxu0 %v197
    %307 = vmatmul.f32.gmra.mxu0 %v132
    %v308 = vpop.f32.mrf.mxu0
    %v309 = vadd.f32 %v289, %v308
    %310 = vdwg.mxu0
    %311 = vmatpush.msra.mxu0 %v194
    %312 = vmatpush.msra.mxu0 %v190
    %313 = vmatpush.msra.mxu0 %v186
    %314 = vmatpush.msra.mxu0 %v182
    %315 = vmatpush.msra.mxu0 %v178
    %316 = vmatpush.msra.mxu0 %v174
    %317 = vmatpush.msra.mxu0 %v170
    %318 = vmatpush.msra.mxu0 %v166
    %319 = vmatpush.msra.mxu0 %v162
    %320 = vmatpush.msra.mxu0 %v158
    %321 = vmatpush.msra.mxu0 %v154
    %322 = vmatpush.msra.mxu0 %v150
    %323 = vmatpush.msra.mxu0 %v146
    %324 = vmatpush.msra.mxu0 %v142
    %325 = vmatpush.msra.mxu0 %v138
    %326 = vmatpush.msra.mxu0 %v134
    %327 = vmatmul.f32.gmra.mxu0 %v131
    %v328 = vpop.f32.mrf.mxu0
    %v329 = vadd.f32 %v264, %v328
    %330 = vdwg.mxu0
    %331 = vmatpush.msra.mxu0 %v258
    %332 = vmatpush.msra.mxu0 %v254
    %333 = vmatpush.msra.mxu0 %v250
    %334 = vmatpush.msra.mxu0 %v246
    %335 = vmatpush.msra.mxu0 %v242
    %336 = vmatpush.msra.mxu0 %v238
    %337 = vmatpush.msra.mxu0 %v234
    %338 = vmatpush.msra.mxu0 %v230
    %339 = vmatpush.msra.mxu0 %v226
    %340 = vmatpush.msra.mxu0 %v222
    %341 = vmatpush.msra.mxu0 %v218
    %342 = vmatpush.msra.mxu0 %v214
    %343 = vmatpush.msra.mxu0 %v210
    %344 = vmatpush.msra.mxu0 %v206
    %345 = vmatpush.msra.mxu0 %v202
    %346 = vmatpush.msra.mxu0 %v198
    %347 = vmatmul.f32.gmra.mxu0 %v132
    %v348 = vpop.f32.mrf.mxu0
    %v349 = vadd.f32 %v329, %v348
    %350 = vdwg.mxu0
    %351 = vmatpush.msra.mxu0 %v195
    %352 = vmatpush.msra.mxu0 %v191
    %353 = vmatpush.msra.mxu0 %v187
    %354 = vmatpush.msra.mxu0 %v183
    %355 = vmatpush.msra.mxu0 %v179
    %356 = vmatpush.msra.mxu0 %v175
    %357 = vmatpush.msra.mxu0 %v171
    %358 = vmatpush.msra.mxu0 %v167
    %359 = vmatpush.msra.mxu0 %v163
    %360 = vmatpush.msra.mxu0 %v159
    %361 = vmatpush.msra.mxu0 %v155
    %362 = vmatpush.msra.mxu0 %v151
    %363 = vmatpush.msra.mxu0 %v147
    %364 = vmatpush.msra.mxu0 %v143
    %365 = vmatpush.msra.mxu0 %v139
    %366 = vmatpush.msra.mxu0 %v135
    %367 = vmatmul.f32.gmra.mxu0 %v131
    %v368 = vpop.f32.mrf.mxu0
    %v369 = vadd.f32 %v265, %v368
    %370 = vdwg.mxu0
    %371 = vmatpush.msra.mxu0 %v259
    %372 = vmatpush.msra.mxu0 %v255
    %373 = vmatpush.msra.mxu0 %v251
    %374 = vmatpush.msra.mxu0 %v247
    %375 = vmatpush.msra.mxu0 %v243
    %376 = vmatpush.msra.mxu0 %v239
    %377 = vmatpush.msra.mxu0 %v235
    %378 = vmatpush.msra.mxu0 %v231
    %379 = vmatpush.msra.mxu0 %v227
    %380 = vmatpush.msra.mxu0 %v223
    %381 = vmatpush.msra.mxu0 %v219
    %382 = vmatpush.msra.mxu0 %v215
    %383 = vmatpush.msra.mxu0 %v211
    %384 = vmatpush.msra.mxu0 %v207
    %385 = vmatpush.msra.mxu0 %v203
    %386 = vmatpush.msra.mxu0 %v199
    %387 = vmatmul.f32.gmra.mxu0 %v132
    %v388 = vpop.f32.mrf.mxu0
    %v389 = vadd.f32 %v369, %v388
    %390 = vdwg.mxu0
    %391 = vmatpush.msra.mxu0 %v196
    %392 = vmatpush.msra.mxu0 %v192
    %393 = vmatpush.msra.mxu0 %v188
    %394 = vmatpush.msra.mxu0 %v184
    %395 = vmatpush.msra.mxu0 %v180
    %396 = vmatpush.msra.mxu0 %v176
    %397 = vmatpush.msra.mxu0 %v172
    %398 = vmatpush.msra.mxu0 %v168
    %399 = vmatpush.msra.mxu0 %v164
    %400 = vmatpush.msra.mxu0 %v160
    %401 = vmatpush.msra.mxu0 %v156
    %402 = vmatpush.msra.mxu0 %v152
    %403 = vmatpush.msra.mxu0 %v148
    %404 = vmatpush.msra.mxu0 %v144
    %405 = vmatpush.msra.mxu0 %v140
    %406 = vmatpush.msra.mxu0 %v136
    %407 = vmatmul.f32.gmra.mxu0 %v131
    %v408 = vpop.f32.mrf.mxu0
    %v409 = vadd.f32 %v266, %v408
    %410 = vdwg.mxu0
    %411 = vmatpush.msra.mxu0 %v260
    %412 = vmatpush.msra.mxu0 %v256
    %413 = vmatpush.msra.mxu0 %v252
    %414 = vmatpush.msra.mxu0 %v248
    %415 = vmatpush.msra.mxu0 %v244
    %416 = vmatpush.msra.mxu0 %v240
    %417 = vmatpush.msra.mxu0 %v236
    %418 = vmatpush.msra.mxu0 %v232
    %419 = vmatpush.msra.mxu0 %v228
    %420 = vmatpush.msra.mxu0 %v224
    %421 = vmatpush.msra.mxu0 %v220
    %422 = vmatpush.msra.mxu0 %v216
    %423 = vmatpush.msra.mxu0 %v212
    %424 = vmatpush.msra.mxu0 %v208
    %425 = vmatpush.msra.mxu0 %v204
    %426 = vmatpush.msra.mxu0 %v200
    %427 = vmatmul.f32.gmra.mxu0 %v132
    %v428 = vpop.f32.mrf.mxu0
    %v429 = vadd.f32 %v409, %v428
    %430 = vdwg.mxu0
    %v431 = vxor.u32 %v309, 2147483648
    %v432 = vxor.u32 %v349, 2147483648
    %v433 = vxor.u32 %v389, 2147483648
    %v434 = vmul.f32 %v431, 1.442695
    %v435 = vpow.pop %v434
    %v436 = vmul.f32 %v432, 1.442695
    %v437 = vpow.pop %v436
    %v438 = vmul.f32 %v433, 1.442695
    %v439 = vpow.pop %v438
    %v440 = vadd.f32 %v435, 1.0
    %v441 = vadd.f32 %v437, 1.0
    %v442 = vadd.f32 %v439, 1.0
    %v443 = vrcp.pop %v440
    %v444 = vmul.f32 %v440, %v443
    %v445 = vsub.f32 1.0, %v444
    %v446 = vmul.f32 %v443, %v445
    %v447 = vadd.f32 %v443, %v446
    %vm448 = vweird.f32 %v440
    %vm449 = vweird.f32 %v443
    %vm450 = vmor %vm448, %vm449
    %v451 = vsel %vm450, %v443, %v447
    %v452 = vand.u32 2147483647, %v440
    %vm453 = vcmp.eq.f32.partialorder %v452, 8.507059e+37
    %v454 = vand.u32 %v440, 2147483648
    %v455 = vor.u32 1.1754944e-38, %v454
    %v456 = vsel %vm453, %v455, %v451
    %v457 = vmul.f32 1.0, %v456
    %v458 = vrcp.pop %v441
    %v459 = vmul.f32 %v441, %v458
    %v460 = vsub.f32 1.0, %v459
    %v461 = vmul.f32 %v458, %v460
    %v462 = vadd.f32 %v458, %v461
    %vm463 = vweird.f32 %v441
    %vm464 = vweird.f32 %v458
    %vm465 = vmor %vm463, %vm464
    %v466 = vsel %vm465, %v458, %v462
    %v467 = vand.u32 2147483647, %v441
    %vm468 = vcmp.eq.f32.partialorder %v467, 8.507059e+37
    %v469 = vand.u32 %v441, 2147483648
    %v470 = vor.u32 1.1754944e-38, %v469
    %v471 = vsel %vm468, %v470, %v466
    %v472 = vmul.f32 1.0, %v471
    %v473 = vrcp.pop %v442
    %v474 = vmul.f32 %v442, %v473
    %v475 = vsub.f32 1.0, %v474
    %v476 = vmul.f32 %v473, %v475
    %v477 = vadd.f32 %v473, %v476
    %vm478 = vweird.f32 %v442
    %vm479 = vweird.f32 %v473
    %vm480 = vmor %vm478, %vm479
    %v481 = vsel %vm480, %v473, %v477
    %v482 = vand.u32 2147483647, %v442
    %vm483 = vcmp.eq.f32.partialorder %v482, 8.507059e+37
    %v484 = vand.u32 %v442, 2147483648
    %v485 = vor.u32 1.1754944e-38, %v484
    %v486 = vsel %vm483, %v485, %v481
    %v487 = vmul.f32 1.0, %v486
    %v488 = vtanh.pop %v429
    %v489 = vld [vmem:[#allocation3] sm:$0xff]
    %v490 = vmul.f32 %v472, %v489
    %v491 = vmul.f32 %v457, %v488
    %v492 = vadd.f32 %v490, %v491
    %v493 = vtanh.pop %v492
    %v494 = vmul.f32 %v487, %v493
    %495 = vst [vmem:[#allocation3] sm:$0xff] %v492
    %496 = vst [vmem:[#allocation2] sm:$0xff] %v494
    %497 = vst [vmem:[#allocation4 + $0x8] sm:$0xff] %v494
    %s498 = sld [smem:[#allocation6 + $0x1]]
    %v499 = vstv %s498
    %vm500 = vcmp.eq.s32.totalorder %v75, %v499
    %vm501 = vmand %vm83, %vm500
    %v502 = vsel %vm501, 1.0, 0.0
    %s503 = sld [smem:[#allocation6 + $0x81]]
    %v504 = vstv %s503
    %vm505 = vcmp.eq.s32.totalorder %v75, %v504
    %vm506 = vmand %vm89, %vm505
    %v507 = vsel %vm506, 1.0, %v502
    %v508 = vld [vmem:[%s3] sm:$0xff]
    %v509 = vld [vmem:[%s3 + $0x8] sm:$0xff]
    %v510 = vld [vmem:[%s3 + $0x10] sm:$0xff]
    %v511 = vld [vmem:[%s3 + $0x18] sm:$0xff]
    %v512 = vld [vmem:[%s3 + $0x20] sm:$0xff]
    %v513 = vld [vmem:[%s3 + $0x28] sm:$0xff]
    %v514 = vld [vmem:[%s3 + $0x30] sm:$0xff]
    %v515 = vld [vmem:[%s3 + $0x38] sm:$0xff]
    %v516 = vld [vmem:[%s3 + $0x40] sm:$0xff]
    %v517 = vld [vmem:[%s3 + $0x48] sm:$0xff]
    %v518 = vld [vmem:[%s3 + $0x50] sm:$0xff]
    %v519 = vld [vmem:[%s3 + $0x58] sm:$0xff]
    %v520 = vld [vmem:[%s3 + $0x60] sm:$0xff]
    %v521 = vld [vmem:[%s3 + $0x68] sm:$0xff]
    %v522 = vld [vmem:[%s3 + $0x70] sm:$0xff]
    %v523 = vld [vmem:[%s3 + $0x78] sm:$0xff]
    %524 = vmatpush.msra.mxu0 %v523
    %525 = vmatpush.msra.mxu0 %v522
    %526 = vmatpush.msra.mxu0 %v521
    %527 = vmatpush.msra.mxu0 %v520
    %528 = vmatpush.msra.mxu0 %v519
    %529 = vmatpush.msra.mxu0 %v518
    %530 = vmatpush.msra.mxu0 %v517
    %531 = vmatpush.msra.mxu0 %v516
    %532 = vmatpush.msra.mxu0 %v515
    %533 = vmatpush.msra.mxu0 %v514
    %534 = vmatpush.msra.mxu0 %v513
    %535 = vmatpush.msra.mxu0 %v512
    %536 = vmatpush.msra.mxu0 %v511
    %537 = vmatpush.msra.mxu0 %v510
    %538 = vmatpush.msra.mxu0 %v509
    %539 = vmatpush.msra.mxu0 %v508
    %540 = vmatmul.f32.gmra.mxu0 %v507
    %v541 = vpop.f32.mrf.mxu0
    %v542 = vadd.f32 0.0, %v541
    %543 = vdwg.mxu0
    %544 = vst [vmem:[#allocation4] sm:$0xff] %v542
    %v545 = vld [vmem:[#allocation4] sm:$0xff]
    %v546 = vld [vmem:[#allocation4 + $0x8] sm:$0xff]
    %v547 = vld [vmem:[%s4] sm:$0xff]
    %v548 = vld [vmem:[%s4 + $0x8] sm:$0xff]
    %v549 = vld [vmem:[%s4 + $0x10] sm:$0xff]
    %v550 = vld [vmem:[%s4 + $0x18] sm:$0xff]
    %v551 = vld [vmem:[%s4 + $0x20] sm:$0xff]
    %v552 = vld [vmem:[%s4 + $0x28] sm:$0xff]
    %v553 = vld [vmem:[%s4 + $0x30] sm:$0xff]
    %v554 = vld [vmem:[%s4 + $0x38] sm:$0xff]
    %v555 = vld [vmem:[%s4 + $0x40] sm:$0xff]
    %v556 = vld [vmem:[%s4 + $0x48] sm:$0xff]
    %v557 = vld [vmem:[%s4 + $0x50] sm:$0xff]
    %v558 = vld [vmem:[%s4 + $0x58] sm:$0xff]
    %v559 = vld [vmem:[%s4 + $0x60] sm:$0xff]
    %v560 = vld [vmem:[%s4 + $0x68] sm:$0xff]
    %v561 = vld [vmem:[%s4 + $0x70] sm:$0xff]
    %v562 = vld [vmem:[%s4 + $0x78] sm:$0xff]
    %v563 = vld [vmem:[%s4 + $0x80] sm:$0xff]
    %v564 = vld [vmem:[%s4 + $0x88] sm:$0xff]
    %v565 = vld [vmem:[%s4 + $0x90] sm:$0xff]
    %v566 = vld [vmem:[%s4 + $0x98] sm:$0xff]
    %v567 = vld [vmem:[%s4 + $0xa0] sm:$0xff]
    %v568 = vld [vmem:[%s4 + $0xa8] sm:$0xff]
    %v569 = vld [vmem:[%s4 + $0xb0] sm:$0xff]
    %v570 = vld [vmem:[%s4 + $0xb8] sm:$0xff]
    %v571 = vld [vmem:[%s4 + $0xc0] sm:$0xff]
    %v572 = vld [vmem:[%s4 + $0xc8] sm:$0xff]
    %v573 = vld [vmem:[%s4 + $0xd0] sm:$0xff]
    %v574 = vld [vmem:[%s4 + $0xd8] sm:$0xff]
    %v575 = vld [vmem:[%s4 + $0xe0] sm:$0xff]
    %v576 = vld [vmem:[%s4 + $0xe8] sm:$0xff]
    %v577 = vld [vmem:[%s4 + $0xf0] sm:$0xff]
    %v578 = vld [vmem:[%s4 + $0xf8] sm:$0xff]
    %v579 = vld [vmem:[%s4 + $0x100] sm:$0xff]
    %v580 = vld [vmem:[%s4 + $0x108] sm:$0xff]
    %v581 = vld [vmem:[%s4 + $0x110] sm:$0xff]
    %v582 = vld [vmem:[%s4 + $0x118] sm:$0xff]
    %v583 = vld [vmem:[%s4 + $0x120] sm:$0xff]
    %v584 = vld [vmem:[%s4 + $0x128] sm:$0xff]
    %v585 = vld [vmem:[%s4 + $0x130] sm:$0xff]
    %v586 = vld [vmem:[%s4 + $0x138] sm:$0xff]
    %v587 = vld [vmem:[%s4 + $0x140] sm:$0xff]
    %v588 = vld [vmem:[%s4 + $0x148] sm:$0xff]
    %v589 = vld [vmem:[%s4 + $0x150] sm:$0xff]
    %v590 = vld [vmem:[%s4 + $0x158] sm:$0xff]
    %v591 = vld [vmem:[%s4 + $0x160] sm:$0xff]
    %v592 = vld [vmem:[%s4 + $0x168] sm:$0xff]
    %v593 = vld [vmem:[%s4 + $0x170] sm:$0xff]
    %v594 = vld [vmem:[%s4 + $0x178] sm:$0xff]
    %v595 = vld [vmem:[%s4 + $0x180] sm:$0xff]
    %v596 = vld [vmem:[%s4 + $0x188] sm:$0xff]
    %v597 = vld [vmem:[%s4 + $0x190] sm:$0xff]
    %v598 = vld [vmem:[%s4 + $0x198] sm:$0xff]
    %v599 = vld [vmem:[%s4 + $0x1a0] sm:$0xff]
    %v600 = vld [vmem:[%s4 + $0x1a8] sm:$0xff]
    %v601 = vld [vmem:[%s4 + $0x1b0] sm:$0xff]
    %v602 = vld [vmem:[%s4 + $0x1b8] sm:$0xff]
    %v603 = vld [vmem:[%s4 + $0x1c0] sm:$0xff]
    %v604 = vld [vmem:[%s4 + $0x1c8] sm:$0xff]
    %v605 = vld [vmem:[%s4 + $0x1d0] sm:$0xff]
    %v606 = vld [vmem:[%s4 + $0x1d8] sm:$0xff]
    %v607 = vld [vmem:[%s4 + $0x1e0] sm:$0xff]
    %v608 = vld [vmem:[%s4 + $0x1e8] sm:$0xff]
    %v609 = vld [vmem:[%s4 + $0x1f0] sm:$0xff]
    %v610 = vld [vmem:[%s4 + $0x1f8] sm:$0xff]
    %v611 = vld [vmem:[%s4 + $0x200] sm:$0xff]
    %v612 = vld [vmem:[%s4 + $0x208] sm:$0xff]
    %v613 = vld [vmem:[%s4 + $0x210] sm:$0xff]
    %v614 = vld [vmem:[%s4 + $0x218] sm:$0xff]
    %v615 = vld [vmem:[%s4 + $0x220] sm:$0xff]
    %v616 = vld [vmem:[%s4 + $0x228] sm:$0xff]
    %v617 = vld [vmem:[%s4 + $0x230] sm:$0xff]
    %v618 = vld [vmem:[%s4 + $0x238] sm:$0xff]
    %v619 = vld [vmem:[%s4 + $0x240] sm:$0xff]
    %v620 = vld [vmem:[%s4 + $0x248] sm:$0xff]
    %v621 = vld [vmem:[%s4 + $0x250] sm:$0xff]
    %v622 = vld [vmem:[%s4 + $0x258] sm:$0xff]
    %v623 = vld [vmem:[%s4 + $0x260] sm:$0xff]
    %v624 = vld [vmem:[%s4 + $0x268] sm:$0xff]
    %v625 = vld [vmem:[%s4 + $0x270] sm:$0xff]
    %v626 = vld [vmem:[%s4 + $0x278] sm:$0xff]
    %v627 = vld [vmem:[%s4 + $0x280] sm:$0xff]
    %v628 = vld [vmem:[%s4 + $0x288] sm:$0xff]
    %v629 = vld [vmem:[%s4 + $0x290] sm:$0xff]
    %v630 = vld [vmem:[%s4 + $0x298] sm:$0xff]
    %v631 = vld [vmem:[%s4 + $0x2a0] sm:$0xff]
    %v632 = vld [vmem:[%s4 + $0x2a8] sm:$0xff]
    %v633 = vld [vmem:[%s4 + $0x2b0] sm:$0xff]
    %v634 = vld [vmem:[%s4 + $0x2b8] sm:$0xff]
    %v635 = vld [vmem:[%s4 + $0x2c0] sm:$0xff]
    %v636 = vld [vmem:[%s4 + $0x2c8] sm:$0xff]
    %v637 = vld [vmem:[%s4 + $0x2d0] sm:$0xff]
    %v638 = vld [vmem:[%s4 + $0x2d8] sm:$0xff]
    %v639 = vld [vmem:[%s4 + $0x2e0] sm:$0xff]
    %v640 = vld [vmem:[%s4 + $0x2e8] sm:$0xff]
    %v641 = vld [vmem:[%s4 + $0x2f0] sm:$0xff]
    %v642 = vld [vmem:[%s4 + $0x2f8] sm:$0xff]
    %v643 = vld [vmem:[%s4 + $0x300] sm:$0xff]
    %v644 = vld [vmem:[%s4 + $0x308] sm:$0xff]
    %v645 = vld [vmem:[%s4 + $0x310] sm:$0xff]
    %v646 = vld [vmem:[%s4 + $0x318] sm:$0xff]
    %v647 = vld [vmem:[%s4 + $0x320] sm:$0xff]
    %v648 = vld [vmem:[%s4 + $0x328] sm:$0xff]
    %v649 = vld [vmem:[%s4 + $0x330] sm:$0xff]
    %v650 = vld [vmem:[%s4 + $0x338] sm:$0xff]
    %v651 = vld [vmem:[%s4 + $0x340] sm:$0xff]
    %v652 = vld [vmem:[%s4 + $0x348] sm:$0xff]
    %v653 = vld [vmem:[%s4 + $0x350] sm:$0xff]
    %v654 = vld [vmem:[%s4 + $0x358] sm:$0xff]
    %v655 = vld [vmem:[%s4 + $0x360] sm:$0xff]
    %v656 = vld [vmem:[%s4 + $0x368] sm:$0xff]
    %v657 = vld [vmem:[%s4 + $0x370] sm:$0xff]
    %v658 = vld [vmem:[%s4 + $0x378] sm:$0xff]
    %v659 = vld [vmem:[%s4 + $0x380] sm:$0xff]
    %v660 = vld [vmem:[%s4 + $0x388] sm:$0xff]
    %v661 = vld [vmem:[%s4 + $0x390] sm:$0xff]
    %v662 = vld [vmem:[%s4 + $0x398] sm:$0xff]
    %v663 = vld [vmem:[%s4 + $0x3a0] sm:$0xff]
    %v664 = vld [vmem:[%s4 + $0x3a8] sm:$0xff]
    %v665 = vld [vmem:[%s4 + $0x3b0] sm:$0xff]
    %v666 = vld [vmem:[%s4 + $0x3b8] sm:$0xff]
    %v667 = vld [vmem:[%s4 + $0x3c0] sm:$0xff]
    %v668 = vld [vmem:[%s4 + $0x3c8] sm:$0xff]
    %v669 = vld [vmem:[%s4 + $0x3d0] sm:$0xff]
    %v670 = vld [vmem:[%s4 + $0x3d8] sm:$0xff]
    %v671 = vld [vmem:[%s4 + $0x3e0] sm:$0xff]
    %v672 = vld [vmem:[%s4 + $0x3e8] sm:$0xff]
    %v673 = vld [vmem:[%s4 + $0x3f0] sm:$0xff]
    %v674 = vld [vmem:[%s4 + $0x3f8] sm:$0xff]
    %v675 = vld [vmem:[%s5] sm:$0xf]
    %v677 = vperm.slane %v675, 0
    %v678 = vperm.slane %v675, 1
    %v679 = vperm.slane %v675, 2
    %v680 = vperm.slane %v675, 3
    %685 = vmatpush.msra.mxu0 %v607
    %686 = vmatpush.msra.mxu0 %v603
    %687 = vmatpush.msra.mxu0 %v599
    %688 = vmatpush.msra.mxu0 %v595
    %689 = vmatpush.msra.mxu0 %v591
    %690 = vmatpush.msra.mxu0 %v587
    %691 = vmatpush.msra.mxu0 %v583
    %692 = vmatpush.msra.mxu0 %v579
    %693 = vmatpush.msra.mxu0 %v575
    %694 = vmatpush.msra.mxu0 %v571
    %695 = vmatpush.msra.mxu0 %v567
    %696 = vmatpush.msra.mxu0 %v563
    %697 = vmatpush.msra.mxu0 %v559
    %698 = vmatpush.msra.mxu0 %v555
    %699 = vmatpush.msra.mxu0 %v551
    %700 = vmatpush.msra.mxu0 %v547
    %701 = vmatmul.f32.gmra.mxu0 %v545
    %v702 = vpop.f32.mrf.mxu0
    %v703 = vadd.f32 %v677, %v702
    %704 = vdwg.mxu0
    %705 = vmatpush.msra.mxu0 %v671
    %706 = vmatpush.msra.mxu0 %v667
    %707 = vmatpush.msra.mxu0 %v663
    %708 = vmatpush.msra.mxu0 %v659
    %709 = vmatpush.msra.mxu0 %v655
    %710 = vmatpush.msra.mxu0 %v651
    %711 = vmatpush.msra.mxu0 %v647
    %712 = vmatpush.msra.mxu0 %v643
    %713 = vmatpush.msra.mxu0 %v639
    %714 = vmatpush.msra.mxu0 %v635
    %715 = vmatpush.msra.mxu0 %v631
    %716 = vmatpush.msra.mxu0 %v627
    %717 = vmatpush.msra.mxu0 %v623
    %718 = vmatpush.msra.mxu0 %v619
    %719 = vmatpush.msra.mxu0 %v615
    %720 = vmatpush.msra.mxu0 %v611
    %721 = vmatmul.f32.gmra.mxu0 %v546
    %v722 = vpop.f32.mrf.mxu0
    %v723 = vadd.f32 %v703, %v722
    %724 = vdwg.mxu0
    %725 = vmatpush.msra.mxu0 %v608
    %726 = vmatpush.msra.mxu0 %v604
    %727 = vmatpush.msra.mxu0 %v600
    %728 = vmatpush.msra.mxu0 %v596
    %729 = vmatpush.msra.mxu0 %v592
    %730 = vmatpush.msra.mxu0 %v588
    %731 = vmatpush.msra.mxu0 %v584
    %732 = vmatpush.msra.mxu0 %v580
    %733 = vmatpush.msra.mxu0 %v576
    %734 = vmatpush.msra.mxu0 %v572
    %735 = vmatpush.msra.mxu0 %v568
    %736 = vmatpush.msra.mxu0 %v564
    %737 = vmatpush.msra.mxu0 %v560
    %738 = vmatpush.msra.mxu0 %v556
    %739 = vmatpush.msra.mxu0 %v552
    %740 = vmatpush.msra.mxu0 %v548
    %741 = vmatmul.f32.gmra.mxu0 %v545
    %v742 = vpop.f32.mrf.mxu0
    %v743 = vadd.f32 %v678, %v742
    %744 = vdwg.mxu0
    %745 = vmatpush.msra.mxu0 %v672
    %746 = vmatpush.msra.mxu0 %v668
    %747 = vmatpush.msra.mxu0 %v664
    %748 = vmatpush.msra.mxu0 %v660
    %749 = vmatpush.msra.mxu0 %v656
    %750 = vmatpush.msra.mxu0 %v652
    %751 = vmatpush.msra.mxu0 %v648
    %752 = vmatpush.msra.mxu0 %v644
    %753 = vmatpush.msra.mxu0 %v640
    %754 = vmatpush.msra.mxu0 %v636
    %755 = vmatpush.msra.mxu0 %v632
    %756 = vmatpush.msra.mxu0 %v628
    %757 = vmatpush.msra.mxu0 %v624
    %758 = vmatpush.msra.mxu0 %v620
    %759 = vmatpush.msra.mxu0 %v616
    %760 = vmatpush.msra.mxu0 %v612
    %761 = vmatmul.f32.gmra.mxu0 %v546
    %v762 = vpop.f32.mrf.mxu0
    %v763 = vadd.f32 %v743, %v762
    %764 = vdwg.mxu0
    %765 = vmatpush.msra.mxu0 %v609
    %766 = vmatpush.msra.mxu0 %v605
    %767 = vmatpush.msra.mxu0 %v601
    %768 = vmatpush.msra.mxu0 %v597
    %769 = vmatpush.msra.mxu0 %v593
    %770 = vmatpush.msra.mxu0 %v589
    %771 = vmatpush.msra.mxu0 %v585
    %772 = vmatpush.msra.mxu0 %v581
    %773 = vmatpush.msra.mxu0 %v577
    %774 = vmatpush.msra.mxu0 %v573
    %775 = vmatpush.msra.mxu0 %v569
    %776 = vmatpush.msra.mxu0 %v565
    %777 = vmatpush.msra.mxu0 %v561
    %778 = vmatpush.msra.mxu0 %v557
    %779 = vmatpush.msra.mxu0 %v553
    %780 = vmatpush.msra.mxu0 %v549
    %781 = vmatmul.f32.gmra.mxu0 %v545
    %v782 = vpop.f32.mrf.mxu0
    %v783 = vadd.f32 %v679, %v782
    %784 = vdwg.mxu0
    %785 = vmatpush.msra.mxu0 %v673
    %786 = vmatpush.msra.mxu0 %v669
    %787 = vmatpush.msra.mxu0 %v665
    %788 = vmatpush.msra.mxu0 %v661
    %789 = vmatpush.msra.mxu0 %v657
    %790 = vmatpush.msra.mxu0 %v653
    %791 = vmatpush.msra.mxu0 %v649
    %792 = vmatpush.msra.mxu0 %v645
    %793 = vmatpush.msra.mxu0 %v641
    %794 = vmatpush.msra.mxu0 %v637
    %795 = vmatpush.msra.mxu0 %v633
    %796 = vmatpush.msra.mxu0 %v629
    %797 = vmatpush.msra.mxu0 %v625
    %798 = vmatpush.msra.mxu0 %v621
    %799 = vmatpush.msra.mxu0 %v617
    %800 = vmatpush.msra.mxu0 %v613
    %801 = vmatmul.f32.gmra.mxu0 %v546
    %v802 = vpop.f32.mrf.mxu0
    %v803 = vadd.f32 %v783, %v802
    %804 = vdwg.mxu0
    %805 = vmatpush.msra.mxu0 %v610
    %806 = vmatpush.msra.mxu0 %v606
    %807 = vmatpush.msra.mxu0 %v602
    %808 = vmatpush.msra.mxu0 %v598
    %809 = vmatpush.msra.mxu0 %v594
    %810 = vmatpush.msra.mxu0 %v590
    %811 = vmatpush.msra.mxu0 %v586
    %812 = vmatpush.msra.mxu0 %v582
    %813 = vmatpush.msra.mxu0 %v578
    %814 = vmatpush.msra.mxu0 %v574
    %815 = vmatpush.msra.mxu0 %v570
    %816 = vmatpush.msra.mxu0 %v566
    %817 = vmatpush.msra.mxu0 %v562
    %818 = vmatpush.msra.mxu0 %v558
    %819 = vmatpush.msra.mxu0 %v554
    %820 = vmatpush.msra.mxu0 %v550
    %821 = vmatmul.f32.gmra.mxu0 %v545
    %v822 = vpop.f32.mrf.mxu0
    %v823 = vadd.f32 %v680, %v822
    %824 = vdwg.mxu0
    %825 = vmatpush.msra.mxu0 %v674
    %826 = vmatpush.msra.mxu0 %v670
    %827 = vmatpush.msra.mxu0 %v666
    %828 = vmatpush.msra.mxu0 %v662
    %829 = vmatpush.msra.mxu0 %v658
    %830 = vmatpush.msra.mxu0 %v654
    %831 = vmatpush.msra.mxu0 %v650
    %832 = vmatpush.msra.mxu0 %v646
    %833 = vmatpush.msra.mxu0 %v642
    %834 = vmatpush.msra.mxu0 %v638
    %835 = vmatpush.msra.mxu0 %v634
    %836 = vmatpush.msra.mxu0 %v630
    %837 = vmatpush.msra.mxu0 %v626
    %838 = vmatpush.msra.mxu0 %v622
    %839 = vmatpush.msra.mxu0 %v618
    %840 = vmatpush.msra.mxu0 %v614
    %841 = vmatmul.f32.gmra.mxu0 %v546
    %v842 = vpop.f32.mrf.mxu0
    %v843 = vadd.f32 %v823, %v842
    %844 = vdwg.mxu0
    %v845 = vxor.u32 %v723, 2147483648
    %v846 = vxor.u32 %v763, 2147483648
    %v847 = vxor.u32 %v803, 2147483648
    %v848 = vmul.f32 %v845, 1.442695
    %v849 = vpow.pop %v848
    %v850 = vmul.f32 %v846, 1.442695
    %v851 = vpow.pop %v850
    %v852 = vmul.f32 %v847, 1.442695
    %v853 = vpow.pop %v852
    %v854 = vadd.f32 %v849, 1.0
    %v855 = vadd.f32 %v851, 1.0
    %v856 = vadd.f32 %v853, 1.0
    %v857 = vrcp.pop %v854
    %v858 = vmul.f32 %v854, %v857
    %v859 = vsub.f32 1.0, %v858
    %v860 = vmul.f32 %v857, %v859
    %v861 = vadd.f32 %v857, %v860
    %vm862 = vweird.f32 %v854
    %vm863 = vweird.f32 %v857
    %vm864 = vmor %vm862, %vm863
    %v865 = vsel %vm864, %v857, %v861
    %v866 = vand.u32 2147483647, %v854
    %vm867 = vcmp.eq.f32.partialorder %v866, 8.507059e+37
    %v868 = vand.u32 %v854, 2147483648
    %v869 = vor.u32 1.1754944e-38, %v868
    %v870 = vsel %vm867, %v869, %v865
    %v871 = vmul.f32 1.0, %v870
    %v872 = vrcp.pop %v855
    %v873 = vmul.f32 %v855, %v872
    %v874 = vsub.f32 1.0, %v873
    %v875 = vmul.f32 %v872, %v874
    %v876 = vadd.f32 %v872, %v875
    %vm877 = vweird.f32 %v855
    %vm878 = vweird.f32 %v872
    %vm879 = vmor %vm877, %vm878
    %v880 = vsel %vm879, %v872, %v876
    %v881 = vand.u32 2147483647, %v855
    %vm882 = vcmp.eq.f32.partialorder %v881, 8.507059e+37
    %v883 = vand.u32 %v855, 2147483648
    %v884 = vor.u32 1.1754944e-38, %v883
    %v885 = vsel %vm882, %v884, %v880
    %v886 = vmul.f32 1.0, %v885
    %v887 = vrcp.pop %v856
    %v888 = vmul.f32 %v856, %v887
    %v889 = vsub.f32 1.0, %v888
    %v890 = vmul.f32 %v887, %v889
    %v891 = vadd.f32 %v887, %v890
    %vm892 = vweird.f32 %v856
    %vm893 = vweird.f32 %v887
    %vm894 = vmor %vm892, %vm893
    %v895 = vsel %vm894, %v887, %v891
    %v896 = vand.u32 2147483647, %v856
    %vm897 = vcmp.eq.f32.partialorder %v896, 8.507059e+37
    %v898 = vand.u32 %v856, 2147483648
    %v899 = vor.u32 1.1754944e-38, %v898
    %v900 = vsel %vm897, %v899, %v895
    %v901 = vmul.f32 1.0, %v900
    %v902 = vtanh.pop %v843
    %v903 = vld [vmem:[#allocation3] sm:$0xff]
    %v904 = vmul.f32 %v886, %v903
    %v905 = vmul.f32 %v871, %v902
    %v906 = vadd.f32 %v904, %v905
    %v907 = vtanh.pop %v906
    %v908 = vmul.f32 %v901, %v907
    %909 = vst [vmem:[#allocation3] sm:$0xff] %v906
    %910 = vst [vmem:[#allocation2] sm:$0xff] %v908
    %911 = vst [vmem:[#allocation4 + $0x8] sm:$0xff] %v908
    %s912 = sld [smem:[#allocation6 + $0x2]]
    %v913 = vstv %s912
    %vm914 = vcmp.eq.s32.totalorder %v75, %v913
    %vm915 = vmand %vm83, %vm914
    %v916 = vsel %vm915, 1.0, 0.0
    %s917 = sld [smem:[#allocation6 + $0x82]]
    %v918 = vstv %s917
    %vm919 = vcmp.eq.s32.totalorder %v75, %v918
    %vm920 = vmand %vm89, %vm919
    %v921 = vsel %vm920, 1.0, %v916
    %v922 = vld [vmem:[%s3] sm:$0xff]
    %v923 = vld [vmem:[%s3 + $0x8] sm:$0xff]
    %v924 = vld [vmem:[%s3 + $0x10] sm:$0xff]
    %v925 = vld [vmem:[%s3 + $0x18] sm:$0xff]
    %v926 = vld [vmem:[%s3 + $0x20] sm:$0xff]
    %v927 = vld [vmem:[%s3 + $0x28] sm:$0xff]
    %v928 = vld [vmem:[%s3 + $0x30] sm:$0xff]
    %v929 = vld [vmem:[%s3 + $0x38] sm:$0xff]
    %v930 = vld [vmem:[%s3 + $0x40] sm:$0xff]
    %v931 = vld [vmem:[%s3 + $0x48] sm:$0xff]
    %v932 = vld [vmem:[%s3 + $0x50] sm:$0xff]
    %v933 = vld [vmem:[%s3 + $0x58] sm:$0xff]
    %v934 = vld [vmem:[%s3 + $0x60] sm:$0xff]
    %v935 = vld [vmem:[%s3 + $0x68] sm:$0xff]
    %v936 = vld [vmem:[%s3 + $0x70] sm:$0xff]
    %v937 = vld [vmem:[%s3 + $0x78] sm:$0xff]
    %938 = vmatpush.msra.mxu0 %v937
    %939 = vmatpush.msra.mxu0 %v936
    %940 = vmatpush.msra.mxu0 %v935
    %941 = vmatpush.msra.mxu0 %v934
    %942 = vmatpush.msra.mxu0 %v933
    %943 = vmatpush.msra.mxu0 %v932
    %944 = vmatpush.msra.mxu0 %v931
    %945 = vmatpush.msra.mxu0 %v930
    %946 = vmatpush.msra.mxu0 %v929
    %947 = vmatpush.msra.mxu0 %v928
    %948 = vmatpush.msra.mxu0 %v927
    %949 = vmatpush.msra.mxu0 %v926
    %950 = vmatpush.msra.mxu0 %v925
    %951 = vmatpush.msra.mxu0 %v924
    %952 = vmatpush.msra.mxu0 %v923
    %953 = vmatpush.msra.mxu0 %v922
    %954 = vmatmul.f32.gmra.mxu0 %v921
    %v955 = vpop.f32.mrf.mxu0
    %v956 = vadd.f32 0.0, %v955
    %957 = vdwg.mxu0
    %958 = vst [vmem:[#allocation4] sm:$0xff] %v956
    %v959 = vld [vmem:[#allocation4] sm:$0xff]
    %v960 = vld [vmem:[#allocation4 + $0x8] sm:$0xff]
    %v961 = vld [vmem:[%s4] sm:$0xff]
    %v962 = vld [vmem:[%s4 + $0x8] sm:$0xff]
    %v963 = vld [vmem:[%s4 + $0x10] sm:$0xff]
    %v964 = vld [vmem:[%s4 + $0x18] sm:$0xff]
    %v965 = vld [vmem:[%s4 + $0x20] sm:$0xff]
    %v966 = vld [vmem:[%s4 + $0x28] sm:$0xff]
    %v967 = vld [vmem:[%s4 + $0x30] sm:$0xff]
    %v968 = vld [vmem:[%s4 + $0x38] sm:$0xff]
    %v969 = vld [vmem:[%s4 + $0x40] sm:$0xff]
    %v970 = vld [vmem:[%s4 + $0x48] sm:$0xff]
    %v971 = vld [vmem:[%s4 + $0x50] sm:$0xff]
    %v972 = vld [vmem:[%s4 + $0x58] sm:$0xff]
    %v973 = vld [vmem:[%s4 + $0x60] sm:$0xff]
    %v974 = vld [vmem:[%s4 + $0x68] sm:$0xff]
    %v975 = vld [vmem:[%s4 + $0x70] sm:$0xff]
    %v976 = vld [vmem:[%s4 + $0x78] sm:$0xff]
    %v977 = vld [vmem:[%s4 + $0x80] sm:$0xff]
    %v978 = vld [vmem:[%s4 + $0x88] sm:$0xff]
    %v979 = vld [vmem:[%s4 + $0x90] sm:$0xff]
    %v980 = vld [vmem:[%s4 + $0x98] sm:$0xff]
    %v981 = vld [vmem:[%s4 + $0xa0] sm:$0xff]
    %v982 = vld [vmem:[%s4 + $0xa8] sm:$0xff]
    %v983 = vld [vmem:[%s4 + $0xb0] sm:$0xff]
    %v984 = vld [vmem:[%s4 + $0xb8] sm:$0xff]
    %v985 = vld [vmem:[%s4 + $0xc0] sm:$0xff]
    %v986 = vld [vmem:[%s4 + $0xc8] sm:$0xff]
    %v987 = vld [vmem:[%s4 + $0xd0] sm:$0xff]
    %v988 = vld [vmem:[%s4 + $0xd8] sm:$0xff]
    %v989 = vld [vmem:[%s4 + $0xe0] sm:$0xff]
    %v990 = vld [vmem:[%s4 + $0xe8] sm:$0xff]
    %v991 = vld [vmem:[%s4 + $0xf0] sm:$0xff]
    %v992 = vld [vmem:[%s4 + $0xf8] sm:$0xff]
    %v993 = vld [vmem:[%s4 + $0x100] sm:$0xff]
    %v994 = vld [vmem:[%s4 + $0x108] sm:$0xff]
    %v995 = vld [vmem:[%s4 + $0x110] sm:$0xff]
    %v996 = vld [vmem:[%s4 + $0x118] sm:$0xff]
    %v997 = vld [vmem:[%s4 + $0x120] sm:$0xff]
    %v998 = vld [vmem:[%s4 + $0x128] sm:$0xff]
    %v999 = vld [vmem:[%s4 + $0x130] sm:$0xff]
    %v1000 = vld [vmem:[%s4 + $0x138] sm:$0xff]
    %v1001 = vld [vmem:[%s4 + $0x140] sm:$0xff]
    %v1002 = vld [vmem:[%s4 + $0x148] sm:$0xff]
    %v1003 = vld [vmem:[%s4 + $0x150] sm:$0xff]
    %v1004 = vld [vmem:[%s4 + $0x158] sm:$0xff]
    %v1005 = vld [vmem:[%s4 + $0x160] sm:$0xff]
    %v1006 = vld [vmem:[%s4 + $0x168] sm:$0xff]
    %v1007 = vld [vmem:[%s4 + $0x170] sm:$0xff]
    %v1008 = vld [vmem:[%s4 + $0x178] sm:$0xff]
    %v1009 = vld [vmem:[%s4 + $0x180] sm:$0xff]
    %v1010 = vld [vmem:[%s4 + $0x188] sm:$0xff]
    %v1011 = vld [vmem:[%s4 + $0x190] sm:$0xff]
    %v1012 = vld [vmem:[%s4 + $0x198] sm:$0xff]
    %v1013 = vld [vmem:[%s4 + $0x1a0] sm:$0xff]
    %v1014 = vld [vmem:[%s4 + $0x1a8] sm:$0xff]
    %v1015 = vld [vmem:[%s4 + $0x1b0] sm:$0xff]
    %v1016 = vld [vmem:[%s4 + $0x1b8] sm:$0xff]
    %v1017 = vld [vmem:[%s4 + $0x1c0] sm:$0xff]
    %v1018 = vld [vmem:[%s4 + $0x1c8] sm:$0xff]
    %v1019 = vld [vmem:[%s4 + $0x1d0] sm:$0xff]
    %v1020 = vld [vmem:[%s4 + $0x1d8] sm:$0xff]
    %v1021 = vld [vmem:[%s4 + $0x1e0] sm:$0xff]
    %v1022 = vld [vmem:[%s4 + $0x1e8] sm:$0xff]
    %v1023 = vld [vmem:[%s4 + $0x1f0] sm:$0xff]
    %v1024 = vld [vmem:[%s4 + $0x1f8] sm:$0xff]
    %v1025 = vld [vmem:[%s4 + $0x200] sm:$0xff]
    %v1026 = vld [vmem:[%s4 + $0x208] sm:$0xff]
    %v1027 = vld [vmem:[%s4 + $0x210] sm:$0xff]
    %v1028 = vld [vmem:[%s4 + $0x218] sm:$0xff]
    %v1029 = vld [vmem:[%s4 + $0x220] sm:$0xff]
    %v1030 = vld [vmem:[%s4 + $0x228] sm:$0xff]
    %v1031 = vld [vmem:[%s4 + $0x230] sm:$0xff]
    %v1032 = vld [vmem:[%s4 + $0x238] sm:$0xff]
    %v1033 = vld [vmem:[%s4 + $0x240] sm:$0xff]
    %v1034 = vld [vmem:[%s4 + $0x248] sm:$0xff]
    %v1035 = vld [vmem:[%s4 + $0x250] sm:$0xff]
    %v1036 = vld [vmem:[%s4 + $0x258] sm:$0xff]
    %v1037 = vld [vmem:[%s4 + $0x260] sm:$0xff]
    %v1038 = vld [vmem:[%s4 + $0x268] sm:$0xff]
    %v1039 = vld [vmem:[%s4 + $0x270] sm:$0xff]
    %v1040 = vld [vmem:[%s4 + $0x278] sm:$0xff]
    %v1041 = vld [vmem:[%s4 + $0x280] sm:$0xff]
    %v1042 = vld [vmem:[%s4 + $0x288] sm:$0xff]
    %v1043 = vld [vmem:[%s4 + $0x290] sm:$0xff]
    %v1044 = vld [vmem:[%s4 + $0x298] sm:$0xff]
    %v1045 = vld [vmem:[%s4 + $0x2a0] sm:$0xff]
    %v1046 = vld [vmem:[%s4 + $0x2a8] sm:$0xff]
    %v1047 = vld [vmem:[%s4 + $0x2b0] sm:$0xff]
    %v1048 = vld [vmem:[%s4 + $0x2b8] sm:$0xff]
    %v1049 = vld [vmem:[%s4 + $0x2c0] sm:$0xff]
    %v1050 = vld [vmem:[%s4 + $0x2c8] sm:$0xff]
    %v1051 = vld [vmem:[%s4 + $0x2d0] sm:$0xff]
    %v1052 = vld [vmem:[%s4 + $0x2d8] sm:$0xff]
    %v1053 = vld [vmem:[%s4 + $0x2e0] sm:$0xff]
    %v1054 = vld [vmem:[%s4 + $0x2e8] sm:$0xff]
    %v1055 = vld [vmem:[%s4 + $0x2f0] sm:$0xff]
    %v1056 = vld [vmem:[%s4 + $0x2f8] sm:$0xff]
    %v1057 = vld [vmem:[%s4 + $0x300] sm:$0xff]
    %v1058 = vld [vmem:[%s4 + $0x308] sm:$0xff]
    %v1059 = vld [vmem:[%s4 + $0x310] sm:$0xff]
    %v1060 = vld [vmem:[%s4 + $0x318] sm:$0xff]
    %v1061 = vld [vmem:[%s4 + $0x320] sm:$0xff]
    %v1062 = vld [vmem:[%s4 + $0x328] sm:$0xff]
    %v1063 = vld [vmem:[%s4 + $0x330] sm:$0xff]
    %v1064 = vld [vmem:[%s4 + $0x338] sm:$0xff]
    %v1065 = vld [vmem:[%s4 + $0x340] sm:$0xff]
    %v1066 = vld [vmem:[%s4 + $0x348] sm:$0xff]
    %v1067 = vld [vmem:[%s4 + $0x350] sm:$0xff]
    %v1068 = vld [vmem:[%s4 + $0x358] sm:$0xff]
    %v1069 = vld [vmem:[%s4 + $0x360] sm:$0xff]
    %v1070 = vld [vmem:[%s4 + $0x368] sm:$0xff]
    %v1071 = vld [vmem:[%s4 + $0x370] sm:$0xff]
    %v1072 = vld [vmem:[%s4 + $0x378] sm:$0xff]
    %v1073 = vld [vmem:[%s4 + $0x380] sm:$0xff]
    %v1074 = vld [vmem:[%s4 + $0x388] sm:$0xff]
    %v1075 = vld [vmem:[%s4 + $0x390] sm:$0xff]
    %v1076 = vld [vmem:[%s4 + $0x398] sm:$0xff]
    %v1077 = vld [vmem:[%s4 + $0x3a0] sm:$0xff]
    %v1078 = vld [vmem:[%s4 + $0x3a8] sm:$0xff]
    %v1079 = vld [vmem:[%s4 + $0x3b0] sm:$0xff]
    %v1080 = vld [vmem:[%s4 + $0x3b8] sm:$0xff]
    %v1081 = vld [vmem:[%s4 + $0x3c0] sm:$0xff]
    %v1082 = vld [vmem:[%s4 + $0x3c8] sm:$0xff]
    %v1083 = vld [vmem:[%s4 + $0x3d0] sm:$0xff]
    %v1084 = vld [vmem:[%s4 + $0x3d8] sm:$0xff]
    %v1085 = vld [vmem:[%s4 + $0x3e0] sm:$0xff]
    %v1086 = vld [vmem:[%s4 + $0x3e8] sm:$0xff]
    %v1087 = vld [vmem:[%s4 + $0x3f0] sm:$0xff]
    %v1088 = vld [vmem:[%s4 + $0x3f8] sm:$0xff]
    %v1089 = vld [vmem:[%s5] sm:$0xf]
    %v1091 = vperm.slane %v1089, 0
    %v1092 = vperm.slane %v1089, 1
    %v1093 = vperm.slane %v1089, 2
    %v1094 = vperm.slane %v1089, 3
    %1099 = vmatpush.msra.mxu0 %v1021
    %1100 = vmatpush.msra.mxu0 %v1017
    %1101 = vmatpush.msra.mxu0 %v1013
    %1102 = vmatpush.msra.mxu0 %v1009
    %1103 = vmatpush.msra.mxu0 %v1005
    %1104 = vmatpush.msra.mxu0 %v1001
    %1105 = vmatpush.msra.mxu0 %v997
    %1106 = vmatpush.msra.mxu0 %v993
    %1107 = vmatpush.msra.mxu0 %v989
    %1108 = vmatpush.msra.mxu0 %v985
    %1109 = vmatpush.msra.mxu0 %v981
    %1110 = vmatpush.msra.mxu0 %v977
    %1111 = vmatpush.msra.mxu0 %v973
    %1112 = vmatpush.msra.mxu0 %v969
    %1113 = vmatpush.msra.mxu0 %v965
    %1114 = vmatpush.msra.mxu0 %v961
    %1115 = vmatmul.f32.gmra.mxu0 %v959
    %v1116 = vpop.f32.mrf.mxu0
    %v1117 = vadd.f32 %v1091, %v1116
    %1118 = vdwg.mxu0
    %1119 = vmatpush.msra.mxu0 %v1085
    %1120 = vmatpush.msra.mxu0 %v1081
    %1121 = vmatpush.msra.mxu0 %v1077
    %1122 = vmatpush.msra.mxu0 %v1073
    %1123 = vmatpush.msra.mxu0 %v1069
    %1124 = vmatpush.msra.mxu0 %v1065
    %1125 = vmatpush.msra.mxu0 %v1061
    %1126 = vmatpush.msra.mxu0 %v1057
    %1127 = vmatpush.msra.mxu0 %v1053
    %1128 = vmatpush.msra.mxu0 %v1049
    %1129 = vmatpush.msra.mxu0 %v1045
    %1130 = vmatpush.msra.mxu0 %v1041
    %1131 = vmatpush.msra.mxu0 %v1037
    %1132 = vmatpush.msra.mxu0 %v1033
    %1133 = vmatpush.msra.mxu0 %v1029
    %1134 = vmatpush.msra.mxu0 %v1025
    %1135 = vmatmul.f32.gmra.mxu0 %v960
    %v1136 = vpop.f32.mrf.mxu0
    %v1137 = vadd.f32 %v1117, %v1136
    %1138 = vdwg.mxu0
    %1139 = vmatpush.msra.mxu0 %v1022
    %1140 = vmatpush.msra.mxu0 %v1018
    %1141 = vmatpush.msra.mxu0 %v1014
    %1142 = vmatpush.msra.mxu0 %v1010
    %1143 = vmatpush.msra.mxu0 %v1006
    %1144 = vmatpush.msra.mxu0 %v1002
    %1145 = vmatpush.msra.mxu0 %v998
    %1146 = vmatpush.msra.mxu0 %v994
    %1147 = vmatpush.msra.mxu0 %v990
    %1148 = vmatpush.msra.mxu0 %v986
    %1149 = vmatpush.msra.mxu0 %v982
    %1150 = vmatpush.msra.mxu0 %v978
    %1151 = vmatpush.msra.mxu0 %v974
    %1152 = vmatpush.msra.mxu0 %v970
    %1153 = vmatpush.msra.mxu0 %v966
    %1154 = vmatpush.msra.mxu0 %v962
    %1155 = vmatmul.f32.gmra.mxu0 %v959
    %v1156 = vpop.f32.mrf.mxu0
    %v1157 = vadd.f32 %v1092, %v1156
    %1158 = vdwg.mxu0
    %1159 = vmatpush.msra.mxu0 %v1086
    %1160 = vmatpush.msra.mxu0 %v1082
    %1161 = vmatpush.msra.mxu0 %v1078
    %1162 = vmatpush.msra.mxu0 %v1074
    %1163 = vmatpush.msra.mxu0 %v1070
    %1164 = vmatpush.msra.mxu0 %v1066
    %1165 = vmatpush.msra.mxu0 %v1062
    %1166 = vmatpush.msra.mxu0 %v1058
    %1167 = vmatpush.msra.mxu0 %v1054
    %1168 = vmatpush.msra.mxu0 %v1050
    %1169 = vmatpush.msra.mxu0 %v1046
    %1170 = vmatpush.msra.mxu0 %v1042
    %1171 = vmatpush.msra.mxu0 %v1038
    %1172 = vmatpush.msra.mxu0 %v1034
    %1173 = vmatpush.msra.mxu0 %v1030
    %1174 = vmatpush.msra.mxu0 %v1026
    %1175 = vmatmul.f32.gmra.mxu0 %v960
    %v1176 = vpop.f32.mrf.mxu0
    %v1177 = vadd.f32 %v1157, %v1176
    %1178 = vdwg.mxu0
    %1179 = vmatpush.msra.mxu0 %v1023
    %1180 = vmatpush.msra.mxu0 %v1019
    %1181 = vmatpush.msra.mxu0 %v1015
    %1182 = vmatpush.msra.mxu0 %v1011
    %1183 = vmatpush.msra.mxu0 %v1007
    %1184 = vmatpush.msra.mxu0 %v1003
    %1185 = vmatpush.msra.mxu0 %v999
    %1186 = vmatpush.msra.mxu0 %v995
    %1187 = vmatpush.msra.mxu0 %v991
    %1188 = vmatpush.msra.mxu0 %v987
    %1189 = vmatpush.msra.mxu0 %v983
    %1190 = vmatpush.msra.mxu0 %v979
    %1191 = vmatpush.msra.mxu0 %v975
    %1192 = vmatpush.msra.mxu0 %v971
    %1193 = vmatpush.msra.mxu0 %v967
    %1194 = vmatpush.msra.mxu0 %v963
    %1195 = vmatmul.f32.gmra.mxu0 %v959
    %v1196 = vpop.f32.mrf.mxu0
    %v1197 = vadd.f32 %v1093, %v1196
    %1198 = vdwg.mxu0
    %1199 = vmatpush.msra.mxu0 %v1087
    %1200 = vmatpush.msra.mxu0 %v1083
    %1201 = vmatpush.msra.mxu0 %v1079
    %1202 = vmatpush.msra.mxu0 %v1075
    %1203 = vmatpush.msra.mxu0 %v1071
    %1204 = vmatpush.msra.mxu0 %v1067
    %1205 = vmatpush.msra.mxu0 %v1063
    %1206 = vmatpush.msra.mxu0 %v1059
    %1207 = vmatpush.msra.mxu0 %v1055
    %1208 = vmatpush.msra.mxu0 %v1051
    %1209 = vmatpush.msra.mxu0 %v1047
    %1210 = vmatpush.msra.mxu0 %v1043
    %1211 = vmatpush.msra.mxu0 %v1039
    %1212 = vmatpush.msra.mxu0 %v1035
    %1213 = vmatpush.msra.mxu0 %v1031
    %1214 = vmatpush.msra.mxu0 %v1027
    %1215 = vmatmul.f32.gmra.mxu0 %v960
    %v1216 = vpop.f32.mrf.mxu0
    %v1217 = vadd.f32 %v1197, %v1216
    %1218 = vdwg.mxu0
    %1219 = vmatpush.msra.mxu0 %v1024
    %1220 = vmatpush.msra.mxu0 %v1020
    %1221 = vmatpush.msra.mxu0 %v1016
    %1222 = vmatpush.msra.mxu0 %v1012
    %1223 = vmatpush.msra.mxu0 %v1008
    %1224 = vmatpush.msra.mxu0 %v1004
    %1225 = vmatpush.msra.mxu0 %v1000
    %1226 = vmatpush.msra.mxu0 %v996
    %1227 = vmatpush.msra.mxu0 %v992
    %1228 = vmatpush.msra.mxu0 %v988
    %1229 = vmatpush.msra.mxu0 %v984
    %1230 = vmatpush.msra.mxu0 %v980
    %1231 = vmatpush.msra.mxu0 %v976
    %1232 = vmatpush.msra.mxu0 %v972
    %1233 = vmatpush.msra.mxu0 %v968
    %1234 = vmatpush.msra.mxu0 %v964
    %1235 = vmatmul.f32.gmra.mxu0 %v959
    %v1236 = vpop.f32.mrf.mxu0
    %v1237 = vadd.f32 %v1094, %v1236
    %1238 = vdwg.mxu0
    %1239 = vmatpush.msra.mxu0 %v1088
    %1240 = vmatpush.msra.mxu0 %v1084
    %1241 = vmatpush.msra.mxu0 %v1080
    %1242 = vmatpush.msra.mxu0 %v1076
    %1243 = vmatpush.msra.mxu0 %v1072
    %1244 = vmatpush.msra.mxu0 %v1068
    %1245 = vmatpush.msra.mxu0 %v1064
    %1246 = vmatpush.msra.mxu0 %v1060
    %1247 = vmatpush.msra.mxu0 %v1056
    %1248 = vmatpush.msra.mxu0 %v1052
    %1249 = vmatpush.msra.mxu0 %v1048
    %1250 = vmatpush.msra.mxu0 %v1044
    %1251 = vmatpush.msra.mxu0 %v1040
    %1252 = vmatpush.msra.mxu0 %v1036
    %1253 = vmatpush.msra.mxu0 %v1032
    %1254 = vmatpush.msra.mxu0 %v1028
    %1255 = vmatmul.f32.gmra.mxu0 %v960
    %v1256 = vpop.f32.mrf.mxu0
    %v1257 = vadd.f32 %v1237, %v1256
    %1258 = vdwg.mxu0
    %v1259 = vxor.u32 %v1137, 2147483648
    %v1260 = vxor.u32 %v1177, 2147483648
    %v1261 = vxor.u32 %v1217, 2147483648
    %v1262 = vmul.f32 %v1259, 1.442695
    %v1263 = vpow.pop %v1262
    %v1264 = vmul.f32 %v1260, 1.442695
    %v1265 = vpow.pop %v1264
    %v1266 = vmul.f32 %v1261, 1.442695
    %v1267 = vpow.pop %v1266
    %v1268 = vadd.f32 %v1263, 1.0
    %v1269 = vadd.f32 %v1265, 1.0
    %v1270 = vadd.f32 %v1267, 1.0
    %v1271 = vrcp.pop %v1268
    %v1272 = vmul.f32 %v1268, %v1271
    %v1273 = vsub.f32 1.0, %v1272
    %v1274 = vmul.f32 %v1271, %v1273
    %v1275 = vadd.f32 %v1271, %v1274
    %vm1276 = vweird.f32 %v1268
    %vm1277 = vweird.f32 %v1271
    %vm1278 = vmor %vm1276, %vm1277
    %v1279 = vsel %vm1278, %v1271, %v1275
    %v1280 = vand.u32 2147483647, %v1268
    %vm1281 = vcmp.eq.f32.partialorder %v1280, 8.507059e+37
    %v1282 = vand.u32 %v1268, 2147483648
    %v1283 = vor.u32 1.1754944e-38, %v1282
    %v1284 = vsel %vm1281, %v1283, %v1279
    %v1285 = vmul.f32 1.0, %v1284
    %v1286 = vrcp.pop %v1269
    %v1287 = vmul.f32 %v1269, %v1286
    %v1288 = vsub.f32 1.0, %v1287
    %v1289 = vmul.f32 %v1286, %v1288
    %v1290 = vadd.f32 %v1286, %v1289
    %vm1291 = vweird.f32 %v1269
    %vm1292 = vweird.f32 %v1286
    %vm1293 = vmor %vm1291, %vm1292
    %v1294 = vsel %vm1293, %v1286, %v1290
    %v1295 = vand.u32 2147483647, %v1269
    %vm1296 = vcmp.eq.f32.partialorder %v1295, 8.507059e+37
    %v1297 = vand.u32 %v1269, 2147483648
    %v1298 = vor.u32 1.1754944e-38, %v1297
    %v1299 = vsel %vm1296, %v1298, %v1294
    %v1300 = vmul.f32 1.0, %v1299
    %v1301 = vrcp.pop %v1270
    %v1302 = vmul.f32 %v1270, %v1301
    %v1303 = vsub.f32 1.0, %v1302
    %v1304 = vmul.f32 %v1301, %v1303
    %v1305 = vadd.f32 %v1301, %v1304
    %vm1306 = vweird.f32 %v1270
    %vm1307 = vweird.f32 %v1301
    %vm1308 = vmor %vm1306, %vm1307
    %v1309 = vsel %vm1308, %v1301, %v1305
    %v1310 = vand.u32 2147483647, %v1270
    %vm1311 = vcmp.eq.f32.partialorder %v1310, 8.507059e+37
    %v1312 = vand.u32 %v1270, 2147483648
    %v1313 = vor.u32 1.1754944e-38, %v1312
    %v1314 = vsel %vm1311, %v1313, %v1309
    %v1315 = vmul.f32 1.0, %v1314
    %v1316 = vtanh.pop %v1257
    %v1317 = vld [vmem:[#allocation3] sm:$0xff]
    %v1318 = vmul.f32 %v1300, %v1317
    %v1319 = vmul.f32 %v1285, %v1316
    %v1320 = vadd.f32 %v1318, %v1319
    %v1321 = vtanh.pop %v1320
    %v1322 = vmul.f32 %v1315, %v1321
    %1323 = vst [vmem:[#allocation3] sm:$0xff] %v1320
    %1324 = vst [vmem:[#allocation2] sm:$0xff] %v1322
    %1325 = vst [vmem:[#allocation4 + $0x8] sm:$0xff] %v1322
    %s1326 = sld [smem:[#allocation6 + $0x3]]
    %v1327 = vstv %s1326
    %vm1328 = vcmp.eq.s32.totalorder %v75, %v1327
    %vm1329 = vmand %vm83, %vm1328
    %v1330 = vsel %vm1329, 1.0, 0.0
    %s1331 = sld [smem:[#allocation6 + $0x83]]
    %v1332 = vstv %s1331
    %vm1333 = vcmp.eq.s32.totalorder %v75, %v1332
    %vm1334 = vmand %vm89, %vm1333
    %v1335 = vsel %vm1334, 1.0, %v1330
    %v1336 = vld [vmem:[%s3] sm:$0xff]
    %v1337 = vld [vmem:[%s3 + $0x8] sm:$0xff]
    %v1338 = vld [vmem:[%s3 + $0x10] sm:$0xff]
    %v1339 = vld [vmem:[%s3 + $0x18] sm:$0xff]
    %v1340 = vld [vmem:[%s3 + $0x20] sm:$0xff]
    %v1341 = vld [vmem:[%s3 + $0x28] sm:$0xff]
    %v1342 = vld [vmem:[%s3 + $0x30] sm:$0xff]
    %v1343 = vld [vmem:[%s3 + $0x38] sm:$0xff]
    %v1344 = vld [vmem:[%s3 + $0x40] sm:$0xff]
    %v1345 = vld [vmem:[%s3 + $0x48] sm:$0xff]
    %v1346 = vld [vmem:[%s3 + $0x50] sm:$0xff]
    %v1347 = vld [vmem:[%s3 + $0x58] sm:$0xff]
    %v1348 = vld [vmem:[%s3 + $0x60] sm:$0xff]
    %v1349 = vld [vmem:[%s3 + $0x68] sm:$0xff]
    %v1350 = vld [vmem:[%s3 + $0x70] sm:$0xff]
    %v1351 = vld [vmem:[%s3 + $0x78] sm:$0xff]
    %1352 = vmatpush.msra.mxu0 %v1351
    %1353 = vmatpush.msra.mxu0 %v1350
    %1354 = vmatpush.msra.mxu0 %v1349
    %1355 = vmatpush.msra.mxu0 %v1348
    %1356 = vmatpush.msra.mxu0 %v1347
    %1357 = vmatpush.msra.mxu0 %v1346
    %1358 = vmatpush.msra.mxu0 %v1345
    %1359 = vmatpush.msra.mxu0 %v1344
    %1360 = vmatpush.msra.mxu0 %v1343
    %1361 = vmatpush.msra.mxu0 %v1342
    %1362 = vmatpush.msra.mxu0 %v1341
    %1363 = vmatpush.msra.mxu0 %v1340
    %1364 = vmatpush.msra.mxu0 %v1339
    %1365 = vmatpush.msra.mxu0 %v1338
    %1366 = vmatpush.msra.mxu0 %v1337
    %1367 = vmatpush.msra.mxu0 %v1336
    %1368 = vmatmul.f32.gmra.mxu0 %v1335
    %v1369 = vpop.f32.mrf.mxu0
    %v1370 = vadd.f32 0.0, %v1369
    %1371 = vdwg.mxu0
    %1372 = vst [vmem:[#allocation4] sm:$0xff] %v1370
    %v1373 = vld [vmem:[#allocation4] sm:$0xff]
    %v1374 = vld [vmem:[#allocation4 + $0x8] sm:$0xff]
    %v1375 = vld [vmem:[%s4] sm:$0xff]
    %v1376 = vld [vmem:[%s4 + $0x8] sm:$0xff]
    %v1377 = vld [vmem:[%s4 + $0x10] sm:$0xff]
    %v1378 = vld [vmem:[%s4 + $0x18] sm:$0xff]
    %v1379 = vld [vmem:[%s4 + $0x20] sm:$0xff]
    %v1380 = vld [vmem:[%s4 + $0x28] sm:$0xff]
    %v1381 = vld [vmem:[%s4 + $0x30] sm:$0xff]
    %v1382 = vld [vmem:[%s4 + $0x38] sm:$0xff]
    %v1383 = vld [vmem:[%s4 + $0x40] sm:$0xff]
    %v1384 = vld [vmem:[%s4 + $0x48] sm:$0xff]
    %v1385 = vld [vmem:[%s4 + $0x50] sm:$0xff]
    %v1386 = vld [vmem:[%s4 + $0x58] sm:$0xff]
    %v1387 = vld [vmem:[%s4 + $0x60] sm:$0xff]
    %v1388 = vld [vmem:[%s4 + $0x68] sm:$0xff]
    %v1389 = vld [vmem:[%s4 + $0x70] sm:$0xff]
    %v1390 = vld [vmem:[%s4 + $0x78] sm:$0xff]
    %v1391 = vld [vmem:[%s4 + $0x80] sm:$0xff]
    %v1392 = vld [vmem:[%s4 + $0x88] sm:$0xff]
    %v1393 = vld [vmem:[%s4 + $0x90] sm:$0xff]
    %v1394 = vld [vmem:[%s4 + $0x98] sm:$0xff]
    %v1395 = vld [vmem:[%s4 + $0xa0] sm:$0xff]
    %v1396 = vld [vmem:[%s4 + $0xa8] sm:$0xff]
    %v1397 = vld [vmem:[%s4 + $0xb0] sm:$0xff]
    %v1398 = vld [vmem:[%s4 + $0xb8] sm:$0xff]
    %v1399 = vld [vmem:[%s4 + $0xc0] sm:$0xff]
    %v1400 = vld [vmem:[%s4 + $0xc8] sm:$0xff]
    %v1401 = vld [vmem:[%s4 + $0xd0] sm:$0xff]
    %v1402 = vld [vmem:[%s4 + $0xd8] sm:$0xff]
    %v1403 = vld [vmem:[%s4 + $0xe0] sm:$0xff]
    %v1404 = vld [vmem:[%s4 + $0xe8] sm:$0xff]
    %v1405 = vld [vmem:[%s4 + $0xf0] sm:$0xff]
    %v1406 = vld [vmem:[%s4 + $0xf8] sm:$0xff]
    %v1407 = vld [vmem:[%s4 + $0x100] sm:$0xff]
    %v1408 = vld [vmem:[%s4 + $0x108] sm:$0xff]
    %v1409 = vld [vmem:[%s4 + $0x110] sm:$0xff]
    %v1410 = vld [vmem:[%s4 + $0x118] sm:$0xff]
    %v1411 = vld [vmem:[%s4 + $0x120] sm:$0xff]
    %v1412 = vld [vmem:[%s4 + $0x128] sm:$0xff]
    %v1413 = vld [vmem:[%s4 + $0x130] sm:$0xff]
    %v1414 = vld [vmem:[%s4 + $0x138] sm:$0xff]
    %v1415 = vld [vmem:[%s4 + $0x140] sm:$0xff]
    %v1416 = vld [vmem:[%s4 + $0x148] sm:$0xff]
    %v1417 = vld [vmem:[%s4 + $0x150] sm:$0xff]
    %v1418 = vld [vmem:[%s4 + $0x158] sm:$0xff]
    %v1419 = vld [vmem:[%s4 + $0x160] sm:$0xff]
    %v1420 = vld [vmem:[%s4 + $0x168] sm:$0xff]
    %v1421 = vld [vmem:[%s4 + $0x170] sm:$0xff]
    %v1422 = vld [vmem:[%s4 + $0x178] sm:$0xff]
    %v1423 = vld [vmem:[%s4 + $0x180] sm:$0xff]
    %v1424 = vld [vmem:[%s4 + $0x188] sm:$0xff]
    %v1425 = vld [vmem:[%s4 + $0x190] sm:$0xff]
    %v1426 = vld [vmem:[%s4 + $0x198] sm:$0xff]
    %v1427 = vld [vmem:[%s4 + $0x1a0] sm:$0xff]
    %v1428 = vld [vmem:[%s4 + $0x1a8] sm:$0xff]
    %v1429 = vld [vmem:[%s4 + $0x1b0] sm:$0xff]
    %v1430 = vld [vmem:[%s4 + $0x1b8] sm:$0xff]
    %v1431 = vld [vmem:[%s4 + $0x1c0] sm:$0xff]
    %v1432 = vld [vmem:[%s4 + $0x1c8] sm:$0xff]
    %v1433 = vld [vmem:[%s4 + $0x1d0] sm:$0xff]
    %v1434 = vld [vmem:[%s4 + $0x1d8] sm:$0xff]
    %v1435 = vld [vmem:[%s4 + $0x1e0] sm:$0xff]
    %v1436 = vld [vmem:[%s4 + $0x1e8] sm:$0xff]
    %v1437 = vld [vmem:[%s4 + $0x1f0] sm:$0xff]
    %v1438 = vld [vmem:[%s4 + $0x1f8] sm:$0xff]
    %v1439 = vld [vmem:[%s4 + $0x200] sm:$0xff]
    %v1440 = vld [vmem:[%s4 + $0x208] sm:$0xff]
    %v1441 = vld [vmem:[%s4 + $0x210] sm:$0xff]
    %v1442 = vld [vmem:[%s4 + $0x218] sm:$0xff]
    %v1443 = vld [vmem:[%s4 + $0x220] sm:$0xff]
    %v1444 = vld [vmem:[%s4 + $0x228] sm:$0xff]
    %v1445 = vld [vmem:[%s4 + $0x230] sm:$0xff]
    %v1446 = vld [vmem:[%s4 + $0x238] sm:$0xff]
    %v1447 = vld [vmem:[%s4 + $0x240] sm:$0xff]
    %v1448 = vld [vmem:[%s4 + $0x248] sm:$0xff]
    %v1449 = vld [vmem:[%s4 + $0x250] sm:$0xff]
    %v1450 = vld [vmem:[%s4 + $0x258] sm:$0xff]
    %v1451 = vld [vmem:[%s4 + $0x260] sm:$0xff]
    %v1452 = vld [vmem:[%s4 + $0x268] sm:$0xff]
    %v1453 = vld [vmem:[%s4 + $0x270] sm:$0xff]
    %v1454 = vld [vmem:[%s4 + $0x278] sm:$0xff]
    %v1455 = vld [vmem:[%s4 + $0x280] sm:$0xff]
    %v1456 = vld [vmem:[%s4 + $0x288] sm:$0xff]
    %v1457 = vld [vmem:[%s4 + $0x290] sm:$0xff]
    %v1458 = vld [vmem:[%s4 + $0x298] sm:$0xff]
    %v1459 = vld [vmem:[%s4 + $0x2a0] sm:$0xff]
    %v1460 = vld [vmem:[%s4 + $0x2a8] sm:$0xff]
    %v1461 = vld [vmem:[%s4 + $0x2b0] sm:$0xff]
    %v1462 = vld [vmem:[%s4 + $0x2b8] sm:$0xff]
    %v1463 = vld [vmem:[%s4 + $0x2c0] sm:$0xff]
    %v1464 = vld [vmem:[%s4 + $0x2c8] sm:$0xff]
    %v1465 = vld [vmem:[%s4 + $0x2d0] sm:$0xff]
    %v1466 = vld [vmem:[%s4 + $0x2d8] sm:$0xff]
    %v1467 = vld [vmem:[%s4 + $0x2e0] sm:$0xff]
    %v1468 = vld [vmem:[%s4 + $0x2e8] sm:$0xff]
    %v1469 = vld [vmem:[%s4 + $0x2f0] sm:$0xff]
    %v1470 = vld [vmem:[%s4 + $0x2f8] sm:$0xff]
    %v1471 = vld [vmem:[%s4 + $0x300] sm:$0xff]
    %v1472 = vld [vmem:[%s4 + $0x308] sm:$0xff]
    %v1473 = vld [vmem:[%s4 + $0x310] sm:$0xff]
    %v1474 = vld [vmem:[%s4 + $0x318] sm:$0xff]
    %v1475 = vld [vmem:[%s4 + $0x320] sm:$0xff]
    %v1476 = vld [vmem:[%s4 + $0x328] sm:$0xff]
    %v1477 = vld [vmem:[%s4 + $0x330] sm:$0xff]
    %v1478 = vld [vmem:[%s4 + $0x338] sm:$0xff]
    %v1479 = vld [vmem:[%s4 + $0x340] sm:$0xff]
    %v1480 = vld [vmem:[%s4 + $0x348] sm:$0xff]
    %v1481 = vld [vmem:[%s4 + $0x350] sm:$0xff]
    %v1482 = vld [vmem:[%s4 + $0x358] sm:$0xff]
    %v1483 = vld [vmem:[%s4 + $0x360] sm:$0xff]
    %v1484 = vld [vmem:[%s4 + $0x368] sm:$0xff]
    %v1485 = vld [vmem:[%s4 + $0x370] sm:$0xff]
    %v1486 = vld [vmem:[%s4 + $0x378] sm:$0xff]
    %v1487 = vld [vmem:[%s4 + $0x380] sm:$0xff]
    %v1488 = vld [vmem:[%s4 + $0x388] sm:$0xff]
    %v1489 = vld [vmem:[%s4 + $0x390] sm:$0xff]
    %v1490 = vld [vmem:[%s4 + $0x398] sm:$0xff]
    %v1491 = vld [vmem:[%s4 + $0x3a0] sm:$0xff]
    %v1492 = vld [vmem:[%s4 + $0x3a8] sm:$0xff]
    %v1493 = vld [vmem:[%s4 + $0x3b0] sm:$0xff]
    %v1494 = vld [vmem:[%s4 + $0x3b8] sm:$0xff]
    %v1495 = vld [vmem:[%s4 + $0x3c0] sm:$0xff]
    %v1496 = vld [vmem:[%s4 + $0x3c8] sm:$0xff]
    %v1497 = vld [vmem:[%s4 + $0x3d0] sm:$0xff]
    %v1498 = vld [vmem:[%s4 + $0x3d8] sm:$0xff]
    %v1499 = vld [vmem:[%s4 + $0x3e0] sm:$0xff]
    %v1500 = vld [vmem:[%s4 + $0x3e8] sm:$0xff]
    %v1501 = vld [vmem:[%s4 + $0x3f0] sm:$0xff]
    %v1502 = vld [vmem:[%s4 + $0x3f8] sm:$0xff]
    %v1503 = vld [vmem:[%s5] sm:$0xf]
    %v1505 = vperm.slane %v1503, 0
    %v1506 = vperm.slane %v1503, 1
    %v1507 = vperm.slane %v1503, 2
    %v1508 = vperm.slane %v1503, 3
    %1513 = vmatpush.msra.mxu0 %v1435
    %1514 = vmatpush.msra.mxu0 %v1431
    %1515 = vmatpush.msra.mxu0 %v1427
    %1516 = vmatpush.msra.mxu0 %v1423
    %1517 = vmatpush.msra.mxu0 %v1419
    %1518 = vmatpush.msra.mxu0 %v1415
    %1519 = vmatpush.msra.mxu0 %v1411
    %1520 = vmatpush.msra.mxu0 %v1407
    %1521 = vmatpush.msra.mxu0 %v1403
    %1522 = vmatpush.msra.mxu0 %v1399
    %1523 = vmatpush.msra.mxu0 %v1395
    %1524 = vmatpush.msra.mxu0 %v1391
    %1525 = vmatpush.msra.mxu0 %v1387
    %1526 = vmatpush.msra.mxu0 %v1383
    %1527 = vmatpush.msra.mxu0 %v1379
    %1528 = vmatpush.msra.mxu0 %v1375
    %1529 = vmatmul.f32.gmra.mxu0 %v1373
    %v1530 = vpop.f32.mrf.mxu0
    %v1531 = vadd.f32 %v1505, %v1530
    %1532 = vdwg.mxu0
    %1533 = vmatpush.msra.mxu0 %v1499
    %1534 = vmatpush.msra.mxu0 %v1495
    %1535 = vmatpush.msra.mxu0 %v1491
    %1536 = vmatpush.msra.mxu0 %v1487
    %1537 = vmatpush.msra.mxu0 %v1483
    %1538 = vmatpush.msra.mxu0 %v1479
    %1539 = vmatpush.msra.mxu0 %v1475
    %1540 = vmatpush.msra.mxu0 %v1471
    %1541 = vmatpush.msra.mxu0 %v1467
    %1542 = vmatpush.msra.mxu0 %v1463
    %1543 = vmatpush.msra.mxu0 %v1459
    %1544 = vmatpush.msra.mxu0 %v1455
    %1545 = vmatpush.msra.mxu0 %v1451
    %1546 = vmatpush.msra.mxu0 %v1447
    %1547 = vmatpush.msra.mxu0 %v1443
    %1548 = vmatpush.msra.mxu0 %v1439
    %1549 = vmatmul.f32.gmra.mxu0 %v1374
    %v1550 = vpop.f32.mrf.mxu0
    %v1551 = vadd.f32 %v1531, %v1550
    %1552 = vdwg.mxu0
    %1553 = vmatpush.msra.mxu0 %v1436
    %1554 = vmatpush.msra.mxu0 %v1432
    %1555 = vmatpush.msra.mxu0 %v1428
    %1556 = vmatpush.msra.mxu0 %v1424
    %1557 = vmatpush.msra.mxu0 %v1420
    %1558 = vmatpush.msra.mxu0 %v1416
    %1559 = vmatpush.msra.mxu0 %v1412
    %1560 = vmatpush.msra.mxu0 %v1408
    %1561 = vmatpush.msra.mxu0 %v1404
    %1562 = vmatpush.msra.mxu0 %v1400
    %1563 = vmatpush.msra.mxu0 %v1396
    %1564 = vmatpush.msra.mxu0 %v1392
    %1565 = vmatpush.msra.mxu0 %v1388
    %1566 = vmatpush.msra.mxu0 %v1384
    %1567 = vmatpush.msra.mxu0 %v1380
    %1568 = vmatpush.msra.mxu0 %v1376
    %1569 = vmatmul.f32.gmra.mxu0 %v1373
    %v1570 = vpop.f32.mrf.mxu0
    %v1571 = vadd.f32 %v1506, %v1570
    %1572 = vdwg.mxu0
    %1573 = vmatpush.msra.mxu0 %v1500
    %1574 = vmatpush.msra.mxu0 %v1496
    %1575 = vmatpush.msra.mxu0 %v1492
    %1576 = vmatpush.msra.mxu0 %v1488
    %1577 = vmatpush.msra.mxu0 %v1484
    %1578 = vmatpush.msra.mxu0 %v1480
    %1579 = vmatpush.msra.mxu0 %v1476
    %1580 = vmatpush.msra.mxu0 %v1472
    %1581 = vmatpush.msra.mxu0 %v1468
    %1582 = vmatpush.msra.mxu0 %v1464
    %1583 = vmatpush.msra.mxu0 %v1460
    %1584 = vmatpush.msra.mxu0 %v1456
    %1585 = vmatpush.msra.mxu0 %v1452
    %1586 = vmatpush.msra.mxu0 %v1448
    %1587 = vmatpush.msra.mxu0 %v1444
    %1588 = vmatpush.msra.mxu0 %v1440
    %1589 = vmatmul.f32.gmra.mxu0 %v1374
    %v1590 = vpop.f32.mrf.mxu0
    %v1591 = vadd.f32 %v1571, %v1590
    %1592 = vdwg.mxu0
    %1593 = vmatpush.msra.mxu0 %v1437
    %1594 = vmatpush.msra.mxu0 %v1433
    %1595 = vmatpush.msra.mxu0 %v1429
    %1596 = vmatpush.msra.mxu0 %v1425
    %1597 = vmatpush.msra.mxu0 %v1421
    %1598 = vmatpush.msra.mxu0 %v1417
    %1599 = vmatpush.msra.mxu0 %v1413
    %1600 = vmatpush.msra.mxu0 %v1409
    %1601 = vmatpush.msra.mxu0 %v1405
    %1602 = vmatpush.msra.mxu0 %v1401
    %1603 = vmatpush.msra.mxu0 %v1397
    %1604 = vmatpush.msra.mxu0 %v1393
    %1605 = vmatpush.msra.mxu0 %v1389
    %1606 = vmatpush.msra.mxu0 %v1385
    %1607 = vmatpush.msra.mxu0 %v1381
    %1608 = vmatpush.msra.mxu0 %v1377
    %1609 = vmatmul.f32.gmra.mxu0 %v1373
    %v1610 = vpop.f32.mrf.mxu0
    %v1611 = vadd.f32 %v1507, %v1610
    %1612 = vdwg.mxu0
    %1613 = vmatpush.msra.mxu0 %v1501
    %1614 = vmatpush.msra.mxu0 %v1497
    %1615 = vmatpush.msra.mxu0 %v1493
    %1616 = vmatpush.msra.mxu0 %v1489
    %1617 = vmatpush.msra.mxu0 %v1485
    %1618 = vmatpush.msra.mxu0 %v1481
    %1619 = vmatpush.msra.mxu0 %v1477
    %1620 = vmatpush.msra.mxu0 %v1473
    %1621 = vmatpush.msra.mxu0 %v1469
    %1622 = vmatpush.msra.mxu0 %v1465
    %1623 = vmatpush.msra.mxu0 %v1461
    %1624 = vmatpush.msra.mxu0 %v1457
    %1625 = vmatpush.msra.mxu0 %v1453
    %1626 = vmatpush.msra.mxu0 %v1449
    %1627 = vmatpush.msra.mxu0 %v1445
    %1628 = vmatpush.msra.mxu0 %v1441
    %1629 = vmatmul.f32.gmra.mxu0 %v1374
    %v1630 = vpop.f32.mrf.mxu0
    %v1631 = vadd.f32 %v1611, %v1630
    %1632 = vdwg.mxu0
    %1633 = vmatpush.msra.mxu0 %v1438
    %1634 = vmatpush.msra.mxu0 %v1434
    %1635 = vmatpush.msra.mxu0 %v1430
    %1636 = vmatpush.msra.mxu0 %v1426
    %1637 = vmatpush.msra.mxu0 %v1422
    %1638 = vmatpush.msra.mxu0 %v1418
    %1639 = vmatpush.msra.mxu0 %v1414
    %1640 = vmatpush.msra.mxu0 %v1410
    %1641 = vmatpush.msra.mxu0 %v1406
    %1642 = vmatpush.msra.mxu0 %v1402
    %1643 = vmatpush.msra.mxu0 %v1398
    %1644 = vmatpush.msra.mxu0 %v1394
    %1645 = vmatpush.msra.mxu0 %v1390
    %1646 = vmatpush.msra.mxu0 %v1386
    %1647 = vmatpush.msra.mxu0 %v1382
    %1648 = vmatpush.msra.mxu0 %v1378
    %1649 = vmatmul.f32.gmra.mxu0 %v1373
    %v1650 = vpop.f32.mrf.mxu0
    %v1651 = vadd.f32 %v1508, %v1650
    %1652 = vdwg.mxu0
    %1653 = vmatpush.msra.mxu0 %v1502
    %1654 = vmatpush.msra.mxu0 %v1498
    %1655 = vmatpush.msra.mxu0 %v1494
    %1656 = vmatpush.msra.mxu0 %v1490
    %1657 = vmatpush.msra.mxu0 %v1486
    %1658 = vmatpush.msra.mxu0 %v1482
    %1659 = vmatpush.msra.mxu0 %v1478
    %1660 = vmatpush.msra.mxu0 %v1474
    %1661 = vmatpush.msra.mxu0 %v1470
    %1662 = vmatpush.msra.mxu0 %v1466
    %1663 = vmatpush.msra.mxu0 %v1462
    %1664 = vmatpush.msra.mxu0 %v1458
    %1665 = vmatpush.msra.mxu0 %v1454
    %1666 = vmatpush.msra.mxu0 %v1450
    %1667 = vmatpush.msra.mxu0 %v1446
    %1668 = vmatpush.msra.mxu0 %v1442
    %1669 = vmatmul.f32.gmra.mxu0 %v1374
    %v1670 = vpop.f32.mrf.mxu0
    %v1671 = vadd.f32 %v1651, %v1670
    %1672 = vdwg.mxu0
    %v1673 = vxor.u32 %v1551, 2147483648
    %v1674 = vxor.u32 %v1591, 2147483648
    %v1675 = vxor.u32 %v1631, 2147483648
    %v1676 = vmul.f32 %v1673, 1.442695
    %v1677 = vpow.pop %v1676
    %v1678 = vmul.f32 %v1674, 1.442695
    %v1679 = vpow.pop %v1678
    %v1680 = vmul.f32 %v1675, 1.442695
    %v1681 = vpow.pop %v1680
    %v1682 = vadd.f32 %v1677, 1.0
    %v1683 = vadd.f32 %v1679, 1.0
    %v1684 = vadd.f32 %v1681, 1.0
    %v1685 = vrcp.pop %v1682
    %v1686 = vmul.f32 %v1682, %v1685
    %v1687 = vsub.f32 1.0, %v1686
    %v1688 = vmul.f32 %v1685, %v1687
    %v1689 = vadd.f32 %v1685, %v1688
    %vm1690 = vweird.f32 %v1682
    %vm1691 = vweird.f32 %v1685
    %vm1692 = vmor %vm1690, %vm1691
    %v1693 = vsel %vm1692, %v1685, %v1689
    %v1694 = vand.u32 2147483647, %v1682
    %vm1695 = vcmp.eq.f32.partialorder %v1694, 8.507059e+37
    %v1696 = vand.u32 %v1682, 2147483648
    %v1697 = vor.u32 1.1754944e-38, %v1696
    %v1698 = vsel %vm1695, %v1697, %v1693
    %v1699 = vmul.f32 1.0, %v1698
    %v1700 = vrcp.pop %v1683
    %v1701 = vmul.f32 %v1683, %v1700
    %v1702 = vsub.f32 1.0, %v1701
    %v1703 = vmul.f32 %v1700, %v1702
    %v1704 = vadd.f32 %v1700, %v1703
    %vm1705 = vweird.f32 %v1683
    %vm1706 = vweird.f32 %v1700
    %vm1707 = vmor %vm1705, %vm1706
    %v1708 = vsel %vm1707, %v1700, %v1704
    %v1709 = vand.u32 2147483647, %v1683
    %vm1710 = vcmp.eq.f32.partialorder %v1709, 8.507059e+37
    %v1711 = vand.u32 %v1683, 2147483648
    %v1712 = vor.u32 1.1754944e-38, %v1711
    %v1713 = vsel %vm1710, %v1712, %v1708
    %v1714 = vmul.f32 1.0, %v1713
    %v1715 = vrcp.pop %v1684
    %v1716 = vmul.f32 %v1684, %v1715
    %v1717 = vsub.f32 1.0, %v1716
    %v1718 = vmul.f32 %v1715, %v1717
    %v1719 = vadd.f32 %v1715, %v1718
    %vm1720 = vweird.f32 %v1684
    %vm1721 = vweird.f32 %v1715
    %vm1722 = vmor %vm1720, %vm1721
    %v1723 = vsel %vm1722, %v1715, %v1719
    %v1724 = vand.u32 2147483647, %v1684
    %vm1725 = vcmp.eq.f32.partialorder %v1724, 8.507059e+37
    %v1726 = vand.u32 %v1684, 2147483648
    %v1727 = vor.u32 1.1754944e-38, %v1726
    %v1728 = vsel %vm1725, %v1727, %v1723
    %v1729 = vmul.f32 1.0, %v1728
    %v1730 = vtanh.pop %v1671
    %v1731 = vld [vmem:[#allocation3] sm:$0xff]
    %v1732 = vmul.f32 %v1714, %v1731
    %v1733 = vmul.f32 %v1699, %v1730
    %v1734 = vadd.f32 %v1732, %v1733
    %v1735 = vtanh.pop %v1734
    %v1736 = vmul.f32 %v1729, %v1735
    %1737 = vst [vmem:[#allocation3] sm:$0xff] %v1734
    %1738 = vst [vmem:[#allocation2] sm:$0xff] %v1736
    %1739 = vst [vmem:[#allocation4 + $0x8] sm:$0xff] %v1736
    %s1740 = sld [smem:[#allocation6 + $0x4]]
    %v1741 = vstv %s1740
    %vm1742 = vcmp.eq.s32.totalorder %v75, %v1741
    %vm1743 = vmand %vm83, %vm1742
    %v1744 = vsel %vm1743, 1.0, 0.0
    %s1745 = sld [smem:[#allocation6 + $0x84]]
    %v1746 = vstv %s1745
    %vm1747 = vcmp.eq.s32.totalorder %v75, %v1746
    %vm1748 = vmand %vm89, %vm1747
    %v1749 = vsel %vm1748, 1.0, %v1744
    %v1750 = vld [vmem:[%s3] sm:$0xff]
    %v1751 = vld [vmem:[%s3 + $0x8] sm:$0xff]
    %v1752 = vld [vmem:[%s3 + $0x10] sm:$0xff]
    %v1753 = vld [vmem:[%s3 + $0x18] sm:$0xff]
    %v1754 = vld [vmem:[%s3 + $0x20] sm:$0xff]
    %v1755 = vld [vmem:[%s3 + $0x28] sm:$0xff]
    %v1756 = vld [vmem:[%s3 + $0x30] sm:$0xff]
    %v1757 = vld [vmem:[%s3 + $0x38] sm:$0xff]
    %v1758 = vld [vmem:[%s3 + $0x40] sm:$0xff]
    %v1759 = vld [vmem:[%s3 + $0x48] sm:$0xff]
    %v1760 = vld [vmem:[%s3 + $0x50] sm:$0xff]
    %v1761 = vld [vmem:[%s3 + $0x58] sm:$0xff]
    %v1762 = vld [vmem:[%s3 + $0x60] sm:$0xff]
    %v1763 = vld [vmem:[%s3 + $0x68] sm:$0xff]
    %v1764 = vld [vmem:[%s3 + $0x70] sm:$0xff]
    %v1765 = vld [vmem:[%s3 + $0x78] sm:$0xff]
    %1766 = vmatpush.msra.mxu0 %v1765
    %1767 = vmatpush.msra.mxu0 %v1764
    %1768 = vmatpush.msra.mxu0 %v1763
    %1769 = vmatpush.msra.mxu0 %v1762
    %1770 = vmatpush.msra.mxu0 %v1761
    %1771 = vmatpush.msra.mxu0 %v1760
    %1772 = vmatpush.msra.mxu0 %v1759
    %1773 = vmatpush.msra.mxu0 %v1758
    %1774 = vmatpush.msra.mxu0 %v1757
    %1775 = vmatpush.msra.mxu0 %v1756
    %1776 = vmatpush.msra.mxu0 %v1755
    %1777 = vmatpush.msra.mxu0 %v1754
    %1778 = vmatpush.msra.mxu0 %v1753
    %1779 = vmatpush.msra.mxu0 %v1752
    %1780 = vmatpush.msra.mxu0 %v1751
    %1781 = vmatpush.msra.mxu0 %v1750
    %1782 = vmatmul.f32.gmra.mxu0 %v1749
    %v1783 = vpop.f32.mrf.mxu0
    %v1784 = vadd.f32 0.0, %v1783
    %1785 = vdwg.mxu0
    %1786 = vst [vmem:[#allocation4] sm:$0xff] %v1784
    %v1787 = vld [vmem:[#allocation4] sm:$0xff]
    %v1788 = vld [vmem:[#allocation4 + $0x8] sm:$0xff]
    %v1789 = vld [vmem:[%s4] sm:$0xff]
    %v1790 = vld [vmem:[%s4 + $0x8] sm:$0xff]
    %v1791 = vld [vmem:[%s4 + $0x10] sm:$0xff]
    %v1792 = vld [vmem:[%s4 + $0x18] sm:$0xff]
    %v1793 = vld [vmem:[%s4 + $0x20] sm:$0xff]
    %v1794 = vld [vmem:[%s4 + $0x28] sm:$0xff]
    %v1795 = vld [vmem:[%s4 + $0x30] sm:$0xff]
    %v1796 = vld [vmem:[%s4 + $0x38] sm:$0xff]
    %v1797 = vld [vmem:[%s4 + $0x40] sm:$0xff]
    %v1798 = vld [vmem:[%s4 + $0x48] sm:$0xff]
    %v1799 = vld [vmem:[%s4 + $0x50] sm:$0xff]
    %v1800 = vld [vmem:[%s4 + $0x58] sm:$0xff]
    %v1801 = vld [vmem:[%s4 + $0x60] sm:$0xff]
    %v1802 = vld [vmem:[%s4 + $0x68] sm:$0xff]
    %v1803 = vld [vmem:[%s4 + $0x70] sm:$0xff]
    %v1804 = vld [vmem:[%s4 + $0x78] sm:$0xff]
    %v1805 = vld [vmem:[%s4 + $0x80] sm:$0xff]
    %v1806 = vld [vmem:[%s4 + $0x88] sm:$0xff]
    %v1807 = vld [vmem:[%s4 + $0x90] sm:$0xff]
    %v1808 = vld [vmem:[%s4 + $0x98] sm:$0xff]
    %v1809 = vld [vmem:[%s4 + $0xa0] sm:$0xff]
    %v1810 = vld [vmem:[%s4 + $0xa8] sm:$0xff]
    %v1811 = vld [vmem:[%s4 + $0xb0] sm:$0xff]
    %v1812 = vld [vmem:[%s4 + $0xb8] sm:$0xff]
    %v1813 = vld [vmem:[%s4 + $0xc0] sm:$0xff]
    %v1814 = vld [vmem:[%s4 + $0xc8] sm:$0xff]
    %v1815 = vld [vmem:[%s4 + $0xd0] sm:$0xff]
    %v1816 = vld [vmem:[%s4 + $0xd8] sm:$0xff]
    %v1817 = vld [vmem:[%s4 + $0xe0] sm:$0xff]
    %v1818 = vld [vmem:[%s4 + $0xe8] sm:$0xff]
    %v1819 = vld [vmem:[%s4 + $0xf0] sm:$0xff]
    %v1820 = vld [vmem:[%s4 + $0xf8] sm:$0xff]
    %v1821 = vld [vmem:[%s4 + $0x100] sm:$0xff]
    %v1822 = vld [vmem:[%s4 + $0x108] sm:$0xff]
    %v1823 = vld [vmem:[%s4 + $0x110] sm:$0xff]
    %v1824 = vld [vmem:[%s4 + $0x118] sm:$0xff]
    %v1825 = vld [vmem:[%s4 + $0x120] sm:$0xff]
    %v1826 = vld [vmem:[%s4 + $0x128] sm:$0xff]
    %v1827 = vld [vmem:[%s4 + $0x130] sm:$0xff]
    %v1828 = vld [vmem:[%s4 + $0x138] sm:$0xff]
    %v1829 = vld [vmem:[%s4 + $0x140] sm:$0xff]
    %v1830 = vld [vmem:[%s4 + $0x148] sm:$0xff]
    %v1831 = vld [vmem:[%s4 + $0x150] sm:$0xff]
    %v1832 = vld [vmem:[%s4 + $0x158] sm:$0xff]
    %v1833 = vld [vmem:[%s4 + $0x160] sm:$0xff]
    %v1834 = vld [vmem:[%s4 + $0x168] sm:$0xff]
    %v1835 = vld [vmem:[%s4 + $0x170] sm:$0xff]
    %v1836 = vld [vmem:[%s4 + $0x178] sm:$0xff]
    %v1837 = vld [vmem:[%s4 + $0x180] sm:$0xff]
    %v1838 = vld [vmem:[%s4 + $0x188] sm:$0xff]
    %v1839 = vld [vmem:[%s4 + $0x190] sm:$0xff]
    %v1840 = vld [vmem:[%s4 + $0x198] sm:$0xff]
    %v1841 = vld [vmem:[%s4 + $0x1a0] sm:$0xff]
    %v1842 = vld [vmem:[%s4 + $0x1a8] sm:$0xff]
    %v1843 = vld [vmem:[%s4 + $0x1b0] sm:$0xff]
    %v1844 = vld [vmem:[%s4 + $0x1b8] sm:$0xff]
    %v1845 = vld [vmem:[%s4 + $0x1c0] sm:$0xff]
    %v1846 = vld [vmem:[%s4 + $0x1c8] sm:$0xff]
    %v1847 = vld [vmem:[%s4 + $0x1d0] sm:$0xff]
    %v1848 = vld [vmem:[%s4 + $0x1d8] sm:$0xff]
    %v1849 = vld [vmem:[%s4 + $0x1e0] sm:$0xff]
    %v1850 = vld [vmem:[%s4 + $0x1e8] sm:$0xff]
    %v1851 = vld [vmem:[%s4 + $0x1f0] sm:$0xff]
    %v1852 = vld [vmem:[%s4 + $0x1f8] sm:$0xff]
    %v1853 = vld [vmem:[%s4 + $0x200] sm:$0xff]
    %v1854 = vld [vmem:[%s4 + $0x208] sm:$0xff]
    %v1855 = vld [vmem:[%s4 + $0x210] sm:$0xff]
    %v1856 = vld [vmem:[%s4 + $0x218] sm:$0xff]
    %v1857 = vld [vmem:[%s4 + $0x220] sm:$0xff]
    %v1858 = vld [vmem:[%s4 + $0x228] sm:$0xff]
    %v1859 = vld [vmem:[%s4 + $0x230] sm:$0xff]
    %v1860 = vld [vmem:[%s4 + $0x238] sm:$0xff]
    %v1861 = vld [vmem:[%s4 + $0x240] sm:$0xff]
    %v1862 = vld [vmem:[%s4 + $0x248] sm:$0xff]
    %v1863 = vld [vmem:[%s4 + $0x250] sm:$0xff]
    %v1864 = vld [vmem:[%s4 + $0x258] sm:$0xff]
    %v1865 = vld [vmem:[%s4 + $0x260] sm:$0xff]
    %v1866 = vld [vmem:[%s4 + $0x268] sm:$0xff]
    %v1867 = vld [vmem:[%s4 + $0x270] sm:$0xff]
    %v1868 = vld [vmem:[%s4 + $0x278] sm:$0xff]
    %v1869 = vld [vmem:[%s4 + $0x280] sm:$0xff]
    %v1870 = vld [vmem:[%s4 + $0x288] sm:$0xff]
    %v1871 = vld [vmem:[%s4 + $0x290] sm:$0xff]
    %v1872 = vld [vmem:[%s4 + $0x298] sm:$0xff]
    %v1873 = vld [vmem:[%s4 + $0x2a0] sm:$0xff]
    %v1874 = vld [vmem:[%s4 + $0x2a8] sm:$0xff]
    %v1875 = vld [vmem:[%s4 + $0x2b0] sm:$0xff]
    %v1876 = vld [vmem:[%s4 + $0x2b8] sm:$0xff]
    %v1877 = vld [vmem:[%s4 + $0x2c0] sm:$0xff]
    %v1878 = vld [vmem:[%s4 + $0x2c8] sm:$0xff]
    %v1879 = vld [vmem:[%s4 + $0x2d0] sm:$0xff]
    %v1880 = vld [vmem:[%s4 + $0x2d8] sm:$0xff]
    %v1881 = vld [vmem:[%s4 + $0x2e0] sm:$0xff]
    %v1882 = vld [vmem:[%s4 + $0x2e8] sm:$0xff]
    %v1883 = vld [vmem:[%s4 + $0x2f0] sm:$0xff]
    %v1884 = vld [vmem:[%s4 + $0x2f8] sm:$0xff]
    %v1885 = vld [vmem:[%s4 + $0x300] sm:$0xff]
    %v1886 = vld [vmem:[%s4 + $0x308] sm:$0xff]
    %v1887 = vld [vmem:[%s4 + $0x310] sm:$0xff]
    %v1888 = vld [vmem:[%s4 + $0x318] sm:$0xff]
    %v1889 = vld [vmem:[%s4 + $0x320] sm:$0xff]
    %v1890 = vld [vmem:[%s4 + $0x328] sm:$0xff]
    %v1891 = vld [vmem:[%s4 + $0x330] sm:$0xff]
    %v1892 = vld [vmem:[%s4 + $0x338] sm:$0xff]
    %v1893 = vld [vmem:[%s4 + $0x340] sm:$0xff]
    %v1894 = vld [vmem:[%s4 + $0x348] sm:$0xff]
    %v1895 = vld [vmem:[%s4 + $0x350] sm:$0xff]
    %v1896 = vld [vmem:[%s4 + $0x358] sm:$0xff]
    %v1897 = vld [vmem:[%s4 + $0x360] sm:$0xff]
    %v1898 = vld [vmem:[%s4 + $0x368] sm:$0xff]
    %v1899 = vld [vmem:[%s4 + $0x370] sm:$0xff]
    %v1900 = vld [vmem:[%s4 + $0x378] sm:$0xff]
    %v1901 = vld [vmem:[%s4 + $0x380] sm:$0xff]
    %v1902 = vld [vmem:[%s4 + $0x388] sm:$0xff]
    %v1903 = vld [vmem:[%s4 + $0x390] sm:$0xff]
    %v1904 = vld [vmem:[%s4 + $0x398] sm:$0xff]
    %v1905 = vld [vmem:[%s4 + $0x3a0] sm:$0xff]
    %v1906 = vld [vmem:[%s4 + $0x3a8] sm:$0xff]
    %v1907 = vld [vmem:[%s4 + $0x3b0] sm:$0xff]
    %v1908 = vld [vmem:[%s4 + $0x3b8] sm:$0xff]
    %v1909 = vld [vmem:[%s4 + $0x3c0] sm:$0xff]
    %v1910 = vld [vmem:[%s4 + $0x3c8] sm:$0xff]
    %v1911 = vld [vmem:[%s4 + $0x3d0] sm:$0xff]
    %v1912 = vld [vmem:[%s4 + $0x3d8] sm:$0xff]
    %v1913 = vld [vmem:[%s4 + $0x3e0] sm:$0xff]
    %v1914 = vld [vmem:[%s4 + $0x3e8] sm:$0xff]
    %v1915 = vld [vmem:[%s4 + $0x3f0] sm:$0xff]
    %v1916 = vld [vmem:[%s4 + $0x3f8] sm:$0xff]
    %v1917 = vld [vmem:[%s5] sm:$0xf]
    %v1919 = vperm.slane %v1917, 0
    %v1920 = vperm.slane %v1917, 1
    %v1921 = vperm.slane %v1917, 2
    %v1922 = vperm.slane %v1917, 3
    %1927 = vmatpush.msra.mxu0 %v1849
    %1928 = vmatpush.msra.mxu0 %v1845
    %1929 = vmatpush.msra.mxu0 %v1841
    %1930 = vmatpush.msra.mxu0 %v1837
    %1931 = vmatpush.msra.mxu0 %v1833
    %1932 = vmatpush.msra.mxu0 %v1829
    %1933 = vmatpush.msra.mxu0 %v1825
    %1934 = vmatpush.msra.mxu0 %v1821
    %1935 = vmatpush.msra.mxu0 %v1817
    %1936 = vmatpush.msra.mxu0 %v1813
    %1937 = vmatpush.msra.mxu0 %v1809
    %1938 = vmatpush.msra.mxu0 %v1805
    %1939 = vmatpush.msra.mxu0 %v1801
    %1940 = vmatpush.msra.mxu0 %v1797
    %1941 = vmatpush.msra.mxu0 %v1793
    %1942 = vmatpush.msra.mxu0 %v1789
    %1943 = vmatmul.f32.gmra.mxu0 %v1787
    %v1944 = vpop.f32.mrf.mxu0
    %v1945 = vadd.f32 %v1919, %v1944
    %1946 = vdwg.mxu0
    %1947 = vmatpush.msra.mxu0 %v1913
    %1948 = vmatpush.msra.mxu0 %v1909
    %1949 = vmatpush.msra.mxu0 %v1905
    %1950 = vmatpush.msra.mxu0 %v1901
    %1951 = vmatpush.msra.mxu0 %v1897
    %1952 = vmatpush.msra.mxu0 %v1893
    %1953 = vmatpush.msra.mxu0 %v1889
    %1954 = vmatpush.msra.mxu0 %v1885
    %1955 = vmatpush.msra.mxu0 %v1881
    %1956 = vmatpush.msra.mxu0 %v1877
    %1957 = vmatpush.msra.mxu0 %v1873
    %1958 = vmatpush.msra.mxu0 %v1869
    %1959 = vmatpush.msra.mxu0 %v1865
    %1960 = vmatpush.msra.mxu0 %v1861
    %1961 = vmatpush.msra.mxu0 %v1857
    %1962 = vmatpush.msra.mxu0 %v1853
    %1963 = vmatmul.f32.gmra.mxu0 %v1788
    %v1964 = vpop.f32.mrf.mxu0
    %v1965 = vadd.f32 %v1945, %v1964
    %1966 = vdwg.mxu0
    %1967 = vmatpush.msra.mxu0 %v1850
    %1968 = vmatpush.msra.mxu0 %v1846
    %1969 = vmatpush.msra.mxu0 %v1842
    %1970 = vmatpush.msra.mxu0 %v1838
    %1971 = vmatpush.msra.mxu0 %v1834
    %1972 = vmatpush.msra.mxu0 %v1830
    %1973 = vmatpush.msra.mxu0 %v1826
    %1974 = vmatpush.msra.mxu0 %v1822
    %1975 = vmatpush.msra.mxu0 %v1818
    %1976 = vmatpush.msra.mxu0 %v1814
    %1977 = vmatpush.msra.mxu0 %v1810
    %1978 = vmatpush.msra.mxu0 %v1806
    %1979 = vmatpush.msra.mxu0 %v1802
    %1980 = vmatpush.msra.mxu0 %v1798
    %1981 = vmatpush.msra.mxu0 %v1794
    %1982 = vmatpush.msra.mxu0 %v1790
    %1983 = vmatmul.f32.gmra.mxu0 %v1787
    %v1984 = vpop.f32.mrf.mxu0
    %v1985 = vadd.f32 %v1920, %v1984
    %1986 = vdwg.mxu0
    %1987 = vmatpush.msra.mxu0 %v1914
    %1988 = vmatpush.msra.mxu0 %v1910
    %1989 = vmatpush.msra.mxu0 %v1906
    %1990 = vmatpush.msra.mxu0 %v1902
    %1991 = vmatpush.msra.mxu0 %v1898
    %1992 = vmatpush.msra.mxu0 %v1894
    %1993 = vmatpush.msra.mxu0 %v1890
    %1994 = vmatpush.msra.mxu0 %v1886
    %1995 = vmatpush.msra.mxu0 %v1882
    %1996 = vmatpush.msra.mxu0 %v1878
    %1997 = vmatpush.msra.mxu0 %v1874
    %1998 = vmatpush.msra.mxu0 %v1870
    %1999 = vmatpush.msra.mxu0 %v1866
    %2000 = vmatpush.msra.mxu0 %v1862
    %2001 = vmatpush.msra.mxu0 %v1858
    %2002 = vmatpush.msra.mxu0 %v1854
    %2003 = vmatmul.f32.gmra.mxu0 %v1788
    %v2004 = vpop.f32.mrf.mxu0
    %v2005 = vadd.f32 %v1985, %v2004
    %2006 = vdwg.mxu0
    %2007 = vmatpush.msra.mxu0 %v1851
    %2008 = vmatpush.msra.mxu0 %v1847
    %2009 = vmatpush.msra.mxu0 %v1843
    %2010 = vmatpush.msra.mxu0 %v1839
    %2011 = vmatpush.msra.mxu0 %v1835
    %2012 = vmatpush.msra.mxu0 %v1831
    %2013 = vmatpush.msra.mxu0 %v1827
    %2014 = vmatpush.msra.mxu0 %v1823
    %2015 = vmatpush.msra.mxu0 %v1819
    %2016 = vmatpush.msra.mxu0 %v1815
    %2017 = vmatpush.msra.mxu0 %v1811
    %2018 = vmatpush.msra.mxu0 %v1807
    %2019 = vmatpush.msra.mxu0 %v1803
    %2020 = vmatpush.msra.mxu0 %v1799
    %2021 = vmatpush.msra.mxu0 %v1795
    %2022 = vmatpush.msra.mxu0 %v1791
    %2023 = vmatmul.f32.gmra.mxu0 %v1787
    %v2024 = vpop.f32.mrf.mxu0
    %v2025 = vadd.f32 %v1921, %v2024
    %2026 = vdwg.mxu0
    %2027 = vmatpush.msra.mxu0 %v1915
    %2028 = vmatpush.msra.mxu0 %v1911
    %2029 = vmatpush.msra.mxu0 %v1907
    %2030 = vmatpush.msra.mxu0 %v1903
    %2031 = vmatpush.msra.mxu0 %v1899
    %2032 = vmatpush.msra.mxu0 %v1895
    %2033 = vmatpush.msra.mxu0 %v1891
    %2034 = vmatpush.msra.mxu0 %v1887
    %2035 = vmatpush.msra.mxu0 %v1883
    %2036 = vmatpush.msra.mxu0 %v1879
    %2037 = vmatpush.msra.mxu0 %v1875
    %2038 = vmatpush.msra.mxu0 %v1871
    %2039 = vmatpush.msra.mxu0 %v1867
    %2040 = vmatpush.msra.mxu0 %v1863
    %2041 = vmatpush.msra.mxu0 %v1859
    %2042 = vmatpush.msra.mxu0 %v1855
    %2043 = vmatmul.f32.gmra.mxu0 %v1788
    %v2044 = vpop.f32.mrf.mxu0
    %v2045 = vadd.f32 %v2025, %v2044
    %2046 = vdwg.mxu0
    %2047 = vmatpush.msra.mxu0 %v1852
    %2048 = vmatpush.msra.mxu0 %v1848
    %2049 = vmatpush.msra.mxu0 %v1844
    %2050 = vmatpush.msra.mxu0 %v1840
    %2051 = vmatpush.msra.mxu0 %v1836
    %2052 = vmatpush.msra.mxu0 %v1832
    %2053 = vmatpush.msra.mxu0 %v1828
    %2054 = vmatpush.msra.mxu0 %v1824
    %2055 = vmatpush.msra.mxu0 %v1820
    %2056 = vmatpush.msra.mxu0 %v1816
    %2057 = vmatpush.msra.mxu0 %v1812
    %2058 = vmatpush.msra.mxu0 %v1808
    %2059 = vmatpush.msra.mxu0 %v1804
    %2060 = vmatpush.msra.mxu0 %v1800
    %2061 = vmatpush.msra.mxu0 %v1796
    %2062 = vmatpush.msra.mxu0 %v1792
    %2063 = vmatmul.f32.gmra.mxu0 %v1787
    %v2064 = vpop.f32.mrf.mxu0
    %v2065 = vadd.f32 %v1922, %v2064
    %2066 = vdwg.mxu0
    %2067 = vmatpush.msra.mxu0 %v1916
    %2068 = vmatpush.msra.mxu0 %v1912
    %2069 = vmatpush.msra.mxu0 %v1908
    %2070 = vmatpush.msra.mxu0 %v1904
    %2071 = vmatpush.msra.mxu0 %v1900
    %2072 = vmatpush.msra.mxu0 %v1896
    %2073 = vmatpush.msra.mxu0 %v1892
    %2074 = vmatpush.msra.mxu0 %v1888
    %2075 = vmatpush.msra.mxu0 %v1884
    %2076 = vmatpush.msra.mxu0 %v1880
    %2077 = vmatpush.msra.mxu0 %v1876
    %2078 = vmatpush.msra.mxu0 %v1872
    %2079 = vmatpush.msra.mxu0 %v1868
    %2080 = vmatpush.msra.mxu0 %v1864
    %2081 = vmatpush.msra.mxu0 %v1860
    %2082 = vmatpush.msra.mxu0 %v1856
    %2083 = vmatmul.f32.gmra.mxu0 %v1788
    %v2084 = vpop.f32.mrf.mxu0
    %v2085 = vadd.f32 %v2065, %v2084
    %2086 = vdwg.mxu0
    %v2087 = vxor.u32 %v1965, 2147483648
    %v2088 = vxor.u32 %v2005, 2147483648
    %v2089 = vxor.u32 %v2045, 2147483648
    %v2090 = vmul.f32 %v2087, 1.442695
    %v2091 = vpow.pop %v2090
    %v2092 = vmul.f32 %v2088, 1.442695
    %v2093 = vpow.pop %v2092
    %v2094 = vmul.f32 %v2089, 1.442695
    %v2095 = vpow.pop %v2094
    %v2096 = vadd.f32 %v2091, 1.0
    %v2097 = vadd.f32 %v2093, 1.0
    %v2098 = vadd.f32 %v2095, 1.0
    %v2099 = vrcp.pop %v2096
    %v2100 = vmul.f32 %v2096, %v2099
    %v2101 = vsub.f32 1.0, %v2100
    %v2102 = vmul.f32 %v2099, %v2101
    %v2103 = vadd.f32 %v2099, %v2102
    %vm2104 = vweird.f32 %v2096
    %vm2105 = vweird.f32 %v2099
    %vm2106 = vmor %vm2104, %vm2105
    %v2107 = vsel %vm2106, %v2099, %v2103
    %v2108 = vand.u32 2147483647, %v2096
    %vm2109 = vcmp.eq.f32.partialorder %v2108, 8.507059e+37
    %v2110 = vand.u32 %v2096, 2147483648
    %v2111 = vor.u32 1.1754944e-38, %v2110
    %v2112 = vsel %vm2109, %v2111, %v2107
    %v2113 = vmul.f32 1.0, %v2112
    %v2114 = vrcp.pop %v2097
    %v2115 = vmul.f32 %v2097, %v2114
    %v2116 = vsub.f32 1.0, %v2115
    %v2117 = vmul.f32 %v2114, %v2116
    %v2118 = vadd.f32 %v2114, %v2117
    %vm2119 = vweird.f32 %v2097
    %vm2120 = vweird.f32 %v2114
    %vm2121 = vmor %vm2119, %vm2120
    %v2122 = vsel %vm2121, %v2114, %v2118
    %v2123 = vand.u32 2147483647, %v2097
    %vm2124 = vcmp.eq.f32.partialorder %v2123, 8.507059e+37
    %v2125 = vand.u32 %v2097, 2147483648
    %v2126 = vor.u32 1.1754944e-38, %v2125
    %v2127 = vsel %vm2124, %v2126, %v2122
    %v2128 = vmul.f32 1.0, %v2127
    %v2129 = vrcp.pop %v2098
    %v2130 = vmul.f32 %v2098, %v2129
    %v2131 = vsub.f32 1.0, %v2130
    %v2132 = vmul.f32 %v2129, %v2131
    %v2133 = vadd.f32 %v2129, %v2132
    %vm2134 = vweird.f32 %v2098
    %vm2135 = vweird.f32 %v2129
    %vm2136 = vmor %vm2134, %vm2135
    %v2137 = vsel %vm2136, %v2129, %v2133
    %v2138 = vand.u32 2147483647, %v2098
    %vm2139 = vcmp.eq.f32.partialorder %v2138, 8.507059e+37
    %v2140 = vand.u32 %v2098, 2147483648
    %v2141 = vor.u32 1.1754944e-38, %v2140
    %v2142 = vsel %vm2139, %v2141, %v2137
    %v2143 = vmul.f32 1.0, %v2142
    %v2144 = vtanh.pop %v2085
    %v2145 = vld [vmem:[#allocation3] sm:$0xff]
    %v2146 = vmul.f32 %v2128, %v2145
    %v2147 = vmul.f32 %v2113, %v2144
    %v2148 = vadd.f32 %v2146, %v2147
    %v2149 = vtanh.pop %v2148
    %v2150 = vmul.f32 %v2143, %v2149
    %2151 = vst [vmem:[#allocation3] sm:$0xff] %v2148
    %2152 = vst [vmem:[#allocation2] sm:$0xff] %v2150
    %2153 = vst [vmem:[#allocation4 + $0x8] sm:$0xff] %v2150
    %s2154 = sld [smem:[#allocation6 + $0x5]]
    %v2155 = vstv %s2154
    %vm2156 = vcmp.eq.s32.totalorder %v75, %v2155
    %vm2157 = vmand %vm83, %vm2156
    %v2158 = vsel %vm2157, 1.0, 0.0
    %s2159 = sld [smem:[#allocation6 + $0x85]]
    %v2160 = vstv %s2159
    %vm2161 = vcmp.eq.s32.totalorder %v75, %v2160
    %vm2162 = vmand %vm89, %vm2161
    %v2163 = vsel %vm2162, 1.0, %v2158
    %v2164 = vld [vmem:[%s3] sm:$0xff]
    %v2165 = vld [vmem:[%s3 + $0x8] sm:$0xff]
    %v2166 = vld [vmem:[%s3 + $0x10] sm:$0xff]
    %v2167 = vld [vmem:[%s3 + $0x18] sm:$0xff]
    %v2168 = vld [vmem:[%s3 + $0x20] sm:$0xff]
    %v2169 = vld [vmem:[%s3 + $0x28] sm:$0xff]
    %v2170 = vld [vmem:[%s3 + $0x30] sm:$0xff]
    %v2171 = vld [vmem:[%s3 + $0x38] sm:$0xff]
    %v2172 = vld [vmem:[%s3 + $0x40] sm:$0xff]
    %v2173 = vld [vmem:[%s3 + $0x48] sm:$0xff]
    %v2174 = vld [vmem:[%s3 + $0x50] sm:$0xff]
    %v2175 = vld [vmem:[%s3 + $0x58] sm:$0xff]
    %v2176 = vld [vmem:[%s3 + $0x60] sm:$0xff]
    %v2177 = vld [vmem:[%s3 + $0x68] sm:$0xff]
    %v2178 = vld [vmem:[%s3 + $0x70] sm:$0xff]
    %v2179 = vld [vmem:[%s3 + $0x78] sm:$0xff]
    %2180 = vmatpush.msra.mxu0 %v2179
    %2181 = vmatpush.msra.mxu0 %v2178
    %2182 = vmatpush.msra.mxu0 %v2177
    %2183 = vmatpush.msra.mxu0 %v2176
    %2184 = vmatpush.msra.mxu0 %v2175
    %2185 = vmatpush.msra.mxu0 %v2174
    %2186 = vmatpush.msra.mxu0 %v2173
    %2187 = vmatpush.msra.mxu0 %v2172
    %2188 = vmatpush.msra.mxu0 %v2171
    %2189 = vmatpush.msra.mxu0 %v2170
    %2190 = vmatpush.msra.mxu0 %v2169
    %2191 = vmatpush.msra.mxu0 %v2168
    %2192 = vmatpush.msra.mxu0 %v2167
    %2193 = vmatpush.msra.mxu0 %v2166
    %2194 = vmatpush.msra.mxu0 %v2165
    %2195 = vmatpush.msra.mxu0 %v2164
    %2196 = vmatmul.f32.gmra.mxu0 %v2163
    %v2197 = vpop.f32.mrf.mxu0
    %v2198 = vadd.f32 0.0, %v2197
    %2199 = vdwg.mxu0
    %2200 = vst [vmem:[#allocation4] sm:$0xff] %v2198
    %v2201 = vld [vmem:[#allocation4] sm:$0xff]
    %v2202 = vld [vmem:[#allocation4 + $0x8] sm:$0xff]
    %v2203 = vld [vmem:[%s4] sm:$0xff]
    %v2204 = vld [vmem:[%s4 + $0x8] sm:$0xff]
    %v2205 = vld [vmem:[%s4 + $0x10] sm:$0xff]
    %v2206 = vld [vmem:[%s4 + $0x18] sm:$0xff]
    %v2207 = vld [vmem:[%s4 + $0x20] sm:$0xff]
    %v2208 = vld [vmem:[%s4 + $0x28] sm:$0xff]
    %v2209 = vld [vmem:[%s4 + $0x30] sm:$0xff]
    %v2210 = vld [vmem:[%s4 + $0x38] sm:$0xff]
    %v2211 = vld [vmem:[%s4 + $0x40] sm:$0xff]
    %v2212 = vld [vmem:[%s4 + $0x48] sm:$0xff]
    %v2213 = vld [vmem:[%s4 + $0x50] sm:$0xff]
    %v2214 = vld [vmem:[%s4 + $0x58] sm:$0xff]
    %v2215 = vld [vmem:[%s4 + $0x60] sm:$0xff]
    %v2216 = vld [vmem:[%s4 + $0x68] sm:$0xff]
    %v2217 = vld [vmem:[%s4 + $0x70] sm:$0xff]
    %v2218 = vld [vmem:[%s4 + $0x78] sm:$0xff]
    %v2219 = vld [vmem:[%s4 + $0x80] sm:$0xff]
    %v2220 = vld [vmem:[%s4 + $0x88] sm:$0xff]
    %v2221 = vld [vmem:[%s4 + $0x90] sm:$0xff]
    %v2222 = vld [vmem:[%s4 + $0x98] sm:$0xff]
    %v2223 = vld [vmem:[%s4 + $0xa0] sm:$0xff]
    %v2224 = vld [vmem:[%s4 + $0xa8] sm:$0xff]
    %v2225 = vld [vmem:[%s4 + $0xb0] sm:$0xff]
    %v2226 = vld [vmem:[%s4 + $0xb8] sm:$0xff]
    %v2227 = vld [vmem:[%s4 + $0xc0] sm:$0xff]
    %v2228 = vld [vmem:[%s4 + $0xc8] sm:$0xff]
    %v2229 = vld [vmem:[%s4 + $0xd0] sm:$0xff]
    %v2230 = vld [vmem:[%s4 + $0xd8] sm:$0xff]
    %v2231 = vld [vmem:[%s4 + $0xe0] sm:$0xff]
    %v2232 = vld [vmem:[%s4 + $0xe8] sm:$0xff]
    %v2233 = vld [vmem:[%s4 + $0xf0] sm:$0xff]
    %v2234 = vld [vmem:[%s4 + $0xf8] sm:$0xff]
    %v2235 = vld [vmem:[%s4 + $0x100] sm:$0xff]
    %v2236 = vld [vmem:[%s4 + $0x108] sm:$0xff]
    %v2237 = vld [vmem:[%s4 + $0x110] sm:$0xff]
    %v2238 = vld [vmem:[%s4 + $0x118] sm:$0xff]
    %v2239 = vld [vmem:[%s4 + $0x120] sm:$0xff]
    %v2240 = vld [vmem:[%s4 + $0x128] sm:$0xff]
    %v2241 = vld [vmem:[%s4 + $0x130] sm:$0xff]
    %v2242 = vld [vmem:[%s4 + $0x138] sm:$0xff]
    %v2243 = vld [vmem:[%s4 + $0x140] sm:$0xff]
    %v2244 = vld [vmem:[%s4 + $0x148] sm:$0xff]
    %v2245 = vld [vmem:[%s4 + $0x150] sm:$0xff]
    %v2246 = vld [vmem:[%s4 + $0x158] sm:$0xff]
    %v2247 = vld [vmem:[%s4 + $0x160] sm:$0xff]
    %v2248 = vld [vmem:[%s4 + $0x168] sm:$0xff]
    %v2249 = vld [vmem:[%s4 + $0x170] sm:$0xff]
    %v2250 = vld [vmem:[%s4 + $0x178] sm:$0xff]
    %v2251 = vld [vmem:[%s4 + $0x180] sm:$0xff]
    %v2252 = vld [vmem:[%s4 + $0x188] sm:$0xff]
    %v2253 = vld [vmem:[%s4 + $0x190] sm:$0xff]
    %v2254 = vld [vmem:[%s4 + $0x198] sm:$0xff]
    %v2255 = vld [vmem:[%s4 + $0x1a0] sm:$0xff]
    %v2256 = vld [vmem:[%s4 + $0x1a8] sm:$0xff]
    %v2257 = vld [vmem:[%s4 + $0x1b0] sm:$0xff]
    %v2258 = vld [vmem:[%s4 + $0x1b8] sm:$0xff]
    %v2259 = vld [vmem:[%s4 + $0x1c0] sm:$0xff]
    %v2260 = vld [vmem:[%s4 + $0x1c8] sm:$0xff]
    %v2261 = vld [vmem:[%s4 + $0x1d0] sm:$0xff]
    %v2262 = vld [vmem:[%s4 + $0x1d8] sm:$0xff]
    %v2263 = vld [vmem:[%s4 + $0x1e0] sm:$0xff]
    %v2264 = vld [vmem:[%s4 + $0x1e8] sm:$0xff]
    %v2265 = vld [vmem:[%s4 + $0x1f0] sm:$0xff]
    %v2266 = vld [vmem:[%s4 + $0x1f8] sm:$0xff]
    %v2267 = vld [vmem:[%s4 + $0x200] sm:$0xff]
    %v2268 = vld [vmem:[%s4 + $0x208] sm:$0xff]
    %v2269 = vld [vmem:[%s4 + $0x210] sm:$0xff]
    %v2270 = vld [vmem:[%s4 + $0x218] sm:$0xff]
    %v2271 = vld [vmem:[%s4 + $0x220] sm:$0xff]
    %v2272 = vld [vmem:[%s4 + $0x228] sm:$0xff]
    %v2273 = vld [vmem:[%s4 + $0x230] sm:$0xff]
    %v2274 = vld [vmem:[%s4 + $0x238] sm:$0xff]
    %v2275 = vld [vmem:[%s4 + $0x240] sm:$0xff]
    %v2276 = vld [vmem:[%s4 + $0x248] sm:$0xff]
    %v2277 = vld [vmem:[%s4 + $0x250] sm:$0xff]
    %v2278 = vld [vmem:[%s4 + $0x258] sm:$0xff]
    %v2279 = vld [vmem:[%s4 + $0x260] sm:$0xff]
    %v2280 = vld [vmem:[%s4 + $0x268] sm:$0xff]
    %v2281 = vld [vmem:[%s4 + $0x270] sm:$0xff]
    %v2282 = vld [vmem:[%s4 + $0x278] sm:$0xff]
    %v2283 = vld [vmem:[%s4 + $0x280] sm:$0xff]
    %v2284 = vld [vmem:[%s4 + $0x288] sm:$0xff]
    %v2285 = vld [vmem:[%s4 + $0x290] sm:$0xff]
    %v2286 = vld [vmem:[%s4 + $0x298] sm:$0xff]
    %v2287 = vld [vmem:[%s4 + $0x2a0] sm:$0xff]
    %v2288 = vld [vmem:[%s4 + $0x2a8] sm:$0xff]
    %v2289 = vld [vmem:[%s4 + $0x2b0] sm:$0xff]
    %v2290 = vld [vmem:[%s4 + $0x2b8] sm:$0xff]
    %v2291 = vld [vmem:[%s4 + $0x2c0] sm:$0xff]
    %v2292 = vld [vmem:[%s4 + $0x2c8] sm:$0xff]
    %v2293 = vld [vmem:[%s4 + $0x2d0] sm:$0xff]
    %v2294 = vld [vmem:[%s4 + $0x2d8] sm:$0xff]
    %v2295 = vld [vmem:[%s4 + $0x2e0] sm:$0xff]
    %v2296 = vld [vmem:[%s4 + $0x2e8] sm:$0xff]
    %v2297 = vld [vmem:[%s4 + $0x2f0] sm:$0xff]
    %v2298 = vld [vmem:[%s4 + $0x2f8] sm:$0xff]
    %v2299 = vld [vmem:[%s4 + $0x300] sm:$0xff]
    %v2300 = vld [vmem:[%s4 + $0x308] sm:$0xff]
    %v2301 = vld [vmem:[%s4 + $0x310] sm:$0xff]
    %v2302 = vld [vmem:[%s4 + $0x318] sm:$0xff]
    %v2303 = vld [vmem:[%s4 + $0x320] sm:$0xff]
    %v2304 = vld [vmem:[%s4 + $0x328] sm:$0xff]
    %v2305 = vld [vmem:[%s4 + $0x330] sm:$0xff]
    %v2306 = vld [vmem:[%s4 + $0x338] sm:$0xff]
    %v2307 = vld [vmem:[%s4 + $0x340] sm:$0xff]
    %v2308 = vld [vmem:[%s4 + $0x348] sm:$0xff]
    %v2309 = vld [vmem:[%s4 + $0x350] sm:$0xff]
    %v2310 = vld [vmem:[%s4 + $0x358] sm:$0xff]
    %v2311 = vld [vmem:[%s4 + $0x360] sm:$0xff]
    %v2312 = vld [vmem:[%s4 + $0x368] sm:$0xff]
    %v2313 = vld [vmem:[%s4 + $0x370] sm:$0xff]
    %v2314 = vld [vmem:[%s4 + $0x378] sm:$0xff]
    %v2315 = vld [vmem:[%s4 + $0x380] sm:$0xff]
    %v2316 = vld [vmem:[%s4 + $0x388] sm:$0xff]
    %v2317 = vld [vmem:[%s4 + $0x390] sm:$0xff]
    %v2318 = vld [vmem:[%s4 + $0x398] sm:$0xff]
    %v2319 = vld [vmem:[%s4 + $0x3a0] sm:$0xff]
    %v2320 = vld [vmem:[%s4 + $0x3a8] sm:$0xff]
    %v2321 = vld [vmem:[%s4 + $0x3b0] sm:$0xff]
    %v2322 = vld [vmem:[%s4 + $0x3b8] sm:$0xff]
    %v2323 = vld [vmem:[%s4 + $0x3c0] sm:$0xff]
    %v2324 = vld [vmem:[%s4 + $0x3c8] sm:$0xff]
    %v2325 = vld [vmem:[%s4 + $0x3d0] sm:$0xff]
    %v2326 = vld [vmem:[%s4 + $0x3d8] sm:$0xff]
    %v2327 = vld [vmem:[%s4 + $0x3e0] sm:$0xff]
    %v2328 = vld [vmem:[%s4 + $0x3e8] sm:$0xff]
    %v2329 = vld [vmem:[%s4 + $0x3f0] sm:$0xff]
    %v2330 = vld [vmem:[%s4 + $0x3f8] sm:$0xff]
    %v2331 = vld [vmem:[%s5] sm:$0xf]
    %v2333 = vperm.slane %v2331, 0
    %v2334 = vperm.slane %v2331, 1
    %v2335 = vperm.slane %v2331, 2
    %v2336 = vperm.slane %v2331, 3
    %2341 = vmatpush.msra.mxu0 %v2263
    %2342 = vmatpush.msra.mxu0 %v2259
    %2343 = vmatpush.msra.mxu0 %v2255
    %2344 = vmatpush.msra.mxu0 %v2251
    %2345 = vmatpush.msra.mxu0 %v2247
    %2346 = vmatpush.msra.mxu0 %v2243
    %2347 = vmatpush.msra.mxu0 %v2239
    %2348 = vmatpush.msra.mxu0 %v2235
    %2349 = vmatpush.msra.mxu0 %v2231
    %2350 = vmatpush.msra.mxu0 %v2227
    %2351 = vmatpush.msra.mxu0 %v2223
    %2352 = vmatpush.msra.mxu0 %v2219
    %2353 = vmatpush.msra.mxu0 %v2215
    %2354 = vmatpush.msra.mxu0 %v2211
    %2355 = vmatpush.msra.mxu0 %v2207
    %2356 = vmatpush.msra.mxu0 %v2203
    %2357 = vmatmul.f32.gmra.mxu0 %v2201
    %v2358 = vpop.f32.mrf.mxu0
    %v2359 = vadd.f32 %v2333, %v2358
    %2360 = vdwg.mxu0
    %2361 = vmatpush.msra.mxu0 %v2327
    %2362 = vmatpush.msra.mxu0 %v2323
    %2363 = vmatpush.msra.mxu0 %v2319
    %2364 = vmatpush.msra.mxu0 %v2315
    %2365 = vmatpush.msra.mxu0 %v2311
    %2366 = vmatpush.msra.mxu0 %v2307
    %2367 = vmatpush.msra.mxu0 %v2303
    %2368 = vmatpush.msra.mxu0 %v2299
    %2369 = vmatpush.msra.mxu0 %v2295
    %2370 = vmatpush.msra.mxu0 %v2291
    %2371 = vmatpush.msra.mxu0 %v2287
    %2372 = vmatpush.msra.mxu0 %v2283
    %2373 = vmatpush.msra.mxu0 %v2279
    %2374 = vmatpush.msra.mxu0 %v2275
    %2375 = vmatpush.msra.mxu0 %v2271
    %2376 = vmatpush.msra.mxu0 %v2267
    %2377 = vmatmul.f32.gmra.mxu0 %v2202
    %v2378 = vpop.f32.mrf.mxu0
    %v2379 = vadd.f32 %v2359, %v2378
    %2380 = vdwg.mxu0
    %2381 = vmatpush.msra.mxu0 %v2264
    %2382 = vmatpush.msra.mxu0 %v2260
    %2383 = vmatpush.msra.mxu0 %v2256
    %2384 = vmatpush.msra.mxu0 %v2252
    %2385 = vmatpush.msra.mxu0 %v2248
    %2386 = vmatpush.msra.mxu0 %v2244
    %2387 = vmatpush.msra.mxu0 %v2240
    %2388 = vmatpush.msra.mxu0 %v2236
    %2389 = vmatpush.msra.mxu0 %v2232
    %2390 = vmatpush.msra.mxu0 %v2228
    %2391 = vmatpush.msra.mxu0 %v2224
    %2392 = vmatpush.msra.mxu0 %v2220
    %2393 = vmatpush.msra.mxu0 %v2216
    %2394 = vmatpush.msra.mxu0 %v2212
    %2395 = vmatpush.msra.mxu0 %v2208
    %2396 = vmatpush.msra.mxu0 %v2204
    %2397 = vmatmul.f32.gmra.mxu0 %v2201
    %v2398 = vpop.f32.mrf.mxu0
    %v2399 = vadd.f32 %v2334, %v2398
    %2400 = vdwg.mxu0
    %2401 = vmatpush.msra.mxu0 %v2328
    %2402 = vmatpush.msra.mxu0 %v2324
    %2403 = vmatpush.msra.mxu0 %v2320
    %2404 = vmatpush.msra.mxu0 %v2316
    %2405 = vmatpush.msra.mxu0 %v2312
    %2406 = vmatpush.msra.mxu0 %v2308
    %2407 = vmatpush.msra.mxu0 %v2304
    %2408 = vmatpush.msra.mxu0 %v2300
    %2409 = vmatpush.msra.mxu0 %v2296
    %2410 = vmatpush.msra.mxu0 %v2292
    %2411 = vmatpush.msra.mxu0 %v2288
    %2412 = vmatpush.msra.mxu0 %v2284
    %2413 = vmatpush.msra.mxu0 %v2280
    %2414 = vmatpush.msra.mxu0 %v2276
    %2415 = vmatpush.msra.mxu0 %v2272
    %2416 = vmatpush.msra.mxu0 %v2268
    %2417 = vmatmul.f32.gmra.mxu0 %v2202
    %v2418 = vpop.f32.mrf.mxu0
    %v2419 = vadd.f32 %v2399, %v2418
    %2420 = vdwg.mxu0
    %2421 = vmatpush.msra.mxu0 %v2265
    %2422 = vmatpush.msra.mxu0 %v2261
    %2423 = vmatpush.msra.mxu0 %v2257
    %2424 = vmatpush.msra.mxu0 %v2253
    %2425 = vmatpush.msra.mxu0 %v2249
    %2426 = vmatpush.msra.mxu0 %v2245
    %2427 = vmatpush.msra.mxu0 %v2241
    %2428 = vmatpush.msra.mxu0 %v2237
    %2429 = vmatpush.msra.mxu0 %v2233
    %2430 = vmatpush.msra.mxu0 %v2229
    %2431 = vmatpush.msra.mxu0 %v2225
    %2432 = vmatpush.msra.mxu0 %v2221
    %2433 = vmatpush.msra.mxu0 %v2217
    %2434 = vmatpush.msra.mxu0 %v2213
    %2435 = vmatpush.msra.mxu0 %v2209
    %2436 = vmatpush.msra.mxu0 %v2205
    %2437 = vmatmul.f32.gmra.mxu0 %v2201
    %v2438 = vpop.f32.mrf.mxu0
    %v2439 = vadd.f32 %v2335, %v2438
    %2440 = vdwg.mxu0
    %2441 = vmatpush.msra.mxu0 %v2329
    %2442 = vmatpush.msra.mxu0 %v2325
    %2443 = vmatpush.msra.mxu0 %v2321
    %2444 = vmatpush.msra.mxu0 %v2317
    %2445 = vmatpush.msra.mxu0 %v2313
    %2446 = vmatpush.msra.mxu0 %v2309
    %2447 = vmatpush.msra.mxu0 %v2305
    %2448 = vmatpush.msra.mxu0 %v2301
    %2449 = vmatpush.msra.mxu0 %v2297
    %2450 = vmatpush.msra.mxu0 %v2293
    %2451 = vmatpush.msra.mxu0 %v2289
    %2452 = vmatpush.msra.mxu0 %v2285
    %2453 = vmatpush.msra.mxu0 %v2281
    %2454 = vmatpush.msra.mxu0 %v2277
    %2455 = vmatpush.msra.mxu0 %v2273
    %2456 = vmatpush.msra.mxu0 %v2269
    %2457 = vmatmul.f32.gmra.mxu0 %v2202
    %v2458 = vpop.f32.mrf.mxu0
    %v2459 = vadd.f32 %v2439, %v2458
    %2460 = vdwg.mxu0
    %2461 = vmatpush.msra.mxu0 %v2266
    %2462 = vmatpush.msra.mxu0 %v2262
    %2463 = vmatpush.msra.mxu0 %v2258
    %2464 = vmatpush.msra.mxu0 %v2254
    %2465 = vmatpush.msra.mxu0 %v2250
    %2466 = vmatpush.msra.mxu0 %v2246
    %2467 = vmatpush.msra.mxu0 %v2242
    %2468 = vmatpush.msra.mxu0 %v2238
    %2469 = vmatpush.msra.mxu0 %v2234
    %2470 = vmatpush.msra.mxu0 %v2230
    %2471 = vmatpush.msra.mxu0 %v2226
    %2472 = vmatpush.msra.mxu0 %v2222
    %2473 = vmatpush.msra.mxu0 %v2218
    %2474 = vmatpush.msra.mxu0 %v2214
    %2475 = vmatpush.msra.mxu0 %v2210
    %2476 = vmatpush.msra.mxu0 %v2206
    %2477 = vmatmul.f32.gmra.mxu0 %v2201
    %v2478 = vpop.f32.mrf.mxu0
    %v2479 = vadd.f32 %v2336, %v2478
    %2480 = vdwg.mxu0
    %2481 = vmatpush.msra.mxu0 %v2330
    %2482 = vmatpush.msra.mxu0 %v2326
    %2483 = vmatpush.msra.mxu0 %v2322
    %2484 = vmatpush.msra.mxu0 %v2318
    %2485 = vmatpush.msra.mxu0 %v2314
    %2486 = vmatpush.msra.mxu0 %v2310
    %2487 = vmatpush.msra.mxu0 %v2306
    %2488 = vmatpush.msra.mxu0 %v2302
    %2489 = vmatpush.msra.mxu0 %v2298
    %2490 = vmatpush.msra.mxu0 %v2294
    %2491 = vmatpush.msra.mxu0 %v2290
    %2492 = vmatpush.msra.mxu0 %v2286
    %2493 = vmatpush.msra.mxu0 %v2282
    %2494 = vmatpush.msra.mxu0 %v2278
    %2495 = vmatpush.msra.mxu0 %v2274
    %2496 = vmatpush.msra.mxu0 %v2270
    %2497 = vmatmul.f32.gmra.mxu0 %v2202
    %v2498 = vpop.f32.mrf.mxu0
    %v2499 = vadd.f32 %v2479, %v2498
    %2500 = vdwg.mxu0
    %v2501 = vxor.u32 %v2379, 2147483648
    %v2502 = vxor.u32 %v2419, 2147483648
    %v2503 = vxor.u32 %v2459, 2147483648
    %v2504 = vmul.f32 %v2501, 1.442695
    %v2505 = vpow.pop %v2504
    %v2506 = vmul.f32 %v2502, 1.442695
    %v2507 = vpow.pop %v2506
    %v2508 = vmul.f32 %v2503, 1.442695
    %v2509 = vpow.pop %v2508
    %v2510 = vadd.f32 %v2505, 1.0
    %v2511 = vadd.f32 %v2507, 1.0
    %v2512 = vadd.f32 %v2509, 1.0
    %v2513 = vrcp.pop %v2510
    %v2514 = vmul.f32 %v2510, %v2513
    %v2515 = vsub.f32 1.0, %v2514
    %v2516 = vmul.f32 %v2513, %v2515
    %v2517 = vadd.f32 %v2513, %v2516
    %vm2518 = vweird.f32 %v2510
    %vm2519 = vweird.f32 %v2513
    %vm2520 = vmor %vm2518, %vm2519
    %v2521 = vsel %vm2520, %v2513, %v2517
    %v2522 = vand.u32 2147483647, %v2510
    %vm2523 = vcmp.eq.f32.partialorder %v2522, 8.507059e+37
    %v2524 = vand.u32 %v2510, 2147483648
    %v2525 = vor.u32 1.1754944e-38, %v2524
    %v2526 = vsel %vm2523, %v2525, %v2521
    %v2527 = vmul.f32 1.0, %v2526
    %v2528 = vrcp.pop %v2511
    %v2529 = vmul.f32 %v2511, %v2528
    %v2530 = vsub.f32 1.0, %v2529
    %v2531 = vmul.f32 %v2528, %v2530
    %v2532 = vadd.f32 %v2528, %v2531
    %vm2533 = vweird.f32 %v2511
    %vm2534 = vweird.f32 %v2528
    %vm2535 = vmor %vm2533, %vm2534
    %v2536 = vsel %vm2535, %v2528, %v2532
    %v2537 = vand.u32 2147483647, %v2511
    %vm2538 = vcmp.eq.f32.partialorder %v2537, 8.507059e+37
    %v2539 = vand.u32 %v2511, 2147483648
    %v2540 = vor.u32 1.1754944e-38, %v2539
    %v2541 = vsel %vm2538, %v2540, %v2536
    %v2542 = vmul.f32 1.0, %v2541
    %v2543 = vrcp.pop %v2512
    %v2544 = vmul.f32 %v2512, %v2543
    %v2545 = vsub.f32 1.0, %v2544
    %v2546 = vmul.f32 %v2543, %v2545
    %v2547 = vadd.f32 %v2543, %v2546
    %vm2548 = vweird.f32 %v2512
    %vm2549 = vweird.f32 %v2543
    %vm2550 = vmor %vm2548, %vm2549
    %v2551 = vsel %vm2550, %v2543, %v2547
    %v2552 = vand.u32 2147483647, %v2512
    %vm2553 = vcmp.eq.f32.partialorder %v2552, 8.507059e+37
    %v2554 = vand.u32 %v2512, 2147483648
    %v2555 = vor.u32 1.1754944e-38, %v2554
    %v2556 = vsel %vm2553, %v2555, %v2551
    %v2557 = vmul.f32 1.0, %v2556
    %v2558 = vtanh.pop %v2499
    %v2559 = vld [vmem:[#allocation3] sm:$0xff]
    %v2560 = vmul.f32 %v2542, %v2559
    %v2561 = vmul.f32 %v2527, %v2558
    %v2562 = vadd.f32 %v2560, %v2561
    %v2563 = vtanh.pop %v2562
    %v2564 = vmul.f32 %v2557, %v2563
    %2565 = vst [vmem:[#allocation3] sm:$0xff] %v2562
    %2566 = vst [vmem:[#allocation2] sm:$0xff] %v2564
    %2567 = vst [vmem:[#allocation4 + $0x8] sm:$0xff] %v2564
    %s2568 = sld [smem:[#allocation6 + $0x6]]
    %v2569 = vstv %s2568
    %vm2570 = vcmp.eq.s32.totalorder %v75, %v2569
    %vm2571 = vmand %vm83, %vm2570
    %v2572 = vsel %vm2571, 1.0, 0.0
    %s2573 = sld [smem:[#allocation6 + $0x86]]
    %v2574 = vstv %s2573
    %vm2575 = vcmp.eq.s32.totalorder %v75, %v2574
    %vm2576 = vmand %vm89, %vm2575
    %v2577 = vsel %vm2576, 1.0, %v2572
    %v2578 = vld [vmem:[%s3] sm:$0xff]
    %v2579 = vld [vmem:[%s3 + $0x8] sm:$0xff]
    %v2580 = vld [vmem:[%s3 + $0x10] sm:$0xff]
    %v2581 = vld [vmem:[%s3 + $0x18] sm:$0xff]
    %v2582 = vld [vmem:[%s3 + $0x20] sm:$0xff]
    %v2583 = vld [vmem:[%s3 + $0x28] sm:$0xff]
    %v2584 = vld [vmem:[%s3 + $0x30] sm:$0xff]
    %v2585 = vld [vmem:[%s3 + $0x38] sm:$0xff]
    %v2586 = vld [vmem:[%s3 + $0x40] sm:$0xff]
    %v2587 = vld [vmem:[%s3 + $0x48] sm:$0xff]
    %v2588 = vld [vmem:[%s3 + $0x50] sm:$0xff]
    %v2589 = vld [vmem:[%s3 + $0x58] sm:$0xff]
    %v2590 = vld [vmem:[%s3 + $0x60] sm:$0xff]
    %v2591 = vld [vmem:[%s3 + $0x68] sm:$0xff]
    %v2592 = vld [vmem:[%s3 + $0x70] sm:$0xff]
    %v2593 = vld [vmem:[%s3 + $0x78] sm:$0xff]
    %2594 = vmatpush.msra.mxu0 %v2593
    %2595 = vmatpush.msra.mxu0 %v2592
    %2596 = vmatpush.msra.mxu0 %v2591
    %2597 = vmatpush.msra.mxu0 %v2590
    %2598 = vmatpush.msra.mxu0 %v2589
    %2599 = vmatpush.msra.mxu0 %v2588
    %2600 = vmatpush.msra.mxu0 %v2587
    %2601 = vmatpush.msra.mxu0 %v2586
    %2602 = vmatpush.msra.mxu0 %v2585
    %2603 = vmatpush.msra.mxu0 %v2584
    %2604 = vmatpush.msra.mxu0 %v2583
    %2605 = vmatpush.msra.mxu0 %v2582
    %2606 = vmatpush.msra.mxu0 %v2581
    %2607 = vmatpush.msra.mxu0 %v2580
    %2608 = vmatpush.msra.mxu0 %v2579
    %2609 = vmatpush.msra.mxu0 %v2578
    %2610 = vmatmul.f32.gmra.mxu0 %v2577
    %v2611 = vpop.f32.mrf.mxu0
    %v2612 = vadd.f32 0.0, %v2611
    %2613 = vdwg.mxu0
    %2614 = vst [vmem:[#allocation4] sm:$0xff] %v2612
    %v2615 = vld [vmem:[#allocation4] sm:$0xff]
    %v2616 = vld [vmem:[#allocation4 + $0x8] sm:$0xff]
    %v2617 = vld [vmem:[%s4] sm:$0xff]
    %v2618 = vld [vmem:[%s4 + $0x8] sm:$0xff]
    %v2619 = vld [vmem:[%s4 + $0x10] sm:$0xff]
    %v2620 = vld [vmem:[%s4 + $0x18] sm:$0xff]
    %v2621 = vld [vmem:[%s4 + $0x20] sm:$0xff]
    %v2622 = vld [vmem:[%s4 + $0x28] sm:$0xff]
    %v2623 = vld [vmem:[%s4 + $0x30] sm:$0xff]
    %v2624 = vld [vmem:[%s4 + $0x38] sm:$0xff]
    %v2625 = vld [vmem:[%s4 + $0x40] sm:$0xff]
    %v2626 = vld [vmem:[%s4 + $0x48] sm:$0xff]
    %v2627 = vld [vmem:[%s4 + $0x50] sm:$0xff]
    %v2628 = vld [vmem:[%s4 + $0x58] sm:$0xff]
    %v2629 = vld [vmem:[%s4 + $0x60] sm:$0xff]
    %v2630 = vld [vmem:[%s4 + $0x68] sm:$0xff]
    %v2631 = vld [vmem:[%s4 + $0x70] sm:$0xff]
    %v2632 = vld [vmem:[%s4 + $0x78] sm:$0xff]
    %v2633 = vld [vmem:[%s4 + $0x80] sm:$0xff]
    %v2634 = vld [vmem:[%s4 + $0x88] sm:$0xff]
    %v2635 = vld [vmem:[%s4 + $0x90] sm:$0xff]
    %v2636 = vld [vmem:[%s4 + $0x98] sm:$0xff]
    %v2637 = vld [vmem:[%s4 + $0xa0] sm:$0xff]
    %v2638 = vld [vmem:[%s4 + $0xa8] sm:$0xff]
    %v2639 = vld [vmem:[%s4 + $0xb0] sm:$0xff]
    %v2640 = vld [vmem:[%s4 + $0xb8] sm:$0xff]
    %v2641 = vld [vmem:[%s4 + $0xc0] sm:$0xff]
    %v2642 = vld [vmem:[%s4 + $0xc8] sm:$0xff]
    %v2643 = vld [vmem:[%s4 + $0xd0] sm:$0xff]
    %v2644 = vld [vmem:[%s4 + $0xd8] sm:$0xff]
    %v2645 = vld [vmem:[%s4 + $0xe0] sm:$0xff]
    %v2646 = vld [vmem:[%s4 + $0xe8] sm:$0xff]
    %v2647 = vld [vmem:[%s4 + $0xf0] sm:$0xff]
    %v2648 = vld [vmem:[%s4 + $0xf8] sm:$0xff]
    %v2649 = vld [vmem:[%s4 + $0x100] sm:$0xff]
    %v2650 = vld [vmem:[%s4 + $0x108] sm:$0xff]
    %v2651 = vld [vmem:[%s4 + $0x110] sm:$0xff]
    %v2652 = vld [vmem:[%s4 + $0x118] sm:$0xff]
    %v2653 = vld [vmem:[%s4 + $0x120] sm:$0xff]
    %v2654 = vld [vmem:[%s4 + $0x128] sm:$0xff]
    %v2655 = vld [vmem:[%s4 + $0x130] sm:$0xff]
    %v2656 = vld [vmem:[%s4 + $0x138] sm:$0xff]
    %v2657 = vld [vmem:[%s4 + $0x140] sm:$0xff]
    %v2658 = vld [vmem:[%s4 + $0x148] sm:$0xff]
    %v2659 = vld [vmem:[%s4 + $0x150] sm:$0xff]
    %v2660 = vld [vmem:[%s4 + $0x158] sm:$0xff]
    %v2661 = vld [vmem:[%s4 + $0x160] sm:$0xff]
    %v2662 = vld [vmem:[%s4 + $0x168] sm:$0xff]
    %v2663 = vld [vmem:[%s4 + $0x170] sm:$0xff]
    %v2664 = vld [vmem:[%s4 + $0x178] sm:$0xff]
    %v2665 = vld [vmem:[%s4 + $0x180] sm:$0xff]
    %v2666 = vld [vmem:[%s4 + $0x188] sm:$0xff]
    %v2667 = vld [vmem:[%s4 + $0x190] sm:$0xff]
    %v2668 = vld [vmem:[%s4 + $0x198] sm:$0xff]
    %v2669 = vld [vmem:[%s4 + $0x1a0] sm:$0xff]
    %v2670 = vld [vmem:[%s4 + $0x1a8] sm:$0xff]
    %v2671 = vld [vmem:[%s4 + $0x1b0] sm:$0xff]
    %v2672 = vld [vmem:[%s4 + $0x1b8] sm:$0xff]
    %v2673 = vld [vmem:[%s4 + $0x1c0] sm:$0xff]
    %v2674 = vld [vmem:[%s4 + $0x1c8] sm:$0xff]
    %v2675 = vld [vmem:[%s4 + $0x1d0] sm:$0xff]
    %v2676 = vld [vmem:[%s4 + $0x1d8] sm:$0xff]
    %v2677 = vld [vmem:[%s4 + $0x1e0] sm:$0xff]
    %v2678 = vld [vmem:[%s4 + $0x1e8] sm:$0xff]
    %v2679 = vld [vmem:[%s4 + $0x1f0] sm:$0xff]
    %v2680 = vld [vmem:[%s4 + $0x1f8] sm:$0xff]
    %v2681 = vld [vmem:[%s4 + $0x200] sm:$0xff]
    %v2682 = vld [vmem:[%s4 + $0x208] sm:$0xff]
    %v2683 = vld [vmem:[%s4 + $0x210] sm:$0xff]
    %v2684 = vld [vmem:[%s4 + $0x218] sm:$0xff]
    %v2685 = vld [vmem:[%s4 + $0x220] sm:$0xff]
    %v2686 = vld [vmem:[%s4 + $0x228] sm:$0xff]
    %v2687 = vld [vmem:[%s4 + $0x230] sm:$0xff]
    %v2688 = vld [vmem:[%s4 + $0x238] sm:$0xff]
    %v2689 = vld [vmem:[%s4 + $0x240] sm:$0xff]
    %v2690 = vld [vmem:[%s4 + $0x248] sm:$0xff]
    %v2691 = vld [vmem:[%s4 + $0x250] sm:$0xff]
    %v2692 = vld [vmem:[%s4 + $0x258] sm:$0xff]
    %v2693 = vld [vmem:[%s4 + $0x260] sm:$0xff]
    %v2694 = vld [vmem:[%s4 + $0x268] sm:$0xff]
    %v2695 = vld [vmem:[%s4 + $0x270] sm:$0xff]
    %v2696 = vld [vmem:[%s4 + $0x278] sm:$0xff]
    %v2697 = vld [vmem:[%s4 + $0x280] sm:$0xff]
    %v2698 = vld [vmem:[%s4 + $0x288] sm:$0xff]
    %v2699 = vld [vmem:[%s4 + $0x290] sm:$0xff]
    %v2700 = vld [vmem:[%s4 + $0x298] sm:$0xff]
    %v2701 = vld [vmem:[%s4 + $0x2a0] sm:$0xff]
    %v2702 = vld [vmem:[%s4 + $0x2a8] sm:$0xff]
    %v2703 = vld [vmem:[%s4 + $0x2b0] sm:$0xff]
    %v2704 = vld [vmem:[%s4 + $0x2b8] sm:$0xff]
    %v2705 = vld [vmem:[%s4 + $0x2c0] sm:$0xff]
    %v2706 = vld [vmem:[%s4 + $0x2c8] sm:$0xff]
    %v2707 = vld [vmem:[%s4 + $0x2d0] sm:$0xff]
    %v2708 = vld [vmem:[%s4 + $0x2d8] sm:$0xff]
    %v2709 = vld [vmem:[%s4 + $0x2e0] sm:$0xff]
    %v2710 = vld [vmem:[%s4 + $0x2e8] sm:$0xff]
    %v2711 = vld [vmem:[%s4 + $0x2f0] sm:$0xff]
    %v2712 = vld [vmem:[%s4 + $0x2f8] sm:$0xff]
    %v2713 = vld [vmem:[%s4 + $0x300] sm:$0xff]
    %v2714 = vld [vmem:[%s4 + $0x308] sm:$0xff]
    %v2715 = vld [vmem:[%s4 + $0x310] sm:$0xff]
    %v2716 = vld [vmem:[%s4 + $0x318] sm:$0xff]
    %v2717 = vld [vmem:[%s4 + $0x320] sm:$0xff]
    %v2718 = vld [vmem:[%s4 + $0x328] sm:$0xff]
    %v2719 = vld [vmem:[%s4 + $0x330] sm:$0xff]
    %v2720 = vld [vmem:[%s4 + $0x338] sm:$0xff]
    %v2721 = vld [vmem:[%s4 + $0x340] sm:$0xff]
    %v2722 = vld [vmem:[%s4 + $0x348] sm:$0xff]
    %v2723 = vld [vmem:[%s4 + $0x350] sm:$0xff]
    %v2724 = vld [vmem:[%s4 + $0x358] sm:$0xff]
    %v2725 = vld [vmem:[%s4 + $0x360] sm:$0xff]
    %v2726 = vld [vmem:[%s4 + $0x368] sm:$0xff]
    %v2727 = vld [vmem:[%s4 + $0x370] sm:$0xff]
    %v2728 = vld [vmem:[%s4 + $0x378] sm:$0xff]
    %v2729 = vld [vmem:[%s4 + $0x380] sm:$0xff]
    %v2730 = vld [vmem:[%s4 + $0x388] sm:$0xff]
    %v2731 = vld [vmem:[%s4 + $0x390] sm:$0xff]
    %v2732 = vld [vmem:[%s4 + $0x398] sm:$0xff]
    %v2733 = vld [vmem:[%s4 + $0x3a0] sm:$0xff]
    %v2734 = vld [vmem:[%s4 + $0x3a8] sm:$0xff]
    %v2735 = vld [vmem:[%s4 + $0x3b0] sm:$0xff]
    %v2736 = vld [vmem:[%s4 + $0x3b8] sm:$0xff]
    %v2737 = vld [vmem:[%s4 + $0x3c0] sm:$0xff]
    %v2738 = vld [vmem:[%s4 + $0x3c8] sm:$0xff]
    %v2739 = vld [vmem:[%s4 + $0x3d0] sm:$0xff]
    %v2740 = vld [vmem:[%s4 + $0x3d8] sm:$0xff]
    %v2741 = vld [vmem:[%s4 + $0x3e0] sm:$0xff]
    %v2742 = vld [vmem:[%s4 + $0x3e8] sm:$0xff]
    %v2743 = vld [vmem:[%s4 + $0x3f0] sm:$0xff]
    %v2744 = vld [vmem:[%s4 + $0x3f8] sm:$0xff]
    %v2745 = vld [vmem:[%s5] sm:$0xf]
    %v2747 = vperm.slane %v2745, 0
    %v2748 = vperm.slane %v2745, 1
    %v2749 = vperm.slane %v2745, 2
    %v2750 = vperm.slane %v2745, 3
    %2755 = vmatpush.msra.mxu0 %v2677
    %2756 = vmatpush.msra.mxu0 %v2673
    %2757 = vmatpush.msra.mxu0 %v2669
    %2758 = vmatpush.msra.mxu0 %v2665
    %2759 = vmatpush.msra.mxu0 %v2661
    %2760 = vmatpush.msra.mxu0 %v2657
    %2761 = vmatpush.msra.mxu0 %v2653
    %2762 = vmatpush.msra.mxu0 %v2649
    %2763 = vmatpush.msra.mxu0 %v2645
    %2764 = vmatpush.msra.mxu0 %v2641
    %2765 = vmatpush.msra.mxu0 %v2637
    %2766 = vmatpush.msra.mxu0 %v2633
    %2767 = vmatpush.msra.mxu0 %v2629
    %2768 = vmatpush.msra.mxu0 %v2625
    %2769 = vmatpush.msra.mxu0 %v2621
    %2770 = vmatpush.msra.mxu0 %v2617
    %2771 = vmatmul.f32.gmra.mxu0 %v2615
    %v2772 = vpop.f32.mrf.mxu0
    %v2773 = vadd.f32 %v2747, %v2772
    %2774 = vdwg.mxu0
    %2775 = vmatpush.msra.mxu0 %v2741
    %2776 = vmatpush.msra.mxu0 %v2737
    %2777 = vmatpush.msra.mxu0 %v2733
    %2778 = vmatpush.msra.mxu0 %v2729
    %2779 = vmatpush.msra.mxu0 %v2725
    %2780 = vmatpush.msra.mxu0 %v2721
    %2781 = vmatpush.msra.mxu0 %v2717
    %2782 = vmatpush.msra.mxu0 %v2713
    %2783 = vmatpush.msra.mxu0 %v2709
    %2784 = vmatpush.msra.mxu0 %v2705
    %2785 = vmatpush.msra.mxu0 %v2701
    %2786 = vmatpush.msra.mxu0 %v2697
    %2787 = vmatpush.msra.mxu0 %v2693
    %2788 = vmatpush.msra.mxu0 %v2689
    %2789 = vmatpush.msra.mxu0 %v2685
    %2790 = vmatpush.msra.mxu0 %v2681
    %2791 = vmatmul.f32.gmra.mxu0 %v2616
    %v2792 = vpop.f32.mrf.mxu0
    %v2793 = vadd.f32 %v2773, %v2792
    %2794 = vdwg.mxu0
    %2795 = vmatpush.msra.mxu0 %v2678
    %2796 = vmatpush.msra.mxu0 %v2674
    %2797 = vmatpush.msra.mxu0 %v2670
    %2798 = vmatpush.msra.mxu0 %v2666
    %2799 = vmatpush.msra.mxu0 %v2662
    %2800 = vmatpush.msra.mxu0 %v2658
    %2801 = vmatpush.msra.mxu0 %v2654
    %2802 = vmatpush.msra.mxu0 %v2650
    %2803 = vmatpush.msra.mxu0 %v2646
    %2804 = vmatpush.msra.mxu0 %v2642
    %2805 = vmatpush.msra.mxu0 %v2638
    %2806 = vmatpush.msra.mxu0 %v2634
    %2807 = vmatpush.msra.mxu0 %v2630
    %2808 = vmatpush.msra.mxu0 %v2626
    %2809 = vmatpush.msra.mxu0 %v2622
    %2810 = vmatpush.msra.mxu0 %v2618
    %2811 = vmatmul.f32.gmra.mxu0 %v2615
    %v2812 = vpop.f32.mrf.mxu0
    %v2813 = vadd.f32 %v2748, %v2812
    %2814 = vdwg.mxu0
    %2815 = vmatpush.msra.mxu0 %v2742
    %2816 = vmatpush.msra.mxu0 %v2738
    %2817 = vmatpush.msra.mxu0 %v2734
    %2818 = vmatpush.msra.mxu0 %v2730
    %2819 = vmatpush.msra.mxu0 %v2726
    %2820 = vmatpush.msra.mxu0 %v2722
    %2821 = vmatpush.msra.mxu0 %v2718
    %2822 = vmatpush.msra.mxu0 %v2714
    %2823 = vmatpush.msra.mxu0 %v2710
    %2824 = vmatpush.msra.mxu0 %v2706
    %2825 = vmatpush.msra.mxu0 %v2702
    %2826 = vmatpush.msra.mxu0 %v2698
    %2827 = vmatpush.msra.mxu0 %v2694
    %2828 = vmatpush.msra.mxu0 %v2690
    %2829 = vmatpush.msra.mxu0 %v2686
    %2830 = vmatpush.msra.mxu0 %v2682
    %2831 = vmatmul.f32.gmra.mxu0 %v2616
    %v2832 = vpop.f32.mrf.mxu0
    %v2833 = vadd.f32 %v2813, %v2832
    %2834 = vdwg.mxu0
    %2835 = vmatpush.msra.mxu0 %v2679
    %2836 = vmatpush.msra.mxu0 %v2675
    %2837 = vmatpush.msra.mxu0 %v2671
    %2838 = vmatpush.msra.mxu0 %v2667
    %2839 = vmatpush.msra.mxu0 %v2663
    %2840 = vmatpush.msra.mxu0 %v2659
    %2841 = vmatpush.msra.mxu0 %v2655
    %2842 = vmatpush.msra.mxu0 %v2651
    %2843 = vmatpush.msra.mxu0 %v2647
    %2844 = vmatpush.msra.mxu0 %v2643
    %2845 = vmatpush.msra.mxu0 %v2639
    %2846 = vmatpush.msra.mxu0 %v2635
    %2847 = vmatpush.msra.mxu0 %v2631
    %2848 = vmatpush.msra.mxu0 %v2627
    %2849 = vmatpush.msra.mxu0 %v2623
    %2850 = vmatpush.msra.mxu0 %v2619
    %2851 = vmatmul.f32.gmra.mxu0 %v2615
    %v2852 = vpop.f32.mrf.mxu0
    %v2853 = vadd.f32 %v2749, %v2852
    %2854 = vdwg.mxu0
    %2855 = vmatpush.msra.mxu0 %v2743
    %2856 = vmatpush.msra.mxu0 %v2739
    %2857 = vmatpush.msra.mxu0 %v2735
    %2858 = vmatpush.msra.mxu0 %v2731
    %2859 = vmatpush.msra.mxu0 %v2727
    %2860 = vmatpush.msra.mxu0 %v2723
    %2861 = vmatpush.msra.mxu0 %v2719
    %2862 = vmatpush.msra.mxu0 %v2715
    %2863 = vmatpush.msra.mxu0 %v2711
    %2864 = vmatpush.msra.mxu0 %v2707
    %2865 = vmatpush.msra.mxu0 %v2703
    %2866 = vmatpush.msra.mxu0 %v2699
    %2867 = vmatpush.msra.mxu0 %v2695
    %2868 = vmatpush.msra.mxu0 %v2691
    %2869 = vmatpush.msra.mxu0 %v2687
    %2870 = vmatpush.msra.mxu0 %v2683
    %2871 = vmatmul.f32.gmra.mxu0 %v2616
    %v2872 = vpop.f32.mrf.mxu0
    %v2873 = vadd.f32 %v2853, %v2872
    %2874 = vdwg.mxu0
    %2875 = vmatpush.msra.mxu0 %v2680
    %2876 = vmatpush.msra.mxu0 %v2676
    %2877 = vmatpush.msra.mxu0 %v2672
    %2878 = vmatpush.msra.mxu0 %v2668
    %2879 = vmatpush.msra.mxu0 %v2664
    %2880 = vmatpush.msra.mxu0 %v2660
    %2881 = vmatpush.msra.mxu0 %v2656
    %2882 = vmatpush.msra.mxu0 %v2652
    %2883 = vmatpush.msra.mxu0 %v2648
    %2884 = vmatpush.msra.mxu0 %v2644
    %2885 = vmatpush.msra.mxu0 %v2640
    %2886 = vmatpush.msra.mxu0 %v2636
    %2887 = vmatpush.msra.mxu0 %v2632
    %2888 = vmatpush.msra.mxu0 %v2628
    %2889 = vmatpush.msra.mxu0 %v2624
    %2890 = vmatpush.msra.mxu0 %v2620
    %2891 = vmatmul.f32.gmra.mxu0 %v2615
    %v2892 = vpop.f32.mrf.mxu0
    %v2893 = vadd.f32 %v2750, %v2892
    %2894 = vdwg.mxu0
    %2895 = vmatpush.msra.mxu0 %v2744
    %2896 = vmatpush.msra.mxu0 %v2740
    %2897 = vmatpush.msra.mxu0 %v2736
    %2898 = vmatpush.msra.mxu0 %v2732
    %2899 = vmatpush.msra.mxu0 %v2728
    %2900 = vmatpush.msra.mxu0 %v2724
    %2901 = vmatpush.msra.mxu0 %v2720
    %2902 = vmatpush.msra.mxu0 %v2716
    %2903 = vmatpush.msra.mxu0 %v2712
    %2904 = vmatpush.msra.mxu0 %v2708
    %2905 = vmatpush.msra.mxu0 %v2704
    %2906 = vmatpush.msra.mxu0 %v2700
    %2907 = vmatpush.msra.mxu0 %v2696
    %2908 = vmatpush.msra.mxu0 %v2692
    %2909 = vmatpush.msra.mxu0 %v2688
    %2910 = vmatpush.msra.mxu0 %v2684
    %2911 = vmatmul.f32.gmra.mxu0 %v2616
    %v2912 = vpop.f32.mrf.mxu0
    %v2913 = vadd.f32 %v2893, %v2912
    %2914 = vdwg.mxu0
    %v2915 = vxor.u32 %v2793, 2147483648
    %v2916 = vxor.u32 %v2833, 2147483648
    %v2917 = vxor.u32 %v2873, 2147483648
    %v2918 = vmul.f32 %v2915, 1.442695
    %v2919 = vpow.pop %v2918
    %v2920 = vmul.f32 %v2916, 1.442695
    %v2921 = vpow.pop %v2920
    %v2922 = vmul.f32 %v2917, 1.442695
    %v2923 = vpow.pop %v2922
    %v2924 = vadd.f32 %v2919, 1.0
    %v2925 = vadd.f32 %v2921, 1.0
    %v2926 = vadd.f32 %v2923, 1.0
    %v2927 = vrcp.pop %v2924
    %v2928 = vmul.f32 %v2924, %v2927
    %v2929 = vsub.f32 1.0, %v2928
    %v2930 = vmul.f32 %v2927, %v2929
    %v2931 = vadd.f32 %v2927, %v2930
    %vm2932 = vweird.f32 %v2924
    %vm2933 = vweird.f32 %v2927
    %vm2934 = vmor %vm2932, %vm2933
    %v2935 = vsel %vm2934, %v2927, %v2931
    %v2936 = vand.u32 2147483647, %v2924
    %vm2937 = vcmp.eq.f32.partialorder %v2936, 8.507059e+37
    %v2938 = vand.u32 %v2924, 2147483648
    %v2939 = vor.u32 1.1754944e-38, %v2938
    %v2940 = vsel %vm2937, %v2939, %v2935
    %v2941 = vmul.f32 1.0, %v2940
    %v2942 = vrcp.pop %v2925
    %v2943 = vmul.f32 %v2925, %v2942
    %v2944 = vsub.f32 1.0, %v2943
    %v2945 = vmul.f32 %v2942, %v2944
    %v2946 = vadd.f32 %v2942, %v2945
    %vm2947 = vweird.f32 %v2925
    %vm2948 = vweird.f32 %v2942
    %vm2949 = vmor %vm2947, %vm2948
    %v2950 = vsel %vm2949, %v2942, %v2946
    %v2951 = vand.u32 2147483647, %v2925
    %vm2952 = vcmp.eq.f32.partialorder %v2951, 8.507059e+37
    %v2953 = vand.u32 %v2925, 2147483648
    %v2954 = vor.u32 1.1754944e-38, %v2953
    %v2955 = vsel %vm2952, %v2954, %v2950
    %v2956 = vmul.f32 1.0, %v2955
    %v2957 = vrcp.pop %v2926
    %v2958 = vmul.f32 %v2926, %v2957
    %v2959 = vsub.f32 1.0, %v2958
    %v2960 = vmul.f32 %v2957, %v2959
    %v2961 = vadd.f32 %v2957, %v2960
    %vm2962 = vweird.f32 %v2926
    %vm2963 = vweird.f32 %v2957
    %vm2964 = vmor %vm2962, %vm2963
    %v2965 = vsel %vm2964, %v2957, %v2961
    %v2966 = vand.u32 2147483647, %v2926
    %vm2967 = vcmp.eq.f32.partialorder %v2966, 8.507059e+37
    %v2968 = vand.u32 %v2926, 2147483648
    %v2969 = vor.u32 1.1754944e-38, %v2968
    %v2970 = vsel %vm2967, %v2969, %v2965
    %v2971 = vmul.f32 1.0, %v2970
    %v2972 = vtanh.pop %v2913
    %v2973 = vld [vmem:[#allocation3] sm:$0xff]
    %v2974 = vmul.f32 %v2956, %v2973
    %v2975 = vmul.f32 %v2941, %v2972
    %v2976 = vadd.f32 %v2974, %v2975
    %v2977 = vtanh.pop %v2976
    %v2978 = vmul.f32 %v2971, %v2977
    %2979 = vst [vmem:[#allocation3] sm:$0xff] %v2976
    %2980 = vst [vmem:[#allocation2] sm:$0xff] %v2978
    %2981 = vst [vmem:[#allocation4 + $0x8] sm:$0xff] %v2978
    %s2982 = sld [smem:[#allocation6 + $0x7]]
    %v2983 = vstv %s2982
    %vm2984 = vcmp.eq.s32.totalorder %v75, %v2983
    %vm2985 = vmand %vm83, %vm2984
    %v2986 = vsel %vm2985, 1.0, 0.0
    %s2987 = sld [smem:[#allocation6 + $0x87]]
    %v2988 = vstv %s2987
    %vm2989 = vcmp.eq.s32.totalorder %v75, %v2988
    %vm2990 = vmand %vm89, %vm2989
    %v2991 = vsel %vm2990, 1.0, %v2986
    %v2992 = vld [vmem:[%s3] sm:$0xff]
    %v2993 = vld [vmem:[%s3 + $0x8] sm:$0xff]
    %v2994 = vld [vmem:[%s3 + $0x10] sm:$0xff]
    %v2995 = vld [vmem:[%s3 + $0x18] sm:$0xff]
    %v2996 = vld [vmem:[%s3 + $0x20] sm:$0xff]
    %v2997 = vld [vmem:[%s3 + $0x28] sm:$0xff]
    %v2998 = vld [vmem:[%s3 + $0x30] sm:$0xff]
    %v2999 = vld [vmem:[%s3 + $0x38] sm:$0xff]
    %v3000 = vld [vmem:[%s3 + $0x40] sm:$0xff]
    %v3001 = vld [vmem:[%s3 + $0x48] sm:$0xff]
    %v3002 = vld [vmem:[%s3 + $0x50] sm:$0xff]
    %v3003 = vld [vmem:[%s3 + $0x58] sm:$0xff]
    %v3004 = vld [vmem:[%s3 + $0x60] sm:$0xff]
    %v3005 = vld [vmem:[%s3 + $0x68] sm:$0xff]
    %v3006 = vld [vmem:[%s3 + $0x70] sm:$0xff]
    %v3007 = vld [vmem:[%s3 + $0x78] sm:$0xff]
    %3008 = vmatpush.msra.mxu0 %v3007
    %3009 = vmatpush.msra.mxu0 %v3006
    %3010 = vmatpush.msra.mxu0 %v3005
    %3011 = vmatpush.msra.mxu0 %v3004
    %3012 = vmatpush.msra.mxu0 %v3003
    %3013 = vmatpush.msra.mxu0 %v3002
    %3014 = vmatpush.msra.mxu0 %v3001
    %3015 = vmatpush.msra.mxu0 %v3000
    %3016 = vmatpush.msra.mxu0 %v2999
    %3017 = vmatpush.msra.mxu0 %v2998
    %3018 = vmatpush.msra.mxu0 %v2997
    %3019 = vmatpush.msra.mxu0 %v2996
    %3020 = vmatpush.msra.mxu0 %v2995
    %3021 = vmatpush.msra.mxu0 %v2994
    %3022 = vmatpush.msra.mxu0 %v2993
    %3023 = vmatpush.msra.mxu0 %v2992
    %3024 = vmatmul.f32.gmra.mxu0 %v2991
    %v3025 = vpop.f32.mrf.mxu0
    %v3026 = vadd.f32 0.0, %v3025
    %3027 = vdwg.mxu0
    %3028 = vst [vmem:[#allocation4] sm:$0xff] %v3026
    %v3029 = vld [vmem:[#allocation4] sm:$0xff]
    %v3030 = vld [vmem:[#allocation4 + $0x8] sm:$0xff]
    %v3031 = vld [vmem:[%s4] sm:$0xff]
    %v3032 = vld [vmem:[%s4 + $0x8] sm:$0xff]
    %v3033 = vld [vmem:[%s4 + $0x10] sm:$0xff]
    %v3034 = vld [vmem:[%s4 + $0x18] sm:$0xff]
    %v3035 = vld [vmem:[%s4 + $0x20] sm:$0xff]
    %v3036 = vld [vmem:[%s4 + $0x28] sm:$0xff]
    %v3037 = vld [vmem:[%s4 + $0x30] sm:$0xff]
    %v3038 = vld [vmem:[%s4 + $0x38] sm:$0xff]
    %v3039 = vld [vmem:[%s4 + $0x40] sm:$0xff]
    %v3040 = vld [vmem:[%s4 + $0x48] sm:$0xff]
    %v3041 = vld [vmem:[%s4 + $0x50] sm:$0xff]
    %v3042 = vld [vmem:[%s4 + $0x58] sm:$0xff]
    %v3043 = vld [vmem:[%s4 + $0x60] sm:$0xff]
    %v3044 = vld [vmem:[%s4 + $0x68] sm:$0xff]
    %v3045 = vld [vmem:[%s4 + $0x70] sm:$0xff]
    %v3046 = vld [vmem:[%s4 + $0x78] sm:$0xff]
    %v3047 = vld [vmem:[%s4 + $0x80] sm:$0xff]
    %v3048 = vld [vmem:[%s4 + $0x88] sm:$0xff]
    %v3049 = vld [vmem:[%s4 + $0x90] sm:$0xff]
    %v3050 = vld [vmem:[%s4 + $0x98] sm:$0xff]
    %v3051 = vld [vmem:[%s4 + $0xa0] sm:$0xff]
    %v3052 = vld [vmem:[%s4 + $0xa8] sm:$0xff]
    %v3053 = vld [vmem:[%s4 + $0xb0] sm:$0xff]
    %v3054 = vld [vmem:[%s4 + $0xb8] sm:$0xff]
    %v3055 = vld [vmem:[%s4 + $0xc0] sm:$0xff]
    %v3056 = vld [vmem:[%s4 + $0xc8] sm:$0xff]
    %v3057 = vld [vmem:[%s4 + $0xd0] sm:$0xff]
    %v3058 = vld [vmem:[%s4 + $0xd8] sm:$0xff]
    %v3059 = vld [vmem:[%s4 + $0xe0] sm:$0xff]
    %v3060 = vld [vmem:[%s4 + $0xe8] sm:$0xff]
    %v3061 = vld [vmem:[%s4 + $0xf0] sm:$0xff]
    %v3062 = vld [vmem:[%s4 + $0xf8] sm:$0xff]
    %v3063 = vld [vmem:[%s4 + $0x100] sm:$0xff]
    %v3064 = vld [vmem:[%s4 + $0x108] sm:$0xff]
    %v3065 = vld [vmem:[%s4 + $0x110] sm:$0xff]
    %v3066 = vld [vmem:[%s4 + $0x118] sm:$0xff]
    %v3067 = vld [vmem:[%s4 + $0x120] sm:$0xff]
    %v3068 = vld [vmem:[%s4 + $0x128] sm:$0xff]
    %v3069 = vld [vmem:[%s4 + $0x130] sm:$0xff]
    %v3070 = vld [vmem:[%s4 + $0x138] sm:$0xff]
    %v3071 = vld [vmem:[%s4 + $0x140] sm:$0xff]
    %v3072 = vld [vmem:[%s4 + $0x148] sm:$0xff]
    %v3073 = vld [vmem:[%s4 + $0x150] sm:$0xff]
    %v3074 = vld [vmem:[%s4 + $0x158] sm:$0xff]
    %v3075 = vld [vmem:[%s4 + $0x160] sm:$0xff]
    %v3076 = vld [vmem:[%s4 + $0x168] sm:$0xff]
    %v3077 = vld [vmem:[%s4 + $0x170] sm:$0xff]
    %v3078 = vld [vmem:[%s4 + $0x178] sm:$0xff]
    %v3079 = vld [vmem:[%s4 + $0x180] sm:$0xff]
    %v3080 = vld [vmem:[%s4 + $0x188] sm:$0xff]
    %v3081 = vld [vmem:[%s4 + $0x190] sm:$0xff]
    %v3082 = vld [vmem:[%s4 + $0x198] sm:$0xff]
    %v3083 = vld [vmem:[%s4 + $0x1a0] sm:$0xff]
    %v3084 = vld [vmem:[%s4 + $0x1a8] sm:$0xff]
    %v3085 = vld [vmem:[%s4 + $0x1b0] sm:$0xff]
    %v3086 = vld [vmem:[%s4 + $0x1b8] sm:$0xff]
    %v3087 = vld [vmem:[%s4 + $0x1c0] sm:$0xff]
    %v3088 = vld [vmem:[%s4 + $0x1c8] sm:$0xff]
    %v3089 = vld [vmem:[%s4 + $0x1d0] sm:$0xff]
    %v3090 = vld [vmem:[%s4 + $0x1d8] sm:$0xff]
    %v3091 = vld [vmem:[%s4 + $0x1e0] sm:$0xff]
    %v3092 = vld [vmem:[%s4 + $0x1e8] sm:$0xff]
    %v3093 = vld [vmem:[%s4 + $0x1f0] sm:$0xff]
    %v3094 = vld [vmem:[%s4 + $0x1f8] sm:$0xff]
    %v3095 = vld [vmem:[%s4 + $0x200] sm:$0xff]
    %v3096 = vld [vmem:[%s4 + $0x208] sm:$0xff]
    %v3097 = vld [vmem:[%s4 + $0x210] sm:$0xff]
    %v3098 = vld [vmem:[%s4 + $0x218] sm:$0xff]
    %v3099 = vld [vmem:[%s4 + $0x220] sm:$0xff]
    %v3100 = vld [vmem:[%s4 + $0x228] sm:$0xff]
    %v3101 = vld [vmem:[%s4 + $0x230] sm:$0xff]
    %v3102 = vld [vmem:[%s4 + $0x238] sm:$0xff]
    %v3103 = vld [vmem:[%s4 + $0x240] sm:$0xff]
    %v3104 = vld [vmem:[%s4 + $0x248] sm:$0xff]
    %v3105 = vld [vmem:[%s4 + $0x250] sm:$0xff]
    %v3106 = vld [vmem:[%s4 + $0x258] sm:$0xff]
    %v3107 = vld [vmem:[%s4 + $0x260] sm:$0xff]
    %v3108 = vld [vmem:[%s4 + $0x268] sm:$0xff]
    %v3109 = vld [vmem:[%s4 + $0x270] sm:$0xff]
    %v3110 = vld [vmem:[%s4 + $0x278] sm:$0xff]
    %v3111 = vld [vmem:[%s4 + $0x280] sm:$0xff]
    %v3112 = vld [vmem:[%s4 + $0x288] sm:$0xff]
    %v3113 = vld [vmem:[%s4 + $0x290] sm:$0xff]
    %v3114 = vld [vmem:[%s4 + $0x298] sm:$0xff]
    %v3115 = vld [vmem:[%s4 + $0x2a0] sm:$0xff]
    %v3116 = vld [vmem:[%s4 + $0x2a8] sm:$0xff]
    %v3117 = vld [vmem:[%s4 + $0x2b0] sm:$0xff]
    %v3118 = vld [vmem:[%s4 + $0x2b8] sm:$0xff]
    %v3119 = vld [vmem:[%s4 + $0x2c0] sm:$0xff]
    %v3120 = vld [vmem:[%s4 + $0x2c8] sm:$0xff]
    %v3121 = vld [vmem:[%s4 + $0x2d0] sm:$0xff]
    %v3122 = vld [vmem:[%s4 + $0x2d8] sm:$0xff]
    %v3123 = vld [vmem:[%s4 + $0x2e0] sm:$0xff]
    %v3124 = vld [vmem:[%s4 + $0x2e8] sm:$0xff]
    %v3125 = vld [vmem:[%s4 + $0x2f0] sm:$0xff]
    %v3126 = vld [vmem:[%s4 + $0x2f8] sm:$0xff]
    %v3127 = vld [vmem:[%s4 + $0x300] sm:$0xff]
    %v3128 = vld [vmem:[%s4 + $0x308] sm:$0xff]
    %v3129 = vld [vmem:[%s4 + $0x310] sm:$0xff]
    %v3130 = vld [vmem:[%s4 + $0x318] sm:$0xff]
    %v3131 = vld [vmem:[%s4 + $0x320] sm:$0xff]
    %v3132 = vld [vmem:[%s4 + $0x328] sm:$0xff]
    %v3133 = vld [vmem:[%s4 + $0x330] sm:$0xff]
    %v3134 = vld [vmem:[%s4 + $0x338] sm:$0xff]
    %v3135 = vld [vmem:[%s4 + $0x340] sm:$0xff]
    %v3136 = vld [vmem:[%s4 + $0x348] sm:$0xff]
    %v3137 = vld [vmem:[%s4 + $0x350] sm:$0xff]
    %v3138 = vld [vmem:[%s4 + $0x358] sm:$0xff]
    %v3139 = vld [vmem:[%s4 + $0x360] sm:$0xff]
    %v3140 = vld [vmem:[%s4 + $0x368] sm:$0xff]
    %v3141 = vld [vmem:[%s4 + $0x370] sm:$0xff]
    %v3142 = vld [vmem:[%s4 + $0x378] sm:$0xff]
    %v3143 = vld [vmem:[%s4 + $0x380] sm:$0xff]
    %v3144 = vld [vmem:[%s4 + $0x388] sm:$0xff]
    %v3145 = vld [vmem:[%s4 + $0x390] sm:$0xff]
    %v3146 = vld [vmem:[%s4 + $0x398] sm:$0xff]
    %v3147 = vld [vmem:[%s4 + $0x3a0] sm:$0xff]
    %v3148 = vld [vmem:[%s4 + $0x3a8] sm:$0xff]
    %v3149 = vld [vmem:[%s4 + $0x3b0] sm:$0xff]
    %v3150 = vld [vmem:[%s4 + $0x3b8] sm:$0xff]
    %v3151 = vld [vmem:[%s4 + $0x3c0] sm:$0xff]
    %v3152 = vld [vmem:[%s4 + $0x3c8] sm:$0xff]
    %v3153 = vld [vmem:[%s4 + $0x3d0] sm:$0xff]
    %v3154 = vld [vmem:[%s4 + $0x3d8] sm:$0xff]
    %v3155 = vld [vmem:[%s4 + $0x3e0] sm:$0xff]
    %v3156 = vld [vmem:[%s4 + $0x3e8] sm:$0xff]
    %v3157 = vld [vmem:[%s4 + $0x3f0] sm:$0xff]
    %v3158 = vld [vmem:[%s4 + $0x3f8] sm:$0xff]
    %v3159 = vld [vmem:[%s5] sm:$0xf]
    %v3161 = vperm.slane %v3159, 0
    %v3162 = vperm.slane %v3159, 1
    %v3163 = vperm.slane %v3159, 2
    %v3164 = vperm.slane %v3159, 3
    %3169 = vmatpush.msra.mxu0 %v3091
    %3170 = vmatpush.msra.mxu0 %v3087
    %3171 = vmatpush.msra.mxu0 %v3083
    %3172 = vmatpush.msra.mxu0 %v3079
    %3173 = vmatpush.msra.mxu0 %v3075
    %3174 = vmatpush.msra.mxu0 %v3071
    %3175 = vmatpush.msra.mxu0 %v3067
    %3176 = vmatpush.msra.mxu0 %v3063
    %3177 = vmatpush.msra.mxu0 %v3059
    %3178 = vmatpush.msra.mxu0 %v3055
    %3179 = vmatpush.msra.mxu0 %v3051
    %3180 = vmatpush.msra.mxu0 %v3047
    %3181 = vmatpush.msra.mxu0 %v3043
    %3182 = vmatpush.msra.mxu0 %v3039
    %3183 = vmatpush.msra.mxu0 %v3035
    %3184 = vmatpush.msra.mxu0 %v3031
    %3185 = vmatmul.f32.gmra.mxu0 %v3029
    %v3186 = vpop.f32.mrf.mxu0
    %v3187 = vadd.f32 %v3161, %v3186
    %3188 = vdwg.mxu0
    %3189 = vmatpush.msra.mxu0 %v3155
    %3190 = vmatpush.msra.mxu0 %v3151
    %3191 = vmatpush.msra.mxu0 %v3147
    %3192 = vmatpush.msra.mxu0 %v3143
    %3193 = vmatpush.msra.mxu0 %v3139
    %3194 = vmatpush.msra.mxu0 %v3135
    %3195 = vmatpush.msra.mxu0 %v3131
    %3196 = vmatpush.msra.mxu0 %v3127
    %3197 = vmatpush.msra.mxu0 %v3123
    %3198 = vmatpush.msra.mxu0 %v3119
    %3199 = vmatpush.msra.mxu0 %v3115
    %3200 = vmatpush.msra.mxu0 %v3111
    %3201 = vmatpush.msra.mxu0 %v3107
    %3202 = vmatpush.msra.mxu0 %v3103
    %3203 = vmatpush.msra.mxu0 %v3099
    %3204 = vmatpush.msra.mxu0 %v3095
    %3205 = vmatmul.f32.gmra.mxu0 %v3030
    %v3206 = vpop.f32.mrf.mxu0
    %v3207 = vadd.f32 %v3187, %v3206
    %3208 = vdwg.mxu0
    %3209 = vmatpush.msra.mxu0 %v3092
    %3210 = vmatpush.msra.mxu0 %v3088
    %3211 = vmatpush.msra.mxu0 %v3084
    %3212 = vmatpush.msra.mxu0 %v3080
    %3213 = vmatpush.msra.mxu0 %v3076
    %3214 = vmatpush.msra.mxu0 %v3072
    %3215 = vmatpush.msra.mxu0 %v3068
    %3216 = vmatpush.msra.mxu0 %v3064
    %3217 = vmatpush.msra.mxu0 %v3060
    %3218 = vmatpush.msra.mxu0 %v3056
    %3219 = vmatpush.msra.mxu0 %v3052
    %3220 = vmatpush.msra.mxu0 %v3048
    %3221 = vmatpush.msra.mxu0 %v3044
    %3222 = vmatpush.msra.mxu0 %v3040
    %3223 = vmatpush.msra.mxu0 %v3036
    %3224 = vmatpush.msra.mxu0 %v3032
    %3225 = vmatmul.f32.gmra.mxu0 %v3029
    %v3226 = vpop.f32.mrf.mxu0
    %v3227 = vadd.f32 %v3162, %v3226
    %3228 = vdwg.mxu0
    %3229 = vmatpush.msra.mxu0 %v3156
    %3230 = vmatpush.msra.mxu0 %v3152
    %3231 = vmatpush.msra.mxu0 %v3148
    %3232 = vmatpush.msra.mxu0 %v3144
    %3233 = vmatpush.msra.mxu0 %v3140
    %3234 = vmatpush.msra.mxu0 %v3136
    %3235 = vmatpush.msra.mxu0 %v3132
    %3236 = vmatpush.msra.mxu0 %v3128
    %3237 = vmatpush.msra.mxu0 %v3124
    %3238 = vmatpush.msra.mxu0 %v3120
    %3239 = vmatpush.msra.mxu0 %v3116
    %3240 = vmatpush.msra.mxu0 %v3112
    %3241 = vmatpush.msra.mxu0 %v3108
    %3242 = vmatpush.msra.mxu0 %v3104
    %3243 = vmatpush.msra.mxu0 %v3100
    %3244 = vmatpush.msra.mxu0 %v3096
    %3245 = vmatmul.f32.gmra.mxu0 %v3030
    %v3246 = vpop.f32.mrf.mxu0
    %v3247 = vadd.f32 %v3227, %v3246
    %3248 = vdwg.mxu0
    %3249 = vmatpush.msra.mxu0 %v3093
    %3250 = vmatpush.msra.mxu0 %v3089
    %3251 = vmatpush.msra.mxu0 %v3085
    %3252 = vmatpush.msra.mxu0 %v3081
    %3253 = vmatpush.msra.mxu0 %v3077
    %3254 = vmatpush.msra.mxu0 %v3073
    %3255 = vmatpush.msra.mxu0 %v3069
    %3256 = vmatpush.msra.mxu0 %v3065
    %3257 = vmatpush.msra.mxu0 %v3061
    %3258 = vmatpush.msra.mxu0 %v3057
    %3259 = vmatpush.msra.mxu0 %v3053
    %3260 = vmatpush.msra.mxu0 %v3049
    %3261 = vmatpush.msra.mxu0 %v3045
    %3262 = vmatpush.msra.mxu0 %v3041
    %3263 = vmatpush.msra.mxu0 %v3037
    %3264 = vmatpush.msra.mxu0 %v3033
    %3265 = vmatmul.f32.gmra.mxu0 %v3029
    %v3266 = vpop.f32.mrf.mxu0
    %v3267 = vadd.f32 %v3163, %v3266
    %3268 = vdwg.mxu0
    %3269 = vmatpush.msra.mxu0 %v3157
    %3270 = vmatpush.msra.mxu0 %v3153
    %3271 = vmatpush.msra.mxu0 %v3149
    %3272 = vmatpush.msra.mxu0 %v3145
    %3273 = vmatpush.msra.mxu0 %v3141
    %3274 = vmatpush.msra.mxu0 %v3137
    %3275 = vmatpush.msra.mxu0 %v3133
    %3276 = vmatpush.msra.mxu0 %v3129
    %3277 = vmatpush.msra.mxu0 %v3125
    %3278 = vmatpush.msra.mxu0 %v3121
    %3279 = vmatpush.msra.mxu0 %v3117
    %3280 = vmatpush.msra.mxu0 %v3113
    %3281 = vmatpush.msra.mxu0 %v3109
    %3282 = vmatpush.msra.mxu0 %v3105
    %3283 = vmatpush.msra.mxu0 %v3101
    %3284 = vmatpush.msra.mxu0 %v3097
    %3285 = vmatmul.f32.gmra.mxu0 %v3030
    %v3286 = vpop.f32.mrf.mxu0
    %v3287 = vadd.f32 %v3267, %v3286
    %3288 = vdwg.mxu0
    %3289 = vmatpush.msra.mxu0 %v3094
    %3290 = vmatpush.msra.mxu0 %v3090
    %3291 = vmatpush.msra.mxu0 %v3086
    %3292 = vmatpush.msra.mxu0 %v3082
    %3293 = vmatpush.msra.mxu0 %v3078
    %3294 = vmatpush.msra.mxu0 %v3074
    %3295 = vmatpush.msra.mxu0 %v3070
    %3296 = vmatpush.msra.mxu0 %v3066
    %3297 = vmatpush.msra.mxu0 %v3062
    %3298 = vmatpush.msra.mxu0 %v3058
    %3299 = vmatpush.msra.mxu0 %v3054
    %3300 = vmatpush.msra.mxu0 %v3050
    %3301 = vmatpush.msra.mxu0 %v3046
    %3302 = vmatpush.msra.mxu0 %v3042
    %3303 = vmatpush.msra.mxu0 %v3038
    %3304 = vmatpush.msra.mxu0 %v3034
    %3305 = vmatmul.f32.gmra.mxu0 %v3029
    %v3306 = vpop.f32.mrf.mxu0
    %v3307 = vadd.f32 %v3164, %v3306
    %3308 = vdwg.mxu0
    %3309 = vmatpush.msra.mxu0 %v3158
    %3310 = vmatpush.msra.mxu0 %v3154
    %3311 = vmatpush.msra.mxu0 %v3150
    %3312 = vmatpush.msra.mxu0 %v3146
    %3313 = vmatpush.msra.mxu0 %v3142
    %3314 = vmatpush.msra.mxu0 %v3138
    %3315 = vmatpush.msra.mxu0 %v3134
    %3316 = vmatpush.msra.mxu0 %v3130
    %3317 = vmatpush.msra.mxu0 %v3126
    %3318 = vmatpush.msra.mxu0 %v3122
    %3319 = vmatpush.msra.mxu0 %v3118
    %3320 = vmatpush.msra.mxu0 %v3114
    %3321 = vmatpush.msra.mxu0 %v3110
    %3322 = vmatpush.msra.mxu0 %v3106
    %3323 = vmatpush.msra.mxu0 %v3102
    %3324 = vmatpush.msra.mxu0 %v3098
    %3325 = vmatmul.f32.gmra.mxu0 %v3030
    %v3326 = vpop.f32.mrf.mxu0
    %v3327 = vadd.f32 %v3307, %v3326
    %3328 = vdwg.mxu0
    %v3329 = vxor.u32 %v3207, 2147483648
    %v3330 = vxor.u32 %v3247, 2147483648
    %v3331 = vxor.u32 %v3287, 2147483648
    %v3332 = vmul.f32 %v3329, 1.442695
    %v3333 = vpow.pop %v3332
    %v3334 = vmul.f32 %v3330, 1.442695
    %v3335 = vpow.pop %v3334
    %v3336 = vmul.f32 %v3331, 1.442695
    %v3337 = vpow.pop %v3336
    %v3338 = vadd.f32 %v3333, 1.0
    %v3339 = vadd.f32 %v3335, 1.0
    %v3340 = vadd.f32 %v3337, 1.0
    %v3341 = vrcp.pop %v3338
    %v3342 = vmul.f32 %v3338, %v3341
    %v3343 = vsub.f32 1.0, %v3342
    %v3344 = vmul.f32 %v3341, %v3343
    %v3345 = vadd.f32 %v3341, %v3344
    %vm3346 = vweird.f32 %v3338
    %vm3347 = vweird.f32 %v3341
    %vm3348 = vmor %vm3346, %vm3347
    %v3349 = vsel %vm3348, %v3341, %v3345
    %v3350 = vand.u32 2147483647, %v3338
    %vm3351 = vcmp.eq.f32.partialorder %v3350, 8.507059e+37
    %v3352 = vand.u32 %v3338, 2147483648
    %v3353 = vor.u32 1.1754944e-38, %v3352
    %v3354 = vsel %vm3351, %v3353, %v3349
    %v3355 = vmul.f32 1.0, %v3354
    %v3356 = vrcp.pop %v3339
    %v3357 = vmul.f32 %v3339, %v3356
    %v3358 = vsub.f32 1.0, %v3357
    %v3359 = vmul.f32 %v3356, %v3358
    %v3360 = vadd.f32 %v3356, %v3359
    %vm3361 = vweird.f32 %v3339
    %vm3362 = vweird.f32 %v3356
    %vm3363 = vmor %vm3361, %vm3362
    %v3364 = vsel %vm3363, %v3356, %v3360
    %v3365 = vand.u32 2147483647, %v3339
    %vm3366 = vcmp.eq.f32.partialorder %v3365, 8.507059e+37
    %v3367 = vand.u32 %v3339, 2147483648
    %v3368 = vor.u32 1.1754944e-38, %v3367
    %v3369 = vsel %vm3366, %v3368, %v3364
    %v3370 = vmul.f32 1.0, %v3369
    %v3371 = vrcp.pop %v3340
    %v3372 = vmul.f32 %v3340, %v3371
    %v3373 = vsub.f32 1.0, %v3372
    %v3374 = vmul.f32 %v3371, %v3373
    %v3375 = vadd.f32 %v3371, %v3374
    %vm3376 = vweird.f32 %v3340
    %vm3377 = vweird.f32 %v3371
    %vm3378 = vmor %vm3376, %vm3377
    %v3379 = vsel %vm3378, %v3371, %v3375
    %v3380 = vand.u32 2147483647, %v3340
    %vm3381 = vcmp.eq.f32.partialorder %v3380, 8.507059e+37
    %v3382 = vand.u32 %v3340, 2147483648
    %v3383 = vor.u32 1.1754944e-38, %v3382
    %v3384 = vsel %vm3381, %v3383, %v3379
    %v3385 = vmul.f32 1.0, %v3384
    %v3386 = vtanh.pop %v3327
    %v3387 = vld [vmem:[#allocation3] sm:$0xff]
    %v3388 = vmul.f32 %v3370, %v3387
    %v3389 = vmul.f32 %v3355, %v3386
    %v3390 = vadd.f32 %v3388, %v3389
    %v3391 = vtanh.pop %v3390
    %v3392 = vmul.f32 %v3385, %v3391
    %3393 = vst [vmem:[#allocation3] sm:$0xff] %v3390
    %3394 = vst [vmem:[#allocation2] sm:$0xff] %v3392
    %3395 = vst [vmem:[#allocation4 + $0x8] sm:$0xff] %v3392
    %s3396 = sld [smem:[#allocation8]]
    %v3397 = vstv %s3396
    %vm3398 = vcmp.eq.s32.totalorder %v75, %v3397
    %vm3399 = vmand %vm83, %vm3398
    %v3400 = vsel %vm3399, 1.0, 0.0
    %s3401 = sld [smem:[#allocation8 + $0x80]]
    %v3402 = vstv %s3401
    %vm3403 = vcmp.eq.s32.totalorder %v75, %v3402
    %vm3404 = vmand %vm89, %vm3403
    %v3405 = vsel %vm3404, 1.0, %v3400
    %3406 = vst [vmem:[#allocation5] sm:$0xff] %v3405
    %v3407 = vld [vmem:[#allocation5] sm:$0xff]
    %v3408 = vld [vmem:[%s6] sm:$0xff]
    %v3409 = vld [vmem:[%s6 + $0x8] sm:$0xff]
    %v3410 = vld [vmem:[%s6 + $0x10] sm:$0xff]
    %v3411 = vld [vmem:[%s6 + $0x18] sm:$0xff]
    %v3412 = vld [vmem:[%s6 + $0x20] sm:$0xff]
    %v3413 = vld [vmem:[%s6 + $0x28] sm:$0xff]
    %v3414 = vld [vmem:[%s6 + $0x30] sm:$0xff]
    %v3415 = vld [vmem:[%s6 + $0x38] sm:$0xff]
    %v3416 = vld [vmem:[%s6 + $0x40] sm:$0xff]
    %v3417 = vld [vmem:[%s6 + $0x48] sm:$0xff]
    %v3418 = vld [vmem:[%s6 + $0x50] sm:$0xff]
    %v3419 = vld [vmem:[%s6 + $0x58] sm:$0xff]
    %v3420 = vld [vmem:[%s6 + $0x60] sm:$0xff]
    %v3421 = vld [vmem:[%s6 + $0x68] sm:$0xff]
    %v3422 = vld [vmem:[%s6 + $0x70] sm:$0xff]
    %v3423 = vld [vmem:[%s6 + $0x78] sm:$0xff]
    %3424 = vmatpush.msra.mxu0 %v3423
    %3425 = vmatpush.msra.mxu0 %v3422
    %3426 = vmatpush.msra.mxu0 %v3421
    %3427 = vmatpush.msra.mxu0 %v3420
    %3428 = vmatpush.msra.mxu0 %v3419
    %3429 = vmatpush.msra.mxu0 %v3418
    %3430 = vmatpush.msra.mxu0 %v3417
    %3431 = vmatpush.msra.mxu0 %v3416
    %3432 = vmatpush.msra.mxu0 %v3415
    %3433 = vmatpush.msra.mxu0 %v3414
    %3434 = vmatpush.msra.mxu0 %v3413
    %3435 = vmatpush.msra.mxu0 %v3412
    %3436 = vmatpush.msra.mxu0 %v3411
    %3437 = vmatpush.msra.mxu0 %v3410
    %3438 = vmatpush.msra.mxu0 %v3409
    %3439 = vmatpush.msra.mxu0 %v3408
    %3440 = vmatmul.f32.gmra.mxu0 %v3407
    %v3441 = vpop.f32.mrf.mxu0
    %v3442 = vadd.f32 0.0, %v3441
    %3443 = vdwg.mxu0
    %3444 = vst [vmem:[#allocation4] sm:$0xff] %v3442
    %v3445 = vld [vmem:[#allocation4] sm:$0xff]
    %v3446 = vld [vmem:[#allocation4 + $0x8] sm:$0xff]
    %v3447 = vld [vmem:[%s7] sm:$0xff]
    %v3448 = vld [vmem:[%s7 + $0x8] sm:$0xff]
    %v3449 = vld [vmem:[%s7 + $0x10] sm:$0xff]
    %v3450 = vld [vmem:[%s7 + $0x18] sm:$0xff]
    %v3451 = vld [vmem:[%s7 + $0x20] sm:$0xff]
    %v3452 = vld [vmem:[%s7 + $0x28] sm:$0xff]
    %v3453 = vld [vmem:[%s7 + $0x30] sm:$0xff]
    %v3454 = vld [vmem:[%s7 + $0x38] sm:$0xff]
    %v3455 = vld [vmem:[%s7 + $0x40] sm:$0xff]
    %v3456 = vld [vmem:[%s7 + $0x48] sm:$0xff]
    %v3457 = vld [vmem:[%s7 + $0x50] sm:$0xff]
    %v3458 = vld [vmem:[%s7 + $0x58] sm:$0xff]
    %v3459 = vld [vmem:[%s7 + $0x60] sm:$0xff]
    %v3460 = vld [vmem:[%s7 + $0x68] sm:$0xff]
    %v3461 = vld [vmem:[%s7 + $0x70] sm:$0xff]
    %v3462 = vld [vmem:[%s7 + $0x78] sm:$0xff]
    %v3463 = vld [vmem:[%s7 + $0x80] sm:$0xff]
    %v3464 = vld [vmem:[%s7 + $0x88] sm:$0xff]
    %v3465 = vld [vmem:[%s7 + $0x90] sm:$0xff]
    %v3466 = vld [vmem:[%s7 + $0x98] sm:$0xff]
    %v3467 = vld [vmem:[%s7 + $0xa0] sm:$0xff]
    %v3468 = vld [vmem:[%s7 + $0xa8] sm:$0xff]
    %v3469 = vld [vmem:[%s7 + $0xb0] sm:$0xff]
    %v3470 = vld [vmem:[%s7 + $0xb8] sm:$0xff]
    %v3471 = vld [vmem:[%s7 + $0xc0] sm:$0xff]
    %v3472 = vld [vmem:[%s7 + $0xc8] sm:$0xff]
    %v3473 = vld [vmem:[%s7 + $0xd0] sm:$0xff]
    %v3474 = vld [vmem:[%s7 + $0xd8] sm:$0xff]
    %v3475 = vld [vmem:[%s7 + $0xe0] sm:$0xff]
    %v3476 = vld [vmem:[%s7 + $0xe8] sm:$0xff]
    %v3477 = vld [vmem:[%s7 + $0xf0] sm:$0xff]
    %v3478 = vld [vmem:[%s7 + $0xf8] sm:$0xff]
    %v3479 = vld [vmem:[%s7 + $0x100] sm:$0xff]
    %v3480 = vld [vmem:[%s7 + $0x108] sm:$0xff]
    %v3481 = vld [vmem:[%s7 + $0x110] sm:$0xff]
    %v3482 = vld [vmem:[%s7 + $0x118] sm:$0xff]
    %v3483 = vld [vmem:[%s7 + $0x120] sm:$0xff]
    %v3484 = vld [vmem:[%s7 + $0x128] sm:$0xff]
    %v3485 = vld [vmem:[%s7 + $0x130] sm:$0xff]
    %v3486 = vld [vmem:[%s7 + $0x138] sm:$0xff]
    %v3487 = vld [vmem:[%s7 + $0x140] sm:$0xff]
    %v3488 = vld [vmem:[%s7 + $0x148] sm:$0xff]
    %v3489 = vld [vmem:[%s7 + $0x150] sm:$0xff]
    %v3490 = vld [vmem:[%s7 + $0x158] sm:$0xff]
    %v3491 = vld [vmem:[%s7 + $0x160] sm:$0xff]
    %v3492 = vld [vmem:[%s7 + $0x168] sm:$0xff]
    %v3493 = vld [vmem:[%s7 + $0x170] sm:$0xff]
    %v3494 = vld [vmem:[%s7 + $0x178] sm:$0xff]
    %v3495 = vld [vmem:[%s7 + $0x180] sm:$0xff]
    %v3496 = vld [vmem:[%s7 + $0x188] sm:$0xff]
    %v3497 = vld [vmem:[%s7 + $0x190] sm:$0xff]
    %v3498 = vld [vmem:[%s7 + $0x198] sm:$0xff]
    %v3499 = vld [vmem:[%s7 + $0x1a0] sm:$0xff]
    %v3500 = vld [vmem:[%s7 + $0x1a8] sm:$0xff]
    %v3501 = vld [vmem:[%s7 + $0x1b0] sm:$0xff]
    %v3502 = vld [vmem:[%s7 + $0x1b8] sm:$0xff]
    %v3503 = vld [vmem:[%s7 + $0x1c0] sm:$0xff]
    %v3504 = vld [vmem:[%s7 + $0x1c8] sm:$0xff]
    %v3505 = vld [vmem:[%s7 + $0x1d0] sm:$0xff]
    %v3506 = vld [vmem:[%s7 + $0x1d8] sm:$0xff]
    %v3507 = vld [vmem:[%s7 + $0x1e0] sm:$0xff]
    %v3508 = vld [vmem:[%s7 + $0x1e8] sm:$0xff]
    %v3509 = vld [vmem:[%s7 + $0x1f0] sm:$0xff]
    %v3510 = vld [vmem:[%s7 + $0x1f8] sm:$0xff]
    %v3511 = vld [vmem:[%s7 + $0x200] sm:$0xff]
    %v3512 = vld [vmem:[%s7 + $0x208] sm:$0xff]
    %v3513 = vld [vmem:[%s7 + $0x210] sm:$0xff]
    %v3514 = vld [vmem:[%s7 + $0x218] sm:$0xff]
    %v3515 = vld [vmem:[%s7 + $0x220] sm:$0xff]
    %v3516 = vld [vmem:[%s7 + $0x228] sm:$0xff]
    %v3517 = vld [vmem:[%s7 + $0x230] sm:$0xff]
    %v3518 = vld [vmem:[%s7 + $0x238] sm:$0xff]
    %v3519 = vld [vmem:[%s7 + $0x240] sm:$0xff]
    %v3520 = vld [vmem:[%s7 + $0x248] sm:$0xff]
    %v3521 = vld [vmem:[%s7 + $0x250] sm:$0xff]
    %v3522 = vld [vmem:[%s7 + $0x258] sm:$0xff]
    %v3523 = vld [vmem:[%s7 + $0x260] sm:$0xff]
    %v3524 = vld [vmem:[%s7 + $0x268] sm:$0xff]
    %v3525 = vld [vmem:[%s7 + $0x270] sm:$0xff]
    %v3526 = vld [vmem:[%s7 + $0x278] sm:$0xff]
    %v3527 = vld [vmem:[%s7 + $0x280] sm:$0xff]
    %v3528 = vld [vmem:[%s7 + $0x288] sm:$0xff]
    %v3529 = vld [vmem:[%s7 + $0x290] sm:$0xff]
    %v3530 = vld [vmem:[%s7 + $0x298] sm:$0xff]
    %v3531 = vld [vmem:[%s7 + $0x2a0] sm:$0xff]
    %v3532 = vld [vmem:[%s7 + $0x2a8] sm:$0xff]
    %v3533 = vld [vmem:[%s7 + $0x2b0] sm:$0xff]
    %v3534 = vld [vmem:[%s7 + $0x2b8] sm:$0xff]
    %v3535 = vld [vmem:[%s7 + $0x2c0] sm:$0xff]
    %v3536 = vld [vmem:[%s7 + $0x2c8] sm:$0xff]
    %v3537 = vld [vmem:[%s7 + $0x2d0] sm:$0xff]
    %v3538 = vld [vmem:[%s7 + $0x2d8] sm:$0xff]
    %v3539 = vld [vmem:[%s7 + $0x2e0] sm:$0xff]
    %v3540 = vld [vmem:[%s7 + $0x2e8] sm:$0xff]
    %v3541 = vld [vmem:[%s7 + $0x2f0] sm:$0xff]
    %v3542 = vld [vmem:[%s7 + $0x2f8] sm:$0xff]
    %v3543 = vld [vmem:[%s7 + $0x300] sm:$0xff]
    %v3544 = vld [vmem:[%s7 + $0x308] sm:$0xff]
    %v3545 = vld [vmem:[%s7 + $0x310] sm:$0xff]
    %v3546 = vld [vmem:[%s7 + $0x318] sm:$0xff]
    %v3547 = vld [vmem:[%s7 + $0x320] sm:$0xff]
    %v3548 = vld [vmem:[%s7 + $0x328] sm:$0xff]
    %v3549 = vld [vmem:[%s7 + $0x330] sm:$0xff]
    %v3550 = vld [vmem:[%s7 + $0x338] sm:$0xff]
    %v3551 = vld [vmem:[%s7 + $0x340] sm:$0xff]
    %v3552 = vld [vmem:[%s7 + $0x348] sm:$0xff]
    %v3553 = vld [vmem:[%s7 + $0x350] sm:$0xff]
    %v3554 = vld [vmem:[%s7 + $0x358] sm:$0xff]
    %v3555 = vld [vmem:[%s7 + $0x360] sm:$0xff]
    %v3556 = vld [vmem:[%s7 + $0x368] sm:$0xff]
    %v3557 = vld [vmem:[%s7 + $0x370] sm:$0xff]
    %v3558 = vld [vmem:[%s7 + $0x378] sm:$0xff]
    %v3559 = vld [vmem:[%s7 + $0x380] sm:$0xff]
    %v3560 = vld [vmem:[%s7 + $0x388] sm:$0xff]
    %v3561 = vld [vmem:[%s7 + $0x390] sm:$0xff]
    %v3562 = vld [vmem:[%s7 + $0x398] sm:$0xff]
    %v3563 = vld [vmem:[%s7 + $0x3a0] sm:$0xff]
    %v3564 = vld [vmem:[%s7 + $0x3a8] sm:$0xff]
    %v3565 = vld [vmem:[%s7 + $0x3b0] sm:$0xff]
    %v3566 = vld [vmem:[%s7 + $0x3b8] sm:$0xff]
    %v3567 = vld [vmem:[%s7 + $0x3c0] sm:$0xff]
    %v3568 = vld [vmem:[%s7 + $0x3c8] sm:$0xff]
    %v3569 = vld [vmem:[%s7 + $0x3d0] sm:$0xff]
    %v3570 = vld [vmem:[%s7 + $0x3d8] sm:$0xff]
    %v3571 = vld [vmem:[%s7 + $0x3e0] sm:$0xff]
    %v3572 = vld [vmem:[%s7 + $0x3e8] sm:$0xff]
    %v3573 = vld [vmem:[%s7 + $0x3f0] sm:$0xff]
    %v3574 = vld [vmem:[%s7 + $0x3f8] sm:$0xff]
    %v3575 = vld [vmem:[%s8] sm:$0xf]
    %v3577 = vperm.slane %v3575, 0
    %v3578 = vperm.slane %v3575, 1
    %v3579 = vperm.slane %v3575, 2
    %v3580 = vperm.slane %v3575, 3
    %3585 = vmatpush.msra.mxu0 %v3507
    %3586 = vmatpush.msra.mxu0 %v3503
    %3587 = vmatpush.msra.mxu0 %v3499
    %3588 = vmatpush.msra.mxu0 %v3495
    %3589 = vmatpush.msra.mxu0 %v3491
    %3590 = vmatpush.msra.mxu0 %v3487
    %3591 = vmatpush.msra.mxu0 %v3483
    %3592 = vmatpush.msra.mxu0 %v3479
    %3593 = vmatpush.msra.mxu0 %v3475
    %3594 = vmatpush.msra.mxu0 %v3471
    %3595 = vmatpush.msra.mxu0 %v3467
    %3596 = vmatpush.msra.mxu0 %v3463
    %3597 = vmatpush.msra.mxu0 %v3459
    %3598 = vmatpush.msra.mxu0 %v3455
    %3599 = vmatpush.msra.mxu0 %v3451
    %3600 = vmatpush.msra.mxu0 %v3447
    %3601 = vmatmul.f32.gmra.mxu0 %v3445
    %v3602 = vpop.f32.mrf.mxu0
    %v3603 = vadd.f32 %v3577, %v3602
    %3604 = vdwg.mxu0
    %3605 = vmatpush.msra.mxu0 %v3571
    %3606 = vmatpush.msra.mxu0 %v3567
    %3607 = vmatpush.msra.mxu0 %v3563
    %3608 = vmatpush.msra.mxu0 %v3559
    %3609 = vmatpush.msra.mxu0 %v3555
    %3610 = vmatpush.msra.mxu0 %v3551
    %3611 = vmatpush.msra.mxu0 %v3547
    %3612 = vmatpush.msra.mxu0 %v3543
    %3613 = vmatpush.msra.mxu0 %v3539
    %3614 = vmatpush.msra.mxu0 %v3535
    %3615 = vmatpush.msra.mxu0 %v3531
    %3616 = vmatpush.msra.mxu0 %v3527
    %3617 = vmatpush.msra.mxu0 %v3523
    %3618 = vmatpush.msra.mxu0 %v3519
    %3619 = vmatpush.msra.mxu0 %v3515
    %3620 = vmatpush.msra.mxu0 %v3511
    %3621 = vmatmul.f32.gmra.mxu0 %v3446
    %v3622 = vpop.f32.mrf.mxu0
    %v3623 = vadd.f32 %v3603, %v3622
    %3624 = vdwg.mxu0
    %3625 = vmatpush.msra.mxu0 %v3508
    %3626 = vmatpush.msra.mxu0 %v3504
    %3627 = vmatpush.msra.mxu0 %v3500
    %3628 = vmatpush.msra.mxu0 %v3496
    %3629 = vmatpush.msra.mxu0 %v3492
    %3630 = vmatpush.msra.mxu0 %v3488
    %3631 = vmatpush.msra.mxu0 %v3484
    %3632 = vmatpush.msra.mxu0 %v3480
    %3633 = vmatpush.msra.mxu0 %v3476
    %3634 = vmatpush.msra.mxu0 %v3472
    %3635 = vmatpush.msra.mxu0 %v3468
    %3636 = vmatpush.msra.mxu0 %v3464
    %3637 = vmatpush.msra.mxu0 %v3460
    %3638 = vmatpush.msra.mxu0 %v3456
    %3639 = vmatpush.msra.mxu0 %v3452
    %3640 = vmatpush.msra.mxu0 %v3448
    %3641 = vmatmul.f32.gmra.mxu0 %v3445
    %v3642 = vpop.f32.mrf.mxu0
    %v3643 = vadd.f32 %v3578, %v3642
    %3644 = vdwg.mxu0
    %3645 = vmatpush.msra.mxu0 %v3572
    %3646 = vmatpush.msra.mxu0 %v3568
    %3647 = vmatpush.msra.mxu0 %v3564
    %3648 = vmatpush.msra.mxu0 %v3560
    %3649 = vmatpush.msra.mxu0 %v3556
    %3650 = vmatpush.msra.mxu0 %v3552
    %3651 = vmatpush.msra.mxu0 %v3548
    %3652 = vmatpush.msra.mxu0 %v3544
    %3653 = vmatpush.msra.mxu0 %v3540
    %3654 = vmatpush.msra.mxu0 %v3536
    %3655 = vmatpush.msra.mxu0 %v3532
    %3656 = vmatpush.msra.mxu0 %v3528
    %3657 = vmatpush.msra.mxu0 %v3524
    %3658 = vmatpush.msra.mxu0 %v3520
    %3659 = vmatpush.msra.mxu0 %v3516
    %3660 = vmatpush.msra.mxu0 %v3512
    %3661 = vmatmul.f32.gmra.mxu0 %v3446
    %v3662 = vpop.f32.mrf.mxu0
    %v3663 = vadd.f32 %v3643, %v3662
    %3664 = vdwg.mxu0
    %3665 = vmatpush.msra.mxu0 %v3509
    %3666 = vmatpush.msra.mxu0 %v3505
    %3667 = vmatpush.msra.mxu0 %v3501
    %3668 = vmatpush.msra.mxu0 %v3497
    %3669 = vmatpush.msra.mxu0 %v3493
    %3670 = vmatpush.msra.mxu0 %v3489
    %3671 = vmatpush.msra.mxu0 %v3485
    %3672 = vmatpush.msra.mxu0 %v3481
    %3673 = vmatpush.msra.mxu0 %v3477
    %3674 = vmatpush.msra.mxu0 %v3473
    %3675 = vmatpush.msra.mxu0 %v3469
    %3676 = vmatpush.msra.mxu0 %v3465
    %3677 = vmatpush.msra.mxu0 %v3461
    %3678 = vmatpush.msra.mxu0 %v3457
    %3679 = vmatpush.msra.mxu0 %v3453
    %3680 = vmatpush.msra.mxu0 %v3449
    %3681 = vmatmul.f32.gmra.mxu0 %v3445
    %v3682 = vpop.f32.mrf.mxu0
    %v3683 = vadd.f32 %v3579, %v3682
    %3684 = vdwg.mxu0
    %3685 = vmatpush.msra.mxu0 %v3573
    %3686 = vmatpush.msra.mxu0 %v3569
    %3687 = vmatpush.msra.mxu0 %v3565
    %3688 = vmatpush.msra.mxu0 %v3561
    %3689 = vmatpush.msra.mxu0 %v3557
    %3690 = vmatpush.msra.mxu0 %v3553
    %3691 = vmatpush.msra.mxu0 %v3549
    %3692 = vmatpush.msra.mxu0 %v3545
    %3693 = vmatpush.msra.mxu0 %v3541
    %3694 = vmatpush.msra.mxu0 %v3537
    %3695 = vmatpush.msra.mxu0 %v3533
    %3696 = vmatpush.msra.mxu0 %v3529
    %3697 = vmatpush.msra.mxu0 %v3525
    %3698 = vmatpush.msra.mxu0 %v3521
    %3699 = vmatpush.msra.mxu0 %v3517
    %3700 = vmatpush.msra.mxu0 %v3513
    %3701 = vmatmul.f32.gmra.mxu0 %v3446
    %v3702 = vpop.f32.mrf.mxu0
    %v3703 = vadd.f32 %v3683, %v3702
    %3704 = vdwg.mxu0
    %3705 = vmatpush.msra.mxu0 %v3510
    %3706 = vmatpush.msra.mxu0 %v3506
    %3707 = vmatpush.msra.mxu0 %v3502
    %3708 = vmatpush.msra.mxu0 %v3498
    %3709 = vmatpush.msra.mxu0 %v3494
    %3710 = vmatpush.msra.mxu0 %v3490
    %3711 = vmatpush.msra.mxu0 %v3486
    %3712 = vmatpush.msra.mxu0 %v3482
    %3713 = vmatpush.msra.mxu0 %v3478
    %3714 = vmatpush.msra.mxu0 %v3474
    %3715 = vmatpush.msra.mxu0 %v3470
    %3716 = vmatpush.msra.mxu0 %v3466
    %3717 = vmatpush.msra.mxu0 %v3462
    %3718 = vmatpush.msra.mxu0 %v3458
    %3719 = vmatpush.msra.mxu0 %v3454
    %3720 = vmatpush.msra.mxu0 %v3450
    %3721 = vmatmul.f32.gmra.mxu0 %v3445
    %v3722 = vpop.f32.mrf.mxu0
    %v3723 = vadd.f32 %v3580, %v3722
    %3724 = vdwg.mxu0
    %3725 = vmatpush.msra.mxu0 %v3574
    %3726 = vmatpush.msra.mxu0 %v3570
    %3727 = vmatpush.msra.mxu0 %v3566
    %3728 = vmatpush.msra.mxu0 %v3562
    %3729 = vmatpush.msra.mxu0 %v3558
    %3730 = vmatpush.msra.mxu0 %v3554
    %3731 = vmatpush.msra.mxu0 %v3550
    %3732 = vmatpush.msra.mxu0 %v3546
    %3733 = vmatpush.msra.mxu0 %v3542
    %3734 = vmatpush.msra.mxu0 %v3538
    %3735 = vmatpush.msra.mxu0 %v3534
    %3736 = vmatpush.msra.mxu0 %v3530
    %3737 = vmatpush.msra.mxu0 %v3526
    %3738 = vmatpush.msra.mxu0 %v3522
    %3739 = vmatpush.msra.mxu0 %v3518
    %3740 = vmatpush.msra.mxu0 %v3514
    %3741 = vmatmul.f32.gmra.mxu0 %v3446
    %v3742 = vpop.f32.mrf.mxu0
    %v3743 = vadd.f32 %v3723, %v3742
    %3744 = vdwg.mxu0
    %v3745 = vxor.u32 %v3623, 2147483648
    %v3746 = vxor.u32 %v3663, 2147483648
    %v3747 = vxor.u32 %v3703, 2147483648
    %v3748 = vmul.f32 %v3745, 1.442695
    %v3749 = vpow.pop %v3748
    %v3750 = vmul.f32 %v3746, 1.442695
    %v3751 = vpow.pop %v3750
    %v3752 = vmul.f32 %v3747, 1.442695
    %v3753 = vpow.pop %v3752
    %v3754 = vadd.f32 %v3749, 1.0
    %v3755 = vadd.f32 %v3751, 1.0
    %v3756 = vadd.f32 %v3753, 1.0
    %v3757 = vrcp.pop %v3754
    %v3758 = vmul.f32 %v3754, %v3757
    %v3759 = vsub.f32 1.0, %v3758
    %v3760 = vmul.f32 %v3757, %v3759
    %v3761 = vadd.f32 %v3757, %v3760
    %vm3762 = vweird.f32 %v3754
    %vm3763 = vweird.f32 %v3757
    %vm3764 = vmor %vm3762, %vm3763
    %v3765 = vsel %vm3764, %v3757, %v3761
    %v3766 = vand.u32 2147483647, %v3754
    %vm3767 = vcmp.eq.f32.partialorder %v3766, 8.507059e+37
    %v3768 = vand.u32 %v3754, 2147483648
    %v3769 = vor.u32 1.1754944e-38, %v3768
    %v3770 = vsel %vm3767, %v3769, %v3765
    %v3771 = vmul.f32 1.0, %v3770
    %v3772 = vrcp.pop %v3755
    %v3773 = vmul.f32 %v3755, %v3772
    %v3774 = vsub.f32 1.0, %v3773
    %v3775 = vmul.f32 %v3772, %v3774
    %v3776 = vadd.f32 %v3772, %v3775
    %vm3777 = vweird.f32 %v3755
    %vm3778 = vweird.f32 %v3772
    %vm3779 = vmor %vm3777, %vm3778
    %v3780 = vsel %vm3779, %v3772, %v3776
    %v3781 = vand.u32 2147483647, %v3755
    %vm3782 = vcmp.eq.f32.partialorder %v3781, 8.507059e+37
    %v3783 = vand.u32 %v3755, 2147483648
    %v3784 = vor.u32 1.1754944e-38, %v3783
    %v3785 = vsel %vm3782, %v3784, %v3780
    %v3786 = vmul.f32 1.0, %v3785
    %v3787 = vrcp.pop %v3756
    %v3788 = vmul.f32 %v3756, %v3787
    %v3789 = vsub.f32 1.0, %v3788
    %v3790 = vmul.f32 %v3787, %v3789
    %v3791 = vadd.f32 %v3787, %v3790
    %vm3792 = vweird.f32 %v3756
    %vm3793 = vweird.f32 %v3787
    %vm3794 = vmor %vm3792, %vm3793
    %v3795 = vsel %vm3794, %v3787, %v3791
    %v3796 = vand.u32 2147483647, %v3756
    %vm3797 = vcmp.eq.f32.partialorder %v3796, 8.507059e+37
    %v3798 = vand.u32 %v3756, 2147483648
    %v3799 = vor.u32 1.1754944e-38, %v3798
    %v3800 = vsel %vm3797, %v3799, %v3795
    %v3801 = vmul.f32 1.0, %v3800
    %v3802 = vtanh.pop %v3743
    %v3803 = vld [vmem:[#allocation3] sm:$0xff]
    %v3804 = vmul.f32 %v3786, %v3803
    %v3805 = vmul.f32 %v3771, %v3802
    %v3806 = vadd.f32 %v3804, %v3805
    %v3807 = vtanh.pop %v3806
    %v3808 = vmul.f32 %v3801, %v3807
    %3809 = vst [vmem:[#allocation3] sm:$0xff] %v3806
    %3810 = vst [vmem:[#allocation2] sm:$0xff] %v3808
    %3811 = vst [vmem:[#allocation4 + $0x8] sm:$0xff] %v3808
    %v3812 = vld [vmem:[%s9] sm:$0xff]
    %v3813 = vld [vmem:[%s9 + $0x8] sm:$0xff]
    %v3814 = vld [vmem:[%s9 + $0x10] sm:$0xff]
    %v3815 = vld [vmem:[%s9 + $0x18] sm:$0xff]
    %v3816 = vld [vmem:[%s9 + $0x20] sm:$0xff]
    %v3817 = vld [vmem:[%s9 + $0x28] sm:$0xff]
    %v3818 = vld [vmem:[%s9 + $0x30] sm:$0xff]
    %v3819 = vld [vmem:[%s9 + $0x38] sm:$0xff]
    %v3820 = vld [vmem:[%s9 + $0x40] sm:$0xff]
    %v3821 = vld [vmem:[%s9 + $0x48] sm:$0xff]
    %v3822 = vld [vmem:[%s9 + $0x50] sm:$0xff]
    %v3823 = vld [vmem:[%s9 + $0x58] sm:$0xff]
    %v3824 = vld [vmem:[%s9 + $0x60] sm:$0xff]
    %v3825 = vld [vmem:[%s9 + $0x68] sm:$0xff]
    %v3826 = vld [vmem:[%s9 + $0x70] sm:$0xff]
    %v3827 = vld [vmem:[%s9 + $0x78] sm:$0xff]
    %v3828 = vld [vmem:[%s10] sm:$0x1]
    %v3830 = vperm.slane %v3828, 0
    %3832 = vmatpush.msra.mxu0 %v3827
    %3833 = vmatpush.msra.mxu0 %v3826
    %3834 = vmatpush.msra.mxu0 %v3825
    %3835 = vmatpush.msra.mxu0 %v3824
    %3836 = vmatpush.msra.mxu0 %v3823
    %3837 = vmatpush.msra.mxu0 %v3822
    %3838 = vmatpush.msra.mxu0 %v3821
    %3839 = vmatpush.msra.mxu0 %v3820
    %3840 = vmatpush.msra.mxu0 %v3819
    %3841 = vmatpush.msra.mxu0 %v3818
    %3842 = vmatpush.msra.mxu0 %v3817
    %3843 = vmatpush.msra.mxu0 %v3816
    %3844 = vmatpush.msra.mxu0 %v3815
    %3845 = vmatpush.msra.mxu0 %v3814
    %3846 = vmatpush.msra.mxu0 %v3813
    %3847 = vmatpush.msra.mxu0 %v3812
    %3848 = vmatmul.f32.gmra.mxu0 %v3808
    %v3849 = vpop.f32.mrf.mxu0
    %v3850 = vadd.f32 %v3830, %v3849
    %3851 = vdwg.mxu0
    %3852 = vst [vmem:[%s11] sm:$0xff] %v3850
    %s3853 = sld [smem:[#allocation10]]
    %p3854 = scmp.gt.s32.totalorder %s3853, 0
    // Predicated region
    $region58: #{_seq2seq_core.1} parent=1 // pred_check
      %p3855 = pneg %p3854
    $region59: #{_seq2seq_core.1} parent=1 // pred_check_branch
      %3857 = sbr.rel (%p3855) target = $region61
    $region60: #{_seq2seq_core.1} parent=1 // pred_region
      %s3858 = sld [smem:[#allocation8 + $0x1]]
      %v3859 = vstv %s3858
      %vm3860 = vcmp.eq.s32.totalorder %v75, %v3859
      %vm3861 = vmand %vm83, %vm3860
      %v3862 = vsel %vm3861, 1.0, 0.0
      %s3863 = sld [smem:[#allocation8 + $0x81]]
      %v3864 = vstv %s3863
      %vm3865 = vcmp.eq.s32.totalorder %v75, %v3864
      %vm3866 = vmand %vm89, %vm3865
      %v3867 = vsel %vm3866, 1.0, %v3862
      %3868 = vst [vmem:[#allocation5] sm:$0xff] %v3867
    $region61: #{_seq2seq_core.1} parent=1 // pred_fallthru
      _
    %s3869 = sld [smem:[#allocation10]]
    %p3870 = scmp.eq.s32.totalorder %s3869, 0
    // Predicated region
    $region62: #{_seq2seq_core.1} parent=1 // pred_check
      %p3871 = pneg %p3870
    $region63: #{_seq2seq_core.1} parent=1 // pred_check_branch
      %3873 = sbr.rel (%p3871) target = $region65
    $region64: #{_seq2seq_core.1} parent=1 // pred_region
      %vm3874 = vcmp.lt.s32.totalorder %v75, 16
      %v3875 = vsel %vm3874, %v3850, -1e+30
      %3876 = vmax.xlane.f32.xlu0 %v3875
      %v3877 = vpop.xlane.xlu0 %3876
      %vm3878 = vcmp.eq.f32.partialorder %v3875, %v3877
      %v3879 = vsel %vm3878, %v75, 128
      %v3880 = vand.u32 %v3879, 65535
      %v3881 = vshra.s32 %v3879, 16
      %v3882 = vcvt.s32.f32 %v3880
      %v3883 = vcvt.s32.f32 %v3881
      %3884 = vmin.xlane.f32.xlu0 %v3883
      %v3885 = vpop.xlane.xlu0 %3884
      %vm3886 = vcmp.eq.f32.partialorder %v3883, %v3885
      %v3887 = vsel %vm3886, %v3882, inf
      %3888 = vmin.xlane.f32.xlu0 %v3887
      %v3889 = vpop.xlane.xlu0 %3888
      %v3890 = vcvt.f32.s32 %v3889
      %v3891 = vcvt.f32.s32 %v3885
      %v3892 = vshll.u32 %v3891, 16
      %v3893 = vadd.s32 %v3892, %v3890
      %vm3894 = vcmp.eq.s32.totalorder %v75, %v3893
      %v3895 = vsel %vm3894, 1, 0
      %v3896 = vcvt.s32.f32 %v3895
      %3897 = vst [vmem:[#allocation5] sm:$0xff] %v3896
    $region65: #{_seq2seq_core.1} parent=1 // pred_fallthru
      _
    %v3898 = vld [vmem:[#allocation5] sm:$0xff]
    %v3899 = vld [vmem:[%s6] sm:$0xff]
    %v3900 = vld [vmem:[%s6 + $0x8] sm:$0xff]
    %v3901 = vld [vmem:[%s6 + $0x10] sm:$0xff]
    %v3902 = vld [vmem:[%s6 + $0x18] sm:$0xff]
    %v3903 = vld [vmem:[%s6 + $0x20] sm:$0xff]
    %v3904 = vld [vmem:[%s6 + $0x28] sm:$0xff]
    %v3905 = vld [vmem:[%s6 + $0x30] sm:$0xff]
    %v3906 = vld [vmem:[%s6 + $0x38] sm:$0xff]
    %v3907 = vld [vmem:[%s6 + $0x40] sm:$0xff]
    %v3908 = vld [vmem:[%s6 + $0x48] sm:$0xff]
    %v3909 = vld [vmem:[%s6 + $0x50] sm:$0xff]
    %v3910 = vld [vmem:[%s6 + $0x58] sm:$0xff]
    %v3911 = vld [vmem:[%s6 + $0x60] sm:$0xff]
    %v3912 = vld [vmem:[%s6 + $0x68] sm:$0xff]
    %v3913 = vld [vmem:[%s6 + $0x70] sm:$0xff]
    %v3914 = vld [vmem:[%s6 + $0x78] sm:$0xff]
    %3915 = vmatpush.msra.mxu0 %v3914
    %3916 = vmatpush.msra.mxu0 %v3913
    %3917 = vmatpush.msra.mxu0 %v3912
    %3918 = vmatpush.msra.mxu0 %v3911
    %3919 = vmatpush.msra.mxu0 %v3910
    %3920 = vmatpush.msra.mxu0 %v3909
    %3921 = vmatpush.msra.mxu0 %v3908
    %3922 = vmatpush.msra.mxu0 %v3907
    %3923 = vmatpush.msra.mxu0 %v3906
    %3924 = vmatpush.msra.mxu0 %v3905
    %3925 = vmatpush.msra.mxu0 %v3904
    %3926 = vmatpush.msra.mxu0 %v3903
    %3927 = vmatpush.msra.mxu0 %v3902
    %3928 = vmatpush.msra.mxu0 %v3901
    %3929 = vmatpush.msra.mxu0 %v3900
    %3930 = vmatpush.msra.mxu0 %v3899
    %3931 = vmatmul.f32.gmra.mxu0 %v3898
    %v3932 = vpop.f32.mrf.mxu0
    %v3933 = vadd.f32 0.0, %v3932
    %3934 = vdwg.mxu0
    %3935 = vst [vmem:[#allocation4] sm:$0xff] %v3933
    %v3936 = vld [vmem:[#allocation4] sm:$0xff]
    %v3937 = vld [vmem:[#allocation4 + $0x8] sm:$0xff]
    %v3938 = vld [vmem:[%s7] sm:$0xff]
    %v3939 = vld [vmem:[%s7 + $0x8] sm:$0xff]
    %v3940 = vld [vmem:[%s7 + $0x10] sm:$0xff]
    %v3941 = vld [vmem:[%s7 + $0x18] sm:$0xff]
    %v3942 = vld [vmem:[%s7 + $0x20] sm:$0xff]
    %v3943 = vld [vmem:[%s7 + $0x28] sm:$0xff]
    %v3944 = vld [vmem:[%s7 + $0x30] sm:$0xff]
    %v3945 = vld [vmem:[%s7 + $0x38] sm:$0xff]
    %v3946 = vld [vmem:[%s7 + $0x40] sm:$0xff]
    %v3947 = vld [vmem:[%s7 + $0x48] sm:$0xff]
    %v3948 = vld [vmem:[%s7 + $0x50] sm:$0xff]
    %v3949 = vld [vmem:[%s7 + $0x58] sm:$0xff]
    %v3950 = vld [vmem:[%s7 + $0x60] sm:$0xff]
    %v3951 = vld [vmem:[%s7 + $0x68] sm:$0xff]
    %v3952 = vld [vmem:[%s7 + $0x70] sm:$0xff]
    %v3953 = vld [vmem:[%s7 + $0x78] sm:$0xff]
    %v3954 = vld [vmem:[%s7 + $0x80] sm:$0xff]
    %v3955 = vld [vmem:[%s7 + $0x88] sm:$0xff]
    %v3956 = vld [vmem:[%s7 + $0x90] sm:$0xff]
    %v3957 = vld [vmem:[%s7 + $0x98] sm:$0xff]
    %v3958 = vld [vmem:[%s7 + $0xa0] sm:$0xff]
    %v3959 = vld [vmem:[%s7 + $0xa8] sm:$0xff]
    %v3960 = vld [vmem:[%s7 + $0xb0] sm:$0xff]
    %v3961 = vld [vmem:[%s7 + $0xb8] sm:$0xff]
    %v3962 = vld [vmem:[%s7 + $0xc0] sm:$0xff]
    %v3963 = vld [vmem:[%s7 + $0xc8] sm:$0xff]
    %v3964 = vld [vmem:[%s7 + $0xd0] sm:$0xff]
    %v3965 = vld [vmem:[%s7 + $0xd8] sm:$0xff]
    %v3966 = vld [vmem:[%s7 + $0xe0] sm:$0xff]
    %v3967 = vld [vmem:[%s7 + $0xe8] sm:$0xff]
    %v3968 = vld [vmem:[%s7 + $0xf0] sm:$0xff]
    %v3969 = vld [vmem:[%s7 + $0xf8] sm:$0xff]
    %v3970 = vld [vmem:[%s7 + $0x100] sm:$0xff]
    %v3971 = vld [vmem:[%s7 + $0x108] sm:$0xff]
    %v3972 = vld [vmem:[%s7 + $0x110] sm:$0xff]
    %v3973 = vld [vmem:[%s7 + $0x118] sm:$0xff]
    %v3974 = vld [vmem:[%s7 + $0x120] sm:$0xff]
    %v3975 = vld [vmem:[%s7 + $0x128] sm:$0xff]
    %v3976 = vld [vmem:[%s7 + $0x130] sm:$0xff]
    %v3977 = vld [vmem:[%s7 + $0x138] sm:$0xff]
    %v3978 = vld [vmem:[%s7 + $0x140] sm:$0xff]
    %v3979 = vld [vmem:[%s7 + $0x148] sm:$0xff]
    %v3980 = vld [vmem:[%s7 + $0x150] sm:$0xff]
    %v3981 = vld [vmem:[%s7 + $0x158] sm:$0xff]
    %v3982 = vld [vmem:[%s7 + $0x160] sm:$0xff]
    %v3983 = vld [vmem:[%s7 + $0x168] sm:$0xff]
    %v3984 = vld [vmem:[%s7 + $0x170] sm:$0xff]
    %v3985 = vld [vmem:[%s7 + $0x178] sm:$0xff]
    %v3986 = vld [vmem:[%s7 + $0x180] sm:$0xff]
    %v3987 = vld [vmem:[%s7 + $0x188] sm:$0xff]
    %v3988 = vld [vmem:[%s7 + $0x190] sm:$0xff]
    %v3989 = vld [vmem:[%s7 + $0x198] sm:$0xff]
    %v3990 = vld [vmem:[%s7 + $0x1a0] sm:$0xff]
    %v3991 = vld [vmem:[%s7 + $0x1a8] sm:$0xff]
    %v3992 = vld [vmem:[%s7 + $0x1b0] sm:$0xff]
    %v3993 = vld [vmem:[%s7 + $0x1b8] sm:$0xff]
    %v3994 = vld [vmem:[%s7 + $0x1c0] sm:$0xff]
    %v3995 = vld [vmem:[%s7 + $0x1c8] sm:$0xff]
    %v3996 = vld [vmem:[%s7 + $0x1d0] sm:$0xff]
    %v3997 = vld [vmem:[%s7 + $0x1d8] sm:$0xff]
    %v3998 = vld [vmem:[%s7 + $0x1e0] sm:$0xff]
    %v3999 = vld [vmem:[%s7 + $0x1e8] sm:$0xff]
    %v4000 = vld [vmem:[%s7 + $0x1f0] sm:$0xff]
    %v4001 = vld [vmem:[%s7 + $0x1f8] sm:$0xff]
    %v4002 = vld [vmem:[%s7 + $0x200] sm:$0xff]
    %v4003 = vld [vmem:[%s7 + $0x208] sm:$0xff]
    %v4004 = vld [vmem:[%s7 + $0x210] sm:$0xff]
    %v4005 = vld [vmem:[%s7 + $0x218] sm:$0xff]
    %v4006 = vld [vmem:[%s7 + $0x220] sm:$0xff]
    %v4007 = vld [vmem:[%s7 + $0x228] sm:$0xff]
    %v4008 = vld [vmem:[%s7 + $0x230] sm:$0xff]
    %v4009 = vld [vmem:[%s7 + $0x238] sm:$0xff]
    %v4010 = vld [vmem:[%s7 + $0x240] sm:$0xff]
    %v4011 = vld [vmem:[%s7 + $0x248] sm:$0xff]
    %v4012 = vld [vmem:[%s7 + $0x250] sm:$0xff]
    %v4013 = vld [vmem:[%s7 + $0x258] sm:$0xff]
    %v4014 = vld [vmem:[%s7 + $0x260] sm:$0xff]
    %v4015 = vld [vmem:[%s7 + $0x268] sm:$0xff]
    %v4016 = vld [vmem:[%s7 + $0x270] sm:$0xff]
    %v4017 = vld [vmem:[%s7 + $0x278] sm:$0xff]
    %v4018 = vld [vmem:[%s7 + $0x280] sm:$0xff]
    %v4019 = vld [vmem:[%s7 + $0x288] sm:$0xff]
    %v4020 = vld [vmem:[%s7 + $0x290] sm:$0xff]
    %v4021 = vld [vmem:[%s7 + $0x298] sm:$0xff]
    %v4022 = vld [vmem:[%s7 + $0x2a0] sm:$0xff]
    %v4023 = vld [vmem:[%s7 + $0x2a8] sm:$0xff]
    %v4024 = vld [vmem:[%s7 + $0x2b0] sm:$0xff]
    %v4025 = vld [vmem:[%s7 + $0x2b8] sm:$0xff]
    %v4026 = vld [vmem:[%s7 + $0x2c0] sm:$0xff]
    %v4027 = vld [vmem:[%s7 + $0x2c8] sm:$0xff]
    %v4028 = vld [vmem:[%s7 + $0x2d0] sm:$0xff]
    %v4029 = vld [vmem:[%s7 + $0x2d8] sm:$0xff]
    %v4030 = vld [vmem:[%s7 + $0x2e0] sm:$0xff]
    %v4031 = vld [vmem:[%s7 + $0x2e8] sm:$0xff]
    %v4032 = vld [vmem:[%s7 + $0x2f0] sm:$0xff]
    %v4033 = vld [vmem:[%s7 + $0x2f8] sm:$0xff]
    %v4034 = vld [vmem:[%s7 + $0x300] sm:$0xff]
    %v4035 = vld [vmem:[%s7 + $0x308] sm:$0xff]
    %v4036 = vld [vmem:[%s7 + $0x310] sm:$0xff]
    %v4037 = vld [vmem:[%s7 + $0x318] sm:$0xff]
    %v4038 = vld [vmem:[%s7 + $0x320] sm:$0xff]
    %v4039 = vld [vmem:[%s7 + $0x328] sm:$0xff]
    %v4040 = vld [vmem:[%s7 + $0x330] sm:$0xff]
    %v4041 = vld [vmem:[%s7 + $0x338] sm:$0xff]
    %v4042 = vld [vmem:[%s7 + $0x340] sm:$0xff]
    %v4043 = vld [vmem:[%s7 + $0x348] sm:$0xff]
    %v4044 = vld [vmem:[%s7 + $0x350] sm:$0xff]
    %v4045 = vld [vmem:[%s7 + $0x358] sm:$0xff]
    %v4046 = vld [vmem:[%s7 + $0x360] sm:$0xff]
    %v4047 = vld [vmem:[%s7 + $0x368] sm:$0xff]
    %v4048 = vld [vmem:[%s7 + $0x370] sm:$0xff]
    %v4049 = vld [vmem:[%s7 + $0x378] sm:$0xff]
    %v4050 = vld [vmem:[%s7 + $0x380] sm:$0xff]
    %v4051 = vld [vmem:[%s7 + $0x388] sm:$0xff]
    %v4052 = vld [vmem:[%s7 + $0x390] sm:$0xff]
    %v4053 = vld [vmem:[%s7 + $0x398] sm:$0xff]
    %v4054 = vld [vmem:[%s7 + $0x3a0] sm:$0xff]
    %v4055 = vld [vmem:[%s7 + $0x3a8] sm:$0xff]
    %v4056 = vld [vmem:[%s7 + $0x3b0] sm:$0xff]
    %v4057 = vld [vmem:[%s7 + $0x3b8] sm:$0xff]
    %v4058 = vld [vmem:[%s7 + $0x3c0] sm:$0xff]
    %v4059 = vld [vmem:[%s7 + $0x3c8] sm:$0xff]
    %v4060 = vld [vmem:[%s7 + $0x3d0] sm:$0xff]
    %v4061 = vld [vmem:[%s7 + $0x3d8] sm:$0xff]
    %v4062 = vld [vmem:[%s7 + $0x3e0] sm:$0xff]
    %v4063 = vld [vmem:[%s7 + $0x3e8] sm:$0xff]
    %v4064 = vld [vmem:[%s7 + $0x3f0] sm:$0xff]
    %v4065 = vld [vmem:[%s7 + $0x3f8] sm:$0xff]
    %v4066 = vld [vmem:[%s8] sm:$0xf]
    %v4068 = vperm.slane %v4066, 0
    %v4069 = vperm.slane %v4066, 1
    %v4070 = vperm.slane %v4066, 2
    %v4071 = vperm.slane %v4066, 3
    %4076 = vmatpush.msra.mxu0 %v3998
    %4077 = vmatpush.msra.mxu0 %v3994
    %4078 = vmatpush.msra.mxu0 %v3990
    %4079 = vmatpush.msra.mxu0 %v3986
    %4080 = vmatpush.msra.mxu0 %v3982
    %4081 = vmatpush.msra.mxu0 %v3978
    %4082 = vmatpush.msra.mxu0 %v3974
    %4083 = vmatpush.msra.mxu0 %v3970
    %4084 = vmatpush.msra.mxu0 %v3966
    %4085 = vmatpush.msra.mxu0 %v3962
    %4086 = vmatpush.msra.mxu0 %v3958
    %4087 = vmatpush.msra.mxu0 %v3954
    %4088 = vmatpush.msra.mxu0 %v3950
    %4089 = vmatpush.msra.mxu0 %v3946
    %4090 = vmatpush.msra.mxu0 %v3942
    %4091 = vmatpush.msra.mxu0 %v3938
    %4092 = vmatmul.f32.gmra.mxu0 %v3936
    %v4093 = vpop.f32.mrf.mxu0
    %v4094 = vadd.f32 %v4068, %v4093
    %4095 = vdwg.mxu0
    %4096 = vmatpush.msra.mxu0 %v4062
    %4097 = vmatpush.msra.mxu0 %v4058
    %4098 = vmatpush.msra.mxu0 %v4054
    %4099 = vmatpush.msra.mxu0 %v4050
    %4100 = vmatpush.msra.mxu0 %v4046
    %4101 = vmatpush.msra.mxu0 %v4042
    %4102 = vmatpush.msra.mxu0 %v4038
    %4103 = vmatpush.msra.mxu0 %v4034
    %4104 = vmatpush.msra.mxu0 %v4030
    %4105 = vmatpush.msra.mxu0 %v4026
    %4106 = vmatpush.msra.mxu0 %v4022
    %4107 = vmatpush.msra.mxu0 %v4018
    %4108 = vmatpush.msra.mxu0 %v4014
    %4109 = vmatpush.msra.mxu0 %v4010
    %4110 = vmatpush.msra.mxu0 %v4006
    %4111 = vmatpush.msra.mxu0 %v4002
    %4112 = vmatmul.f32.gmra.mxu0 %v3937
    %v4113 = vpop.f32.mrf.mxu0
    %v4114 = vadd.f32 %v4094, %v4113
    %4115 = vdwg.mxu0
    %4116 = vmatpush.msra.mxu0 %v3999
    %4117 = vmatpush.msra.mxu0 %v3995
    %4118 = vmatpush.msra.mxu0 %v3991
    %4119 = vmatpush.msra.mxu0 %v3987
    %4120 = vmatpush.msra.mxu0 %v3983
    %4121 = vmatpush.msra.mxu0 %v3979
    %4122 = vmatpush.msra.mxu0 %v3975
    %4123 = vmatpush.msra.mxu0 %v3971
    %4124 = vmatpush.msra.mxu0 %v3967
    %4125 = vmatpush.msra.mxu0 %v3963
    %4126 = vmatpush.msra.mxu0 %v3959
    %4127 = vmatpush.msra.mxu0 %v3955
    %4128 = vmatpush.msra.mxu0 %v3951
    %4129 = vmatpush.msra.mxu0 %v3947
    %4130 = vmatpush.msra.mxu0 %v3943
    %4131 = vmatpush.msra.mxu0 %v3939
    %4132 = vmatmul.f32.gmra.mxu0 %v3936
    %v4133 = vpop.f32.mrf.mxu0
    %v4134 = vadd.f32 %v4069, %v4133
    %4135 = vdwg.mxu0
    %4136 = vmatpush.msra.mxu0 %v4063
    %4137 = vmatpush.msra.mxu0 %v4059
    %4138 = vmatpush.msra.mxu0 %v4055
    %4139 = vmatpush.msra.mxu0 %v4051
    %4140 = vmatpush.msra.mxu0 %v4047
    %4141 = vmatpush.msra.mxu0 %v4043
    %4142 = vmatpush.msra.mxu0 %v4039
    %4143 = vmatpush.msra.mxu0 %v4035
    %4144 = vmatpush.msra.mxu0 %v4031
    %4145 = vmatpush.msra.mxu0 %v4027
    %4146 = vmatpush.msra.mxu0 %v4023
    %4147 = vmatpush.msra.mxu0 %v4019
    %4148 = vmatpush.msra.mxu0 %v4015
    %4149 = vmatpush.msra.mxu0 %v4011
    %4150 = vmatpush.msra.mxu0 %v4007
    %4151 = vmatpush.msra.mxu0 %v4003
    %4152 = vmatmul.f32.gmra.mxu0 %v3937
    %v4153 = vpop.f32.mrf.mxu0
    %v4154 = vadd.f32 %v4134, %v4153
    %4155 = vdwg.mxu0
    %4156 = vmatpush.msra.mxu0 %v4000
    %4157 = vmatpush.msra.mxu0 %v3996
    %4158 = vmatpush.msra.mxu0 %v3992
    %4159 = vmatpush.msra.mxu0 %v3988
    %4160 = vmatpush.msra.mxu0 %v3984
    %4161 = vmatpush.msra.mxu0 %v3980
    %4162 = vmatpush.msra.mxu0 %v3976
    %4163 = vmatpush.msra.mxu0 %v3972
    %4164 = vmatpush.msra.mxu0 %v3968
    %4165 = vmatpush.msra.mxu0 %v3964
    %4166 = vmatpush.msra.mxu0 %v3960
    %4167 = vmatpush.msra.mxu0 %v3956
    %4168 = vmatpush.msra.mxu0 %v3952
    %4169 = vmatpush.msra.mxu0 %v3948
    %4170 = vmatpush.msra.mxu0 %v3944
    %4171 = vmatpush.msra.mxu0 %v3940
    %4172 = vmatmul.f32.gmra.mxu0 %v3936
    %v4173 = vpop.f32.mrf.mxu0
    %v4174 = vadd.f32 %v4070, %v4173
    %4175 = vdwg.mxu0
    %4176 = vmatpush.msra.mxu0 %v4064
    %4177 = vmatpush.msra.mxu0 %v4060
    %4178 = vmatpush.msra.mxu0 %v4056
    %4179 = vmatpush.msra.mxu0 %v4052
    %4180 = vmatpush.msra.mxu0 %v4048
    %4181 = vmatpush.msra.mxu0 %v4044
    %4182 = vmatpush.msra.mxu0 %v4040
    %4183 = vmatpush.msra.mxu0 %v4036
    %4184 = vmatpush.msra.mxu0 %v4032
    %4185 = vmatpush.msra.mxu0 %v4028
    %4186 = vmatpush.msra.mxu0 %v4024
    %4187 = vmatpush.msra.mxu0 %v4020
    %4188 = vmatpush.msra.mxu0 %v4016
    %4189 = vmatpush.msra.mxu0 %v4012
    %4190 = vmatpush.msra.mxu0 %v4008
    %4191 = vmatpush.msra.mxu0 %v4004
    %4192 = vmatmul.f32.gmra.mxu0 %v3937
    %v4193 = vpop.f32.mrf.mxu0
    %v4194 = vadd.f32 %v4174, %v4193
    %4195 = vdwg.mxu0
    %4196 = vmatpush.msra.mxu0 %v4001
    %4197 = vmatpush.msra.mxu0 %v3997
    %4198 = vmatpush.msra.mxu0 %v3993
    %4199 = vmatpush.msra.mxu0 %v3989
    %4200 = vmatpush.msra.mxu0 %v3985
    %4201 = vmatpush.msra.mxu0 %v3981
    %4202 = vmatpush.msra.mxu0 %v3977
    %4203 = vmatpush.msra.mxu0 %v3973
    %4204 = vmatpush.msra.mxu0 %v3969
    %4205 = vmatpush.msra.mxu0 %v3965
    %4206 = vmatpush.msra.mxu0 %v3961
    %4207 = vmatpush.msra.mxu0 %v3957
    %4208 = vmatpush.msra.mxu0 %v3953
    %4209 = vmatpush.msra.mxu0 %v3949
    %4210 = vmatpush.msra.mxu0 %v3945
    %4211 = vmatpush.msra.mxu0 %v3941
    %4212 = vmatmul.f32.gmra.mxu0 %v3936
    %v4213 = vpop.f32.mrf.mxu0
    %v4214 = vadd.f32 %v4071, %v4213
    %4215 = vdwg.mxu0
    %4216 = vmatpush.msra.mxu0 %v4065
    %4217 = vmatpush.msra.mxu0 %v4061
    %4218 = vmatpush.msra.mxu0 %v4057
    %4219 = vmatpush.msra.mxu0 %v4053
    %4220 = vmatpush.msra.mxu0 %v4049
    %4221 = vmatpush.msra.mxu0 %v4045
    %4222 = vmatpush.msra.mxu0 %v4041
    %4223 = vmatpush.msra.mxu0 %v4037
    %4224 = vmatpush.msra.mxu0 %v4033
    %4225 = vmatpush.msra.mxu0 %v4029
    %4226 = vmatpush.msra.mxu0 %v4025
    %4227 = vmatpush.msra.mxu0 %v4021
    %4228 = vmatpush.msra.mxu0 %v4017
    %4229 = vmatpush.msra.mxu0 %v4013
    %4230 = vmatpush.msra.mxu0 %v4009
    %4231 = vmatpush.msra.mxu0 %v4005
    %4232 = vmatmul.f32.gmra.mxu0 %v3937
    %v4233 = vpop.f32.mrf.mxu0
    %v4234 = vadd.f32 %v4214, %v4233
    %4235 = vdwg.mxu0
    %v4236 = vxor.u32 %v4114, 2147483648
    %v4237 = vxor.u32 %v4154, 2147483648
    %v4238 = vxor.u32 %v4194, 2147483648
    %v4239 = vmul.f32 %v4236, 1.442695
    %v4240 = vpow.pop %v4239
    %v4241 = vmul.f32 %v4237, 1.442695
    %v4242 = vpow.pop %v4241
    %v4243 = vmul.f32 %v4238, 1.442695
    %v4244 = vpow.pop %v4243
    %v4245 = vadd.f32 %v4240, 1.0
    %v4246 = vadd.f32 %v4242, 1.0
    %v4247 = vadd.f32 %v4244, 1.0
    %v4248 = vrcp.pop %v4245
    %v4249 = vmul.f32 %v4245, %v4248
    %v4250 = vsub.f32 1.0, %v4249
    %v4251 = vmul.f32 %v4248, %v4250
    %v4252 = vadd.f32 %v4248, %v4251
    %vm4253 = vweird.f32 %v4245
    %vm4254 = vweird.f32 %v4248
    %vm4255 = vmor %vm4253, %vm4254
    %v4256 = vsel %vm4255, %v4248, %v4252
    %v4257 = vand.u32 2147483647, %v4245
    %vm4258 = vcmp.eq.f32.partialorder %v4257, 8.507059e+37
    %v4259 = vand.u32 %v4245, 2147483648
    %v4260 = vor.u32 1.1754944e-38, %v4259
    %v4261 = vsel %vm4258, %v4260, %v4256
    %v4262 = vmul.f32 1.0, %v4261
    %v4263 = vrcp.pop %v4246
    %v4264 = vmul.f32 %v4246, %v4263
    %v4265 = vsub.f32 1.0, %v4264
    %v4266 = vmul.f32 %v4263, %v4265
    %v4267 = vadd.f32 %v4263, %v4266
    %vm4268 = vweird.f32 %v4246
    %vm4269 = vweird.f32 %v4263
    %vm4270 = vmor %vm4268, %vm4269
    %v4271 = vsel %vm4270, %v4263, %v4267
    %v4272 = vand.u32 2147483647, %v4246
    %vm4273 = vcmp.eq.f32.partialorder %v4272, 8.507059e+37
    %v4274 = vand.u32 %v4246, 2147483648
    %v4275 = vor.u32 1.1754944e-38, %v4274
    %v4276 = vsel %vm4273, %v4275, %v4271
    %v4277 = vmul.f32 1.0, %v4276
    %v4278 = vrcp.pop %v4247
    %v4279 = vmul.f32 %v4247, %v4278
    %v4280 = vsub.f32 1.0, %v4279
    %v4281 = vmul.f32 %v4278, %v4280
    %v4282 = vadd.f32 %v4278, %v4281
    %vm4283 = vweird.f32 %v4247
    %vm4284 = vweird.f32 %v4278
    %vm4285 = vmor %vm4283, %vm4284
    %v4286 = vsel %vm4285, %v4278, %v4282
    %v4287 = vand.u32 2147483647, %v4247
    %vm4288 = vcmp.eq.f32.partialorder %v4287, 8.507059e+37
    %v4289 = vand.u32 %v4247, 2147483648
    %v4290 = vor.u32 1.1754944e-38, %v4289
    %v4291 = vsel %vm4288, %v4290, %v4286
    %v4292 = vmul.f32 1.0, %v4291
    %v4293 = vtanh.pop %v4234
    %v4294 = vld [vmem:[#allocation3] sm:$0xff]
    %v4295 = vmul.f32 %v4277, %v4294
    %v4296 = vmul.f32 %v4262, %v4293
    %v4297 = vadd.f32 %v4295, %v4296
    %v4298 = vtanh.pop %v4297
    %v4299 = vmul.f32 %v4292, %v4298
    %4300 = vst [vmem:[#allocation3] sm:$0xff] %v4297
    %4301 = vst [vmem:[#allocation2] sm:$0xff] %v4299
    %4302 = vst [vmem:[#allocation4 + $0x8] sm:$0xff] %v4299
    %v4303 = vld [vmem:[%s9] sm:$0xff]
    %v4304 = vld [vmem:[%s9 + $0x8] sm:$0xff]
    %v4305 = vld [vmem:[%s9 + $0x10] sm:$0xff]
    %v4306 = vld [vmem:[%s9 + $0x18] sm:$0xff]
    %v4307 = vld [vmem:[%s9 + $0x20] sm:$0xff]
    %v4308 = vld [vmem:[%s9 + $0x28] sm:$0xff]
    %v4309 = vld [vmem:[%s9 + $0x30] sm:$0xff]
    %v4310 = vld [vmem:[%s9 + $0x38] sm:$0xff]
    %v4311 = vld [vmem:[%s9 + $0x40] sm:$0xff]
    %v4312 = vld [vmem:[%s9 + $0x48] sm:$0xff]
    %v4313 = vld [vmem:[%s9 + $0x50] sm:$0xff]
    %v4314 = vld [vmem:[%s9 + $0x58] sm:$0xff]
    %v4315 = vld [vmem:[%s9 + $0x60] sm:$0xff]
    %v4316 = vld [vmem:[%s9 + $0x68] sm:$0xff]
    %v4317 = vld [vmem:[%s9 + $0x70] sm:$0xff]
    %v4318 = vld [vmem:[%s9 + $0x78] sm:$0xff]
    %v4319 = vld [vmem:[%s10] sm:$0x1]
    %v4321 = vperm.slane %v4319, 0
    %4323 = vmatpush.msra.mxu0 %v4318
    %4324 = vmatpush.msra.mxu0 %v4317
    %4325 = vmatpush.msra.mxu0 %v4316
    %4326 = vmatpush.msra.mxu0 %v4315
    %4327 = vmatpush.msra.mxu0 %v4314
    %4328 = vmatpush.msra.mxu0 %v4313
    %4329 = vmatpush.msra.mxu0 %v4312
    %4330 = vmatpush.msra.mxu0 %v4311
    %4331 = vmatpush.msra.mxu0 %v4310
    %4332 = vmatpush.msra.mxu0 %v4309
    %4333 = vmatpush.msra.mxu0 %v4308
    %4334 = vmatpush.msra.mxu0 %v4307
    %4335 = vmatpush.msra.mxu0 %v4306
    %4336 = vmatpush.msra.mxu0 %v4305
    %4337 = vmatpush.msra.mxu0 %v4304
    %4338 = vmatpush.msra.mxu0 %v4303
    %4339 = vmatmul.f32.gmra.mxu0 %v4299
    %v4340 = vpop.f32.mrf.mxu0
    %v4341 = vadd.f32 %v4321, %v4340
    %4342 = vdwg.mxu0
    %s4343 = scalar_lea.vmem %s11, 8
    %4344 = vst [vmem:[%s4343] sm:$0xff] %v4341
    %s4345 = sld [smem:[#allocation10 + $0x1]]
    %p4346 = scmp.gt.s32.totalorder %s4345, 0
    // Predicated region
    $region66: #{_seq2seq_core.1} parent=1 // pred_check
      %p4347 = pneg %p4346
    $region67: #{_seq2seq_core.1} parent=1 // pred_check_branch
      %4349 = sbr.rel (%p4347) target = $region69
    $region68: #{_seq2seq_core.1} parent=1 // pred_region
      %s4350 = sld [smem:[#allocation8 + $0x2]]
      %v4351 = vstv %s4350
      %vm4352 = vcmp.eq.s32.totalorder %v75, %v4351
      %vm4353 = vmand %vm83, %vm4352
      %v4354 = vsel %vm4353, 1.0, 0.0
      %s4355 = sld [smem:[#allocation8 + $0x82]]
      %v4356 = vstv %s4355
      %vm4357 = vcmp.eq.s32.totalorder %v75, %v4356
      %vm4358 = vmand %vm89, %vm4357
      %v4359 = vsel %vm4358, 1.0, %v4354
      %4360 = vst [vmem:[#allocation5] sm:$0xff] %v4359
    $region69: #{_seq2seq_core.1} parent=1 // pred_fallthru
      _
    %s4361 = sld [smem:[#allocation10 + $0x1]]
    %p4362 = scmp.eq.s32.totalorder %s4361, 0
    // Predicated region
    $region70: #{_seq2seq_core.1} parent=1 // pred_check
      %p4363 = pneg %p4362
    $region71: #{_seq2seq_core.1} parent=1 // pred_check_branch
      %4365 = sbr.rel (%p4363) target = $region73
    $region72: #{_seq2seq_core.1} parent=1 // pred_region
      %vm4366 = vcmp.lt.s32.totalorder %v75, 16
      %v4367 = vsel %vm4366, %v4341, -1e+30
      %4368 = vmax.xlane.f32.xlu0 %v4367
      %v4369 = vpop.xlane.xlu0 %4368
      %vm4370 = vcmp.eq.f32.partialorder %v4367, %v4369
      %v4371 = vsel %vm4370, %v75, 128
      %v4372 = vand.u32 %v4371, 65535
      %v4373 = vshra.s32 %v4371, 16
      %v4374 = vcvt.s32.f32 %v4372
      %v4375 = vcvt.s32.f32 %v4373
      %4376 = vmin.xlane.f32.xlu0 %v4375
      %v4377 = vpop.xlane.xlu0 %4376
      %vm4378 = vcmp.eq.f32.partialorder %v4375, %v4377
      %v4379 = vsel %vm4378, %v4374, inf
      %4380 = vmin.xlane.f32.xlu0 %v4379
      %v4381 = vpop.xlane.xlu0 %4380
      %v4382 = vcvt.f32.s32 %v4381
      %v4383 = vcvt.f32.s32 %v4377
      %v4384 = vshll.u32 %v4383, 16
      %v4385 = vadd.s32 %v4384, %v4382
      %vm4386 = vcmp.eq.s32.totalorder %v75, %v4385
      %v4387 = vsel %vm4386, 1, 0
      %v4388 = vcvt.s32.f32 %v4387
      %4389 = vst [vmem:[#allocation5] sm:$0xff] %v4388
    $region73: #{_seq2seq_core.1} parent=1 // pred_fallthru
      _
    %v4390 = vld [vmem:[#allocation5] sm:$0xff]
    %v4391 = vld [vmem:[%s6] sm:$0xff]
    %v4392 = vld [vmem:[%s6 + $0x8] sm:$0xff]
    %v4393 = vld [vmem:[%s6 + $0x10] sm:$0xff]
    %v4394 = vld [vmem:[%s6 + $0x18] sm:$0xff]
    %v4395 = vld [vmem:[%s6 + $0x20] sm:$0xff]
    %v4396 = vld [vmem:[%s6 + $0x28] sm:$0xff]
    %v4397 = vld [vmem:[%s6 + $0x30] sm:$0xff]
    %v4398 = vld [vmem:[%s6 + $0x38] sm:$0xff]
    %v4399 = vld [vmem:[%s6 + $0x40] sm:$0xff]
    %v4400 = vld [vmem:[%s6 + $0x48] sm:$0xff]
    %v4401 = vld [vmem:[%s6 + $0x50] sm:$0xff]
    %v4402 = vld [vmem:[%s6 + $0x58] sm:$0xff]
    %v4403 = vld [vmem:[%s6 + $0x60] sm:$0xff]
    %v4404 = vld [vmem:[%s6 + $0x68] sm:$0xff]
    %v4405 = vld [vmem:[%s6 + $0x70] sm:$0xff]
    %v4406 = vld [vmem:[%s6 + $0x78] sm:$0xff]
    %4407 = vmatpush.msra.mxu0 %v4406
    %4408 = vmatpush.msra.mxu0 %v4405
    %4409 = vmatpush.msra.mxu0 %v4404
    %4410 = vmatpush.msra.mxu0 %v4403
    %4411 = vmatpush.msra.mxu0 %v4402
    %4412 = vmatpush.msra.mxu0 %v4401
    %4413 = vmatpush.msra.mxu0 %v4400
    %4414 = vmatpush.msra.mxu0 %v4399
    %4415 = vmatpush.msra.mxu0 %v4398
    %4416 = vmatpush.msra.mxu0 %v4397
    %4417 = vmatpush.msra.mxu0 %v4396
    %4418 = vmatpush.msra.mxu0 %v4395
    %4419 = vmatpush.msra.mxu0 %v4394
    %4420 = vmatpush.msra.mxu0 %v4393
    %4421 = vmatpush.msra.mxu0 %v4392
    %4422 = vmatpush.msra.mxu0 %v4391
    %4423 = vmatmul.f32.gmra.mxu0 %v4390
    %v4424 = vpop.f32.mrf.mxu0
    %v4425 = vadd.f32 0.0, %v4424
    %4426 = vdwg.mxu0
    %4427 = vst [vmem:[#allocation4] sm:$0xff] %v4425
    %v4428 = vld [vmem:[#allocation4] sm:$0xff]
    %v4429 = vld [vmem:[#allocation4 + $0x8] sm:$0xff]
    %v4430 = vld [vmem:[%s7] sm:$0xff]
    %v4431 = vld [vmem:[%s7 + $0x8] sm:$0xff]
    %v4432 = vld [vmem:[%s7 + $0x10] sm:$0xff]
    %v4433 = vld [vmem:[%s7 + $0x18] sm:$0xff]
    %v4434 = vld [vmem:[%s7 + $0x20] sm:$0xff]
    %v4435 = vld [vmem:[%s7 + $0x28] sm:$0xff]
    %v4436 = vld [vmem:[%s7 + $0x30] sm:$0xff]
    %v4437 = vld [vmem:[%s7 + $0x38] sm:$0xff]
    %v4438 = vld [vmem:[%s7 + $0x40] sm:$0xff]
    %v4439 = vld [vmem:[%s7 + $0x48] sm:$0xff]
    %v4440 = vld [vmem:[%s7 + $0x50] sm:$0xff]
    %v4441 = vld [vmem:[%s7 + $0x58] sm:$0xff]
    %v4442 = vld [vmem:[%s7 + $0x60] sm:$0xff]
    %v4443 = vld [vmem:[%s7 + $0x68] sm:$0xff]
    %v4444 = vld [vmem:[%s7 + $0x70] sm:$0xff]
    %v4445 = vld [vmem:[%s7 + $0x78] sm:$0xff]
    %v4446 = vld [vmem:[%s7 + $0x80] sm:$0xff]
    %v4447 = vld [vmem:[%s7 + $0x88] sm:$0xff]
    %v4448 = vld [vmem:[%s7 + $0x90] sm:$0xff]
    %v4449 = vld [vmem:[%s7 + $0x98] sm:$0xff]
    %v4450 = vld [vmem:[%s7 + $0xa0] sm:$0xff]
    %v4451 = vld [vmem:[%s7 + $0xa8] sm:$0xff]
    %v4452 = vld [vmem:[%s7 + $0xb0] sm:$0xff]
    %v4453 = vld [vmem:[%s7 + $0xb8] sm:$0xff]
    %v4454 = vld [vmem:[%s7 + $0xc0] sm:$0xff]
    %v4455 = vld [vmem:[%s7 + $0xc8] sm:$0xff]
    %v4456 = vld [vmem:[%s7 + $0xd0] sm:$0xff]
    %v4457 = vld [vmem:[%s7 + $0xd8] sm:$0xff]
    %v4458 = vld [vmem:[%s7 + $0xe0] sm:$0xff]
    %v4459 = vld [vmem:[%s7 + $0xe8] sm:$0xff]
    %v4460 = vld [vmem:[%s7 + $0xf0] sm:$0xff]
    %v4461 = vld [vmem:[%s7 + $0xf8] sm:$0xff]
    %v4462 = vld [vmem:[%s7 + $0x100] sm:$0xff]
    %v4463 = vld [vmem:[%s7 + $0x108] sm:$0xff]
    %v4464 = vld [vmem:[%s7 + $0x110] sm:$0xff]
    %v4465 = vld [vmem:[%s7 + $0x118] sm:$0xff]
    %v4466 = vld [vmem:[%s7 + $0x120] sm:$0xff]
    %v4467 = vld [vmem:[%s7 + $0x128] sm:$0xff]
    %v4468 = vld [vmem:[%s7 + $0x130] sm:$0xff]
    %v4469 = vld [vmem:[%s7 + $0x138] sm:$0xff]
    %v4470 = vld [vmem:[%s7 + $0x140] sm:$0xff]
    %v4471 = vld [vmem:[%s7 + $0x148] sm:$0xff]
    %v4472 = vld [vmem:[%s7 + $0x150] sm:$0xff]
    %v4473 = vld [vmem:[%s7 + $0x158] sm:$0xff]
    %v4474 = vld [vmem:[%s7 + $0x160] sm:$0xff]
    %v4475 = vld [vmem:[%s7 + $0x168] sm:$0xff]
    %v4476 = vld [vmem:[%s7 + $0x170] sm:$0xff]
    %v4477 = vld [vmem:[%s7 + $0x178] sm:$0xff]
    %v4478 = vld [vmem:[%s7 + $0x180] sm:$0xff]
    %v4479 = vld [vmem:[%s7 + $0x188] sm:$0xff]
    %v4480 = vld [vmem:[%s7 + $0x190] sm:$0xff]
    %v4481 = vld [vmem:[%s7 + $0x198] sm:$0xff]
    %v4482 = vld [vmem:[%s7 + $0x1a0] sm:$0xff]
    %v4483 = vld [vmem:[%s7 + $0x1a8] sm:$0xff]
    %v4484 = vld [vmem:[%s7 + $0x1b0] sm:$0xff]
    %v4485 = vld [vmem:[%s7 + $0x1b8] sm:$0xff]
    %v4486 = vld [vmem:[%s7 + $0x1c0] sm:$0xff]
    %v4487 = vld [vmem:[%s7 + $0x1c8] sm:$0xff]
    %v4488 = vld [vmem:[%s7 + $0x1d0] sm:$0xff]
    %v4489 = vld [vmem:[%s7 + $0x1d8] sm:$0xff]
    %v4490 = vld [vmem:[%s7 + $0x1e0] sm:$0xff]
    %v4491 = vld [vmem:[%s7 + $0x1e8] sm:$0xff]
    %v4492 = vld [vmem:[%s7 + $0x1f0] sm:$0xff]
    %v4493 = vld [vmem:[%s7 + $0x1f8] sm:$0xff]
    %v4494 = vld [vmem:[%s7 + $0x200] sm:$0xff]
    %v4495 = vld [vmem:[%s7 + $0x208] sm:$0xff]
    %v4496 = vld [vmem:[%s7 + $0x210] sm:$0xff]
    %v4497 = vld [vmem:[%s7 + $0x218] sm:$0xff]
    %v4498 = vld [vmem:[%s7 + $0x220] sm:$0xff]
    %v4499 = vld [vmem:[%s7 + $0x228] sm:$0xff]
    %v4500 = vld [vmem:[%s7 + $0x230] sm:$0xff]
    %v4501 = vld [vmem:[%s7 + $0x238] sm:$0xff]
    %v4502 = vld [vmem:[%s7 + $0x240] sm:$0xff]
    %v4503 = vld [vmem:[%s7 + $0x248] sm:$0xff]
    %v4504 = vld [vmem:[%s7 + $0x250] sm:$0xff]
    %v4505 = vld [vmem:[%s7 + $0x258] sm:$0xff]
    %v4506 = vld [vmem:[%s7 + $0x260] sm:$0xff]
    %v4507 = vld [vmem:[%s7 + $0x268] sm:$0xff]
    %v4508 = vld [vmem:[%s7 + $0x270] sm:$0xff]
    %v4509 = vld [vmem:[%s7 + $0x278] sm:$0xff]
    %v4510 = vld [vmem:[%s7 + $0x280] sm:$0xff]
    %v4511 = vld [vmem:[%s7 + $0x288] sm:$0xff]
    %v4512 = vld [vmem:[%s7 + $0x290] sm:$0xff]
    %v4513 = vld [vmem:[%s7 + $0x298] sm:$0xff]
    %v4514 = vld [vmem:[%s7 + $0x2a0] sm:$0xff]
    %v4515 = vld [vmem:[%s7 + $0x2a8] sm:$0xff]
    %v4516 = vld [vmem:[%s7 + $0x2b0] sm:$0xff]
    %v4517 = vld [vmem:[%s7 + $0x2b8] sm:$0xff]
    %v4518 = vld [vmem:[%s7 + $0x2c0] sm:$0xff]
    %v4519 = vld [vmem:[%s7 + $0x2c8] sm:$0xff]
    %v4520 = vld [vmem:[%s7 + $0x2d0] sm:$0xff]
    %v4521 = vld [vmem:[%s7 + $0x2d8] sm:$0xff]
    %v4522 = vld [vmem:[%s7 + $0x2e0] sm:$0xff]
    %v4523 = vld [vmem:[%s7 + $0x2e8] sm:$0xff]
    %v4524 = vld [vmem:[%s7 + $0x2f0] sm:$0xff]
    %v4525 = vld [vmem:[%s7 + $0x2f8] sm:$0xff]
    %v4526 = vld [vmem:[%s7 + $0x300] sm:$0xff]
    %v4527 = vld [vmem:[%s7 + $0x308] sm:$0xff]
    %v4528 = vld [vmem:[%s7 + $0x310] sm:$0xff]
    %v4529 = vld [vmem:[%s7 + $0x318] sm:$0xff]
    %v4530 = vld [vmem:[%s7 + $0x320] sm:$0xff]
    %v4531 = vld [vmem:[%s7 + $0x328] sm:$0xff]
    %v4532 = vld [vmem:[%s7 + $0x330] sm:$0xff]
    %v4533 = vld [vmem:[%s7 + $0x338] sm:$0xff]
    %v4534 = vld [vmem:[%s7 + $0x340] sm:$0xff]
    %v4535 = vld [vmem:[%s7 + $0x348] sm:$0xff]
    %v4536 = vld [vmem:[%s7 + $0x350] sm:$0xff]
    %v4537 = vld [vmem:[%s7 + $0x358] sm:$0xff]
    %v4538 = vld [vmem:[%s7 + $0x360] sm:$0xff]
    %v4539 = vld [vmem:[%s7 + $0x368] sm:$0xff]
    %v4540 = vld [vmem:[%s7 + $0x370] sm:$0xff]
    %v4541 = vld [vmem:[%s7 + $0x378] sm:$0xff]
    %v4542 = vld [vmem:[%s7 + $0x380] sm:$0xff]
    %v4543 = vld [vmem:[%s7 + $0x388] sm:$0xff]
    %v4544 = vld [vmem:[%s7 + $0x390] sm:$0xff]
    %v4545 = vld [vmem:[%s7 + $0x398] sm:$0xff]
    %v4546 = vld [vmem:[%s7 + $0x3a0] sm:$0xff]
    %v4547 = vld [vmem:[%s7 + $0x3a8] sm:$0xff]
    %v4548 = vld [vmem:[%s7 + $0x3b0] sm:$0xff]
    %v4549 = vld [vmem:[%s7 + $0x3b8] sm:$0xff]
    %v4550 = vld [vmem:[%s7 + $0x3c0] sm:$0xff]
    %v4551 = vld [vmem:[%s7 + $0x3c8] sm:$0xff]
    %v4552 = vld [vmem:[%s7 + $0x3d0] sm:$0xff]
    %v4553 = vld [vmem:[%s7 + $0x3d8] sm:$0xff]
    %v4554 = vld [vmem:[%s7 + $0x3e0] sm:$0xff]
    %v4555 = vld [vmem:[%s7 + $0x3e8] sm:$0xff]
    %v4556 = vld [vmem:[%s7 + $0x3f0] sm:$0xff]
    %v4557 = vld [vmem:[%s7 + $0x3f8] sm:$0xff]
    %v4558 = vld [vmem:[%s8] sm:$0xf]
    %v4560 = vperm.slane %v4558, 0
    %v4561 = vperm.slane %v4558, 1
    %v4562 = vperm.slane %v4558, 2
    %v4563 = vperm.slane %v4558, 3
    %4568 = vmatpush.msra.mxu0 %v4490
    %4569 = vmatpush.msra.mxu0 %v4486
    %4570 = vmatpush.msra.mxu0 %v4482
    %4571 = vmatpush.msra.mxu0 %v4478
    %4572 = vmatpush.msra.mxu0 %v4474
    %4573 = vmatpush.msra.mxu0 %v4470
    %4574 = vmatpush.msra.mxu0 %v4466
    %4575 = vmatpush.msra.mxu0 %v4462
    %4576 = vmatpush.msra.mxu0 %v4458
    %4577 = vmatpush.msra.mxu0 %v4454
    %4578 = vmatpush.msra.mxu0 %v4450
    %4579 = vmatpush.msra.mxu0 %v4446
    %4580 = vmatpush.msra.mxu0 %v4442
    %4581 = vmatpush.msra.mxu0 %v4438
    %4582 = vmatpush.msra.mxu0 %v4434
    %4583 = vmatpush.msra.mxu0 %v4430
    %4584 = vmatmul.f32.gmra.mxu0 %v4428
    %v4585 = vpop.f32.mrf.mxu0
    %v4586 = vadd.f32 %v4560, %v4585
    %4587 = vdwg.mxu0
    %4588 = vmatpush.msra.mxu0 %v4554
    %4589 = vmatpush.msra.mxu0 %v4550
    %4590 = vmatpush.msra.mxu0 %v4546
    %4591 = vmatpush.msra.mxu0 %v4542
    %4592 = vmatpush.msra.mxu0 %v4538
    %4593 = vmatpush.msra.mxu0 %v4534
    %4594 = vmatpush.msra.mxu0 %v4530
    %4595 = vmatpush.msra.mxu0 %v4526
    %4596 = vmatpush.msra.mxu0 %v4522
    %4597 = vmatpush.msra.mxu0 %v4518
    %4598 = vmatpush.msra.mxu0 %v4514
    %4599 = vmatpush.msra.mxu0 %v4510
    %4600 = vmatpush.msra.mxu0 %v4506
    %4601 = vmatpush.msra.mxu0 %v4502
    %4602 = vmatpush.msra.mxu0 %v4498
    %4603 = vmatpush.msra.mxu0 %v4494
    %4604 = vmatmul.f32.gmra.mxu0 %v4429
    %v4605 = vpop.f32.mrf.mxu0
    %v4606 = vadd.f32 %v4586, %v4605
    %4607 = vdwg.mxu0
    %4608 = vmatpush.msra.mxu0 %v4491
    %4609 = vmatpush.msra.mxu0 %v4487
    %4610 = vmatpush.msra.mxu0 %v4483
    %4611 = vmatpush.msra.mxu0 %v4479
    %4612 = vmatpush.msra.mxu0 %v4475
    %4613 = vmatpush.msra.mxu0 %v4471
    %4614 = vmatpush.msra.mxu0 %v4467
    %4615 = vmatpush.msra.mxu0 %v4463
    %4616 = vmatpush.msra.mxu0 %v4459
    %4617 = vmatpush.msra.mxu0 %v4455
    %4618 = vmatpush.msra.mxu0 %v4451
    %4619 = vmatpush.msra.mxu0 %v4447
    %4620 = vmatpush.msra.mxu0 %v4443
    %4621 = vmatpush.msra.mxu0 %v4439
    %4622 = vmatpush.msra.mxu0 %v4435
    %4623 = vmatpush.msra.mxu0 %v4431
    %4624 = vmatmul.f32.gmra.mxu0 %v4428
    %v4625 = vpop.f32.mrf.mxu0
    %v4626 = vadd.f32 %v4561, %v4625
    %4627 = vdwg.mxu0
    %4628 = vmatpush.msra.mxu0 %v4555
    %4629 = vmatpush.msra.mxu0 %v4551
    %4630 = vmatpush.msra.mxu0 %v4547
    %4631 = vmatpush.msra.mxu0 %v4543
    %4632 = vmatpush.msra.mxu0 %v4539
    %4633 = vmatpush.msra.mxu0 %v4535
    %4634 = vmatpush.msra.mxu0 %v4531
    %4635 = vmatpush.msra.mxu0 %v4527
    %4636 = vmatpush.msra.mxu0 %v4523
    %4637 = vmatpush.msra.mxu0 %v4519
    %4638 = vmatpush.msra.mxu0 %v4515
    %4639 = vmatpush.msra.mxu0 %v4511
    %4640 = vmatpush.msra.mxu0 %v4507
    %4641 = vmatpush.msra.mxu0 %v4503
    %4642 = vmatpush.msra.mxu0 %v4499
    %4643 = vmatpush.msra.mxu0 %v4495
    %4644 = vmatmul.f32.gmra.mxu0 %v4429
    %v4645 = vpop.f32.mrf.mxu0
    %v4646 = vadd.f32 %v4626, %v4645
    %4647 = vdwg.mxu0
    %4648 = vmatpush.msra.mxu0 %v4492
    %4649 = vmatpush.msra.mxu0 %v4488
    %4650 = vmatpush.msra.mxu0 %v4484
    %4651 = vmatpush.msra.mxu0 %v4480
    %4652 = vmatpush.msra.mxu0 %v4476
    %4653 = vmatpush.msra.mxu0 %v4472
    %4654 = vmatpush.msra.mxu0 %v4468
    %4655 = vmatpush.msra.mxu0 %v4464
    %4656 = vmatpush.msra.mxu0 %v4460
    %4657 = vmatpush.msra.mxu0 %v4456
    %4658 = vmatpush.msra.mxu0 %v4452
    %4659 = vmatpush.msra.mxu0 %v4448
    %4660 = vmatpush.msra.mxu0 %v4444
    %4661 = vmatpush.msra.mxu0 %v4440
    %4662 = vmatpush.msra.mxu0 %v4436
    %4663 = vmatpush.msra.mxu0 %v4432
    %4664 = vmatmul.f32.gmra.mxu0 %v4428
    %v4665 = vpop.f32.mrf.mxu0
    %v4666 = vadd.f32 %v4562, %v4665
    %4667 = vdwg.mxu0
    %4668 = vmatpush.msra.mxu0 %v4556
    %4669 = vmatpush.msra.mxu0 %v4552
    %4670 = vmatpush.msra.mxu0 %v4548
    %4671 = vmatpush.msra.mxu0 %v4544
    %4672 = vmatpush.msra.mxu0 %v4540
    %4673 = vmatpush.msra.mxu0 %v4536
    %4674 = vmatpush.msra.mxu0 %v4532
    %4675 = vmatpush.msra.mxu0 %v4528
    %4676 = vmatpush.msra.mxu0 %v4524
    %4677 = vmatpush.msra.mxu0 %v4520
    %4678 = vmatpush.msra.mxu0 %v4516
    %4679 = vmatpush.msra.mxu0 %v4512
    %4680 = vmatpush.msra.mxu0 %v4508
    %4681 = vmatpush.msra.mxu0 %v4504
    %4682 = vmatpush.msra.mxu0 %v4500
    %4683 = vmatpush.msra.mxu0 %v4496
    %4684 = vmatmul.f32.gmra.mxu0 %v4429
    %v4685 = vpop.f32.mrf.mxu0
    %v4686 = vadd.f32 %v4666, %v4685
    %4687 = vdwg.mxu0
    %4688 = vmatpush.msra.mxu0 %v4493
    %4689 = vmatpush.msra.mxu0 %v4489
    %4690 = vmatpush.msra.mxu0 %v4485
    %4691 = vmatpush.msra.mxu0 %v4481
    %4692 = vmatpush.msra.mxu0 %v4477
    %4693 = vmatpush.msra.mxu0 %v4473
    %4694 = vmatpush.msra.mxu0 %v4469
    %4695 = vmatpush.msra.mxu0 %v4465
    %4696 = vmatpush.msra.mxu0 %v4461
    %4697 = vmatpush.msra.mxu0 %v4457
    %4698 = vmatpush.msra.mxu0 %v4453
    %4699 = vmatpush.msra.mxu0 %v4449
    %4700 = vmatpush.msra.mxu0 %v4445
    %4701 = vmatpush.msra.mxu0 %v4441
    %4702 = vmatpush.msra.mxu0 %v4437
    %4703 = vmatpush.msra.mxu0 %v4433
    %4704 = vmatmul.f32.gmra.mxu0 %v4428
    %v4705 = vpop.f32.mrf.mxu0
    %v4706 = vadd.f32 %v4563, %v4705
    %4707 = vdwg.mxu0
    %4708 = vmatpush.msra.mxu0 %v4557
    %4709 = vmatpush.msra.mxu0 %v4553
    %4710 = vmatpush.msra.mxu0 %v4549
    %4711 = vmatpush.msra.mxu0 %v4545
    %4712 = vmatpush.msra.mxu0 %v4541
    %4713 = vmatpush.msra.mxu0 %v4537
    %4714 = vmatpush.msra.mxu0 %v4533
    %4715 = vmatpush.msra.mxu0 %v4529
    %4716 = vmatpush.msra.mxu0 %v4525
    %4717 = vmatpush.msra.mxu0 %v4521
    %4718 = vmatpush.msra.mxu0 %v4517
    %4719 = vmatpush.msra.mxu0 %v4513
    %4720 = vmatpush.msra.mxu0 %v4509
    %4721 = vmatpush.msra.mxu0 %v4505
    %4722 = vmatpush.msra.mxu0 %v4501
    %4723 = vmatpush.msra.mxu0 %v4497
    %4724 = vmatmul.f32.gmra.mxu0 %v4429
    %v4725 = vpop.f32.mrf.mxu0
    %v4726 = vadd.f32 %v4706, %v4725
    %4727 = vdwg.mxu0
    %v4728 = vxor.u32 %v4606, 2147483648
    %v4729 = vxor.u32 %v4646, 2147483648
    %v4730 = vxor.u32 %v4686, 2147483648
    %v4731 = vmul.f32 %v4728, 1.442695
    %v4732 = vpow.pop %v4731
    %v4733 = vmul.f32 %v4729, 1.442695
    %v4734 = vpow.pop %v4733
    %v4735 = vmul.f32 %v4730, 1.442695
    %v4736 = vpow.pop %v4735
    %v4737 = vadd.f32 %v4732, 1.0
    %v4738 = vadd.f32 %v4734, 1.0
    %v4739 = vadd.f32 %v4736, 1.0
    %v4740 = vrcp.pop %v4737
    %v4741 = vmul.f32 %v4737, %v4740
    %v4742 = vsub.f32 1.0, %v4741
    %v4743 = vmul.f32 %v4740, %v4742
    %v4744 = vadd.f32 %v4740, %v4743
    %vm4745 = vweird.f32 %v4737
    %vm4746 = vweird.f32 %v4740
    %vm4747 = vmor %vm4745, %vm4746
    %v4748 = vsel %vm4747, %v4740, %v4744
    %v4749 = vand.u32 2147483647, %v4737
    %vm4750 = vcmp.eq.f32.partialorder %v4749, 8.507059e+37
    %v4751 = vand.u32 %v4737, 2147483648
    %v4752 = vor.u32 1.1754944e-38, %v4751
    %v4753 = vsel %vm4750, %v4752, %v4748
    %v4754 = vmul.f32 1.0, %v4753
    %v4755 = vrcp.pop %v4738
    %v4756 = vmul.f32 %v4738, %v4755
    %v4757 = vsub.f32 1.0, %v4756
    %v4758 = vmul.f32 %v4755, %v4757
    %v4759 = vadd.f32 %v4755, %v4758
    %vm4760 = vweird.f32 %v4738
    %vm4761 = vweird.f32 %v4755
    %vm4762 = vmor %vm4760, %vm4761
    %v4763 = vsel %vm4762, %v4755, %v4759
    %v4764 = vand.u32 2147483647, %v4738
    %vm4765 = vcmp.eq.f32.partialorder %v4764, 8.507059e+37
    %v4766 = vand.u32 %v4738, 2147483648
    %v4767 = vor.u32 1.1754944e-38, %v4766
    %v4768 = vsel %vm4765, %v4767, %v4763
    %v4769 = vmul.f32 1.0, %v4768
    %v4770 = vrcp.pop %v4739
    %v4771 = vmul.f32 %v4739, %v4770
    %v4772 = vsub.f32 1.0, %v4771
    %v4773 = vmul.f32 %v4770, %v4772
    %v4774 = vadd.f32 %v4770, %v4773
    %vm4775 = vweird.f32 %v4739
    %vm4776 = vweird.f32 %v4770
    %vm4777 = vmor %vm4775, %vm4776
    %v4778 = vsel %vm4777, %v4770, %v4774
    %v4779 = vand.u32 2147483647, %v4739
    %vm4780 = vcmp.eq.f32.partialorder %v4779, 8.507059e+37
    %v4781 = vand.u32 %v4739, 2147483648
    %v4782 = vor.u32 1.1754944e-38, %v4781
    %v4783 = vsel %vm4780, %v4782, %v4778
    %v4784 = vmul.f32 1.0, %v4783
    %v4785 = vtanh.pop %v4726
    %v4786 = vld [vmem:[#allocation3] sm:$0xff]
    %v4787 = vmul.f32 %v4769, %v4786
    %v4788 = vmul.f32 %v4754, %v4785
    %v4789 = vadd.f32 %v4787, %v4788
    %v4790 = vtanh.pop %v4789
    %v4791 = vmul.f32 %v4784, %v4790
    %4792 = vst [vmem:[#allocation3] sm:$0xff] %v4789
    %4793 = vst [vmem:[#allocation2] sm:$0xff] %v4791
    %4794 = vst [vmem:[#allocation4 + $0x8] sm:$0xff] %v4791
    %v4795 = vld [vmem:[%s9] sm:$0xff]
    %v4796 = vld [vmem:[%s9 + $0x8] sm:$0xff]
    %v4797 = vld [vmem:[%s9 + $0x10] sm:$0xff]
    %v4798 = vld [vmem:[%s9 + $0x18] sm:$0xff]
    %v4799 = vld [vmem:[%s9 + $0x20] sm:$0xff]
    %v4800 = vld [vmem:[%s9 + $0x28] sm:$0xff]
    %v4801 = vld [vmem:[%s9 + $0x30] sm:$0xff]
    %v4802 = vld [vmem:[%s9 + $0x38] sm:$0xff]
    %v4803 = vld [vmem:[%s9 + $0x40] sm:$0xff]
    %v4804 = vld [vmem:[%s9 + $0x48] sm:$0xff]
    %v4805 = vld [vmem:[%s9 + $0x50] sm:$0xff]
    %v4806 = vld [vmem:[%s9 + $0x58] sm:$0xff]
    %v4807 = vld [vmem:[%s9 + $0x60] sm:$0xff]
    %v4808 = vld [vmem:[%s9 + $0x68] sm:$0xff]
    %v4809 = vld [vmem:[%s9 + $0x70] sm:$0xff]
    %v4810 = vld [vmem:[%s9 + $0x78] sm:$0xff]
    %v4811 = vld [vmem:[%s10] sm:$0x1]
    %v4813 = vperm.slane %v4811, 0
    %4815 = vmatpush.msra.mxu0 %v4810
    %4816 = vmatpush.msra.mxu0 %v4809
    %4817 = vmatpush.msra.mxu0 %v4808
    %4818 = vmatpush.msra.mxu0 %v4807
    %4819 = vmatpush.msra.mxu0 %v4806
    %4820 = vmatpush.msra.mxu0 %v4805
    %4821 = vmatpush.msra.mxu0 %v4804
    %4822 = vmatpush.msra.mxu0 %v4803
    %4823 = vmatpush.msra.mxu0 %v4802
    %4824 = vmatpush.msra.mxu0 %v4801
    %4825 = vmatpush.msra.mxu0 %v4800
    %4826 = vmatpush.msra.mxu0 %v4799
    %4827 = vmatpush.msra.mxu0 %v4798
    %4828 = vmatpush.msra.mxu0 %v4797
    %4829 = vmatpush.msra.mxu0 %v4796
    %4830 = vmatpush.msra.mxu0 %v4795
    %4831 = vmatmul.f32.gmra.mxu0 %v4791
    %v4832 = vpop.f32.mrf.mxu0
    %v4833 = vadd.f32 %v4813, %v4832
    %4834 = vdwg.mxu0
    %s4835 = scalar_lea.vmem %s11, 16
    %4836 = vst [vmem:[%s4835] sm:$0xff] %v4833
    %s4837 = sld [smem:[#allocation10 + $0x2]]
    %p4838 = scmp.gt.s32.totalorder %s4837, 0
    // Predicated region
    $region74: #{_seq2seq_core.1} parent=1 // pred_check
      %p4839 = pneg %p4838
    $region75: #{_seq2seq_core.1} parent=1 // pred_check_branch
      %4841 = sbr.rel (%p4839) target = $region77
    $region76: #{_seq2seq_core.1} parent=1 // pred_region
      %s4842 = sld [smem:[#allocation8 + $0x3]]
      %v4843 = vstv %s4842
      %vm4844 = vcmp.eq.s32.totalorder %v75, %v4843
      %vm4845 = vmand %vm83, %vm4844
      %v4846 = vsel %vm4845, 1.0, 0.0
      %s4847 = sld [smem:[#allocation8 + $0x83]]
      %v4848 = vstv %s4847
      %vm4849 = vcmp.eq.s32.totalorder %v75, %v4848
      %vm4850 = vmand %vm89, %vm4849
      %v4851 = vsel %vm4850, 1.0, %v4846
      %4852 = vst [vmem:[#allocation5] sm:$0xff] %v4851
    $region77: #{_seq2seq_core.1} parent=1 // pred_fallthru
      _
    %s4853 = sld [smem:[#allocation10 + $0x2]]
    %p4854 = scmp.eq.s32.totalorder %s4853, 0
    // Predicated region
    $region78: #{_seq2seq_core.1} parent=1 // pred_check
      %p4855 = pneg %p4854
    $region79: #{_seq2seq_core.1} parent=1 // pred_check_branch
      %4857 = sbr.rel (%p4855) target = $region81
    $region80: #{_seq2seq_core.1} parent=1 // pred_region
      %vm4858 = vcmp.lt.s32.totalorder %v75, 16
      %v4859 = vsel %vm4858, %v4833, -1e+30
      %4860 = vmax.xlane.f32.xlu0 %v4859
      %v4861 = vpop.xlane.xlu0 %4860
      %vm4862 = vcmp.eq.f32.partialorder %v4859, %v4861
      %v4863 = vsel %vm4862, %v75, 128
      %v4864 = vand.u32 %v4863, 65535
      %v4865 = vshra.s32 %v4863, 16
      %v4866 = vcvt.s32.f32 %v4864
      %v4867 = vcvt.s32.f32 %v4865
      %4868 = vmin.xlane.f32.xlu0 %v4867
      %v4869 = vpop.xlane.xlu0 %4868
      %vm4870 = vcmp.eq.f32.partialorder %v4867, %v4869
      %v4871 = vsel %vm4870, %v4866, inf
      %4872 = vmin.xlane.f32.xlu0 %v4871
      %v4873 = vpop.xlane.xlu0 %4872
      %v4874 = vcvt.f32.s32 %v4873
      %v4875 = vcvt.f32.s32 %v4869
      %v4876 = vshll.u32 %v4875, 16
      %v4877 = vadd.s32 %v4876, %v4874
      %vm4878 = vcmp.eq.s32.totalorder %v75, %v4877
      %v4879 = vsel %vm4878, 1, 0
      %v4880 = vcvt.s32.f32 %v4879
      %4881 = vst [vmem:[#allocation5] sm:$0xff] %v4880
    $region81: #{_seq2seq_core.1} parent=1 // pred_fallthru
      _
    %v4882 = vld [vmem:[#allocation5] sm:$0xff]
    %v4883 = vld [vmem:[%s6] sm:$0xff]
    %v4884 = vld [vmem:[%s6 + $0x8] sm:$0xff]
    %v4885 = vld [vmem:[%s6 + $0x10] sm:$0xff]
    %v4886 = vld [vmem:[%s6 + $0x18] sm:$0xff]
    %v4887 = vld [vmem:[%s6 + $0x20] sm:$0xff]
    %v4888 = vld [vmem:[%s6 + $0x28] sm:$0xff]
    %v4889 = vld [vmem:[%s6 + $0x30] sm:$0xff]
    %v4890 = vld [vmem:[%s6 + $0x38] sm:$0xff]
    %v4891 = vld [vmem:[%s6 + $0x40] sm:$0xff]
    %v4892 = vld [vmem:[%s6 + $0x48] sm:$0xff]
    %v4893 = vld [vmem:[%s6 + $0x50] sm:$0xff]
    %v4894 = vld [vmem:[%s6 + $0x58] sm:$0xff]
    %v4895 = vld [vmem:[%s6 + $0x60] sm:$0xff]
    %v4896 = vld [vmem:[%s6 + $0x68] sm:$0xff]
    %v4897 = vld [vmem:[%s6 + $0x70] sm:$0xff]
    %v4898 = vld [vmem:[%s6 + $0x78] sm:$0xff]
    %4899 = vmatpush.msra.mxu0 %v4898
    %4900 = vmatpush.msra.mxu0 %v4897
    %4901 = vmatpush.msra.mxu0 %v4896
    %4902 = vmatpush.msra.mxu0 %v4895
    %4903 = vmatpush.msra.mxu0 %v4894
    %4904 = vmatpush.msra.mxu0 %v4893
    %4905 = vmatpush.msra.mxu0 %v4892
    %4906 = vmatpush.msra.mxu0 %v4891
    %4907 = vmatpush.msra.mxu0 %v4890
    %4908 = vmatpush.msra.mxu0 %v4889
    %4909 = vmatpush.msra.mxu0 %v4888
    %4910 = vmatpush.msra.mxu0 %v4887
    %4911 = vmatpush.msra.mxu0 %v4886
    %4912 = vmatpush.msra.mxu0 %v4885
    %4913 = vmatpush.msra.mxu0 %v4884
    %4914 = vmatpush.msra.mxu0 %v4883
    %4915 = vmatmul.f32.gmra.mxu0 %v4882
    %v4916 = vpop.f32.mrf.mxu0
    %v4917 = vadd.f32 0.0, %v4916
    %4918 = vdwg.mxu0
    %4919 = vst [vmem:[#allocation4] sm:$0xff] %v4917
    %v4920 = vld [vmem:[#allocation4] sm:$0xff]
    %v4921 = vld [vmem:[#allocation4 + $0x8] sm:$0xff]
    %v4922 = vld [vmem:[%s7] sm:$0xff]
    %v4923 = vld [vmem:[%s7 + $0x8] sm:$0xff]
    %v4924 = vld [vmem:[%s7 + $0x10] sm:$0xff]
    %v4925 = vld [vmem:[%s7 + $0x18] sm:$0xff]
    %v4926 = vld [vmem:[%s7 + $0x20] sm:$0xff]
    %v4927 = vld [vmem:[%s7 + $0x28] sm:$0xff]
    %v4928 = vld [vmem:[%s7 + $0x30] sm:$0xff]
    %v4929 = vld [vmem:[%s7 + $0x38] sm:$0xff]
    %v4930 = vld [vmem:[%s7 + $0x40] sm:$0xff]
    %v4931 = vld [vmem:[%s7 + $0x48] sm:$0xff]
    %v4932 = vld [vmem:[%s7 + $0x50] sm:$0xff]
    %v4933 = vld [vmem:[%s7 + $0x58] sm:$0xff]
    %v4934 = vld [vmem:[%s7 + $0x60] sm:$0xff]
    %v4935 = vld [vmem:[%s7 + $0x68] sm:$0xff]
    %v4936 = vld [vmem:[%s7 + $0x70] sm:$0xff]
    %v4937 = vld [vmem:[%s7 + $0x78] sm:$0xff]
    %v4938 = vld [vmem:[%s7 + $0x80] sm:$0xff]
    %v4939 = vld [vmem:[%s7 + $0x88] sm:$0xff]
    %v4940 = vld [vmem:[%s7 + $0x90] sm:$0xff]
    %v4941 = vld [vmem:[%s7 + $0x98] sm:$0xff]
    %v4942 = vld [vmem:[%s7 + $0xa0] sm:$0xff]
    %v4943 = vld [vmem:[%s7 + $0xa8] sm:$0xff]
    %v4944 = vld [vmem:[%s7 + $0xb0] sm:$0xff]
    %v4945 = vld [vmem:[%s7 + $0xb8] sm:$0xff]
    %v4946 = vld [vmem:[%s7 + $0xc0] sm:$0xff]
    %v4947 = vld [vmem:[%s7 + $0xc8] sm:$0xff]
    %v4948 = vld [vmem:[%s7 + $0xd0] sm:$0xff]
    %v4949 = vld [vmem:[%s7 + $0xd8] sm:$0xff]
    %v4950 = vld [vmem:[%s7 + $0xe0] sm:$0xff]
    %v4951 = vld [vmem:[%s7 + $0xe8] sm:$0xff]
    %v4952 = vld [vmem:[%s7 + $0xf0] sm:$0xff]
    %v4953 = vld [vmem:[%s7 + $0xf8] sm:$0xff]
    %v4954 = vld [vmem:[%s7 + $0x100] sm:$0xff]
    %v4955 = vld [vmem:[%s7 + $0x108] sm:$0xff]
    %v4956 = vld [vmem:[%s7 + $0x110] sm:$0xff]
    %v4957 = vld [vmem:[%s7 + $0x118] sm:$0xff]
    %v4958 = vld [vmem:[%s7 + $0x120] sm:$0xff]
    %v4959 = vld [vmem:[%s7 + $0x128] sm:$0xff]
    %v4960 = vld [vmem:[%s7 + $0x130] sm:$0xff]
    %v4961 = vld [vmem:[%s7 + $0x138] sm:$0xff]
    %v4962 = vld [vmem:[%s7 + $0x140] sm:$0xff]
    %v4963 = vld [vmem:[%s7 + $0x148] sm:$0xff]
    %v4964 = vld [vmem:[%s7 + $0x150] sm:$0xff]
    %v4965 = vld [vmem:[%s7 + $0x158] sm:$0xff]
    %v4966 = vld [vmem:[%s7 + $0x160] sm:$0xff]
    %v4967 = vld [vmem:[%s7 + $0x168] sm:$0xff]
    %v4968 = vld [vmem:[%s7 + $0x170] sm:$0xff]
    %v4969 = vld [vmem:[%s7 + $0x178] sm:$0xff]
    %v4970 = vld [vmem:[%s7 + $0x180] sm:$0xff]
    %v4971 = vld [vmem:[%s7 + $0x188] sm:$0xff]
    %v4972 = vld [vmem:[%s7 + $0x190] sm:$0xff]
    %v4973 = vld [vmem:[%s7 + $0x198] sm:$0xff]
    %v4974 = vld [vmem:[%s7 + $0x1a0] sm:$0xff]
    %v4975 = vld [vmem:[%s7 + $0x1a8] sm:$0xff]
    %v4976 = vld [vmem:[%s7 + $0x1b0] sm:$0xff]
    %v4977 = vld [vmem:[%s7 + $0x1b8] sm:$0xff]
    %v4978 = vld [vmem:[%s7 + $0x1c0] sm:$0xff]
    %v4979 = vld [vmem:[%s7 + $0x1c8] sm:$0xff]
    %v4980 = vld [vmem:[%s7 + $0x1d0] sm:$0xff]
    %v4981 = vld [vmem:[%s7 + $0x1d8] sm:$0xff]
    %v4982 = vld [vmem:[%s7 + $0x1e0] sm:$0xff]
    %v4983 = vld [vmem:[%s7 + $0x1e8] sm:$0xff]
    %v4984 = vld [vmem:[%s7 + $0x1f0] sm:$0xff]
    %v4985 = vld [vmem:[%s7 + $0x1f8] sm:$0xff]
    %v4986 = vld [vmem:[%s7 + $0x200] sm:$0xff]
    %v4987 = vld [vmem:[%s7 + $0x208] sm:$0xff]
    %v4988 = vld [vmem:[%s7 + $0x210] sm:$0xff]
    %v4989 = vld [vmem:[%s7 + $0x218] sm:$0xff]
    %v4990 = vld [vmem:[%s7 + $0x220] sm:$0xff]
    %v4991 = vld [vmem:[%s7 + $0x228] sm:$0xff]
    %v4992 = vld [vmem:[%s7 + $0x230] sm:$0xff]
    %v4993 = vld [vmem:[%s7 + $0x238] sm:$0xff]
    %v4994 = vld [vmem:[%s7 + $0x240] sm:$0xff]
    %v4995 = vld [vmem:[%s7 + $0x248] sm:$0xff]
    %v4996 = vld [vmem:[%s7 + $0x250] sm:$0xff]
    %v4997 = vld [vmem:[%s7 + $0x258] sm:$0xff]
    %v4998 = vld [vmem:[%s7 + $0x260] sm:$0xff]
    %v4999 = vld [vmem:[%s7 + $0x268] sm:$0xff]
    %v5000 = vld [vmem:[%s7 + $0x270] sm:$0xff]
    %v5001 = vld [vmem:[%s7 + $0x278] sm:$0xff]
    %v5002 = vld [vmem:[%s7 + $0x280] sm:$0xff]
    %v5003 = vld [vmem:[%s7 + $0x288] sm:$0xff]
    %v5004 = vld [vmem:[%s7 + $0x290] sm:$0xff]
    %v5005 = vld [vmem:[%s7 + $0x298] sm:$0xff]
    %v5006 = vld [vmem:[%s7 + $0x2a0] sm:$0xff]
    %v5007 = vld [vmem:[%s7 + $0x2a8] sm:$0xff]
    %v5008 = vld [vmem:[%s7 + $0x2b0] sm:$0xff]
    %v5009 = vld [vmem:[%s7 + $0x2b8] sm:$0xff]
    %v5010 = vld [vmem:[%s7 + $0x2c0] sm:$0xff]
    %v5011 = vld [vmem:[%s7 + $0x2c8] sm:$0xff]
    %v5012 = vld [vmem:[%s7 + $0x2d0] sm:$0xff]
    %v5013 = vld [vmem:[%s7 + $0x2d8] sm:$0xff]
    %v5014 = vld [vmem:[%s7 + $0x2e0] sm:$0xff]
    %v5015 = vld [vmem:[%s7 + $0x2e8] sm:$0xff]
    %v5016 = vld [vmem:[%s7 + $0x2f0] sm:$0xff]
    %v5017 = vld [vmem:[%s7 + $0x2f8] sm:$0xff]
    %v5018 = vld [vmem:[%s7 + $0x300] sm:$0xff]
    %v5019 = vld [vmem:[%s7 + $0x308] sm:$0xff]
    %v5020 = vld [vmem:[%s7 + $0x310] sm:$0xff]
    %v5021 = vld [vmem:[%s7 + $0x318] sm:$0xff]
    %v5022 = vld [vmem:[%s7 + $0x320] sm:$0xff]
    %v5023 = vld [vmem:[%s7 + $0x328] sm:$0xff]
    %v5024 = vld [vmem:[%s7 + $0x330] sm:$0xff]
    %v5025 = vld [vmem:[%s7 + $0x338] sm:$0xff]
    %v5026 = vld [vmem:[%s7 + $0x340] sm:$0xff]
    %v5027 = vld [vmem:[%s7 + $0x348] sm:$0xff]
    %v5028 = vld [vmem:[%s7 + $0x350] sm:$0xff]
    %v5029 = vld [vmem:[%s7 + $0x358] sm:$0xff]
    %v5030 = vld [vmem:[%s7 + $0x360] sm:$0xff]
    %v5031 = vld [vmem:[%s7 + $0x368] sm:$0xff]
    %v5032 = vld [vmem:[%s7 + $0x370] sm:$0xff]
    %v5033 = vld [vmem:[%s7 + $0x378] sm:$0xff]
    %v5034 = vld [vmem:[%s7 + $0x380] sm:$0xff]
    %v5035 = vld [vmem:[%s7 + $0x388] sm:$0xff]
    %v5036 = vld [vmem:[%s7 + $0x390] sm:$0xff]
    %v5037 = vld [vmem:[%s7 + $0x398] sm:$0xff]
    %v5038 = vld [vmem:[%s7 + $0x3a0] sm:$0xff]
    %v5039 = vld [vmem:[%s7 + $0x3a8] sm:$0xff]
    %v5040 = vld [vmem:[%s7 + $0x3b0] sm:$0xff]
    %v5041 = vld [vmem:[%s7 + $0x3b8] sm:$0xff]
    %v5042 = vld [vmem:[%s7 + $0x3c0] sm:$0xff]
    %v5043 = vld [vmem:[%s7 + $0x3c8] sm:$0xff]
    %v5044 = vld [vmem:[%s7 + $0x3d0] sm:$0xff]
    %v5045 = vld [vmem:[%s7 + $0x3d8] sm:$0xff]
    %v5046 = vld [vmem:[%s7 + $0x3e0] sm:$0xff]
    %v5047 = vld [vmem:[%s7 + $0x3e8] sm:$0xff]
    %v5048 = vld [vmem:[%s7 + $0x3f0] sm:$0xff]
    %v5049 = vld [vmem:[%s7 + $0x3f8] sm:$0xff]
    %v5050 = vld [vmem:[%s8] sm:$0xf]
    %v5052 = vperm.slane %v5050, 0
    %v5053 = vperm.slane %v5050, 1
    %v5054 = vperm.slane %v5050, 2
    %v5055 = vperm.slane %v5050, 3
    %5060 = vmatpush.msra.mxu0 %v4982
    %5061 = vmatpush.msra.mxu0 %v4978
    %5062 = vmatpush.msra.mxu0 %v4974
    %5063 = vmatpush.msra.mxu0 %v4970
    %5064 = vmatpush.msra.mxu0 %v4966
    %5065 = vmatpush.msra.mxu0 %v4962
    %5066 = vmatpush.msra.mxu0 %v4958
    %5067 = vmatpush.msra.mxu0 %v4954
    %5068 = vmatpush.msra.mxu0 %v4950
    %5069 = vmatpush.msra.mxu0 %v4946
    %5070 = vmatpush.msra.mxu0 %v4942
    %5071 = vmatpush.msra.mxu0 %v4938
    %5072 = vmatpush.msra.mxu0 %v4934
    %5073 = vmatpush.msra.mxu0 %v4930
    %5074 = vmatpush.msra.mxu0 %v4926
    %5075 = vmatpush.msra.mxu0 %v4922
    %5076 = vmatmul.f32.gmra.mxu0 %v4920
    %v5077 = vpop.f32.mrf.mxu0
    %v5078 = vadd.f32 %v5052, %v5077
    %5079 = vdwg.mxu0
    %5080 = vmatpush.msra.mxu0 %v5046
    %5081 = vmatpush.msra.mxu0 %v5042
    %5082 = vmatpush.msra.mxu0 %v5038
    %5083 = vmatpush.msra.mxu0 %v5034
    %5084 = vmatpush.msra.mxu0 %v5030
    %5085 = vmatpush.msra.mxu0 %v5026
    %5086 = vmatpush.msra.mxu0 %v5022
    %5087 = vmatpush.msra.mxu0 %v5018
    %5088 = vmatpush.msra.mxu0 %v5014
    %5089 = vmatpush.msra.mxu0 %v5010
    %5090 = vmatpush.msra.mxu0 %v5006
    %5091 = vmatpush.msra.mxu0 %v5002
    %5092 = vmatpush.msra.mxu0 %v4998
    %5093 = vmatpush.msra.mxu0 %v4994
    %5094 = vmatpush.msra.mxu0 %v4990
    %5095 = vmatpush.msra.mxu0 %v4986
    %5096 = vmatmul.f32.gmra.mxu0 %v4921
    %v5097 = vpop.f32.mrf.mxu0
    %v5098 = vadd.f32 %v5078, %v5097
    %5099 = vdwg.mxu0
    %5100 = vmatpush.msra.mxu0 %v4983
    %5101 = vmatpush.msra.mxu0 %v4979
    %5102 = vmatpush.msra.mxu0 %v4975
    %5103 = vmatpush.msra.mxu0 %v4971
    %5104 = vmatpush.msra.mxu0 %v4967
    %5105 = vmatpush.msra.mxu0 %v4963
    %5106 = vmatpush.msra.mxu0 %v4959
    %5107 = vmatpush.msra.mxu0 %v4955
    %5108 = vmatpush.msra.mxu0 %v4951
    %5109 = vmatpush.msra.mxu0 %v4947
    %5110 = vmatpush.msra.mxu0 %v4943
    %5111 = vmatpush.msra.mxu0 %v4939
    %5112 = vmatpush.msra.mxu0 %v4935
    %5113 = vmatpush.msra.mxu0 %v4931
    %5114 = vmatpush.msra.mxu0 %v4927
    %5115 = vmatpush.msra.mxu0 %v4923
    %5116 = vmatmul.f32.gmra.mxu0 %v4920
    %v5117 = vpop.f32.mrf.mxu0
    %v5118 = vadd.f32 %v5053, %v5117
    %5119 = vdwg.mxu0
    %5120 = vmatpush.msra.mxu0 %v5047
    %5121 = vmatpush.msra.mxu0 %v5043
    %5122 = vmatpush.msra.mxu0 %v5039
    %5123 = vmatpush.msra.mxu0 %v5035
    %5124 = vmatpush.msra.mxu0 %v5031
    %5125 = vmatpush.msra.mxu0 %v5027
    %5126 = vmatpush.msra.mxu0 %v5023
    %5127 = vmatpush.msra.mxu0 %v5019
    %5128 = vmatpush.msra.mxu0 %v5015
    %5129 = vmatpush.msra.mxu0 %v5011
    %5130 = vmatpush.msra.mxu0 %v5007
    %5131 = vmatpush.msra.mxu0 %v5003
    %5132 = vmatpush.msra.mxu0 %v4999
    %5133 = vmatpush.msra.mxu0 %v4995
    %5134 = vmatpush.msra.mxu0 %v4991
    %5135 = vmatpush.msra.mxu0 %v4987
    %5136 = vmatmul.f32.gmra.mxu0 %v4921
    %v5137 = vpop.f32.mrf.mxu0
    %v5138 = vadd.f32 %v5118, %v5137
    %5139 = vdwg.mxu0
    %5140 = vmatpush.msra.mxu0 %v4984
    %5141 = vmatpush.msra.mxu0 %v4980
    %5142 = vmatpush.msra.mxu0 %v4976
    %5143 = vmatpush.msra.mxu0 %v4972
    %5144 = vmatpush.msra.mxu0 %v4968
    %5145 = vmatpush.msra.mxu0 %v4964
    %5146 = vmatpush.msra.mxu0 %v4960
    %5147 = vmatpush.msra.mxu0 %v4956
    %5148 = vmatpush.msra.mxu0 %v4952
    %5149 = vmatpush.msra.mxu0 %v4948
    %5150 = vmatpush.msra.mxu0 %v4944
    %5151 = vmatpush.msra.mxu0 %v4940
    %5152 = vmatpush.msra.mxu0 %v4936
    %5153 = vmatpush.msra.mxu0 %v4932
    %5154 = vmatpush.msra.mxu0 %v4928
    %5155 = vmatpush.msra.mxu0 %v4924
    %5156 = vmatmul.f32.gmra.mxu0 %v4920
    %v5157 = vpop.f32.mrf.mxu0
    %v5158 = vadd.f32 %v5054, %v5157
    %5159 = vdwg.mxu0
    %5160 = vmatpush.msra.mxu0 %v5048
    %5161 = vmatpush.msra.mxu0 %v5044
    %5162 = vmatpush.msra.mxu0 %v5040
    %5163 = vmatpush.msra.mxu0 %v5036
    %5164 = vmatpush.msra.mxu0 %v5032
    %5165 = vmatpush.msra.mxu0 %v5028
    %5166 = vmatpush.msra.mxu0 %v5024
    %5167 = vmatpush.msra.mxu0 %v5020
    %5168 = vmatpush.msra.mxu0 %v5016
    %5169 = vmatpush.msra.mxu0 %v5012
    %5170 = vmatpush.msra.mxu0 %v5008
    %5171 = vmatpush.msra.mxu0 %v5004
    %5172 = vmatpush.msra.mxu0 %v5000
    %5173 = vmatpush.msra.mxu0 %v4996
    %5174 = vmatpush.msra.mxu0 %v4992
    %5175 = vmatpush.msra.mxu0 %v4988
    %5176 = vmatmul.f32.gmra.mxu0 %v4921
    %v5177 = vpop.f32.mrf.mxu0
    %v5178 = vadd.f32 %v5158, %v5177
    %5179 = vdwg.mxu0
    %5180 = vmatpush.msra.mxu0 %v4985
    %5181 = vmatpush.msra.mxu0 %v4981
    %5182 = vmatpush.msra.mxu0 %v4977
    %5183 = vmatpush.msra.mxu0 %v4973
    %5184 = vmatpush.msra.mxu0 %v4969
    %5185 = vmatpush.msra.mxu0 %v4965
    %5186 = vmatpush.msra.mxu0 %v4961
    %5187 = vmatpush.msra.mxu0 %v4957
    %5188 = vmatpush.msra.mxu0 %v4953
    %5189 = vmatpush.msra.mxu0 %v4949
    %5190 = vmatpush.msra.mxu0 %v4945
    %5191 = vmatpush.msra.mxu0 %v4941
    %5192 = vmatpush.msra.mxu0 %v4937
    %5193 = vmatpush.msra.mxu0 %v4933
    %5194 = vmatpush.msra.mxu0 %v4929
    %5195 = vmatpush.msra.mxu0 %v4925
    %5196 = vmatmul.f32.gmra.mxu0 %v4920
    %v5197 = vpop.f32.mrf.mxu0
    %v5198 = vadd.f32 %v5055, %v5197
    %5199 = vdwg.mxu0
    %5200 = vmatpush.msra.mxu0 %v5049
    %5201 = vmatpush.msra.mxu0 %v5045
    %5202 = vmatpush.msra.mxu0 %v5041
    %5203 = vmatpush.msra.mxu0 %v5037
    %5204 = vmatpush.msra.mxu0 %v5033
    %5205 = vmatpush.msra.mxu0 %v5029
    %5206 = vmatpush.msra.mxu0 %v5025
    %5207 = vmatpush.msra.mxu0 %v5021
    %5208 = vmatpush.msra.mxu0 %v5017
    %5209 = vmatpush.msra.mxu0 %v5013
    %5210 = vmatpush.msra.mxu0 %v5009
    %5211 = vmatpush.msra.mxu0 %v5005
    %5212 = vmatpush.msra.mxu0 %v5001
    %5213 = vmatpush.msra.mxu0 %v4997
    %5214 = vmatpush.msra.mxu0 %v4993
    %5215 = vmatpush.msra.mxu0 %v4989
    %5216 = vmatmul.f32.gmra.mxu0 %v4921
    %v5217 = vpop.f32.mrf.mxu0
    %v5218 = vadd.f32 %v5198, %v5217
    %5219 = vdwg.mxu0
    %v5220 = vxor.u32 %v5098, 2147483648
    %v5221 = vxor.u32 %v5138, 2147483648
    %v5222 = vxor.u32 %v5178, 2147483648
    %v5223 = vmul.f32 %v5220, 1.442695
    %v5224 = vpow.pop %v5223
    %v5225 = vmul.f32 %v5221, 1.442695
    %v5226 = vpow.pop %v5225
    %v5227 = vmul.f32 %v5222, 1.442695
    %v5228 = vpow.pop %v5227
    %v5229 = vadd.f32 %v5224, 1.0
    %v5230 = vadd.f32 %v5226, 1.0
    %v5231 = vadd.f32 %v5228, 1.0
    %v5232 = vrcp.pop %v5229
    %v5233 = vmul.f32 %v5229, %v5232
    %v5234 = vsub.f32 1.0, %v5233
    %v5235 = vmul.f32 %v5232, %v5234
    %v5236 = vadd.f32 %v5232, %v5235
    %vm5237 = vweird.f32 %v5229
    %vm5238 = vweird.f32 %v5232
    %vm5239 = vmor %vm5237, %vm5238
    %v5240 = vsel %vm5239, %v5232, %v5236
    %v5241 = vand.u32 2147483647, %v5229
    %vm5242 = vcmp.eq.f32.partialorder %v5241, 8.507059e+37
    %v5243 = vand.u32 %v5229, 2147483648
    %v5244 = vor.u32 1.1754944e-38, %v5243
    %v5245 = vsel %vm5242, %v5244, %v5240
    %v5246 = vmul.f32 1.0, %v5245
    %v5247 = vrcp.pop %v5230
    %v5248 = vmul.f32 %v5230, %v5247
    %v5249 = vsub.f32 1.0, %v5248
    %v5250 = vmul.f32 %v5247, %v5249
    %v5251 = vadd.f32 %v5247, %v5250
    %vm5252 = vweird.f32 %v5230
    %vm5253 = vweird.f32 %v5247
    %vm5254 = vmor %vm5252, %vm5253
    %v5255 = vsel %vm5254, %v5247, %v5251
    %v5256 = vand.u32 2147483647, %v5230
    %vm5257 = vcmp.eq.f32.partialorder %v5256, 8.507059e+37
    %v5258 = vand.u32 %v5230, 2147483648
    %v5259 = vor.u32 1.1754944e-38, %v5258
    %v5260 = vsel %vm5257, %v5259, %v5255
    %v5261 = vmul.f32 1.0, %v5260
    %v5262 = vrcp.pop %v5231
    %v5263 = vmul.f32 %v5231, %v5262
    %v5264 = vsub.f32 1.0, %v5263
    %v5265 = vmul.f32 %v5262, %v5264
    %v5266 = vadd.f32 %v5262, %v5265
    %vm5267 = vweird.f32 %v5231
    %vm5268 = vweird.f32 %v5262
    %vm5269 = vmor %vm5267, %vm5268
    %v5270 = vsel %vm5269, %v5262, %v5266
    %v5271 = vand.u32 2147483647, %v5231
    %vm5272 = vcmp.eq.f32.partialorder %v5271, 8.507059e+37
    %v5273 = vand.u32 %v5231, 2147483648
    %v5274 = vor.u32 1.1754944e-38, %v5273
    %v5275 = vsel %vm5272, %v5274, %v5270
    %v5276 = vmul.f32 1.0, %v5275
    %v5277 = vtanh.pop %v5218
    %v5278 = vld [vmem:[#allocation3] sm:$0xff]
    %v5279 = vmul.f32 %v5261, %v5278
    %v5280 = vmul.f32 %v5246, %v5277
    %v5281 = vadd.f32 %v5279, %v5280
    %v5282 = vtanh.pop %v5281
    %v5283 = vmul.f32 %v5276, %v5282
    %5284 = vst [vmem:[#allocation3] sm:$0xff] %v5281
    %5285 = vst [vmem:[#allocation2] sm:$0xff] %v5283
    %5286 = vst [vmem:[#allocation4 + $0x8] sm:$0xff] %v5283
    %v5287 = vld [vmem:[%s9] sm:$0xff]
    %v5288 = vld [vmem:[%s9 + $0x8] sm:$0xff]
    %v5289 = vld [vmem:[%s9 + $0x10] sm:$0xff]
    %v5290 = vld [vmem:[%s9 + $0x18] sm:$0xff]
    %v5291 = vld [vmem:[%s9 + $0x20] sm:$0xff]
    %v5292 = vld [vmem:[%s9 + $0x28] sm:$0xff]
    %v5293 = vld [vmem:[%s9 + $0x30] sm:$0xff]
    %v5294 = vld [vmem:[%s9 + $0x38] sm:$0xff]
    %v5295 = vld [vmem:[%s9 + $0x40] sm:$0xff]
    %v5296 = vld [vmem:[%s9 + $0x48] sm:$0xff]
    %v5297 = vld [vmem:[%s9 + $0x50] sm:$0xff]
    %v5298 = vld [vmem:[%s9 + $0x58] sm:$0xff]
    %v5299 = vld [vmem:[%s9 + $0x60] sm:$0xff]
    %v5300 = vld [vmem:[%s9 + $0x68] sm:$0xff]
    %v5301 = vld [vmem:[%s9 + $0x70] sm:$0xff]
    %v5302 = vld [vmem:[%s9 + $0x78] sm:$0xff]
    %v5303 = vld [vmem:[%s10] sm:$0x1]
    %v5305 = vperm.slane %v5303, 0
    %5307 = vmatpush.msra.mxu0 %v5302
    %5308 = vmatpush.msra.mxu0 %v5301
    %5309 = vmatpush.msra.mxu0 %v5300
    %5310 = vmatpush.msra.mxu0 %v5299
    %5311 = vmatpush.msra.mxu0 %v5298
    %5312 = vmatpush.msra.mxu0 %v5297
    %5313 = vmatpush.msra.mxu0 %v5296
    %5314 = vmatpush.msra.mxu0 %v5295
    %5315 = vmatpush.msra.mxu0 %v5294
    %5316 = vmatpush.msra.mxu0 %v5293
    %5317 = vmatpush.msra.mxu0 %v5292
    %5318 = vmatpush.msra.mxu0 %v5291
    %5319 = vmatpush.msra.mxu0 %v5290
    %5320 = vmatpush.msra.mxu0 %v5289
    %5321 = vmatpush.msra.mxu0 %v5288
    %5322 = vmatpush.msra.mxu0 %v5287
    %5323 = vmatmul.f32.gmra.mxu0 %v5283
    %v5324 = vpop.f32.mrf.mxu0
    %v5325 = vadd.f32 %v5305, %v5324
    %5326 = vdwg.mxu0
    %s5327 = scalar_lea.vmem %s11, 24
    %5328 = vst [vmem:[%s5327] sm:$0xff] %v5325
    %s5329 = sld [smem:[#allocation10 + $0x3]]
    %p5330 = scmp.gt.s32.totalorder %s5329, 0
    // Predicated region
    $region82: #{_seq2seq_core.1} parent=1 // pred_check
      %p5331 = pneg %p5330
    $region83: #{_seq2seq_core.1} parent=1 // pred_check_branch
      %5333 = sbr.rel (%p5331) target = $region85
    $region84: #{_seq2seq_core.1} parent=1 // pred_region
      %s5334 = sld [smem:[#allocation8 + $0x4]]
      %v5335 = vstv %s5334
      %vm5336 = vcmp.eq.s32.totalorder %v75, %v5335
      %vm5337 = vmand %vm83, %vm5336
      %v5338 = vsel %vm5337, 1.0, 0.0
      %s5339 = sld [smem:[#allocation8 + $0x84]]
      %v5340 = vstv %s5339
      %vm5341 = vcmp.eq.s32.totalorder %v75, %v5340
      %vm5342 = vmand %vm89, %vm5341
      %v5343 = vsel %vm5342, 1.0, %v5338
      %5344 = vst [vmem:[#allocation5] sm:$0xff] %v5343
    $region85: #{_seq2seq_core.1} parent=1 // pred_fallthru
      _
    %s5345 = sld [smem:[#allocation10 + $0x3]]
    %p5346 = scmp.eq.s32.totalorder %s5345, 0
    // Predicated region
    $region86: #{_seq2seq_core.1} parent=1 // pred_check
      %p5347 = pneg %p5346
    $region87: #{_seq2seq_core.1} parent=1 // pred_check_branch
      %5349 = sbr.rel (%p5347) target = $region89
    $region88: #{_seq2seq_core.1} parent=1 // pred_region
      %vm5350 = vcmp.lt.s32.totalorder %v75, 16
      %v5351 = vsel %vm5350, %v5325, -1e+30
      %5352 = vmax.xlane.f32.xlu0 %v5351
      %v5353 = vpop.xlane.xlu0 %5352
      %vm5354 = vcmp.eq.f32.partialorder %v5351, %v5353
      %v5355 = vsel %vm5354, %v75, 128
      %v5356 = vand.u32 %v5355, 65535
      %v5357 = vshra.s32 %v5355, 16
      %v5358 = vcvt.s32.f32 %v5356
      %v5359 = vcvt.s32.f32 %v5357
      %5360 = vmin.xlane.f32.xlu0 %v5359
      %v5361 = vpop.xlane.xlu0 %5360
      %vm5362 = vcmp.eq.f32.partialorder %v5359, %v5361
      %v5363 = vsel %vm5362, %v5358, inf
      %5364 = vmin.xlane.f32.xlu0 %v5363
      %v5365 = vpop.xlane.xlu0 %5364
      %v5366 = vcvt.f32.s32 %v5365
      %v5367 = vcvt.f32.s32 %v5361
      %v5368 = vshll.u32 %v5367, 16
      %v5369 = vadd.s32 %v5368, %v5366
      %vm5370 = vcmp.eq.s32.totalorder %v75, %v5369
      %v5371 = vsel %vm5370, 1, 0
      %v5372 = vcvt.s32.f32 %v5371
      %5373 = vst [vmem:[#allocation5] sm:$0xff] %v5372
    $region89: #{_seq2seq_core.1} parent=1 // pred_fallthru
      _
    %v5374 = vld [vmem:[#allocation5] sm:$0xff]
    %v5375 = vld [vmem:[%s6] sm:$0xff]
    %v5376 = vld [vmem:[%s6 + $0x8] sm:$0xff]
    %v5377 = vld [vmem:[%s6 + $0x10] sm:$0xff]
    %v5378 = vld [vmem:[%s6 + $0x18] sm:$0xff]
    %v5379 = vld [vmem:[%s6 + $0x20] sm:$0xff]
    %v5380 = vld [vmem:[%s6 + $0x28] sm:$0xff]
    %v5381 = vld [vmem:[%s6 + $0x30] sm:$0xff]
    %v5382 = vld [vmem:[%s6 + $0x38] sm:$0xff]
    %v5383 = vld [vmem:[%s6 + $0x40] sm:$0xff]
    %v5384 = vld [vmem:[%s6 + $0x48] sm:$0xff]
    %v5385 = vld [vmem:[%s6 + $0x50] sm:$0xff]
    %v5386 = vld [vmem:[%s6 + $0x58] sm:$0xff]
    %v5387 = vld [vmem:[%s6 + $0x60] sm:$0xff]
    %v5388 = vld [vmem:[%s6 + $0x68] sm:$0xff]
    %v5389 = vld [vmem:[%s6 + $0x70] sm:$0xff]
    %v5390 = vld [vmem:[%s6 + $0x78] sm:$0xff]
    %5391 = vmatpush.msra.mxu0 %v5390
    %5392 = vmatpush.msra.mxu0 %v5389
    %5393 = vmatpush.msra.mxu0 %v5388
    %5394 = vmatpush.msra.mxu0 %v5387
    %5395 = vmatpush.msra.mxu0 %v5386
    %5396 = vmatpush.msra.mxu0 %v5385
    %5397 = vmatpush.msra.mxu0 %v5384
    %5398 = vmatpush.msra.mxu0 %v5383
    %5399 = vmatpush.msra.mxu0 %v5382
    %5400 = vmatpush.msra.mxu0 %v5381
    %5401 = vmatpush.msra.mxu0 %v5380
    %5402 = vmatpush.msra.mxu0 %v5379
    %5403 = vmatpush.msra.mxu0 %v5378
    %5404 = vmatpush.msra.mxu0 %v5377
    %5405 = vmatpush.msra.mxu0 %v5376
    %5406 = vmatpush.msra.mxu0 %v5375
    %5407 = vmatmul.f32.gmra.mxu0 %v5374
    %v5408 = vpop.f32.mrf.mxu0
    %v5409 = vadd.f32 0.0, %v5408
    %5410 = vdwg.mxu0
    %5411 = vst [vmem:[#allocation4] sm:$0xff] %v5409
    %v5412 = vld [vmem:[#allocation4] sm:$0xff]
    %v5413 = vld [vmem:[#allocation4 + $0x8] sm:$0xff]
    %v5414 = vld [vmem:[%s7] sm:$0xff]
    %v5415 = vld [vmem:[%s7 + $0x8] sm:$0xff]
    %v5416 = vld [vmem:[%s7 + $0x10] sm:$0xff]
    %v5417 = vld [vmem:[%s7 + $0x18] sm:$0xff]
    %v5418 = vld [vmem:[%s7 + $0x20] sm:$0xff]
    %v5419 = vld [vmem:[%s7 + $0x28] sm:$0xff]
    %v5420 = vld [vmem:[%s7 + $0x30] sm:$0xff]
    %v5421 = vld [vmem:[%s7 + $0x38] sm:$0xff]
    %v5422 = vld [vmem:[%s7 + $0x40] sm:$0xff]
    %v5423 = vld [vmem:[%s7 + $0x48] sm:$0xff]
    %v5424 = vld [vmem:[%s7 + $0x50] sm:$0xff]
    %v5425 = vld [vmem:[%s7 + $0x58] sm:$0xff]
    %v5426 = vld [vmem:[%s7 + $0x60] sm:$0xff]
    %v5427 = vld [vmem:[%s7 + $0x68] sm:$0xff]
    %v5428 = vld [vmem:[%s7 + $0x70] sm:$0xff]
    %v5429 = vld [vmem:[%s7 + $0x78] sm:$0xff]
    %v5430 = vld [vmem:[%s7 + $0x80] sm:$0xff]
    %v5431 = vld [vmem:[%s7 + $0x88] sm:$0xff]
    %v5432 = vld [vmem:[%s7 + $0x90] sm:$0xff]
    %v5433 = vld [vmem:[%s7 + $0x98] sm:$0xff]
    %v5434 = vld [vmem:[%s7 + $0xa0] sm:$0xff]
    %v5435 = vld [vmem:[%s7 + $0xa8] sm:$0xff]
    %v5436 = vld [vmem:[%s7 + $0xb0] sm:$0xff]
    %v5437 = vld [vmem:[%s7 + $0xb8] sm:$0xff]
    %v5438 = vld [vmem:[%s7 + $0xc0] sm:$0xff]
    %v5439 = vld [vmem:[%s7 + $0xc8] sm:$0xff]
    %v5440 = vld [vmem:[%s7 + $0xd0] sm:$0xff]
    %v5441 = vld [vmem:[%s7 + $0xd8] sm:$0xff]
    %v5442 = vld [vmem:[%s7 + $0xe0] sm:$0xff]
    %v5443 = vld [vmem:[%s7 + $0xe8] sm:$0xff]
    %v5444 = vld [vmem:[%s7 + $0xf0] sm:$0xff]
    %v5445 = vld [vmem:[%s7 + $0xf8] sm:$0xff]
    %v5446 = vld [vmem:[%s7 + $0x100] sm:$0xff]
    %v5447 = vld [vmem:[%s7 + $0x108] sm:$0xff]
    %v5448 = vld [vmem:[%s7 + $0x110] sm:$0xff]
    %v5449 = vld [vmem:[%s7 + $0x118] sm:$0xff]
    %v5450 = vld [vmem:[%s7 + $0x120] sm:$0xff]
    %v5451 = vld [vmem:[%s7 + $0x128] sm:$0xff]
    %v5452 = vld [vmem:[%s7 + $0x130] sm:$0xff]
    %v5453 = vld [vmem:[%s7 + $0x138] sm:$0xff]
    %v5454 = vld [vmem:[%s7 + $0x140] sm:$0xff]
    %v5455 = vld [vmem:[%s7 + $0x148] sm:$0xff]
    %v5456 = vld [vmem:[%s7 + $0x150] sm:$0xff]
    %v5457 = vld [vmem:[%s7 + $0x158] sm:$0xff]
    %v5458 = vld [vmem:[%s7 + $0x160] sm:$0xff]
    %v5459 = vld [vmem:[%s7 + $0x168] sm:$0xff]
    %v5460 = vld [vmem:[%s7 + $0x170] sm:$0xff]
    %v5461 = vld [vmem:[%s7 + $0x178] sm:$0xff]
    %v5462 = vld [vmem:[%s7 + $0x180] sm:$0xff]
    %v5463 = vld [vmem:[%s7 + $0x188] sm:$0xff]
    %v5464 = vld [vmem:[%s7 + $0x190] sm:$0xff]
    %v5465 = vld [vmem:[%s7 + $0x198] sm:$0xff]
    %v5466 = vld [vmem:[%s7 + $0x1a0] sm:$0xff]
    %v5467 = vld [vmem:[%s7 + $0x1a8] sm:$0xff]
    %v5468 = vld [vmem:[%s7 + $0x1b0] sm:$0xff]
    %v5469 = vld [vmem:[%s7 + $0x1b8] sm:$0xff]
    %v5470 = vld [vmem:[%s7 + $0x1c0] sm:$0xff]
    %v5471 = vld [vmem:[%s7 + $0x1c8] sm:$0xff]
    %v5472 = vld [vmem:[%s7 + $0x1d0] sm:$0xff]
    %v5473 = vld [vmem:[%s7 + $0x1d8] sm:$0xff]
    %v5474 = vld [vmem:[%s7 + $0x1e0] sm:$0xff]
    %v5475 = vld [vmem:[%s7 + $0x1e8] sm:$0xff]
    %v5476 = vld [vmem:[%s7 + $0x1f0] sm:$0xff]
    %v5477 = vld [vmem:[%s7 + $0x1f8] sm:$0xff]
    %v5478 = vld [vmem:[%s7 + $0x200] sm:$0xff]
    %v5479 = vld [vmem:[%s7 + $0x208] sm:$0xff]
    %v5480 = vld [vmem:[%s7 + $0x210] sm:$0xff]
    %v5481 = vld [vmem:[%s7 + $0x218] sm:$0xff]
    %v5482 = vld [vmem:[%s7 + $0x220] sm:$0xff]
    %v5483 = vld [vmem:[%s7 + $0x228] sm:$0xff]
    %v5484 = vld [vmem:[%s7 + $0x230] sm:$0xff]
    %v5485 = vld [vmem:[%s7 + $0x238] sm:$0xff]
    %v5486 = vld [vmem:[%s7 + $0x240] sm:$0xff]
    %v5487 = vld [vmem:[%s7 + $0x248] sm:$0xff]
    %v5488 = vld [vmem:[%s7 + $0x250] sm:$0xff]
    %v5489 = vld [vmem:[%s7 + $0x258] sm:$0xff]
    %v5490 = vld [vmem:[%s7 + $0x260] sm:$0xff]
    %v5491 = vld [vmem:[%s7 + $0x268] sm:$0xff]
    %v5492 = vld [vmem:[%s7 + $0x270] sm:$0xff]
    %v5493 = vld [vmem:[%s7 + $0x278] sm:$0xff]
    %v5494 = vld [vmem:[%s7 + $0x280] sm:$0xff]
    %v5495 = vld [vmem:[%s7 + $0x288] sm:$0xff]
    %v5496 = vld [vmem:[%s7 + $0x290] sm:$0xff]
    %v5497 = vld [vmem:[%s7 + $0x298] sm:$0xff]
    %v5498 = vld [vmem:[%s7 + $0x2a0] sm:$0xff]
    %v5499 = vld [vmem:[%s7 + $0x2a8] sm:$0xff]
    %v5500 = vld [vmem:[%s7 + $0x2b0] sm:$0xff]
    %v5501 = vld [vmem:[%s7 + $0x2b8] sm:$0xff]
    %v5502 = vld [vmem:[%s7 + $0x2c0] sm:$0xff]
    %v5503 = vld [vmem:[%s7 + $0x2c8] sm:$0xff]
    %v5504 = vld [vmem:[%s7 + $0x2d0] sm:$0xff]
    %v5505 = vld [vmem:[%s7 + $0x2d8] sm:$0xff]
    %v5506 = vld [vmem:[%s7 + $0x2e0] sm:$0xff]
    %v5507 = vld [vmem:[%s7 + $0x2e8] sm:$0xff]
    %v5508 = vld [vmem:[%s7 + $0x2f0] sm:$0xff]
    %v5509 = vld [vmem:[%s7 + $0x2f8] sm:$0xff]
    %v5510 = vld [vmem:[%s7 + $0x300] sm:$0xff]
    %v5511 = vld [vmem:[%s7 + $0x308] sm:$0xff]
    %v5512 = vld [vmem:[%s7 + $0x310] sm:$0xff]
    %v5513 = vld [vmem:[%s7 + $0x318] sm:$0xff]
    %v5514 = vld [vmem:[%s7 + $0x320] sm:$0xff]
    %v5515 = vld [vmem:[%s7 + $0x328] sm:$0xff]
    %v5516 = vld [vmem:[%s7 + $0x330] sm:$0xff]
    %v5517 = vld [vmem:[%s7 + $0x338] sm:$0xff]
    %v5518 = vld [vmem:[%s7 + $0x340] sm:$0xff]
    %v5519 = vld [vmem:[%s7 + $0x348] sm:$0xff]
    %v5520 = vld [vmem:[%s7 + $0x350] sm:$0xff]
    %v5521 = vld [vmem:[%s7 + $0x358] sm:$0xff]
    %v5522 = vld [vmem:[%s7 + $0x360] sm:$0xff]
    %v5523 = vld [vmem:[%s7 + $0x368] sm:$0xff]
    %v5524 = vld [vmem:[%s7 + $0x370] sm:$0xff]
    %v5525 = vld [vmem:[%s7 + $0x378] sm:$0xff]
    %v5526 = vld [vmem:[%s7 + $0x380] sm:$0xff]
    %v5527 = vld [vmem:[%s7 + $0x388] sm:$0xff]
    %v5528 = vld [vmem:[%s7 + $0x390] sm:$0xff]
    %v5529 = vld [vmem:[%s7 + $0x398] sm:$0xff]
    %v5530 = vld [vmem:[%s7 + $0x3a0] sm:$0xff]
    %v5531 = vld [vmem:[%s7 + $0x3a8] sm:$0xff]
    %v5532 = vld [vmem:[%s7 + $0x3b0] sm:$0xff]
    %v5533 = vld [vmem:[%s7 + $0x3b8] sm:$0xff]
    %v5534 = vld [vmem:[%s7 + $0x3c0] sm:$0xff]
    %v5535 = vld [vmem:[%s7 + $0x3c8] sm:$0xff]
    %v5536 = vld [vmem:[%s7 + $0x3d0] sm:$0xff]
    %v5537 = vld [vmem:[%s7 + $0x3d8] sm:$0xff]
    %v5538 = vld [vmem:[%s7 + $0x3e0] sm:$0xff]
    %v5539 = vld [vmem:[%s7 + $0x3e8] sm:$0xff]
    %v5540 = vld [vmem:[%s7 + $0x3f0] sm:$0xff]
    %v5541 = vld [vmem:[%s7 + $0x3f8] sm:$0xff]
    %v5542 = vld [vmem:[%s8] sm:$0xf]
    %v5544 = vperm.slane %v5542, 0
    %v5545 = vperm.slane %v5542, 1
    %v5546 = vperm.slane %v5542, 2
    %v5547 = vperm.slane %v5542, 3
    %5552 = vmatpush.msra.mxu0 %v5474
    %5553 = vmatpush.msra.mxu0 %v5470
    %5554 = vmatpush.msra.mxu0 %v5466
    %5555 = vmatpush.msra.mxu0 %v5462
    %5556 = vmatpush.msra.mxu0 %v5458
    %5557 = vmatpush.msra.mxu0 %v5454
    %5558 = vmatpush.msra.mxu0 %v5450
    %5559 = vmatpush.msra.mxu0 %v5446
    %5560 = vmatpush.msra.mxu0 %v5442
    %5561 = vmatpush.msra.mxu0 %v5438
    %5562 = vmatpush.msra.mxu0 %v5434
    %5563 = vmatpush.msra.mxu0 %v5430
    %5564 = vmatpush.msra.mxu0 %v5426
    %5565 = vmatpush.msra.mxu0 %v5422
    %5566 = vmatpush.msra.mxu0 %v5418
    %5567 = vmatpush.msra.mxu0 %v5414
    %5568 = vmatmul.f32.gmra.mxu0 %v5412
    %v5569 = vpop.f32.mrf.mxu0
    %v5570 = vadd.f32 %v5544, %v5569
    %5571 = vdwg.mxu0
    %5572 = vmatpush.msra.mxu0 %v5538
    %5573 = vmatpush.msra.mxu0 %v5534
    %5574 = vmatpush.msra.mxu0 %v5530
    %5575 = vmatpush.msra.mxu0 %v5526
    %5576 = vmatpush.msra.mxu0 %v5522
    %5577 = vmatpush.msra.mxu0 %v5518
    %5578 = vmatpush.msra.mxu0 %v5514
    %5579 = vmatpush.msra.mxu0 %v5510
    %5580 = vmatpush.msra.mxu0 %v5506
    %5581 = vmatpush.msra.mxu0 %v5502
    %5582 = vmatpush.msra.mxu0 %v5498
    %5583 = vmatpush.msra.mxu0 %v5494
    %5584 = vmatpush.msra.mxu0 %v5490
    %5585 = vmatpush.msra.mxu0 %v5486
    %5586 = vmatpush.msra.mxu0 %v5482
    %5587 = vmatpush.msra.mxu0 %v5478
    %5588 = vmatmul.f32.gmra.mxu0 %v5413
    %v5589 = vpop.f32.mrf.mxu0
    %v5590 = vadd.f32 %v5570, %v5589
    %5591 = vdwg.mxu0
    %5592 = vmatpush.msra.mxu0 %v5475
    %5593 = vmatpush.msra.mxu0 %v5471
    %5594 = vmatpush.msra.mxu0 %v5467
    %5595 = vmatpush.msra.mxu0 %v5463
    %5596 = vmatpush.msra.mxu0 %v5459
    %5597 = vmatpush.msra.mxu0 %v5455
    %5598 = vmatpush.msra.mxu0 %v5451
    %5599 = vmatpush.msra.mxu0 %v5447
    %5600 = vmatpush.msra.mxu0 %v5443
    %5601 = vmatpush.msra.mxu0 %v5439
    %5602 = vmatpush.msra.mxu0 %v5435
    %5603 = vmatpush.msra.mxu0 %v5431
    %5604 = vmatpush.msra.mxu0 %v5427
    %5605 = vmatpush.msra.mxu0 %v5423
    %5606 = vmatpush.msra.mxu0 %v5419
    %5607 = vmatpush.msra.mxu0 %v5415
    %5608 = vmatmul.f32.gmra.mxu0 %v5412
    %v5609 = vpop.f32.mrf.mxu0
    %v5610 = vadd.f32 %v5545, %v5609
    %5611 = vdwg.mxu0
    %5612 = vmatpush.msra.mxu0 %v5539
    %5613 = vmatpush.msra.mxu0 %v5535
    %5614 = vmatpush.msra.mxu0 %v5531
    %5615 = vmatpush.msra.mxu0 %v5527
    %5616 = vmatpush.msra.mxu0 %v5523
    %5617 = vmatpush.msra.mxu0 %v5519
    %5618 = vmatpush.msra.mxu0 %v5515
    %5619 = vmatpush.msra.mxu0 %v5511
    %5620 = vmatpush.msra.mxu0 %v5507
    %5621 = vmatpush.msra.mxu0 %v5503
    %5622 = vmatpush.msra.mxu0 %v5499
    %5623 = vmatpush.msra.mxu0 %v5495
    %5624 = vmatpush.msra.mxu0 %v5491
    %5625 = vmatpush.msra.mxu0 %v5487
    %5626 = vmatpush.msra.mxu0 %v5483
    %5627 = vmatpush.msra.mxu0 %v5479
    %5628 = vmatmul.f32.gmra.mxu0 %v5413
    %v5629 = vpop.f32.mrf.mxu0
    %v5630 = vadd.f32 %v5610, %v5629
    %5631 = vdwg.mxu0
    %5632 = vmatpush.msra.mxu0 %v5476
    %5633 = vmatpush.msra.mxu0 %v5472
    %5634 = vmatpush.msra.mxu0 %v5468
    %5635 = vmatpush.msra.mxu0 %v5464
    %5636 = vmatpush.msra.mxu0 %v5460
    %5637 = vmatpush.msra.mxu0 %v5456
    %5638 = vmatpush.msra.mxu0 %v5452
    %5639 = vmatpush.msra.mxu0 %v5448
    %5640 = vmatpush.msra.mxu0 %v5444
    %5641 = vmatpush.msra.mxu0 %v5440
    %5642 = vmatpush.msra.mxu0 %v5436
    %5643 = vmatpush.msra.mxu0 %v5432
    %5644 = vmatpush.msra.mxu0 %v5428
    %5645 = vmatpush.msra.mxu0 %v5424
    %5646 = vmatpush.msra.mxu0 %v5420
    %5647 = vmatpush.msra.mxu0 %v5416
    %5648 = vmatmul.f32.gmra.mxu0 %v5412
    %v5649 = vpop.f32.mrf.mxu0
    %v5650 = vadd.f32 %v5546, %v5649
    %5651 = vdwg.mxu0
    %5652 = vmatpush.msra.mxu0 %v5540
    %5653 = vmatpush.msra.mxu0 %v5536
    %5654 = vmatpush.msra.mxu0 %v5532
    %5655 = vmatpush.msra.mxu0 %v5528
    %5656 = vmatpush.msra.mxu0 %v5524
    %5657 = vmatpush.msra.mxu0 %v5520
    %5658 = vmatpush.msra.mxu0 %v5516
    %5659 = vmatpush.msra.mxu0 %v5512
    %5660 = vmatpush.msra.mxu0 %v5508
    %5661 = vmatpush.msra.mxu0 %v5504
    %5662 = vmatpush.msra.mxu0 %v5500
    %5663 = vmatpush.msra.mxu0 %v5496
    %5664 = vmatpush.msra.mxu0 %v5492
    %5665 = vmatpush.msra.mxu0 %v5488
    %5666 = vmatpush.msra.mxu0 %v5484
    %5667 = vmatpush.msra.mxu0 %v5480
    %5668 = vmatmul.f32.gmra.mxu0 %v5413
    %v5669 = vpop.f32.mrf.mxu0
    %v5670 = vadd.f32 %v5650, %v5669
    %5671 = vdwg.mxu0
    %5672 = vmatpush.msra.mxu0 %v5477
    %5673 = vmatpush.msra.mxu0 %v5473
    %5674 = vmatpush.msra.mxu0 %v5469
    %5675 = vmatpush.msra.mxu0 %v5465
    %5676 = vmatpush.msra.mxu0 %v5461
    %5677 = vmatpush.msra.mxu0 %v5457
    %5678 = vmatpush.msra.mxu0 %v5453
    %5679 = vmatpush.msra.mxu0 %v5449
    %5680 = vmatpush.msra.mxu0 %v5445
    %5681 = vmatpush.msra.mxu0 %v5441
    %5682 = vmatpush.msra.mxu0 %v5437
    %5683 = vmatpush.msra.mxu0 %v5433
    %5684 = vmatpush.msra.mxu0 %v5429
    %5685 = vmatpush.msra.mxu0 %v5425
    %5686 = vmatpush.msra.mxu0 %v5421
    %5687 = vmatpush.msra.mxu0 %v5417
    %5688 = vmatmul.f32.gmra.mxu0 %v5412
    %v5689 = vpop.f32.mrf.mxu0
    %v5690 = vadd.f32 %v5547, %v5689
    %5691 = vdwg.mxu0
    %5692 = vmatpush.msra.mxu0 %v5541
    %5693 = vmatpush.msra.mxu0 %v5537
    %5694 = vmatpush.msra.mxu0 %v5533
    %5695 = vmatpush.msra.mxu0 %v5529
    %5696 = vmatpush.msra.mxu0 %v5525
    %5697 = vmatpush.msra.mxu0 %v5521
    %5698 = vmatpush.msra.mxu0 %v5517
    %5699 = vmatpush.msra.mxu0 %v5513
    %5700 = vmatpush.msra.mxu0 %v5509
    %5701 = vmatpush.msra.mxu0 %v5505
    %5702 = vmatpush.msra.mxu0 %v5501
    %5703 = vmatpush.msra.mxu0 %v5497
    %5704 = vmatpush.msra.mxu0 %v5493
    %5705 = vmatpush.msra.mxu0 %v5489
    %5706 = vmatpush.msra.mxu0 %v5485
    %5707 = vmatpush.msra.mxu0 %v5481
    %5708 = vmatmul.f32.gmra.mxu0 %v5413
    %v5709 = vpop.f32.mrf.mxu0
    %v5710 = vadd.f32 %v5690, %v5709
    %5711 = vdwg.mxu0
    %v5712 = vxor.u32 %v5590, 2147483648
    %v5713 = vxor.u32 %v5630, 2147483648
    %v5714 = vxor.u32 %v5670, 2147483648
    %v5715 = vmul.f32 %v5712, 1.442695
    %v5716 = vpow.pop %v5715
    %v5717 = vmul.f32 %v5713, 1.442695
    %v5718 = vpow.pop %v5717
    %v5719 = vmul.f32 %v5714, 1.442695
    %v5720 = vpow.pop %v5719
    %v5721 = vadd.f32 %v5716, 1.0
    %v5722 = vadd.f32 %v5718, 1.0
    %v5723 = vadd.f32 %v5720, 1.0
    %v5724 = vrcp.pop %v5721
    %v5725 = vmul.f32 %v5721, %v5724
    %v5726 = vsub.f32 1.0, %v5725
    %v5727 = vmul.f32 %v5724, %v5726
    %v5728 = vadd.f32 %v5724, %v5727
    %vm5729 = vweird.f32 %v5721
    %vm5730 = vweird.f32 %v5724
    %vm5731 = vmor %vm5729, %vm5730
    %v5732 = vsel %vm5731, %v5724, %v5728
    %v5733 = vand.u32 2147483647, %v5721
    %vm5734 = vcmp.eq.f32.partialorder %v5733, 8.507059e+37
    %v5735 = vand.u32 %v5721, 2147483648
    %v5736 = vor.u32 1.1754944e-38, %v5735
    %v5737 = vsel %vm5734, %v5736, %v5732
    %v5738 = vmul.f32 1.0, %v5737
    %v5739 = vrcp.pop %v5722
    %v5740 = vmul.f32 %v5722, %v5739
    %v5741 = vsub.f32 1.0, %v5740
    %v5742 = vmul.f32 %v5739, %v5741
    %v5743 = vadd.f32 %v5739, %v5742
    %vm5744 = vweird.f32 %v5722
    %vm5745 = vweird.f32 %v5739
    %vm5746 = vmor %vm5744, %vm5745
    %v5747 = vsel %vm5746, %v5739, %v5743
    %v5748 = vand.u32 2147483647, %v5722
    %vm5749 = vcmp.eq.f32.partialorder %v5748, 8.507059e+37
    %v5750 = vand.u32 %v5722, 2147483648
    %v5751 = vor.u32 1.1754944e-38, %v5750
    %v5752 = vsel %vm5749, %v5751, %v5747
    %v5753 = vmul.f32 1.0, %v5752
    %v5754 = vrcp.pop %v5723
    %v5755 = vmul.f32 %v5723, %v5754
    %v5756 = vsub.f32 1.0, %v5755
    %v5757 = vmul.f32 %v5754, %v5756
    %v5758 = vadd.f32 %v5754, %v5757
    %vm5759 = vweird.f32 %v5723
    %vm5760 = vweird.f32 %v5754
    %vm5761 = vmor %vm5759, %vm5760
    %v5762 = vsel %vm5761, %v5754, %v5758
    %v5763 = vand.u32 2147483647, %v5723
    %vm5764 = vcmp.eq.f32.partialorder %v5763, 8.507059e+37
    %v5765 = vand.u32 %v5723, 2147483648
    %v5766 = vor.u32 1.1754944e-38, %v5765
    %v5767 = vsel %vm5764, %v5766, %v5762
    %v5768 = vmul.f32 1.0, %v5767
    %v5769 = vtanh.pop %v5710
    %v5770 = vld [vmem:[#allocation3] sm:$0xff]
    %v5771 = vmul.f32 %v5753, %v5770
    %v5772 = vmul.f32 %v5738, %v5769
    %v5773 = vadd.f32 %v5771, %v5772
    %v5774 = vtanh.pop %v5773
    %v5775 = vmul.f32 %v5768, %v5774
    %5776 = vst [vmem:[#allocation3] sm:$0xff] %v5773
    %5777 = vst [vmem:[#allocation2] sm:$0xff] %v5775
    %5778 = vst [vmem:[#allocation4 + $0x8] sm:$0xff] %v5775
    %v5779 = vld [vmem:[%s9] sm:$0xff]
    %v5780 = vld [vmem:[%s9 + $0x8] sm:$0xff]
    %v5781 = vld [vmem:[%s9 + $0x10] sm:$0xff]
    %v5782 = vld [vmem:[%s9 + $0x18] sm:$0xff]
    %v5783 = vld [vmem:[%s9 + $0x20] sm:$0xff]
    %v5784 = vld [vmem:[%s9 + $0x28] sm:$0xff]
    %v5785 = vld [vmem:[%s9 + $0x30] sm:$0xff]
    %v5786 = vld [vmem:[%s9 + $0x38] sm:$0xff]
    %v5787 = vld [vmem:[%s9 + $0x40] sm:$0xff]
    %v5788 = vld [vmem:[%s9 + $0x48] sm:$0xff]
    %v5789 = vld [vmem:[%s9 + $0x50] sm:$0xff]
    %v5790 = vld [vmem:[%s9 + $0x58] sm:$0xff]
    %v5791 = vld [vmem:[%s9 + $0x60] sm:$0xff]
    %v5792 = vld [vmem:[%s9 + $0x68] sm:$0xff]
    %v5793 = vld [vmem:[%s9 + $0x70] sm:$0xff]
    %v5794 = vld [vmem:[%s9 + $0x78] sm:$0xff]
    %v5795 = vld [vmem:[%s10] sm:$0x1]
    %v5797 = vperm.slane %v5795, 0
    %5799 = vmatpush.msra.mxu0 %v5794
    %5800 = vmatpush.msra.mxu0 %v5793
    %5801 = vmatpush.msra.mxu0 %v5792
    %5802 = vmatpush.msra.mxu0 %v5791
    %5803 = vmatpush.msra.mxu0 %v5790
    %5804 = vmatpush.msra.mxu0 %v5789
    %5805 = vmatpush.msra.mxu0 %v5788
    %5806 = vmatpush.msra.mxu0 %v5787
    %5807 = vmatpush.msra.mxu0 %v5786
    %5808 = vmatpush.msra.mxu0 %v5785
    %5809 = vmatpush.msra.mxu0 %v5784
    %5810 = vmatpush.msra.mxu0 %v5783
    %5811 = vmatpush.msra.mxu0 %v5782
    %5812 = vmatpush.msra.mxu0 %v5781
    %5813 = vmatpush.msra.mxu0 %v5780
    %5814 = vmatpush.msra.mxu0 %v5779
    %5815 = vmatmul.f32.gmra.mxu0 %v5775
    %v5816 = vpop.f32.mrf.mxu0
    %v5817 = vadd.f32 %v5797, %v5816
    %5818 = vdwg.mxu0
    %s5819 = scalar_lea.vmem %s11, 32
    %5820 = vst [vmem:[%s5819] sm:$0xff] %v5817
    %s5821 = sld [smem:[#allocation10 + $0x4]]
    %p5822 = scmp.gt.s32.totalorder %s5821, 0
    // Predicated region
    $region90: #{_seq2seq_core.1} parent=1 // pred_check
      %p5823 = pneg %p5822
    $region91: #{_seq2seq_core.1} parent=1 // pred_check_branch
      %5825 = sbr.rel (%p5823) target = $region93
    $region92: #{_seq2seq_core.1} parent=1 // pred_region
      %s5826 = sld [smem:[#allocation8 + $0x5]]
      %v5827 = vstv %s5826
      %vm5828 = vcmp.eq.s32.totalorder %v75, %v5827
      %vm5829 = vmand %vm83, %vm5828
      %v5830 = vsel %vm5829, 1.0, 0.0
      %s5831 = sld [smem:[#allocation8 + $0x85]]
      %v5832 = vstv %s5831
      %vm5833 = vcmp.eq.s32.totalorder %v75, %v5832
      %vm5834 = vmand %vm89, %vm5833
      %v5835 = vsel %vm5834, 1.0, %v5830
      %5836 = vst [vmem:[#allocation5] sm:$0xff] %v5835
    $region93: #{_seq2seq_core.1} parent=1 // pred_fallthru
      _
    %s5837 = sld [smem:[#allocation10 + $0x4]]
    %p5838 = scmp.eq.s32.totalorder %s5837, 0
    // Predicated region
    $region94: #{_seq2seq_core.1} parent=1 // pred_check
      %p5839 = pneg %p5838
    $region95: #{_seq2seq_core.1} parent=1 // pred_check_branch
      %5841 = sbr.rel (%p5839) target = $region97
    $region96: #{_seq2seq_core.1} parent=1 // pred_region
      %vm5842 = vcmp.lt.s32.totalorder %v75, 16
      %v5843 = vsel %vm5842, %v5817, -1e+30
      %5844 = vmax.xlane.f32.xlu0 %v5843
      %v5845 = vpop.xlane.xlu0 %5844
      %vm5846 = vcmp.eq.f32.partialorder %v5843, %v5845
      %v5847 = vsel %vm5846, %v75, 128
      %v5848 = vand.u32 %v5847, 65535
      %v5849 = vshra.s32 %v5847, 16
      %v5850 = vcvt.s32.f32 %v5848
      %v5851 = vcvt.s32.f32 %v5849
      %5852 = vmin.xlane.f32.xlu0 %v5851
      %v5853 = vpop.xlane.xlu0 %5852
      %vm5854 = vcmp.eq.f32.partialorder %v5851, %v5853
      %v5855 = vsel %vm5854, %v5850, inf
      %5856 = vmin.xlane.f32.xlu0 %v5855
      %v5857 = vpop.xlane.xlu0 %5856
      %v5858 = vcvt.f32.s32 %v5857
      %v5859 = vcvt.f32.s32 %v5853
      %v5860 = vshll.u32 %v5859, 16
      %v5861 = vadd.s32 %v5860, %v5858
      %vm5862 = vcmp.eq.s32.totalorder %v75, %v5861
      %v5863 = vsel %vm5862, 1, 0
      %v5864 = vcvt.s32.f32 %v5863
      %5865 = vst [vmem:[#allocation5] sm:$0xff] %v5864
    $region97: #{_seq2seq_core.1} parent=1 // pred_fallthru
      _
    %v5866 = vld [vmem:[#allocation5] sm:$0xff]
    %v5867 = vld [vmem:[%s6] sm:$0xff]
    %v5868 = vld [vmem:[%s6 + $0x8] sm:$0xff]
    %v5869 = vld [vmem:[%s6 + $0x10] sm:$0xff]
    %v5870 = vld [vmem:[%s6 + $0x18] sm:$0xff]
    %v5871 = vld [vmem:[%s6 + $0x20] sm:$0xff]
    %v5872 = vld [vmem:[%s6 + $0x28] sm:$0xff]
    %v5873 = vld [vmem:[%s6 + $0x30] sm:$0xff]
    %v5874 = vld [vmem:[%s6 + $0x38] sm:$0xff]
    %v5875 = vld [vmem:[%s6 + $0x40] sm:$0xff]
    %v5876 = vld [vmem:[%s6 + $0x48] sm:$0xff]
    %v5877 = vld [vmem:[%s6 + $0x50] sm:$0xff]
    %v5878 = vld [vmem:[%s6 + $0x58] sm:$0xff]
    %v5879 = vld [vmem:[%s6 + $0x60] sm:$0xff]
    %v5880 = vld [vmem:[%s6 + $0x68] sm:$0xff]
    %v5881 = vld [vmem:[%s6 + $0x70] sm:$0xff]
    %v5882 = vld [vmem:[%s6 + $0x78] sm:$0xff]
    %5883 = vmatpush.msra.mxu0 %v5882
    %5884 = vmatpush.msra.mxu0 %v5881
    %5885 = vmatpush.msra.mxu0 %v5880
    %5886 = vmatpush.msra.mxu0 %v5879
    %5887 = vmatpush.msra.mxu0 %v5878
    %5888 = vmatpush.msra.mxu0 %v5877
    %5889 = vmatpush.msra.mxu0 %v5876
    %5890 = vmatpush.msra.mxu0 %v5875
    %5891 = vmatpush.msra.mxu0 %v5874
    %5892 = vmatpush.msra.mxu0 %v5873
    %5893 = vmatpush.msra.mxu0 %v5872
    %5894 = vmatpush.msra.mxu0 %v5871
    %5895 = vmatpush.msra.mxu0 %v5870
    %5896 = vmatpush.msra.mxu0 %v5869
    %5897 = vmatpush.msra.mxu0 %v5868
    %5898 = vmatpush.msra.mxu0 %v5867
    %5899 = vmatmul.f32.gmra.mxu0 %v5866
    %v5900 = vpop.f32.mrf.mxu0
    %v5901 = vadd.f32 0.0, %v5900
    %5902 = vdwg.mxu0
    %5903 = vst [vmem:[#allocation4] sm:$0xff] %v5901
    %v5904 = vld [vmem:[#allocation4] sm:$0xff]
    %v5905 = vld [vmem:[#allocation4 + $0x8] sm:$0xff]
    %v5906 = vld [vmem:[%s7] sm:$0xff]
    %v5907 = vld [vmem:[%s7 + $0x8] sm:$0xff]
    %v5908 = vld [vmem:[%s7 + $0x10] sm:$0xff]
    %v5909 = vld [vmem:[%s7 + $0x18] sm:$0xff]
    %v5910 = vld [vmem:[%s7 + $0x20] sm:$0xff]
    %v5911 = vld [vmem:[%s7 + $0x28] sm:$0xff]
    %v5912 = vld [vmem:[%s7 + $0x30] sm:$0xff]
    %v5913 = vld [vmem:[%s7 + $0x38] sm:$0xff]
    %v5914 = vld [vmem:[%s7 + $0x40] sm:$0xff]
    %v5915 = vld [vmem:[%s7 + $0x48] sm:$0xff]
    %v5916 = vld [vmem:[%s7 + $0x50] sm:$0xff]
    %v5917 = vld [vmem:[%s7 + $0x58] sm:$0xff]
    %v5918 = vld [vmem:[%s7 + $0x60] sm:$0xff]
    %v5919 = vld [vmem:[%s7 + $0x68] sm:$0xff]
    %v5920 = vld [vmem:[%s7 + $0x70] sm:$0xff]
    %v5921 = vld [vmem:[%s7 + $0x78] sm:$0xff]
    %v5922 = vld [vmem:[%s7 + $0x80] sm:$0xff]
    %v5923 = vld [vmem:[%s7 + $0x88] sm:$0xff]
    %v5924 = vld [vmem:[%s7 + $0x90] sm:$0xff]
    %v5925 = vld [vmem:[%s7 + $0x98] sm:$0xff]
    %v5926 = vld [vmem:[%s7 + $0xa0] sm:$0xff]
    %v5927 = vld [vmem:[%s7 + $0xa8] sm:$0xff]
    %v5928 = vld [vmem:[%s7 + $0xb0] sm:$0xff]
    %v5929 = vld [vmem:[%s7 + $0xb8] sm:$0xff]
    %v5930 = vld [vmem:[%s7 + $0xc0] sm:$0xff]
    %v5931 = vld [vmem:[%s7 + $0xc8] sm:$0xff]
    %v5932 = vld [vmem:[%s7 + $0xd0] sm:$0xff]
    %v5933 = vld [vmem:[%s7 + $0xd8] sm:$0xff]
    %v5934 = vld [vmem:[%s7 + $0xe0] sm:$0xff]
    %v5935 = vld [vmem:[%s7 + $0xe8] sm:$0xff]
    %v5936 = vld [vmem:[%s7 + $0xf0] sm:$0xff]
    %v5937 = vld [vmem:[%s7 + $0xf8] sm:$0xff]
    %v5938 = vld [vmem:[%s7 + $0x100] sm:$0xff]
    %v5939 = vld [vmem:[%s7 + $0x108] sm:$0xff]
    %v5940 = vld [vmem:[%s7 + $0x110] sm:$0xff]
    %v5941 = vld [vmem:[%s7 + $0x118] sm:$0xff]
    %v5942 = vld [vmem:[%s7 + $0x120] sm:$0xff]
    %v5943 = vld [vmem:[%s7 + $0x128] sm:$0xff]
    %v5944 = vld [vmem:[%s7 + $0x130] sm:$0xff]
    %v5945 = vld [vmem:[%s7 + $0x138] sm:$0xff]
    %v5946 = vld [vmem:[%s7 + $0x140] sm:$0xff]
    %v5947 = vld [vmem:[%s7 + $0x148] sm:$0xff]
    %v5948 = vld [vmem:[%s7 + $0x150] sm:$0xff]
    %v5949 = vld [vmem:[%s7 + $0x158] sm:$0xff]
    %v5950 = vld [vmem:[%s7 + $0x160] sm:$0xff]
    %v5951 = vld [vmem:[%s7 + $0x168] sm:$0xff]
    %v5952 = vld [vmem:[%s7 + $0x170] sm:$0xff]
    %v5953 = vld [vmem:[%s7 + $0x178] sm:$0xff]
    %v5954 = vld [vmem:[%s7 + $0x180] sm:$0xff]
    %v5955 = vld [vmem:[%s7 + $0x188] sm:$0xff]
    %v5956 = vld [vmem:[%s7 + $0x190] sm:$0xff]
    %v5957 = vld [vmem:[%s7 + $0x198] sm:$0xff]
    %v5958 = vld [vmem:[%s7 + $0x1a0] sm:$0xff]
    %v5959 = vld [vmem:[%s7 + $0x1a8] sm:$0xff]
    %v5960 = vld [vmem:[%s7 + $0x1b0] sm:$0xff]
    %v5961 = vld [vmem:[%s7 + $0x1b8] sm:$0xff]
    %v5962 = vld [vmem:[%s7 + $0x1c0] sm:$0xff]
    %v5963 = vld [vmem:[%s7 + $0x1c8] sm:$0xff]
    %v5964 = vld [vmem:[%s7 + $0x1d0] sm:$0xff]
    %v5965 = vld [vmem:[%s7 + $0x1d8] sm:$0xff]
    %v5966 = vld [vmem:[%s7 + $0x1e0] sm:$0xff]
    %v5967 = vld [vmem:[%s7 + $0x1e8] sm:$0xff]
    %v5968 = vld [vmem:[%s7 + $0x1f0] sm:$0xff]
    %v5969 = vld [vmem:[%s7 + $0x1f8] sm:$0xff]
    %v5970 = vld [vmem:[%s7 + $0x200] sm:$0xff]
    %v5971 = vld [vmem:[%s7 + $0x208] sm:$0xff]
    %v5972 = vld [vmem:[%s7 + $0x210] sm:$0xff]
    %v5973 = vld [vmem:[%s7 + $0x218] sm:$0xff]
    %v5974 = vld [vmem:[%s7 + $0x220] sm:$0xff]
    %v5975 = vld [vmem:[%s7 + $0x228] sm:$0xff]
    %v5976 = vld [vmem:[%s7 + $0x230] sm:$0xff]
    %v5977 = vld [vmem:[%s7 + $0x238] sm:$0xff]
    %v5978 = vld [vmem:[%s7 + $0x240] sm:$0xff]
    %v5979 = vld [vmem:[%s7 + $0x248] sm:$0xff]
    %v5980 = vld [vmem:[%s7 + $0x250] sm:$0xff]
    %v5981 = vld [vmem:[%s7 + $0x258] sm:$0xff]
    %v5982 = vld [vmem:[%s7 + $0x260] sm:$0xff]
    %v5983 = vld [vmem:[%s7 + $0x268] sm:$0xff]
    %v5984 = vld [vmem:[%s7 + $0x270] sm:$0xff]
    %v5985 = vld [vmem:[%s7 + $0x278] sm:$0xff]
    %v5986 = vld [vmem:[%s7 + $0x280] sm:$0xff]
    %v5987 = vld [vmem:[%s7 + $0x288] sm:$0xff]
    %v5988 = vld [vmem:[%s7 + $0x290] sm:$0xff]
    %v5989 = vld [vmem:[%s7 + $0x298] sm:$0xff]
    %v5990 = vld [vmem:[%s7 + $0x2a0] sm:$0xff]
    %v5991 = vld [vmem:[%s7 + $0x2a8] sm:$0xff]
    %v5992 = vld [vmem:[%s7 + $0x2b0] sm:$0xff]
    %v5993 = vld [vmem:[%s7 + $0x2b8] sm:$0xff]
    %v5994 = vld [vmem:[%s7 + $0x2c0] sm:$0xff]
    %v5995 = vld [vmem:[%s7 + $0x2c8] sm:$0xff]
    %v5996 = vld [vmem:[%s7 + $0x2d0] sm:$0xff]
    %v5997 = vld [vmem:[%s7 + $0x2d8] sm:$0xff]
    %v5998 = vld [vmem:[%s7 + $0x2e0] sm:$0xff]
    %v5999 = vld [vmem:[%s7 + $0x2e8] sm:$0xff]
    %v6000 = vld [vmem:[%s7 + $0x2f0] sm:$0xff]
    %v6001 = vld [vmem:[%s7 + $0x2f8] sm:$0xff]
    %v6002 = vld [vmem:[%s7 + $0x300] sm:$0xff]
    %v6003 = vld [vmem:[%s7 + $0x308] sm:$0xff]
    %v6004 = vld [vmem:[%s7 + $0x310] sm:$0xff]
    %v6005 = vld [vmem:[%s7 + $0x318] sm:$0xff]
    %v6006 = vld [vmem:[%s7 + $0x320] sm:$0xff]
    %v6007 = vld [vmem:[%s7 + $0x328] sm:$0xff]
    %v6008 = vld [vmem:[%s7 + $0x330] sm:$0xff]
    %v6009 = vld [vmem:[%s7 + $0x338] sm:$0xff]
    %v6010 = vld [vmem:[%s7 + $0x340] sm:$0xff]
    %v6011 = vld [vmem:[%s7 + $0x348] sm:$0xff]
    %v6012 = vld [vmem:[%s7 + $0x350] sm:$0xff]
    %v6013 = vld [vmem:[%s7 + $0x358] sm:$0xff]
    %v6014 = vld [vmem:[%s7 + $0x360] sm:$0xff]
    %v6015 = vld [vmem:[%s7 + $0x368] sm:$0xff]
    %v6016 = vld [vmem:[%s7 + $0x370] sm:$0xff]
    %v6017 = vld [vmem:[%s7 + $0x378] sm:$0xff]
    %v6018 = vld [vmem:[%s7 + $0x380] sm:$0xff]
    %v6019 = vld [vmem:[%s7 + $0x388] sm:$0xff]
    %v6020 = vld [vmem:[%s7 + $0x390] sm:$0xff]
    %v6021 = vld [vmem:[%s7 + $0x398] sm:$0xff]
    %v6022 = vld [vmem:[%s7 + $0x3a0] sm:$0xff]
    %v6023 = vld [vmem:[%s7 + $0x3a8] sm:$0xff]
    %v6024 = vld [vmem:[%s7 + $0x3b0] sm:$0xff]
    %v6025 = vld [vmem:[%s7 + $0x3b8] sm:$0xff]
    %v6026 = vld [vmem:[%s7 + $0x3c0] sm:$0xff]
    %v6027 = vld [vmem:[%s7 + $0x3c8] sm:$0xff]
    %v6028 = vld [vmem:[%s7 + $0x3d0] sm:$0xff]
    %v6029 = vld [vmem:[%s7 + $0x3d8] sm:$0xff]
    %v6030 = vld [vmem:[%s7 + $0x3e0] sm:$0xff]
    %v6031 = vld [vmem:[%s7 + $0x3e8] sm:$0xff]
    %v6032 = vld [vmem:[%s7 + $0x3f0] sm:$0xff]
    %v6033 = vld [vmem:[%s7 + $0x3f8] sm:$0xff]
    %v6034 = vld [vmem:[%s8] sm:$0xf]
    %v6036 = vperm.slane %v6034, 0
    %v6037 = vperm.slane %v6034, 1
    %v6038 = vperm.slane %v6034, 2
    %v6039 = vperm.slane %v6034, 3
    %6044 = vmatpush.msra.mxu0 %v5966
    %6045 = vmatpush.msra.mxu0 %v5962
    %6046 = vmatpush.msra.mxu0 %v5958
    %6047 = vmatpush.msra.mxu0 %v5954
    %6048 = vmatpush.msra.mxu0 %v5950
    %6049 = vmatpush.msra.mxu0 %v5946
    %6050 = vmatpush.msra.mxu0 %v5942
    %6051 = vmatpush.msra.mxu0 %v5938
    %6052 = vmatpush.msra.mxu0 %v5934
    %6053 = vmatpush.msra.mxu0 %v5930
    %6054 = vmatpush.msra.mxu0 %v5926
    %6055 = vmatpush.msra.mxu0 %v5922
    %6056 = vmatpush.msra.mxu0 %v5918
    %6057 = vmatpush.msra.mxu0 %v5914
    %6058 = vmatpush.msra.mxu0 %v5910
    %6059 = vmatpush.msra.mxu0 %v5906
    %6060 = vmatmul.f32.gmra.mxu0 %v5904
    %v6061 = vpop.f32.mrf.mxu0
    %v6062 = vadd.f32 %v6036, %v6061
    %6063 = vdwg.mxu0
    %6064 = vmatpush.msra.mxu0 %v6030
    %6065 = vmatpush.msra.mxu0 %v6026
    %6066 = vmatpush.msra.mxu0 %v6022
    %6067 = vmatpush.msra.mxu0 %v6018
    %6068 = vmatpush.msra.mxu0 %v6014
    %6069 = vmatpush.msra.mxu0 %v6010
    %6070 = vmatpush.msra.mxu0 %v6006
    %6071 = vmatpush.msra.mxu0 %v6002
    %6072 = vmatpush.msra.mxu0 %v5998
    %6073 = vmatpush.msra.mxu0 %v5994
    %6074 = vmatpush.msra.mxu0 %v5990
    %6075 = vmatpush.msra.mxu0 %v5986
    %6076 = vmatpush.msra.mxu0 %v5982
    %6077 = vmatpush.msra.mxu0 %v5978
    %6078 = vmatpush.msra.mxu0 %v5974
    %6079 = vmatpush.msra.mxu0 %v5970
    %6080 = vmatmul.f32.gmra.mxu0 %v5905
    %v6081 = vpop.f32.mrf.mxu0
    %v6082 = vadd.f32 %v6062, %v6081
    %6083 = vdwg.mxu0
    %6084 = vmatpush.msra.mxu0 %v5967
    %6085 = vmatpush.msra.mxu0 %v5963
    %6086 = vmatpush.msra.mxu0 %v5959
    %6087 = vmatpush.msra.mxu0 %v5955
    %6088 = vmatpush.msra.mxu0 %v5951
    %6089 = vmatpush.msra.mxu0 %v5947
    %6090 = vmatpush.msra.mxu0 %v5943
    %6091 = vmatpush.msra.mxu0 %v5939
    %6092 = vmatpush.msra.mxu0 %v5935
    %6093 = vmatpush.msra.mxu0 %v5931
    %6094 = vmatpush.msra.mxu0 %v5927
    %6095 = vmatpush.msra.mxu0 %v5923
    %6096 = vmatpush.msra.mxu0 %v5919
    %6097 = vmatpush.msra.mxu0 %v5915
    %6098 = vmatpush.msra.mxu0 %v5911
    %6099 = vmatpush.msra.mxu0 %v5907
    %6100 = vmatmul.f32.gmra.mxu0 %v5904
    %v6101 = vpop.f32.mrf.mxu0
    %v6102 = vadd.f32 %v6037, %v6101
    %6103 = vdwg.mxu0
    %6104 = vmatpush.msra.mxu0 %v6031
    %6105 = vmatpush.msra.mxu0 %v6027
    %6106 = vmatpush.msra.mxu0 %v6023
    %6107 = vmatpush.msra.mxu0 %v6019
    %6108 = vmatpush.msra.mxu0 %v6015
    %6109 = vmatpush.msra.mxu0 %v6011
    %6110 = vmatpush.msra.mxu0 %v6007
    %6111 = vmatpush.msra.mxu0 %v6003
    %6112 = vmatpush.msra.mxu0 %v5999
    %6113 = vmatpush.msra.mxu0 %v5995
    %6114 = vmatpush.msra.mxu0 %v5991
    %6115 = vmatpush.msra.mxu0 %v5987
    %6116 = vmatpush.msra.mxu0 %v5983
    %6117 = vmatpush.msra.mxu0 %v5979
    %6118 = vmatpush.msra.mxu0 %v5975
    %6119 = vmatpush.msra.mxu0 %v5971
    %6120 = vmatmul.f32.gmra.mxu0 %v5905
    %v6121 = vpop.f32.mrf.mxu0
    %v6122 = vadd.f32 %v6102, %v6121
    %6123 = vdwg.mxu0
    %6124 = vmatpush.msra.mxu0 %v5968
    %6125 = vmatpush.msra.mxu0 %v5964
    %6126 = vmatpush.msra.mxu0 %v5960
    %6127 = vmatpush.msra.mxu0 %v5956
    %6128 = vmatpush.msra.mxu0 %v5952
    %6129 = vmatpush.msra.mxu0 %v5948
    %6130 = vmatpush.msra.mxu0 %v5944
    %6131 = vmatpush.msra.mxu0 %v5940
    %6132 = vmatpush.msra.mxu0 %v5936
    %6133 = vmatpush.msra.mxu0 %v5932
    %6134 = vmatpush.msra.mxu0 %v5928
    %6135 = vmatpush.msra.mxu0 %v5924
    %6136 = vmatpush.msra.mxu0 %v5920
    %6137 = vmatpush.msra.mxu0 %v5916
    %6138 = vmatpush.msra.mxu0 %v5912
    %6139 = vmatpush.msra.mxu0 %v5908
    %6140 = vmatmul.f32.gmra.mxu0 %v5904
    %v6141 = vpop.f32.mrf.mxu0
    %v6142 = vadd.f32 %v6038, %v6141
    %6143 = vdwg.mxu0
    %6144 = vmatpush.msra.mxu0 %v6032
    %6145 = vmatpush.msra.mxu0 %v6028
    %6146 = vmatpush.msra.mxu0 %v6024
    %6147 = vmatpush.msra.mxu0 %v6020
    %6148 = vmatpush.msra.mxu0 %v6016
    %6149 = vmatpush.msra.mxu0 %v6012
    %6150 = vmatpush.msra.mxu0 %v6008
    %6151 = vmatpush.msra.mxu0 %v6004
    %6152 = vmatpush.msra.mxu0 %v6000
    %6153 = vmatpush.msra.mxu0 %v5996
    %6154 = vmatpush.msra.mxu0 %v5992
    %6155 = vmatpush.msra.mxu0 %v5988
    %6156 = vmatpush.msra.mxu0 %v5984
    %6157 = vmatpush.msra.mxu0 %v5980
    %6158 = vmatpush.msra.mxu0 %v5976
    %6159 = vmatpush.msra.mxu0 %v5972
    %6160 = vmatmul.f32.gmra.mxu0 %v5905
    %v6161 = vpop.f32.mrf.mxu0
    %v6162 = vadd.f32 %v6142, %v6161
    %6163 = vdwg.mxu0
    %6164 = vmatpush.msra.mxu0 %v5969
    %6165 = vmatpush.msra.mxu0 %v5965
    %6166 = vmatpush.msra.mxu0 %v5961
    %6167 = vmatpush.msra.mxu0 %v5957
    %6168 = vmatpush.msra.mxu0 %v5953
    %6169 = vmatpush.msra.mxu0 %v5949
    %6170 = vmatpush.msra.mxu0 %v5945
    %6171 = vmatpush.msra.mxu0 %v5941
    %6172 = vmatpush.msra.mxu0 %v5937
    %6173 = vmatpush.msra.mxu0 %v5933
    %6174 = vmatpush.msra.mxu0 %v5929
    %6175 = vmatpush.msra.mxu0 %v5925
    %6176 = vmatpush.msra.mxu0 %v5921
    %6177 = vmatpush.msra.mxu0 %v5917
    %6178 = vmatpush.msra.mxu0 %v5913
    %6179 = vmatpush.msra.mxu0 %v5909
    %6180 = vmatmul.f32.gmra.mxu0 %v5904
    %v6181 = vpop.f32.mrf.mxu0
    %v6182 = vadd.f32 %v6039, %v6181
    %6183 = vdwg.mxu0
    %6184 = vmatpush.msra.mxu0 %v6033
    %6185 = vmatpush.msra.mxu0 %v6029
    %6186 = vmatpush.msra.mxu0 %v6025
    %6187 = vmatpush.msra.mxu0 %v6021
    %6188 = vmatpush.msra.mxu0 %v6017
    %6189 = vmatpush.msra.mxu0 %v6013
    %6190 = vmatpush.msra.mxu0 %v6009
    %6191 = vmatpush.msra.mxu0 %v6005
    %6192 = vmatpush.msra.mxu0 %v6001
    %6193 = vmatpush.msra.mxu0 %v5997
    %6194 = vmatpush.msra.mxu0 %v5993
    %6195 = vmatpush.msra.mxu0 %v5989
    %6196 = vmatpush.msra.mxu0 %v5985
    %6197 = vmatpush.msra.mxu0 %v5981
    %6198 = vmatpush.msra.mxu0 %v5977
    %6199 = vmatpush.msra.mxu0 %v5973
    %6200 = vmatmul.f32.gmra.mxu0 %v5905
    %v6201 = vpop.f32.mrf.mxu0
    %v6202 = vadd.f32 %v6182, %v6201
    %6203 = vdwg.mxu0
    %v6204 = vxor.u32 %v6082, 2147483648
    %v6205 = vxor.u32 %v6122, 2147483648
    %v6206 = vxor.u32 %v6162, 2147483648
    %v6207 = vmul.f32 %v6204, 1.442695
    %v6208 = vpow.pop %v6207
    %v6209 = vmul.f32 %v6205, 1.442695
    %v6210 = vpow.pop %v6209
    %v6211 = vmul.f32 %v6206, 1.442695
    %v6212 = vpow.pop %v6211
    %v6213 = vadd.f32 %v6208, 1.0
    %v6214 = vadd.f32 %v6210, 1.0
    %v6215 = vadd.f32 %v6212, 1.0
    %v6216 = vrcp.pop %v6213
    %v6217 = vmul.f32 %v6213, %v6216
    %v6218 = vsub.f32 1.0, %v6217
    %v6219 = vmul.f32 %v6216, %v6218
    %v6220 = vadd.f32 %v6216, %v6219
    %vm6221 = vweird.f32 %v6213
    %vm6222 = vweird.f32 %v6216
    %vm6223 = vmor %vm6221, %vm6222
    %v6224 = vsel %vm6223, %v6216, %v6220
    %v6225 = vand.u32 2147483647, %v6213
    %vm6226 = vcmp.eq.f32.partialorder %v6225, 8.507059e+37
    %v6227 = vand.u32 %v6213, 2147483648
    %v6228 = vor.u32 1.1754944e-38, %v6227
    %v6229 = vsel %vm6226, %v6228, %v6224
    %v6230 = vmul.f32 1.0, %v6229
    %v6231 = vrcp.pop %v6214
    %v6232 = vmul.f32 %v6214, %v6231
    %v6233 = vsub.f32 1.0, %v6232
    %v6234 = vmul.f32 %v6231, %v6233
    %v6235 = vadd.f32 %v6231, %v6234
    %vm6236 = vweird.f32 %v6214
    %vm6237 = vweird.f32 %v6231
    %vm6238 = vmor %vm6236, %vm6237
    %v6239 = vsel %vm6238, %v6231, %v6235
    %v6240 = vand.u32 2147483647, %v6214
    %vm6241 = vcmp.eq.f32.partialorder %v6240, 8.507059e+37
    %v6242 = vand.u32 %v6214, 2147483648
    %v6243 = vor.u32 1.1754944e-38, %v6242
    %v6244 = vsel %vm6241, %v6243, %v6239
    %v6245 = vmul.f32 1.0, %v6244
    %v6246 = vrcp.pop %v6215
    %v6247 = vmul.f32 %v6215, %v6246
    %v6248 = vsub.f32 1.0, %v6247
    %v6249 = vmul.f32 %v6246, %v6248
    %v6250 = vadd.f32 %v6246, %v6249
    %vm6251 = vweird.f32 %v6215
    %vm6252 = vweird.f32 %v6246
    %vm6253 = vmor %vm6251, %vm6252
    %v6254 = vsel %vm6253, %v6246, %v6250
    %v6255 = vand.u32 2147483647, %v6215
    %vm6256 = vcmp.eq.f32.partialorder %v6255, 8.507059e+37
    %v6257 = vand.u32 %v6215, 2147483648
    %v6258 = vor.u32 1.1754944e-38, %v6257
    %v6259 = vsel %vm6256, %v6258, %v6254
    %v6260 = vmul.f32 1.0, %v6259
    %v6261 = vtanh.pop %v6202
    %v6262 = vld [vmem:[#allocation3] sm:$0xff]
    %v6263 = vmul.f32 %v6245, %v6262
    %v6264 = vmul.f32 %v6230, %v6261
    %v6265 = vadd.f32 %v6263, %v6264
    %v6266 = vtanh.pop %v6265
    %v6267 = vmul.f32 %v6260, %v6266
    %6268 = vst [vmem:[#allocation3] sm:$0xff] %v6265
    %6269 = vst [vmem:[#allocation2] sm:$0xff] %v6267
    %6270 = vst [vmem:[#allocation4 + $0x8] sm:$0xff] %v6267
    %v6271 = vld [vmem:[%s9] sm:$0xff]
    %v6272 = vld [vmem:[%s9 + $0x8] sm:$0xff]
    %v6273 = vld [vmem:[%s9 + $0x10] sm:$0xff]
    %v6274 = vld [vmem:[%s9 + $0x18] sm:$0xff]
    %v6275 = vld [vmem:[%s9 + $0x20] sm:$0xff]
    %v6276 = vld [vmem:[%s9 + $0x28] sm:$0xff]
    %v6277 = vld [vmem:[%s9 + $0x30] sm:$0xff]
    %v6278 = vld [vmem:[%s9 + $0x38] sm:$0xff]
    %v6279 = vld [vmem:[%s9 + $0x40] sm:$0xff]
    %v6280 = vld [vmem:[%s9 + $0x48] sm:$0xff]
    %v6281 = vld [vmem:[%s9 + $0x50] sm:$0xff]
    %v6282 = vld [vmem:[%s9 + $0x58] sm:$0xff]
    %v6283 = vld [vmem:[%s9 + $0x60] sm:$0xff]
    %v6284 = vld [vmem:[%s9 + $0x68] sm:$0xff]
    %v6285 = vld [vmem:[%s9 + $0x70] sm:$0xff]
    %v6286 = vld [vmem:[%s9 + $0x78] sm:$0xff]
    %v6287 = vld [vmem:[%s10] sm:$0x1]
    %v6289 = vperm.slane %v6287, 0
    %6291 = vmatpush.msra.mxu0 %v6286
    %6292 = vmatpush.msra.mxu0 %v6285
    %6293 = vmatpush.msra.mxu0 %v6284
    %6294 = vmatpush.msra.mxu0 %v6283
    %6295 = vmatpush.msra.mxu0 %v6282
    %6296 = vmatpush.msra.mxu0 %v6281
    %6297 = vmatpush.msra.mxu0 %v6280
    %6298 = vmatpush.msra.mxu0 %v6279
    %6299 = vmatpush.msra.mxu0 %v6278
    %6300 = vmatpush.msra.mxu0 %v6277
    %6301 = vmatpush.msra.mxu0 %v6276
    %6302 = vmatpush.msra.mxu0 %v6275
    %6303 = vmatpush.msra.mxu0 %v6274
    %6304 = vmatpush.msra.mxu0 %v6273
    %6305 = vmatpush.msra.mxu0 %v6272
    %6306 = vmatpush.msra.mxu0 %v6271
    %6307 = vmatmul.f32.gmra.mxu0 %v6267
    %v6308 = vpop.f32.mrf.mxu0
    %v6309 = vadd.f32 %v6289, %v6308
    %6310 = vdwg.mxu0
    %s6311 = scalar_lea.vmem %s11, 40
    %6312 = vst [vmem:[%s6311] sm:$0xff] %v6309
    %s6313 = sld [smem:[#allocation10 + $0x5]]
    %p6314 = scmp.gt.s32.totalorder %s6313, 0
    // Predicated region
    $region98: #{_seq2seq_core.1} parent=1 // pred_check
      %p6315 = pneg %p6314
    $region99: #{_seq2seq_core.1} parent=1 // pred_check_branch
      %6317 = sbr.rel (%p6315) target = $region101
    $region100: #{_seq2seq_core.1} parent=1 // pred_region
      %s6318 = sld [smem:[#allocation8 + $0x6]]
      %v6319 = vstv %s6318
      %vm6320 = vcmp.eq.s32.totalorder %v75, %v6319
      %vm6321 = vmand %vm83, %vm6320
      %v6322 = vsel %vm6321, 1.0, 0.0
      %s6323 = sld [smem:[#allocation8 + $0x86]]
      %v6324 = vstv %s6323
      %vm6325 = vcmp.eq.s32.totalorder %v75, %v6324
      %vm6326 = vmand %vm89, %vm6325
      %v6327 = vsel %vm6326, 1.0, %v6322
      %6328 = vst [vmem:[#allocation5] sm:$0xff] %v6327
    $region101: #{_seq2seq_core.1} parent=1 // pred_fallthru
      _
    %s6329 = sld [smem:[#allocation10 + $0x5]]
    %p6330 = scmp.eq.s32.totalorder %s6329, 0
    // Predicated region
    $region102: #{_seq2seq_core.1} parent=1 // pred_check
      %p6331 = pneg %p6330
    $region103: #{_seq2seq_core.1} parent=1 // pred_check_branch
      %6333 = sbr.rel (%p6331) target = $region105
    $region104: #{_seq2seq_core.1} parent=1 // pred_region
      %vm6334 = vcmp.lt.s32.totalorder %v75, 16
      %v6335 = vsel %vm6334, %v6309, -1e+30
      %6336 = vmax.xlane.f32.xlu0 %v6335
      %v6337 = vpop.xlane.xlu0 %6336
      %vm6338 = vcmp.eq.f32.partialorder %v6335, %v6337
      %v6339 = vsel %vm6338, %v75, 128
      %v6340 = vand.u32 %v6339, 65535
      %v6341 = vshra.s32 %v6339, 16
      %v6342 = vcvt.s32.f32 %v6340
      %v6343 = vcvt.s32.f32 %v6341
      %6344 = vmin.xlane.f32.xlu0 %v6343
      %v6345 = vpop.xlane.xlu0 %6344
      %vm6346 = vcmp.eq.f32.partialorder %v6343, %v6345
      %v6347 = vsel %vm6346, %v6342, inf
      %6348 = vmin.xlane.f32.xlu0 %v6347
      %v6349 = vpop.xlane.xlu0 %6348
      %v6350 = vcvt.f32.s32 %v6349
      %v6351 = vcvt.f32.s32 %v6345
      %v6352 = vshll.u32 %v6351, 16
      %v6353 = vadd.s32 %v6352, %v6350
      %vm6354 = vcmp.eq.s32.totalorder %v75, %v6353
      %v6355 = vsel %vm6354, 1, 0
      %v6356 = vcvt.s32.f32 %v6355
      %6357 = vst [vmem:[#allocation5] sm:$0xff] %v6356
    $region105: #{_seq2seq_core.1} parent=1 // pred_fallthru
      _
    %v6358 = vld [vmem:[#allocation5] sm:$0xff]
    %v6359 = vld [vmem:[%s6] sm:$0xff]
    %v6360 = vld [vmem:[%s6 + $0x8] sm:$0xff]
    %v6361 = vld [vmem:[%s6 + $0x10] sm:$0xff]
    %v6362 = vld [vmem:[%s6 + $0x18] sm:$0xff]
    %v6363 = vld [vmem:[%s6 + $0x20] sm:$0xff]
    %v6364 = vld [vmem:[%s6 + $0x28] sm:$0xff]
    %v6365 = vld [vmem:[%s6 + $0x30] sm:$0xff]
    %v6366 = vld [vmem:[%s6 + $0x38] sm:$0xff]
    %v6367 = vld [vmem:[%s6 + $0x40] sm:$0xff]
    %v6368 = vld [vmem:[%s6 + $0x48] sm:$0xff]
    %v6369 = vld [vmem:[%s6 + $0x50] sm:$0xff]
    %v6370 = vld [vmem:[%s6 + $0x58] sm:$0xff]
    %v6371 = vld [vmem:[%s6 + $0x60] sm:$0xff]
    %v6372 = vld [vmem:[%s6 + $0x68] sm:$0xff]
    %v6373 = vld [vmem:[%s6 + $0x70] sm:$0xff]
    %v6374 = vld [vmem:[%s6 + $0x78] sm:$0xff]
    %6375 = vmatpush.msra.mxu0 %v6374
    %6376 = vmatpush.msra.mxu0 %v6373
    %6377 = vmatpush.msra.mxu0 %v6372
    %6378 = vmatpush.msra.mxu0 %v6371
    %6379 = vmatpush.msra.mxu0 %v6370
    %6380 = vmatpush.msra.mxu0 %v6369
    %6381 = vmatpush.msra.mxu0 %v6368
    %6382 = vmatpush.msra.mxu0 %v6367
    %6383 = vmatpush.msra.mxu0 %v6366
    %6384 = vmatpush.msra.mxu0 %v6365
    %6385 = vmatpush.msra.mxu0 %v6364
    %6386 = vmatpush.msra.mxu0 %v6363
    %6387 = vmatpush.msra.mxu0 %v6362
    %6388 = vmatpush.msra.mxu0 %v6361
    %6389 = vmatpush.msra.mxu0 %v6360
    %6390 = vmatpush.msra.mxu0 %v6359
    %6391 = vmatmul.f32.gmra.mxu0 %v6358
    %v6392 = vpop.f32.mrf.mxu0
    %v6393 = vadd.f32 0.0, %v6392
    %6394 = vdwg.mxu0
    %6395 = vst [vmem:[#allocation4] sm:$0xff] %v6393
    %v6396 = vld [vmem:[#allocation4] sm:$0xff]
    %v6397 = vld [vmem:[#allocation4 + $0x8] sm:$0xff]
    %v6398 = vld [vmem:[%s7] sm:$0xff]
    %v6399 = vld [vmem:[%s7 + $0x8] sm:$0xff]
    %v6400 = vld [vmem:[%s7 + $0x10] sm:$0xff]
    %v6401 = vld [vmem:[%s7 + $0x18] sm:$0xff]
    %v6402 = vld [vmem:[%s7 + $0x20] sm:$0xff]
    %v6403 = vld [vmem:[%s7 + $0x28] sm:$0xff]
    %v6404 = vld [vmem:[%s7 + $0x30] sm:$0xff]
    %v6405 = vld [vmem:[%s7 + $0x38] sm:$0xff]
    %v6406 = vld [vmem:[%s7 + $0x40] sm:$0xff]
    %v6407 = vld [vmem:[%s7 + $0x48] sm:$0xff]
    %v6408 = vld [vmem:[%s7 + $0x50] sm:$0xff]
    %v6409 = vld [vmem:[%s7 + $0x58] sm:$0xff]
    %v6410 = vld [vmem:[%s7 + $0x60] sm:$0xff]
    %v6411 = vld [vmem:[%s7 + $0x68] sm:$0xff]
    %v6412 = vld [vmem:[%s7 + $0x70] sm:$0xff]
    %v6413 = vld [vmem:[%s7 + $0x78] sm:$0xff]
    %v6414 = vld [vmem:[%s7 + $0x80] sm:$0xff]
    %v6415 = vld [vmem:[%s7 + $0x88] sm:$0xff]
    %v6416 = vld [vmem:[%s7 + $0x90] sm:$0xff]
    %v6417 = vld [vmem:[%s7 + $0x98] sm:$0xff]
    %v6418 = vld [vmem:[%s7 + $0xa0] sm:$0xff]
    %v6419 = vld [vmem:[%s7 + $0xa8] sm:$0xff]
    %v6420 = vld [vmem:[%s7 + $0xb0] sm:$0xff]
    %v6421 = vld [vmem:[%s7 + $0xb8] sm:$0xff]
    %v6422 = vld [vmem:[%s7 + $0xc0] sm:$0xff]
    %v6423 = vld [vmem:[%s7 + $0xc8] sm:$0xff]
    %v6424 = vld [vmem:[%s7 + $0xd0] sm:$0xff]
    %v6425 = vld [vmem:[%s7 + $0xd8] sm:$0xff]
    %v6426 = vld [vmem:[%s7 + $0xe0] sm:$0xff]
    %v6427 = vld [vmem:[%s7 + $0xe8] sm:$0xff]
    %v6428 = vld [vmem:[%s7 + $0xf0] sm:$0xff]
    %v6429 = vld [vmem:[%s7 + $0xf8] sm:$0xff]
    %v6430 = vld [vmem:[%s7 + $0x100] sm:$0xff]
    %v6431 = vld [vmem:[%s7 + $0x108] sm:$0xff]
    %v6432 = vld [vmem:[%s7 + $0x110] sm:$0xff]
    %v6433 = vld [vmem:[%s7 + $0x118] sm:$0xff]
    %v6434 = vld [vmem:[%s7 + $0x120] sm:$0xff]
    %v6435 = vld [vmem:[%s7 + $0x128] sm:$0xff]
    %v6436 = vld [vmem:[%s7 + $0x130] sm:$0xff]
    %v6437 = vld [vmem:[%s7 + $0x138] sm:$0xff]
    %v6438 = vld [vmem:[%s7 + $0x140] sm:$0xff]
    %v6439 = vld [vmem:[%s7 + $0x148] sm:$0xff]
    %v6440 = vld [vmem:[%s7 + $0x150] sm:$0xff]
    %v6441 = vld [vmem:[%s7 + $0x158] sm:$0xff]
    %v6442 = vld [vmem:[%s7 + $0x160] sm:$0xff]
    %v6443 = vld [vmem:[%s7 + $0x168] sm:$0xff]
    %v6444 = vld [vmem:[%s7 + $0x170] sm:$0xff]
    %v6445 = vld [vmem:[%s7 + $0x178] sm:$0xff]
    %v6446 = vld [vmem:[%s7 + $0x180] sm:$0xff]
    %v6447 = vld [vmem:[%s7 + $0x188] sm:$0xff]
    %v6448 = vld [vmem:[%s7 + $0x190] sm:$0xff]
    %v6449 = vld [vmem:[%s7 + $0x198] sm:$0xff]
    %v6450 = vld [vmem:[%s7 + $0x1a0] sm:$0xff]
    %v6451 = vld [vmem:[%s7 + $0x1a8] sm:$0xff]
    %v6452 = vld [vmem:[%s7 + $0x1b0] sm:$0xff]
    %v6453 = vld [vmem:[%s7 + $0x1b8] sm:$0xff]
    %v6454 = vld [vmem:[%s7 + $0x1c0] sm:$0xff]
    %v6455 = vld [vmem:[%s7 + $0x1c8] sm:$0xff]
    %v6456 = vld [vmem:[%s7 + $0x1d0] sm:$0xff]
    %v6457 = vld [vmem:[%s7 + $0x1d8] sm:$0xff]
    %v6458 = vld [vmem:[%s7 + $0x1e0] sm:$0xff]
    %v6459 = vld [vmem:[%s7 + $0x1e8] sm:$0xff]
    %v6460 = vld [vmem:[%s7 + $0x1f0] sm:$0xff]
    %v6461 = vld [vmem:[%s7 + $0x1f8] sm:$0xff]
    %v6462 = vld [vmem:[%s7 + $0x200] sm:$0xff]
    %v6463 = vld [vmem:[%s7 + $0x208] sm:$0xff]
    %v6464 = vld [vmem:[%s7 + $0x210] sm:$0xff]
    %v6465 = vld [vmem:[%s7 + $0x218] sm:$0xff]
    %v6466 = vld [vmem:[%s7 + $0x220] sm:$0xff]
    %v6467 = vld [vmem:[%s7 + $0x228] sm:$0xff]
    %v6468 = vld [vmem:[%s7 + $0x230] sm:$0xff]
    %v6469 = vld [vmem:[%s7 + $0x238] sm:$0xff]
    %v6470 = vld [vmem:[%s7 + $0x240] sm:$0xff]
    %v6471 = vld [vmem:[%s7 + $0x248] sm:$0xff]
    %v6472 = vld [vmem:[%s7 + $0x250] sm:$0xff]
    %v6473 = vld [vmem:[%s7 + $0x258] sm:$0xff]
    %v6474 = vld [vmem:[%s7 + $0x260] sm:$0xff]
    %v6475 = vld [vmem:[%s7 + $0x268] sm:$0xff]
    %v6476 = vld [vmem:[%s7 + $0x270] sm:$0xff]
    %v6477 = vld [vmem:[%s7 + $0x278] sm:$0xff]
    %v6478 = vld [vmem:[%s7 + $0x280] sm:$0xff]
    %v6479 = vld [vmem:[%s7 + $0x288] sm:$0xff]
    %v6480 = vld [vmem:[%s7 + $0x290] sm:$0xff]
    %v6481 = vld [vmem:[%s7 + $0x298] sm:$0xff]
    %v6482 = vld [vmem:[%s7 + $0x2a0] sm:$0xff]
    %v6483 = vld [vmem:[%s7 + $0x2a8] sm:$0xff]
    %v6484 = vld [vmem:[%s7 + $0x2b0] sm:$0xff]
    %v6485 = vld [vmem:[%s7 + $0x2b8] sm:$0xff]
    %v6486 = vld [vmem:[%s7 + $0x2c0] sm:$0xff]
    %v6487 = vld [vmem:[%s7 + $0x2c8] sm:$0xff]
    %v6488 = vld [vmem:[%s7 + $0x2d0] sm:$0xff]
    %v6489 = vld [vmem:[%s7 + $0x2d8] sm:$0xff]
    %v6490 = vld [vmem:[%s7 + $0x2e0] sm:$0xff]
    %v6491 = vld [vmem:[%s7 + $0x2e8] sm:$0xff]
    %v6492 = vld [vmem:[%s7 + $0x2f0] sm:$0xff]
    %v6493 = vld [vmem:[%s7 + $0x2f8] sm:$0xff]
    %v6494 = vld [vmem:[%s7 + $0x300] sm:$0xff]
    %v6495 = vld [vmem:[%s7 + $0x308] sm:$0xff]
    %v6496 = vld [vmem:[%s7 + $0x310] sm:$0xff]
    %v6497 = vld [vmem:[%s7 + $0x318] sm:$0xff]
    %v6498 = vld [vmem:[%s7 + $0x320] sm:$0xff]
    %v6499 = vld [vmem:[%s7 + $0x328] sm:$0xff]
    %v6500 = vld [vmem:[%s7 + $0x330] sm:$0xff]
    %v6501 = vld [vmem:[%s7 + $0x338] sm:$0xff]
    %v6502 = vld [vmem:[%s7 + $0x340] sm:$0xff]
    %v6503 = vld [vmem:[%s7 + $0x348] sm:$0xff]
    %v6504 = vld [vmem:[%s7 + $0x350] sm:$0xff]
    %v6505 = vld [vmem:[%s7 + $0x358] sm:$0xff]
    %v6506 = vld [vmem:[%s7 + $0x360] sm:$0xff]
    %v6507 = vld [vmem:[%s7 + $0x368] sm:$0xff]
    %v6508 = vld [vmem:[%s7 + $0x370] sm:$0xff]
    %v6509 = vld [vmem:[%s7 + $0x378] sm:$0xff]
    %v6510 = vld [vmem:[%s7 + $0x380] sm:$0xff]
    %v6511 = vld [vmem:[%s7 + $0x388] sm:$0xff]
    %v6512 = vld [vmem:[%s7 + $0x390] sm:$0xff]
    %v6513 = vld [vmem:[%s7 + $0x398] sm:$0xff]
    %v6514 = vld [vmem:[%s7 + $0x3a0] sm:$0xff]
    %v6515 = vld [vmem:[%s7 + $0x3a8] sm:$0xff]
    %v6516 = vld [vmem:[%s7 + $0x3b0] sm:$0xff]
    %v6517 = vld [vmem:[%s7 + $0x3b8] sm:$0xff]
    %v6518 = vld [vmem:[%s7 + $0x3c0] sm:$0xff]
    %v6519 = vld [vmem:[%s7 + $0x3c8] sm:$0xff]
    %v6520 = vld [vmem:[%s7 + $0x3d0] sm:$0xff]
    %v6521 = vld [vmem:[%s7 + $0x3d8] sm:$0xff]
    %v6522 = vld [vmem:[%s7 + $0x3e0] sm:$0xff]
    %v6523 = vld [vmem:[%s7 + $0x3e8] sm:$0xff]
    %v6524 = vld [vmem:[%s7 + $0x3f0] sm:$0xff]
    %v6525 = vld [vmem:[%s7 + $0x3f8] sm:$0xff]
    %v6526 = vld [vmem:[%s8] sm:$0xf]
    %v6528 = vperm.slane %v6526, 0
    %v6529 = vperm.slane %v6526, 1
    %v6530 = vperm.slane %v6526, 2
    %v6531 = vperm.slane %v6526, 3
    %6536 = vmatpush.msra.mxu0 %v6458
    %6537 = vmatpush.msra.mxu0 %v6454
    %6538 = vmatpush.msra.mxu0 %v6450
    %6539 = vmatpush.msra.mxu0 %v6446
    %6540 = vmatpush.msra.mxu0 %v6442
    %6541 = vmatpush.msra.mxu0 %v6438
    %6542 = vmatpush.msra.mxu0 %v6434
    %6543 = vmatpush.msra.mxu0 %v6430
    %6544 = vmatpush.msra.mxu0 %v6426
    %6545 = vmatpush.msra.mxu0 %v6422
    %6546 = vmatpush.msra.mxu0 %v6418
    %6547 = vmatpush.msra.mxu0 %v6414
    %6548 = vmatpush.msra.mxu0 %v6410
    %6549 = vmatpush.msra.mxu0 %v6406
    %6550 = vmatpush.msra.mxu0 %v6402
    %6551 = vmatpush.msra.mxu0 %v6398
    %6552 = vmatmul.f32.gmra.mxu0 %v6396
    %v6553 = vpop.f32.mrf.mxu0
    %v6554 = vadd.f32 %v6528, %v6553
    %6555 = vdwg.mxu0
    %6556 = vmatpush.msra.mxu0 %v6522
    %6557 = vmatpush.msra.mxu0 %v6518
    %6558 = vmatpush.msra.mxu0 %v6514
    %6559 = vmatpush.msra.mxu0 %v6510
    %6560 = vmatpush.msra.mxu0 %v6506
    %6561 = vmatpush.msra.mxu0 %v6502
    %6562 = vmatpush.msra.mxu0 %v6498
    %6563 = vmatpush.msra.mxu0 %v6494
    %6564 = vmatpush.msra.mxu0 %v6490
    %6565 = vmatpush.msra.mxu0 %v6486
    %6566 = vmatpush.msra.mxu0 %v6482
    %6567 = vmatpush.msra.mxu0 %v6478
    %6568 = vmatpush.msra.mxu0 %v6474
    %6569 = vmatpush.msra.mxu0 %v6470
    %6570 = vmatpush.msra.mxu0 %v6466
    %6571 = vmatpush.msra.mxu0 %v6462
    %6572 = vmatmul.f32.gmra.mxu0 %v6397
    %v6573 = vpop.f32.mrf.mxu0
    %v6574 = vadd.f32 %v6554, %v6573
    %6575 = vdwg.mxu0
    %6576 = vmatpush.msra.mxu0 %v6459
    %6577 = vmatpush.msra.mxu0 %v6455
    %6578 = vmatpush.msra.mxu0 %v6451
    %6579 = vmatpush.msra.mxu0 %v6447
    %6580 = vmatpush.msra.mxu0 %v6443
    %6581 = vmatpush.msra.mxu0 %v6439
    %6582 = vmatpush.msra.mxu0 %v6435
    %6583 = vmatpush.msra.mxu0 %v6431
    %6584 = vmatpush.msra.mxu0 %v6427
    %6585 = vmatpush.msra.mxu0 %v6423
    %6586 = vmatpush.msra.mxu0 %v6419
    %6587 = vmatpush.msra.mxu0 %v6415
    %6588 = vmatpush.msra.mxu0 %v6411
    %6589 = vmatpush.msra.mxu0 %v6407
    %6590 = vmatpush.msra.mxu0 %v6403
    %6591 = vmatpush.msra.mxu0 %v6399
    %6592 = vmatmul.f32.gmra.mxu0 %v6396
    %v6593 = vpop.f32.mrf.mxu0
    %v6594 = vadd.f32 %v6529, %v6593
    %6595 = vdwg.mxu0
    %6596 = vmatpush.msra.mxu0 %v6523
    %6597 = vmatpush.msra.mxu0 %v6519
    %6598 = vmatpush.msra.mxu0 %v6515
    %6599 = vmatpush.msra.mxu0 %v6511
    %6600 = vmatpush.msra.mxu0 %v6507
    %6601 = vmatpush.msra.mxu0 %v6503
    %6602 = vmatpush.msra.mxu0 %v6499
    %6603 = vmatpush.msra.mxu0 %v6495
    %6604 = vmatpush.msra.mxu0 %v6491
    %6605 = vmatpush.msra.mxu0 %v6487
    %6606 = vmatpush.msra.mxu0 %v6483
    %6607 = vmatpush.msra.mxu0 %v6479
    %6608 = vmatpush.msra.mxu0 %v6475
    %6609 = vmatpush.msra.mxu0 %v6471
    %6610 = vmatpush.msra.mxu0 %v6467
    %6611 = vmatpush.msra.mxu0 %v6463
    %6612 = vmatmul.f32.gmra.mxu0 %v6397
    %v6613 = vpop.f32.mrf.mxu0
    %v6614 = vadd.f32 %v6594, %v6613
    %6615 = vdwg.mxu0
    %6616 = vmatpush.msra.mxu0 %v6460
    %6617 = vmatpush.msra.mxu0 %v6456
    %6618 = vmatpush.msra.mxu0 %v6452
    %6619 = vmatpush.msra.mxu0 %v6448
    %6620 = vmatpush.msra.mxu0 %v6444
    %6621 = vmatpush.msra.mxu0 %v6440
    %6622 = vmatpush.msra.mxu0 %v6436
    %6623 = vmatpush.msra.mxu0 %v6432
    %6624 = vmatpush.msra.mxu0 %v6428
    %6625 = vmatpush.msra.mxu0 %v6424
    %6626 = vmatpush.msra.mxu0 %v6420
    %6627 = vmatpush.msra.mxu0 %v6416
    %6628 = vmatpush.msra.mxu0 %v6412
    %6629 = vmatpush.msra.mxu0 %v6408
    %6630 = vmatpush.msra.mxu0 %v6404
    %6631 = vmatpush.msra.mxu0 %v6400
    %6632 = vmatmul.f32.gmra.mxu0 %v6396
    %v6633 = vpop.f32.mrf.mxu0
    %v6634 = vadd.f32 %v6530, %v6633
    %6635 = vdwg.mxu0
    %6636 = vmatpush.msra.mxu0 %v6524
    %6637 = vmatpush.msra.mxu0 %v6520
    %6638 = vmatpush.msra.mxu0 %v6516
    %6639 = vmatpush.msra.mxu0 %v6512
    %6640 = vmatpush.msra.mxu0 %v6508
    %6641 = vmatpush.msra.mxu0 %v6504
    %6642 = vmatpush.msra.mxu0 %v6500
    %6643 = vmatpush.msra.mxu0 %v6496
    %6644 = vmatpush.msra.mxu0 %v6492
    %6645 = vmatpush.msra.mxu0 %v6488
    %6646 = vmatpush.msra.mxu0 %v6484
    %6647 = vmatpush.msra.mxu0 %v6480
    %6648 = vmatpush.msra.mxu0 %v6476
    %6649 = vmatpush.msra.mxu0 %v6472
    %6650 = vmatpush.msra.mxu0 %v6468
    %6651 = vmatpush.msra.mxu0 %v6464
    %6652 = vmatmul.f32.gmra.mxu0 %v6397
    %v6653 = vpop.f32.mrf.mxu0
    %v6654 = vadd.f32 %v6634, %v6653
    %6655 = vdwg.mxu0
    %6656 = vmatpush.msra.mxu0 %v6461
    %6657 = vmatpush.msra.mxu0 %v6457
    %6658 = vmatpush.msra.mxu0 %v6453
    %6659 = vmatpush.msra.mxu0 %v6449
    %6660 = vmatpush.msra.mxu0 %v6445
    %6661 = vmatpush.msra.mxu0 %v6441
    %6662 = vmatpush.msra.mxu0 %v6437
    %6663 = vmatpush.msra.mxu0 %v6433
    %6664 = vmatpush.msra.mxu0 %v6429
    %6665 = vmatpush.msra.mxu0 %v6425
    %6666 = vmatpush.msra.mxu0 %v6421
    %6667 = vmatpush.msra.mxu0 %v6417
    %6668 = vmatpush.msra.mxu0 %v6413
    %6669 = vmatpush.msra.mxu0 %v6409
    %6670 = vmatpush.msra.mxu0 %v6405
    %6671 = vmatpush.msra.mxu0 %v6401
    %6672 = vmatmul.f32.gmra.mxu0 %v6396
    %v6673 = vpop.f32.mrf.mxu0
    %v6674 = vadd.f32 %v6531, %v6673
    %6675 = vdwg.mxu0
    %6676 = vmatpush.msra.mxu0 %v6525
    %6677 = vmatpush.msra.mxu0 %v6521
    %6678 = vmatpush.msra.mxu0 %v6517
    %6679 = vmatpush.msra.mxu0 %v6513
    %6680 = vmatpush.msra.mxu0 %v6509
    %6681 = vmatpush.msra.mxu0 %v6505
    %6682 = vmatpush.msra.mxu0 %v6501
    %6683 = vmatpush.msra.mxu0 %v6497
    %6684 = vmatpush.msra.mxu0 %v6493
    %6685 = vmatpush.msra.mxu0 %v6489
    %6686 = vmatpush.msra.mxu0 %v6485
    %6687 = vmatpush.msra.mxu0 %v6481
    %6688 = vmatpush.msra.mxu0 %v6477
    %6689 = vmatpush.msra.mxu0 %v6473
    %6690 = vmatpush.msra.mxu0 %v6469
    %6691 = vmatpush.msra.mxu0 %v6465
    %6692 = vmatmul.f32.gmra.mxu0 %v6397
    %v6693 = vpop.f32.mrf.mxu0
    %v6694 = vadd.f32 %v6674, %v6693
    %6695 = vdwg.mxu0
    %v6696 = vxor.u32 %v6574, 2147483648
    %v6697 = vxor.u32 %v6614, 2147483648
    %v6698 = vxor.u32 %v6654, 2147483648
    %v6699 = vmul.f32 %v6696, 1.442695
    %v6700 = vpow.pop %v6699
    %v6701 = vmul.f32 %v6697, 1.442695
    %v6702 = vpow.pop %v6701
    %v6703 = vmul.f32 %v6698, 1.442695
    %v6704 = vpow.pop %v6703
    %v6705 = vadd.f32 %v6700, 1.0
    %v6706 = vadd.f32 %v6702, 1.0
    %v6707 = vadd.f32 %v6704, 1.0
    %v6708 = vrcp.pop %v6705
    %v6709 = vmul.f32 %v6705, %v6708
    %v6710 = vsub.f32 1.0, %v6709
    %v6711 = vmul.f32 %v6708, %v6710
    %v6712 = vadd.f32 %v6708, %v6711
    %vm6713 = vweird.f32 %v6705
    %vm6714 = vweird.f32 %v6708
    %vm6715 = vmor %vm6713, %vm6714
    %v6716 = vsel %vm6715, %v6708, %v6712
    %v6717 = vand.u32 2147483647, %v6705
    %vm6718 = vcmp.eq.f32.partialorder %v6717, 8.507059e+37
    %v6719 = vand.u32 %v6705, 2147483648
    %v6720 = vor.u32 1.1754944e-38, %v6719
    %v6721 = vsel %vm6718, %v6720, %v6716
    %v6722 = vmul.f32 1.0, %v6721
    %v6723 = vrcp.pop %v6706
    %v6724 = vmul.f32 %v6706, %v6723
    %v6725 = vsub.f32 1.0, %v6724
    %v6726 = vmul.f32 %v6723, %v6725
    %v6727 = vadd.f32 %v6723, %v6726
    %vm6728 = vweird.f32 %v6706
    %vm6729 = vweird.f32 %v6723
    %vm6730 = vmor %vm6728, %vm6729
    %v6731 = vsel %vm6730, %v6723, %v6727
    %v6732 = vand.u32 2147483647, %v6706
    %vm6733 = vcmp.eq.f32.partialorder %v6732, 8.507059e+37
    %v6734 = vand.u32 %v6706, 2147483648
    %v6735 = vor.u32 1.1754944e-38, %v6734
    %v6736 = vsel %vm6733, %v6735, %v6731
    %v6737 = vmul.f32 1.0, %v6736
    %v6738 = vrcp.pop %v6707
    %v6739 = vmul.f32 %v6707, %v6738
    %v6740 = vsub.f32 1.0, %v6739
    %v6741 = vmul.f32 %v6738, %v6740
    %v6742 = vadd.f32 %v6738, %v6741
    %vm6743 = vweird.f32 %v6707
    %vm6744 = vweird.f32 %v6738
    %vm6745 = vmor %vm6743, %vm6744
    %v6746 = vsel %vm6745, %v6738, %v6742
    %v6747 = vand.u32 2147483647, %v6707
    %vm6748 = vcmp.eq.f32.partialorder %v6747, 8.507059e+37
    %v6749 = vand.u32 %v6707, 2147483648
    %v6750 = vor.u32 1.1754944e-38, %v6749
    %v6751 = vsel %vm6748, %v6750, %v6746
    %v6752 = vmul.f32 1.0, %v6751
    %v6753 = vtanh.pop %v6694
    %v6754 = vld [vmem:[#allocation3] sm:$0xff]
    %v6755 = vmul.f32 %v6737, %v6754
    %v6756 = vmul.f32 %v6722, %v6753
    %v6757 = vadd.f32 %v6755, %v6756
    %v6758 = vtanh.pop %v6757
    %v6759 = vmul.f32 %v6752, %v6758
    %6760 = vst [vmem:[#allocation3] sm:$0xff] %v6757
    %6761 = vst [vmem:[#allocation2] sm:$0xff] %v6759
    %6762 = vst [vmem:[#allocation4 + $0x8] sm:$0xff] %v6759
    %v6763 = vld [vmem:[%s9] sm:$0xff]
    %v6764 = vld [vmem:[%s9 + $0x8] sm:$0xff]
    %v6765 = vld [vmem:[%s9 + $0x10] sm:$0xff]
    %v6766 = vld [vmem:[%s9 + $0x18] sm:$0xff]
    %v6767 = vld [vmem:[%s9 + $0x20] sm:$0xff]
    %v6768 = vld [vmem:[%s9 + $0x28] sm:$0xff]
    %v6769 = vld [vmem:[%s9 + $0x30] sm:$0xff]
    %v6770 = vld [vmem:[%s9 + $0x38] sm:$0xff]
    %v6771 = vld [vmem:[%s9 + $0x40] sm:$0xff]
    %v6772 = vld [vmem:[%s9 + $0x48] sm:$0xff]
    %v6773 = vld [vmem:[%s9 + $0x50] sm:$0xff]
    %v6774 = vld [vmem:[%s9 + $0x58] sm:$0xff]
    %v6775 = vld [vmem:[%s9 + $0x60] sm:$0xff]
    %v6776 = vld [vmem:[%s9 + $0x68] sm:$0xff]
    %v6777 = vld [vmem:[%s9 + $0x70] sm:$0xff]
    %v6778 = vld [vmem:[%s9 + $0x78] sm:$0xff]
    %v6779 = vld [vmem:[%s10] sm:$0x1]
    %v6781 = vperm.slane %v6779, 0
    %6783 = vmatpush.msra.mxu0 %v6778
    %6784 = vmatpush.msra.mxu0 %v6777
    %6785 = vmatpush.msra.mxu0 %v6776
    %6786 = vmatpush.msra.mxu0 %v6775
    %6787 = vmatpush.msra.mxu0 %v6774
    %6788 = vmatpush.msra.mxu0 %v6773
    %6789 = vmatpush.msra.mxu0 %v6772
    %6790 = vmatpush.msra.mxu0 %v6771
    %6791 = vmatpush.msra.mxu0 %v6770
    %6792 = vmatpush.msra.mxu0 %v6769
    %6793 = vmatpush.msra.mxu0 %v6768
    %6794 = vmatpush.msra.mxu0 %v6767
    %6795 = vmatpush.msra.mxu0 %v6766
    %6796 = vmatpush.msra.mxu0 %v6765
    %6797 = vmatpush.msra.mxu0 %v6764
    %6798 = vmatpush.msra.mxu0 %v6763
    %6799 = vmatmul.f32.gmra.mxu0 %v6759
    %v6800 = vpop.f32.mrf.mxu0
    %v6801 = vadd.f32 %v6781, %v6800
    %6802 = vdwg.mxu0
    %s6803 = scalar_lea.vmem %s11, 48
    %6804 = vst [vmem:[%s6803] sm:$0xff] %v6801
    %s6805 = sld [smem:[#allocation10 + $0x6]]
    %p6806 = scmp.gt.s32.totalorder %s6805, 0
    // Predicated region
    $region106: #{_seq2seq_core.1} parent=1 // pred_check
      %p6807 = pneg %p6806
    $region107: #{_seq2seq_core.1} parent=1 // pred_check_branch
      %6809 = sbr.rel (%p6807) target = $region109
    $region108: #{_seq2seq_core.1} parent=1 // pred_region
      %s6810 = sld [smem:[#allocation8 + $0x7]]
      %v6811 = vstv %s6810
      %vm6812 = vcmp.eq.s32.totalorder %v75, %v6811
      %vm6813 = vmand %vm83, %vm6812
      %v6814 = vsel %vm6813, 1.0, 0.0
      %s6815 = sld [smem:[#allocation8 + $0x87]]
      %v6816 = vstv %s6815
      %vm6817 = vcmp.eq.s32.totalorder %v75, %v6816
      %vm6818 = vmand %vm89, %vm6817
      %v6819 = vsel %vm6818, 1.0, %v6814
      %6820 = vst [vmem:[#allocation5] sm:$0xff] %v6819
    $region109: #{_seq2seq_core.1} parent=1 // pred_fallthru
      _
    %s6821 = sld [smem:[#allocation10 + $0x6]]
    %p6822 = scmp.eq.s32.totalorder %s6821, 0
    // Predicated region
    $region110: #{_seq2seq_core.1} parent=1 // pred_check
      %p6823 = pneg %p6822
    $region111: #{_seq2seq_core.1} parent=1 // pred_check_branch
      %6825 = sbr.rel (%p6823) target = $region113
    $region112: #{_seq2seq_core.1} parent=1 // pred_region
      %vm6826 = vcmp.lt.s32.totalorder %v75, 16
      %v6827 = vsel %vm6826, %v6801, -1e+30
      %6828 = vmax.xlane.f32.xlu0 %v6827
      %v6829 = vpop.xlane.xlu0 %6828
      %vm6830 = vcmp.eq.f32.partialorder %v6827, %v6829
      %v6831 = vsel %vm6830, %v75, 128
      %v6832 = vand.u32 %v6831, 65535
      %v6833 = vshra.s32 %v6831, 16
      %v6834 = vcvt.s32.f32 %v6832
      %v6835 = vcvt.s32.f32 %v6833
      %6836 = vmin.xlane.f32.xlu0 %v6835
      %v6837 = vpop.xlane.xlu0 %6836
      %vm6838 = vcmp.eq.f32.partialorder %v6835, %v6837
      %v6839 = vsel %vm6838, %v6834, inf
      %6840 = vmin.xlane.f32.xlu0 %v6839
      %v6841 = vpop.xlane.xlu0 %6840
      %v6842 = vcvt.f32.s32 %v6841
      %v6843 = vcvt.f32.s32 %v6837
      %v6844 = vshll.u32 %v6843, 16
      %v6845 = vadd.s32 %v6844, %v6842
      %vm6846 = vcmp.eq.s32.totalorder %v75, %v6845
      %v6847 = vsel %vm6846, 1, 0
      %v6848 = vcvt.s32.f32 %v6847
      %6849 = vst [vmem:[#allocation5] sm:$0xff] %v6848
    $region113: #{_seq2seq_core.1} parent=1 // pred_fallthru
      _
    // Predicated region
    $region114: #{_seq2seq_core.1} parent=1 // pred_check
      _
    $region115: #{_seq2seq_core.1} parent=1 // pred_check_branch
      %6851 = sbr.rel (0) target = $region117
    $region116: #{_seq2seq_core.1} parent=1 // pred_region
      _
    $region117: #{_seq2seq_core.1} parent=1 // pred_fallthru
      _
    // Predicated region
    $region118: #{_seq2seq_core.1} parent=1 // pred_check
      _
    $region119: #{_seq2seq_core.1} parent=1 // pred_check_branch
      %6853 = sbr.rel (0) target = $region121
    $region120: #{_seq2seq_core.1} parent=1 // pred_region
      _
    $region121: #{_seq2seq_core.1} parent=1 // pred_fallthru
      _
    %6854 = vsyncpa [#allocation7], 1
    %6855 = vsyncpa [#allocation9], 1

</llo_original>
